<compile_context>
chip_gen: v7x
topology: tpu7x:2x2x1
jax: 0.10.0
libtpu: 0.0.40
codegen_flags: <defaults>
</compile_context>

<pallas_src>
import functools

import jax
import jax.numpy as jnp
from jax.experimental import pallas as pl
from jax.experimental.pallas import tpu as pltpu


# ---------------------------------------------------------------------------
# Fused bidirectional LSTM recurrence kernel.
# Grid: (batch blocks, time blocks).  Per grid step it consumes the forward time
# block tb and the mirrored backward time block nb-1-tb of the precomputed gate
# slab gx = x@W_ih^T + bias (fwd half / bwd half), carries (h, c) for both
# directions in VMEM scratch (registers within the unrolled block), and emits
# (Tt, Bt, H) output slabs per direction.
# ---------------------------------------------------------------------------
def _bilstm_rec_kernel(len_ref, gxf_ref, gxb_ref, whhf_hbm, whhb_hbm,
                       outf_ref, outb_ref, hn_ref, cn_ref,
                       hf_scr, cf_scr, hb_scr, cb_scr,
                       whhf_scr, whhb_scr, wsem,
                       *, nl_dtype):
    tb = pl.program_id(1)
    nb = pl.num_programs(1)
    Tt = gxf_ref.shape[0]          # static time-block length
    Bt, H = hf_scr.shape

    @pl.when(tb == 0)
    def _():
        hf_scr[...] = jnp.zeros_like(hf_scr)
        cf_scr[...] = jnp.zeros_like(cf_scr)
        hb_scr[...] = jnp.zeros_like(hb_scr)
        cb_scr[...] = jnp.zeros_like(cb_scr)
        # Single-buffered recurrent weights: DMA once per batch-block pass
        # (re-done per batch block so each megacore-side core is self-contained).
        cpf = pltpu.make_async_copy(whhf_hbm, whhf_scr, wsem.at[0])
        cpb = pltpu.make_async_copy(whhb_hbm, whhb_scr, wsem.at[1])
        cpf.start()
        cpb.start()
        cpf.wait()
        cpb.wait()

    lengths = len_ref[...]          # (Bt, 1) int32
    whh_f = whhf_scr[...]           # (H, 4H) bf16, resident in VMEM scratch
    whh_b = whhb_scr[...]

    # TODO(synk): for H < 128 (toy size) the k*H:(k+1)*H gate slices are sub-lane-width
    #             masked extractions; at realistic H (multiple of 128) they are lane-aligned.
    def cell(gates_x, h_prev, c_prev, whh, t):
        # gates_x is bf16; the MXU matmul accumulates in f32, promotion keeps gates f32.
        gates = jnp.dot(h_prev, whh, preferred_element_type=jnp.float32) + gates_x
        g = gates.astype(nl_dtype)                       # bf16 nonlin on v6e/v7x
        i_g = jax.nn.sigmoid(g[:, 0 * H:1 * H])
        f_g = jax.nn.sigmoid(g[:, 1 * H:2 * H])
        g_g = jnp.tanh(g[:, 2 * H:3 * H])
        o_g = jax.nn.sigmoid(g[:, 3 * H:4 * H])
        c_new = f_g * c_prev + i_g * g_g                 # promotes to f32 (state stays f32)
        h_new = (o_g * jnp.tanh(c_new.astype(nl_dtype))).astype(jnp.bfloat16)
        mask = jnp.broadcast_to(t < lengths, (Bt, H))    # hoisted, reused 3x
        h_next = jnp.where(mask, h_new, h_prev)          # hold state past length (bf16)
        c_next = jnp.where(mask, c_new, c_prev)          # f32
        h_emit = jnp.where(mask, h_new, jnp.zeros_like(h_new))  # padded steps -> 0
        return h_next, c_next, h_emit

    # Carry h/c in registers across the unrolled time block; write scratch once.
    h_f = hf_scr[...]
    c_f = cf_scr[...]
    h_b = hb_scr[...]
    c_b = cb_scr[...]

    for i in range(Tt):
        # ---- forward direction: global time = tb*Tt + i ----
        t_f = tb * Tt + i
        h_f, c_f, emit_f = cell(gxf_ref[i], h_f, c_f, whh_f, t_f)
        outf_ref[i] = emit_f.astype(outf_ref.dtype)

        # ---- backward direction: its BlockSpecs already point at time block
        #      nb-1-tb; walk that block in reverse local order.  The mask compares
        #      the ACTUAL time index, not the grid index. ----
        j = Tt - 1 - i
        t_b = (nb - 1 - tb) * Tt + j
        h_b, c_b, emit_b = cell(gxb_ref[j], h_b, c_b, whh_b, t_b)
        outb_ref[j] = emit_b.astype(outb_ref.dtype)

    hf_scr[...] = h_f
    cf_scr[...] = c_f
    hb_scr[...] = h_b
    cb_scr[...] = c_b

    @pl.when(tb == nb - 1)
    def _():
        # fwd has just finished time T_pad-1 (state held at length-1);
        # bwd has just finished time 0.
        hn_ref[0] = h_f.astype(hn_ref.dtype)
        hn_ref[1] = h_b.astype(hn_ref.dtype)
        cn_ref[0] = c_f.astype(cn_ref.dtype)
        cn_ref[1] = c_b.astype(cn_ref.dtype)


def run_bilstm_layer(gx, lengths, whh_f_t, whh_b_t, *, time_block, batch_block,
                     out_dtype, nl_dtype, vmem_limit_bytes):
    """One fused bidirectional LSTM layer recurrence.

    gx       : (T_pad, B, 8H) bf16 — precomputed x@W_ih^T + bias, fwd half | bwd half
    lengths  : (B,) int32
    whh_*_t  : (H, 4H) f32 — transposed recurrent weights
    returns out_f, out_b (T_pad, B, H) out_dtype, hn, cn (2, B, H) f32
    """
    T_pad, B, H8 = gx.shape
    H = H8 // 8
    Tt = time_block
    nb = T_pad // Tt
    Bt = batch_block
    nbB = B // Bt
    len_col = lengths.astype(jnp.int32).reshape(B, 1)

    grid_spec = pltpu.PrefetchScalarGridSpec(
        num_scalar_prefetch=0,
        grid=(nbB, nb),                                   # batch parallel, time sequential
        in_specs=[
            pl.BlockSpec((Bt, 1), lambda b, t: (b, 0)),                       # lengths
            pl.BlockSpec((Tt, Bt, 4 * H), lambda b, t: (t, b, 0)),            # gx fwd half
            pl.BlockSpec((Tt, Bt, 4 * H), lambda b, t: (nb - 1 - t, b, 1)),   # gx bwd half (reversed)
            pl.BlockSpec(memory_space=pl.ANY),                                # W_hh^T fwd (manual DMA)
            pl.BlockSpec(memory_space=pl.ANY),                                # W_hh^T bwd (manual DMA)
        ],
        out_specs=[
            pl.BlockSpec((Tt, Bt, H), lambda b, t: (t, b, 0)),                # out fwd
            pl.BlockSpec((Tt, Bt, H), lambda b, t: (nb - 1 - t, b, 0)),       # out bwd (reversed)
            pl.BlockSpec((2, Bt, H), lambda b, t: (0, b, 0)),                 # hn (resident per b)
            pl.BlockSpec((2, Bt, H), lambda b, t: (0, b, 0)),                 # cn (resident per b)
        ],
        scratch_shapes=[
            pltpu.VMEM((Bt, H), jnp.bfloat16),    # h fwd (bf16 shadow, MXU-ready)
            pltpu.VMEM((Bt, H), jnp.float32),     # c fwd
            pltpu.VMEM((Bt, H), jnp.bfloat16),    # h bwd
            pltpu.VMEM((Bt, H), jnp.float32),     # c bwd
            pltpu.VMEM((H, 4 * H), jnp.bfloat16), # W_hh fwd (single-buffered)
            pltpu.VMEM((H, 4 * H), jnp.bfloat16), # W_hh bwd
            pltpu.SemaphoreType.DMA((2,)),
        ],
    )

    compiler_kwargs = dict(dimension_semantics=("parallel", "arbitrary"))
    if vmem_limit_bytes is not None:
        compiler_kwargs["vmem_limit_bytes"] = vmem_limit_bytes

    out_f, out_b, hn, cn = pl.pallas_call(
        functools.partial(_bilstm_rec_kernel, nl_dtype=nl_dtype),
        out_shape=(
            jax.ShapeDtypeStruct((T_pad, B, H), out_dtype),
            jax.ShapeDtypeStruct((T_pad, B, H), out_dtype),
            jax.ShapeDtypeStruct((2, B, H), jnp.float32),
            jax.ShapeDtypeStruct((2, B, H), jnp.float32),
        ),
        grid_spec=grid_spec,
        compiler_params=pltpu.CompilerParams(**compiler_kwargs),
    )(len_col, gx, gx,
      whh_f_t.astype(jnp.bfloat16), whh_b_t.astype(jnp.bfloat16))

    return out_f, out_b, hn, cn


# ---------------------------------------------------------------------------
# Hoisted, fused input projection: ONE (T*B, D) x (D, 8H) bf16 MXU matmul per
# layer (fwd and bwd W_ih concatenated on the output dim).  `x_parts` feature
# dims concat to the layer input; W rows are split to match, so the fwd/bwd
# halves of the previous layer's output never need an explicit concat.
# ---------------------------------------------------------------------------
def _project_inputs(x_parts, wih_t_cat, bias_cat):
    T, B = x_parts[0].shape[0], x_parts[0].shape[1]
    n_out = wih_t_cat.shape[1]
    acc = None
    row = 0
    for xp in x_parts:
        d = xp.shape[-1]
        w = wih_t_cat[row:row + d].astype(jnp.bfloat16)
        contrib = jnp.dot(xp.reshape(T * B, d).astype(jnp.bfloat16), w,
                          preferred_element_type=jnp.float32)
        acc = (contrib + bias_cat[None, :]) if acc is None else (acc + contrib)
        row += d
    return acc.reshape(T, B, n_out).astype(jnp.bfloat16)


def init_encoder_params(key, vocab_size, embedding_size, hidden_size, num_layers):
    params = {}
    key, k_emb = jax.random.split(key)
    params["embeddings"] = jax.random.normal(
        k_emb, (vocab_size, embedding_size), dtype=jnp.float32)

    k = 1.0 / jnp.sqrt(hidden_size)
    for layer in range(num_layers):
        d_in = embedding_size if layer == 0 else 2 * hidden_size
        wih_t_parts, bias_parts, whh_t_parts = [], [], []
        for _direction in ("fwd", "bwd"):
            key, k1, k2, k3, k4 = jax.random.split(key, 5)
            w_ih = jax.random.uniform(k1, (4 * hidden_size, d_in),
                                      minval=-k, maxval=k, dtype=jnp.float32)
            w_hh = jax.random.uniform(k2, (4 * hidden_size, hidden_size),
                                      minval=-k, maxval=k, dtype=jnp.float32)
            b_ih = jax.random.uniform(k3, (4 * hidden_size,),
                                      minval=-k, maxval=k, dtype=jnp.float32)
            b_hh = jax.random.uniform(k4, (4 * hidden_size,),
                                      minval=-k, maxval=k, dtype=jnp.float32)
            wih_t_parts.append(w_ih.T)       # (D_in, 4H)
            bias_parts.append(b_ih + b_hh)   # (4H,)
            whh_t_parts.append(w_hh.T)       # (H, 4H)
        params[f"l{layer}"] = (
            jnp.concatenate(wih_t_parts, axis=1),   # (D_in, 8H) = [fwd 4H | bwd 4H]
            jnp.concatenate(bias_parts, axis=0),    # (8H,)
            whh_t_parts[0],                         # (H, 4H) fwd
            whh_t_parts[1],                         # (H, 4H) bwd
        )
    return params


def _device_tuning():
    """Trace-time, generation-specific knobs (safe fallbacks if detection fails)."""
    kind = ""
    try:
        kind = jax.devices()[0].device_kind.lower()
    except Exception:
        pass
    is_v7 = "v7" in kind
    use_bf16_nonlin = ("v6" in kind) or is_v7            # v5e has no bf16 VPU/EUP
    if is_v7:
        vmem_limit = 48 << 20                            # 64 MiB physical on v7x
    elif ("v5" in kind) or ("v6" in kind):
        vmem_limit = 96 << 20                            # raise 16/32 MiB scoped default
    else:
        vmem_limit = None
    default_tt = 8 if is_v7 else 16
    return default_tt, use_bf16_nonlin, vmem_limit


@functools.partial(jax.jit, static_argnames=("num_layers", "time_block", "batch_block"))
def encoder_forward(params, sentence_batch, sequence_length, num_layers,
                    time_block=None, batch_block=None):
    """Mirrors encoder.forward: returns (out (B,T,2H), hn, cn (2*L,B,H))."""
    # Frozen embedding lookup, gathered directly in time-major order
    # (transpose the int token ids, not the embedded tensor).  Dropout = identity.
    emb = jnp.take(params["embeddings"], sentence_batch.T, axis=0)   # (T, B, E)
    T, B, _ = emb.shape
    lengths = sequence_length.astype(jnp.int32)

    default_tt, use_bf16_nonlin, vmem_limit = _device_tuning()
    nl_dtype = jnp.bfloat16 if use_bf16_nonlin else jnp.float32

    if time_block is None:
        time_block = default_tt
    Tt = min(time_block, T)
    T_pad = pl.cdiv(T, Tt) * Tt

    if batch_block is None:
        # split batch across cores (v7x megacore) when it stays (8,·)-aligned
        batch_block = (B // 2) if (B % 16 == 0) else B

    x_parts = [emb]
    hn_list, cn_list = [], []
    out_f = out_b = None
    for layer in range(num_layers):
        wih_cat, bias_cat, whh_f, whh_b = params[f"l{layer}"]

        gx = _project_inputs(x_parts, wih_cat, bias_cat)    # (T or T_pad, B, 8H) bf16
        if gx.shape[0] != T_pad:                            # pad time (masked anyway)
            gx = jnp.pad(gx, ((0, T_pad - gx.shape[0]), (0, 0), (0, 0)))

        last = layer == num_layers - 1
        out_f, out_b, hn_l, cn_l = run_bilstm_layer(
            gx, lengths, whh_f, whh_b,
            time_block=Tt, batch_block=batch_block,
            out_dtype=(jnp.float32 if last else jnp.bfloat16),
            nl_dtype=nl_dtype, vmem_limit_bytes=vmem_limit)

        x_parts = [out_f, out_b]                            # fed split to next layer
        hn_list += [hn_l[0], hn_l[1]]
        cn_list += [cn_l[0], cn_l[1]]

    # TODO(synk): final concat+transpose still materializes one (B,T,2H) copy in XLA;
    #             fusing it into the kernel would need a shared output buffer per direction.
    out = jnp.concatenate([out_f[:T], out_b[:T]], axis=-1)  # (T, B, 2H) f32
    out = jnp.transpose(out, (1, 0, 2))                     # (B, T, 2H)
    hn = jnp.stack(hn_list, axis=0)                         # (2*L, B, H) [l0f,l0b,l1f,...]
    cn = jnp.stack(cn_list, axis=0)
    return out, hn, cn


if __name__ == "__main__":
    B, T = 2, 8
    VOCAB, EMB, HID, NUM_LAYERS = 20, 16, 32, 2

    key = jax.random.PRNGKey(0)
    key, k_tok = jax.random.split(key)
    sentence_batch = jax.random.randint(k_tok, (B, T), 0, VOCAB, dtype=jnp.int32)
    # max length equals T so pad_packed output has T timesteps
    sequence_length = jnp.array([T, 5], dtype=jnp.int32)

    params = init_encoder_params(key, VOCAB, EMB, HID, NUM_LAYERS)

    out, hn, cn = encoder_forward(params, sentence_batch, sequence_length, NUM_LAYERS)
    jax.block_until_ready((out, hn, cn))

    assert out.shape == (B, T, 2 * HID)
    assert hn.shape == (2 * NUM_LAYERS, B, HID)
    assert cn.shape == (2 * NUM_LAYERS, B, HID)
    print("KERNEL_OK")
</pallas_src>

<mosaic_0001>
module attributes {stable_mosaic.version = 11 : i64} {
  func.func @_bilstm_rec_kernel(%arg0: i32, %arg1: i32, %arg2: memref<2x1xi32, #tpu.memory_space<vmem>>, %arg3: memref<8x2x128xbf16, #tpu.memory_space<vmem>>, %arg4: memref<8x2x128xbf16, #tpu.memory_space<vmem>>, %arg5: memref<32x128xbf16, #tpu.memory_space<any>>, %arg6: memref<32x128xbf16, #tpu.memory_space<any>>, %arg7: memref<8x2x32xbf16, #tpu.memory_space<vmem>>, %arg8: memref<8x2x32xbf16, #tpu.memory_space<vmem>>, %arg9: memref<2x2x32xf32, #tpu.memory_space<vmem>>, %arg10: memref<2x2x32xf32, #tpu.memory_space<vmem>>, %arg11: memref<2x32xbf16, #tpu.memory_space<vmem>>, %arg12: memref<2x32xf32, #tpu.memory_space<vmem>>, %arg13: memref<2x32xbf16, #tpu.memory_space<vmem>>, %arg14: memref<2x32xf32, #tpu.memory_space<vmem>>, %arg15: memref<32x128xbf16, #tpu.memory_space<vmem>>, %arg16: memref<32x128xbf16, #tpu.memory_space<vmem>>, %arg17: memref<2x!tpu.dma_semaphore, #tpu.memory_space<semaphore_mem>>) attributes {dimension_semantics = [#tpu.dimension_semantics<parallel>, #tpu.dimension_semantics<arbitrary>], iteration_bounds = array<i64: 1, 1>, scalar_prefetch = 0 : i64, scratch_operands = 7 : i64, tpu.core_type = #tpu.core_type<tc>, window_params = [{transform_indices = @transform_0, window_bounds = array<i64: 2, 1>}, {transform_indices = @transform_1, window_bounds = array<i64: 8, 2, 128>}, {transform_indices = @transform_2, window_bounds = array<i64: 8, 2, 128>}, {}, {}, {transform_indices = @transform_5, window_bounds = array<i64: 8, 2, 32>}, {transform_indices = @transform_6, window_bounds = array<i64: 8, 2, 32>}, {transform_indices = @transform_7, window_bounds = array<i64: 2, 2, 32>}, {transform_indices = @transform_8, window_bounds = array<i64: 2, 2, 32>}]} {
    %c0_i32 = arith.constant 0 : i32
    %0 = arith.cmpi eq, %arg1, %c0_i32 : i32
    %1 = arith.extui %0 : i1 to i32
    %c0_i32_0 = arith.constant 0 : i32
    %2 = arith.cmpi ne, %1, %c0_i32_0 : i32
    scf.if %2 {
      %cst_224 = arith.constant 0.000000e+00 : bf16
      %729 = vector.broadcast %cst_224 : bf16 to vector<2x32xbf16>
      %c0_225 = arith.constant 0 : index
      %c0_226 = arith.constant 0 : index
      %730 = vector.load %arg11[%c0_225, %c0_226] : memref<2x32xbf16, #tpu.memory_space<vmem>>, vector<2x32xbf16>
      tpu.vector_store %arg11[%c0_225, %c0_226], %729 {strides = array<i32>} : memref<2x32xbf16, #tpu.memory_space<vmem>>, vector<2x32xbf16>,
      %cst_227 = arith.constant 0.000000e+00 : f32
      %731 = vector.broadcast %cst_227 : f32 to vector<2x32xf32>
      %c0_228 = arith.constant 0 : index
      %c0_229 = arith.constant 0 : index
      %732 = vector.load %arg12[%c0_228, %c0_229] : memref<2x32xf32, #tpu.memory_space<vmem>>, vector<2x32xf32>
      tpu.vector_store %arg12[%c0_228, %c0_229], %731 {strides = array<i32>} : memref<2x32xf32, #tpu.memory_space<vmem>>, vector<2x32xf32>,
      %cst_230 = arith.constant 0.000000e+00 : bf16
      %733 = vector.broadcast %cst_230 : bf16 to vector<2x32xbf16>
      %c0_231 = arith.constant 0 : index
      %c0_232 = arith.constant 0 : index
      %734 = vector.load %arg13[%c0_231, %c0_232] : memref<2x32xbf16, #tpu.memory_space<vmem>>, vector<2x32xbf16>
      tpu.vector_store %arg13[%c0_231, %c0_232], %733 {strides = array<i32>} : memref<2x32xbf16, #tpu.memory_space<vmem>>, vector<2x32xbf16>,
      %cst_233 = arith.constant 0.000000e+00 : f32
      %735 = vector.broadcast %cst_233 : f32 to vector<2x32xf32>
      %c0_234 = arith.constant 0 : index
      %c0_235 = arith.constant 0 : index
      %736 = vector.load %arg14[%c0_234, %c0_235] : memref<2x32xf32, #tpu.memory_space<vmem>>, vector<2x32xf32>
      tpu.vector_store %arg14[%c0_234, %c0_235], %735 {strides = array<i32>} : memref<2x32xf32, #tpu.memory_space<vmem>>, vector<2x32xf32>,
      %c0_i32_236 = arith.constant 0 : i32
      %737 = tpu.memref_slice %arg17[%c0_i32_236] : memref<2x!tpu.dma_semaphore, #tpu.memory_space<semaphore_mem>> -> memref<1x!tpu.dma_semaphore, #tpu.memory_space<semaphore_mem>>
      %738 = tpu.memref_squeeze %737 : memref<1x!tpu.dma_semaphore, #tpu.memory_space<semaphore_mem>> -> memref<!tpu.dma_semaphore, #tpu.memory_space<semaphore_mem>>
      tpu.enqueue_dma source(%arg5 : memref<32x128xbf16, #tpu.memory_space<any>>) target(%arg15 : memref<32x128xbf16, #tpu.memory_space<vmem>>) target_semaphore(%738 : memref<!tpu.dma_semaphore, #tpu.memory_space<semaphore_mem>>)
      %c1_i32_237 = arith.constant 1 : i32
      %739 = tpu.memref_slice %arg17[%c1_i32_237] : memref<2x!tpu.dma_semaphore, #tpu.memory_space<semaphore_mem>> -> memref<1x!tpu.dma_semaphore, #tpu.memory_space<semaphore_mem>>
      %740 = tpu.memref_squeeze %739 : memref<1x!tpu.dma_semaphore, #tpu.memory_space<semaphore_mem>> -> memref<!tpu.dma_semaphore, #tpu.memory_space<semaphore_mem>>
      tpu.enqueue_dma source(%arg6 : memref<32x128xbf16, #tpu.memory_space<any>>) target(%arg16 : memref<32x128xbf16, #tpu.memory_space<vmem>>) target_semaphore(%740 : memref<!tpu.dma_semaphore, #tpu.memory_space<semaphore_mem>>)
      %c0_i32_238 = arith.constant 0 : i32
      %741 = tpu.memref_slice %arg17[%c0_i32_238] : memref<2x!tpu.dma_semaphore, #tpu.memory_space<semaphore_mem>> -> memref<1x!tpu.dma_semaphore, #tpu.memory_space<semaphore_mem>>
      %742 = tpu.memref_squeeze %741 : memref<1x!tpu.dma_semaphore, #tpu.memory_space<semaphore_mem>> -> memref<!tpu.dma_semaphore, #tpu.memory_space<semaphore_mem>>
      tpu.wait_dma2 semaphore(%742 : memref<!tpu.dma_semaphore, #tpu.memory_space<semaphore_mem>>) src(%arg5 : memref<32x128xbf16, #tpu.memory_space<any>>) dst(%arg15 : memref<32x128xbf16, #tpu.memory_space<vmem>>)
      %c1_i32_239 = arith.constant 1 : i32
      %743 = tpu.memref_slice %arg17[%c1_i32_239] : memref<2x!tpu.dma_semaphore, #tpu.memory_space<semaphore_mem>> -> memref<1x!tpu.dma_semaphore, #tpu.memory_space<semaphore_mem>>
      %744 = tpu.memref_squeeze %743 : memref<1x!tpu.dma_semaphore, #tpu.memory_space<semaphore_mem>> -> memref<!tpu.dma_semaphore, #tpu.memory_space<semaphore_mem>>
      tpu.wait_dma2 semaphore(%744 : memref<!tpu.dma_semaphore, #tpu.memory_space<semaphore_mem>>) src(%arg6 : memref<32x128xbf16, #tpu.memory_space<any>>) dst(%arg16 : memref<32x128xbf16, #tpu.memory_space<vmem>>)
    } else {
    }
    %c0 = arith.constant 0 : index
    %c0_1 = arith.constant 0 : index
    %3 = vector.load %arg2[%c0, %c0_1] : memref<2x1xi32, #tpu.memory_space<vmem>>, vector<2x1xi32>
    %c0_2 = arith.constant 0 : index
    %c0_3 = arith.constant 0 : index
    %4 = vector.load %arg15[%c0_2, %c0_3] : memref<32x128xbf16, #tpu.memory_space<vmem>>, vector<32x128xbf16>
    %c0_4 = arith.constant 0 : index
    %c0_5 = arith.constant 0 : index
    %5 = vector.load %arg16[%c0_4, %c0_5] : memref<32x128xbf16, #tpu.memory_space<vmem>>, vector<32x128xbf16>
    %c0_6 = arith.constant 0 : index
    %c0_7 = arith.constant 0 : index
    %6 = vector.load %arg11[%c0_6, %c0_7] : memref<2x32xbf16, #tpu.memory_space<vmem>>, vector<2x32xbf16>
    %c0_8 = arith.constant 0 : index
    %c0_9 = arith.constant 0 : index
    %7 = vector.load %arg12[%c0_8, %c0_9] : memref<2x32xf32, #tpu.memory_space<vmem>>, vector<2x32xf32>
    %c0_10 = arith.constant 0 : index
    %c0_11 = arith.constant 0 : index
    %8 = vector.load %arg13[%c0_10, %c0_11] : memref<2x32xbf16, #tpu.memory_space<vmem>>, vector<2x32xbf16>
    %c0_12 = arith.constant 0 : index
    %c0_13 = arith.constant 0 : index
    %9 = vector.load %arg14[%c0_12, %c0_13] : memref<2x32xf32, #tpu.memory_space<vmem>>, vector<2x32xf32>
    %c8_i32 = arith.constant 8 : i32
    %10 = arith.muli %arg1, %c8_i32 : i32
    %c0_i32_14 = arith.constant 0 : i32
    %11 = arith.addi %10, %c0_i32_14 : i32
    %c0_15 = arith.constant 0 : index
    %c0_16 = arith.constant 0 : index
    %c0_17 = arith.constant 0 : index
    %12 = vector.load %arg3[%c0_15, %c0_16, %c0_17] : memref<8x2x128xbf16, #tpu.memory_space<vmem>>, vector<1x2x128xbf16>
    %13 = vector.shape_cast %12 : vector<1x2x128xbf16> to vector<2x128xbf16>
    %cst = arith.constant dense<0.000000e+00> : vector<2x128xf32>
    %14 = tpu.matmul %6, %4, %cst {dimension_numbers = #tpu.dot_dimension_numbers<[1], [0], [0], [1], [0, 0, 1, 1], [], []>} : vector<2x32xbf16>, vector<32x128xbf16>, vector<2x128xf32> -> vector<2x128xf32>
    %15 = arith.extf %13 : vector<2x128xbf16> to vector<2x128xf32>
    %16 = arith.addf %14, %15 : vector<2x128xf32>
    %17 = vector.extract_strided_slice %16 {offsets = [0, 0], sizes = [2, 32], strides = [1, 1]} : vector<2x128xf32> to vector<2x32xf32>
    %18 = arith.negf %17 : vector<2x32xf32>
    %19 = math.exp %18 : vector<2x32xf32>
    %cst_18 = arith.constant 1.000000e+00 : f32
    %20 = vector.broadcast %cst_18 : f32 to vector<2x32xf32>
    %21 = arith.addf %20, %19 : vector<2x32xf32>
    %22 = arith.divf %20, %21 : vector<2x32xf32>
    %23 = vector.extract_strided_slice %16 {offsets = [0, 32], sizes = [2, 32], strides = [1, 1]} : vector<2x128xf32> to vector<2x32xf32>
    %24 = arith.negf %23 : vector<2x32xf32>
    %25 = math.exp %24 : vector<2x32xf32>
    %cst_19 = arith.constant 1.000000e+00 : f32
    %26 = vector.broadcast %cst_19 : f32 to vector<2x32xf32>
    %27 = arith.addf %26, %25 : vector<2x32xf32>
    %28 = arith.divf %26, %27 : vector<2x32xf32>
    %29 = vector.extract_strided_slice %16 {offsets = [0, 64], sizes = [2, 32], strides = [1, 1]} : vector<2x128xf32> to vector<2x32xf32>
    %30 = math.tanh %29 : vector<2x32xf32>
    %31 = vector.extract_strided_slice %16 {offsets = [0, 96], sizes = [2, 32], strides = [1, 1]} : vector<2x128xf32> to vector<2x32xf32>
    %32 = arith.negf %31 : vector<2x32xf32>
    %33 = math.exp %32 : vector<2x32xf32>
    %cst_20 = arith.constant 1.000000e+00 : f32
    %34 = vector.broadcast %cst_20 : f32 to vector<2x32xf32>
    %35 = arith.addf %34, %33 : vector<2x32xf32>
    %36 = arith.divf %34, %35 : vector<2x32xf32>
    %37 = arith.mulf %28, %7 : vector<2x32xf32>
    %38 = arith.mulf %22, %30 : vector<2x32xf32>
    %39 = arith.addf %37, %38 : vector<2x32xf32>
    %40 = math.tanh %39 : vector<2x32xf32>
    %41 = arith.mulf %36, %40 : vector<2x32xf32>
    %42 = arith.truncf %41 : vector<2x32xf32> to vector<2x32xbf16>
    %43 = vector.broadcast %11 : i32 to vector<2x1xi32>
    %44 = arith.cmpi slt, %43, %3 : vector<2x1xi32>
    %45 = vector.shape_cast %44 : vector<2x1xi1> to vector<2x1xi1>
    %46 = vector.broadcast %45 : vector<2x1xi1> to vector<2x32xi1>
    %47 = arith.select %46, %42, %6 : vector<2x32xi1>, vector<2x32xbf16>
    %48 = arith.select %46, %39, %7 : vector<2x32xi1>, vector<2x32xf32>
    %cst_21 = arith.constant 0.000000e+00 : bf16
    %49 = vector.broadcast %cst_21 : bf16 to vector<2x32xbf16>
    %50 = arith.select %46, %42, %49 : vector<2x32xi1>, vector<2x32xbf16>
    %c0_22 = arith.constant 0 : index
    %c0_23 = arith.constant 0 : index
    %c0_24 = arith.constant 0 : index
    %51 = vector.load %arg7[%c0_22, %c0_23, %c0_24] : memref<8x2x32xbf16, #tpu.memory_space<vmem>>, vector<1x2x32xbf16>
    %52 = vector.shape_cast %51 : vector<1x2x32xbf16> to vector<2x32xbf16>
    %53 = vector.shape_cast %50 : vector<2x32xbf16> to vector<1x2x32xbf16>
    tpu.vector_store %arg7[%c0_22, %c0_23, %c0_24], %53 {strides = array<i32>} : memref<8x2x32xbf16, #tpu.memory_space<vmem>>, vector<1x2x32xbf16>,
    %c0_i32_25 = arith.constant 0 : i32
    %54 = arith.subi %c0_i32_25, %arg1 : i32
    %c8_i32_26 = arith.constant 8 : i32
    %55 = arith.muli %54, %c8_i32_26 : i32
    %c7_i32 = arith.constant 7 : i32
    %56 = arith.addi %55, %c7_i32 : i32
    %c7 = arith.constant 7 : index
    %c0_27 = arith.constant 0 : index
    %c0_28 = arith.constant 0 : index
    %57 = vector.load %arg4[%c7, %c0_27, %c0_28] : memref<8x2x128xbf16, #tpu.memory_space<vmem>>, vector<1x2x128xbf16>
    %58 = vector.shape_cast %57 : vector<1x2x128xbf16> to vector<2x128xbf16>
    %cst_29 = arith.constant dense<0.000000e+00> : vector<2x128xf32>
    %59 = tpu.matmul %8, %5, %cst_29 {dimension_numbers = #tpu.dot_dimension_numbers<[1], [0], [0], [1], [0, 0, 1, 1], [], []>} : vector<2x32xbf16>, vector<32x128xbf16>, vector<2x128xf32> -> vector<2x128xf32>
    %60 = arith.extf %58 : vector<2x128xbf16> to vector<2x128xf32>
    %61 = arith.addf %59, %60 : vector<2x128xf32>
    %62 = vector.extract_strided_slice %61 {offsets = [0, 0], sizes = [2, 32], strides = [1, 1]} : vector<2x128xf32> to vector<2x32xf32>
    %63 = arith.negf %62 : vector<2x32xf32>
    %64 = math.exp %63 : vector<2x32xf32>
    %cst_30 = arith.constant 1.000000e+00 : f32
    %65 = vector.broadcast %cst_30 : f32 to vector<2x32xf32>
    %66 = arith.addf %65, %64 : vector<2x32xf32>
    %67 = arith.divf %65, %66 : vector<2x32xf32>
    %68 = vector.extract_strided_slice %61 {offsets = [0, 32], sizes = [2, 32], strides = [1, 1]} : vector<2x128xf32> to vector<2x32xf32>
    %69 = arith.negf %68 : vector<2x32xf32>
    %70 = math.exp %69 : vector<2x32xf32>
    %cst_31 = arith.constant 1.000000e+00 : f32
    %71 = vector.broadcast %cst_31 : f32 to vector<2x32xf32>
    %72 = arith.addf %71, %70 : vector<2x32xf32>
    %73 = arith.divf %71, %72 : vector<2x32xf32>
    %74 = vector.extract_strided_slice %61 {offsets = [0, 64], sizes = [2, 32], strides = [1, 1]} : vector<2x128xf32> to vector<2x32xf32>
    %75 = math.tanh %74 : vector<2x32xf32>
    %76 = vector.extract_strided_slice %61 {offsets = [0, 96], sizes = [2, 32], strides = [1, 1]} : vector<2x128xf32> to vector<2x32xf32>
    %77 = arith.negf %76 : vector<2x32xf32>
    %78 = math.exp %77 : vector<2x32xf32>
    %cst_32 = arith.constant 1.000000e+00 : f32
    %79 = vector.broadcast %cst_32 : f32 to vector<2x32xf32>
    %80 = arith.addf %79, %78 : vector<2x32xf32>
    %81 = arith.divf %79, %80 : vector<2x32xf32>
    %82 = arith.mulf %73, %9 : vector<2x32xf32>
    %83 = arith.mulf %67, %75 : vector<2x32xf32>
    %84 = arith.addf %82, %83 : vector<2x32xf32>
    %85 = math.tanh %84 : vector<2x32xf32>
    %86 = arith.mulf %81, %85 : vector<2x32xf32>
    %87 = arith.truncf %86 : vector<2x32xf32> to vector<2x32xbf16>
    %88 = vector.broadcast %56 : i32 to vector<2x1xi32>
    %89 = arith.cmpi slt, %88, %3 : vector<2x1xi32>
    %90 = vector.shape_cast %89 : vector<2x1xi1> to vector<2x1xi1>
    %91 = vector.broadcast %90 : vector<2x1xi1> to vector<2x32xi1>
    %92 = arith.select %91, %87, %8 : vector<2x32xi1>, vector<2x32xbf16>
    %93 = arith.select %91, %84, %9 : vector<2x32xi1>, vector<2x32xf32>
    %cst_33 = arith.constant 0.000000e+00 : bf16
    %94 = vector.broadcast %cst_33 : bf16 to vector<2x32xbf16>
    %95 = arith.select %91, %87, %94 : vector<2x32xi1>, vector<2x32xbf16>
    %c7_34 = arith.constant 7 : index
    %c0_35 = arith.constant 0 : index
    %c0_36 = arith.constant 0 : index
    %96 = vector.load %arg8[%c7_34, %c0_35, %c0_36] : memref<8x2x32xbf16, #tpu.memory_space<vmem>>, vector<1x2x32xbf16>
    %97 = vector.shape_cast %96 : vector<1x2x32xbf16> to vector<2x32xbf16>
    %98 = vector.shape_cast %95 : vector<2x32xbf16> to vector<1x2x32xbf16>
    tpu.vector_store %arg8[%c7_34, %c0_35, %c0_36], %98 {strides = array<i32>} : memref<8x2x32xbf16, #tpu.memory_space<vmem>>, vector<1x2x32xbf16>,
    %c8_i32_37 = arith.constant 8 : i32
    %99 = arith.muli %arg1, %c8_i32_37 : i32
    %c1_i32 = arith.constant 1 : i32
    %100 = arith.addi %99, %c1_i32 : i32
    %c1 = arith.constant 1 : index
    %c0_38 = arith.constant 0 : index
    %c0_39 = arith.constant 0 : index
    %101 = vector.load %arg3[%c1, %c0_38, %c0_39] : memref<8x2x128xbf16, #tpu.memory_space<vmem>>, vector<1x2x128xbf16>
    %102 = vector.shape_cast %101 : vector<1x2x128xbf16> to vector<2x128xbf16>
    %cst_40 = arith.constant dense<0.000000e+00> : vector<2x128xf32>
    %103 = tpu.matmul %47, %4, %cst_40 {dimension_numbers = #tpu.dot_dimension_numbers<[1], [0], [0], [1], [0, 0, 1, 1], [], []>} : vector<2x32xbf16>, vector<32x128xbf16>, vector<2x128xf32> -> vector<2x128xf32>
    %104 = arith.extf %102 : vector<2x128xbf16> to vector<2x128xf32>
    %105 = arith.addf %103, %104 : vector<2x128xf32>
    %106 = vector.extract_strided_slice %105 {offsets = [0, 0], sizes = [2, 32], strides = [1, 1]} : vector<2x128xf32> to vector<2x32xf32>
    %107 = arith.negf %106 : vector<2x32xf32>
    %108 = math.exp %107 : vector<2x32xf32>
    %cst_41 = arith.constant 1.000000e+00 : f32
    %109 = vector.broadcast %cst_41 : f32 to vector<2x32xf32>
    %110 = arith.addf %109, %108 : vector<2x32xf32>
    %111 = arith.divf %109, %110 : vector<2x32xf32>
    %112 = vector.extract_strided_slice %105 {offsets = [0, 32], sizes = [2, 32], strides = [1, 1]} : vector<2x128xf32> to vector<2x32xf32>
    %113 = arith.negf %112 : vector<2x32xf32>
    %114 = math.exp %113 : vector<2x32xf32>
    %cst_42 = arith.constant 1.000000e+00 : f32
    %115 = vector.broadcast %cst_42 : f32 to vector<2x32xf32>
    %116 = arith.addf %115, %114 : vector<2x32xf32>
    %117 = arith.divf %115, %116 : vector<2x32xf32>
    %118 = vector.extract_strided_slice %105 {offsets = [0, 64], sizes = [2, 32], strides = [1, 1]} : vector<2x128xf32> to vector<2x32xf32>
    %119 = math.tanh %118 : vector<2x32xf32>
    %120 = vector.extract_strided_slice %105 {offsets = [0, 96], sizes = [2, 32], strides = [1, 1]} : vector<2x128xf32> to vector<2x32xf32>
    %121 = arith.negf %120 : vector<2x32xf32>
    %122 = math.exp %121 : vector<2x32xf32>
    %cst_43 = arith.constant 1.000000e+00 : f32
    %123 = vector.broadcast %cst_43 : f32 to vector<2x32xf32>
    %124 = arith.addf %123, %122 : vector<2x32xf32>
    %125 = arith.divf %123, %124 : vector<2x32xf32>
    %126 = arith.mulf %117, %48 : vector<2x32xf32>
    %127 = arith.mulf %111, %119 : vector<2x32xf32>
    %128 = arith.addf %126, %127 : vector<2x32xf32>
    %129 = math.tanh %128 : vector<2x32xf32>
    %130 = arith.mulf %125, %129 : vector<2x32xf32>
    %131 = arith.truncf %130 : vector<2x32xf32> to vector<2x32xbf16>
    %132 = vector.broadcast %100 : i32 to vector<2x1xi32>
    %133 = arith.cmpi slt, %132, %3 : vector<2x1xi32>
    %134 = vector.shape_cast %133 : vector<2x1xi1> to vector<2x1xi1>
    %135 = vector.broadcast %134 : vector<2x1xi1> to vector<2x32xi1>
    %136 = arith.select %135, %131, %47 : vector<2x32xi1>, vector<2x32xbf16>
    %137 = arith.select %135, %128, %48 : vector<2x32xi1>, vector<2x32xf32>
    %cst_44 = arith.constant 0.000000e+00 : bf16
    %138 = vector.broadcast %cst_44 : bf16 to vector<2x32xbf16>
    %139 = arith.select %135, %131, %138 : vector<2x32xi1>, vector<2x32xbf16>
    %c1_45 = arith.constant 1 : index
    %c0_46 = arith.constant 0 : index
    %c0_47 = arith.constant 0 : index
    %140 = vector.load %arg7[%c1_45, %c0_46, %c0_47] : memref<8x2x32xbf16, #tpu.memory_space<vmem>>, vector<1x2x32xbf16>
    %141 = vector.shape_cast %140 : vector<1x2x32xbf16> to vector<2x32xbf16>
    %142 = vector.shape_cast %139 : vector<2x32xbf16> to vector<1x2x32xbf16>
    tpu.vector_store %arg7[%c1_45, %c0_46, %c0_47], %142 {strides = array<i32>} : memref<8x2x32xbf16, #tpu.memory_space<vmem>>, vector<1x2x32xbf16>,
    %c0_i32_48 = arith.constant 0 : i32
    %143 = arith.subi %c0_i32_48, %arg1 : i32
    %c8_i32_49 = arith.constant 8 : i32
    %144 = arith.muli %143, %c8_i32_49 : i32
    %c6_i32 = arith.constant 6 : i32
    %145 = arith.addi %144, %c6_i32 : i32
    %c6 = arith.constant 6 : index
    %c0_50 = arith.constant 0 : index
    %c0_51 = arith.constant 0 : index
    %146 = vector.load %arg4[%c6, %c0_50, %c0_51] : memref<8x2x128xbf16, #tpu.memory_space<vmem>>, vector<1x2x128xbf16>
    %147 = vector.shape_cast %146 : vector<1x2x128xbf16> to vector<2x128xbf16>
    %cst_52 = arith.constant dense<0.000000e+00> : vector<2x128xf32>
    %148 = tpu.matmul %92, %5, %cst_52 {dimension_numbers = #tpu.dot_dimension_numbers<[1], [0], [0], [1], [0, 0, 1, 1], [], []>} : vector<2x32xbf16>, vector<32x128xbf16>, vector<2x128xf32> -> vector<2x128xf32>
    %149 = arith.extf %147 : vector<2x128xbf16> to vector<2x128xf32>
    %150 = arith.addf %148, %149 : vector<2x128xf32>
    %151 = vector.extract_strided_slice %150 {offsets = [0, 0], sizes = [2, 32], strides = [1, 1]} : vector<2x128xf32> to vector<2x32xf32>
    %152 = arith.negf %151 : vector<2x32xf32>
    %153 = math.exp %152 : vector<2x32xf32>
    %cst_53 = arith.constant 1.000000e+00 : f32
    %154 = vector.broadcast %cst_53 : f32 to vector<2x32xf32>
    %155 = arith.addf %154, %153 : vector<2x32xf32>
    %156 = arith.divf %154, %155 : vector<2x32xf32>
    %157 = vector.extract_strided_slice %150 {offsets = [0, 32], sizes = [2, 32], strides = [1, 1]} : vector<2x128xf32> to vector<2x32xf32>
    %158 = arith.negf %157 : vector<2x32xf32>
    %159 = math.exp %158 : vector<2x32xf32>
    %cst_54 = arith.constant 1.000000e+00 : f32
    %160 = vector.broadcast %cst_54 : f32 to vector<2x32xf32>
    %161 = arith.addf %160, %159 : vector<2x32xf32>
    %162 = arith.divf %160, %161 : vector<2x32xf32>
    %163 = vector.extract_strided_slice %150 {offsets = [0, 64], sizes = [2, 32], strides = [1, 1]} : vector<2x128xf32> to vector<2x32xf32>
    %164 = math.tanh %163 : vector<2x32xf32>
    %165 = vector.extract_strided_slice %150 {offsets = [0, 96], sizes = [2, 32], strides = [1, 1]} : vector<2x128xf32> to vector<2x32xf32>
    %166 = arith.negf %165 : vector<2x32xf32>
    %167 = math.exp %166 : vector<2x32xf32>
    %cst_55 = arith.constant 1.000000e+00 : f32
    %168 = vector.broadcast %cst_55 : f32 to vector<2x32xf32>
    %169 = arith.addf %168, %167 : vector<2x32xf32>
    %170 = arith.divf %168, %169 : vector<2x32xf32>
    %171 = arith.mulf %162, %93 : vector<2x32xf32>
    %172 = arith.mulf %156, %164 : vector<2x32xf32>
    %173 = arith.addf %171, %172 : vector<2x32xf32>
    %174 = math.tanh %173 : vector<2x32xf32>
    %175 = arith.mulf %170, %174 : vector<2x32xf32>
    %176 = arith.truncf %175 : vector<2x32xf32> to vector<2x32xbf16>
    %177 = vector.broadcast %145 : i32 to vector<2x1xi32>
    %178 = arith.cmpi slt, %177, %3 : vector<2x1xi32>
    %179 = vector.shape_cast %178 : vector<2x1xi1> to vector<2x1xi1>
    %180 = vector.broadcast %179 : vector<2x1xi1> to vector<2x32xi1>
    %181 = arith.select %180, %176, %92 : vector<2x32xi1>, vector<2x32xbf16>
    %182 = arith.select %180, %173, %93 : vector<2x32xi1>, vector<2x32xf32>
    %cst_56 = arith.constant 0.000000e+00 : bf16
    %183 = vector.broadcast %cst_56 : bf16 to vector<2x32xbf16>
    %184 = arith.select %180, %176, %183 : vector<2x32xi1>, vector<2x32xbf16>
    %c6_57 = arith.constant 6 : index
    %c0_58 = arith.constant 0 : index
    %c0_59 = arith.constant 0 : index
    %185 = vector.load %arg8[%c6_57, %c0_58, %c0_59] : memref<8x2x32xbf16, #tpu.memory_space<vmem>>, vector<1x2x32xbf16>
    %186 = vector.shape_cast %185 : vector<1x2x32xbf16> to vector<2x32xbf16>
    %187 = vector.shape_cast %184 : vector<2x32xbf16> to vector<1x2x32xbf16>
    tpu.vector_store %arg8[%c6_57, %c0_58, %c0_59], %187 {strides = array<i32>} : memref<8x2x32xbf16, #tpu.memory_space<vmem>>, vector<1x2x32xbf16>,
    %c8_i32_60 = arith.constant 8 : i32
    %188 = arith.muli %arg1, %c8_i32_60 : i32
    %c2_i32 = arith.constant 2 : i32
    %189 = arith.addi %188, %c2_i32 : i32
    %c2 = arith.constant 2 : index
    %c0_61 = arith.constant 0 : index
    %c0_62 = arith.constant 0 : index
    %190 = vector.load %arg3[%c2, %c0_61, %c0_62] : memref<8x2x128xbf16, #tpu.memory_space<vmem>>, vector<1x2x128xbf16>
    %191 = vector.shape_cast %190 : vector<1x2x128xbf16> to vector<2x128xbf16>
    %cst_63 = arith.constant dense<0.000000e+00> : vector<2x128xf32>
    %192 = tpu.matmul %136, %4, %cst_63 {dimension_numbers = #tpu.dot_dimension_numbers<[1], [0], [0], [1], [0, 0, 1, 1], [], []>} : vector<2x32xbf16>, vector<32x128xbf16>, vector<2x128xf32> -> vector<2x128xf32>
    %193 = arith.extf %191 : vector<2x128xbf16> to vector<2x128xf32>
    %194 = arith.addf %192, %193 : vector<2x128xf32>
    %195 = vector.extract_strided_slice %194 {offsets = [0, 0], sizes = [2, 32], strides = [1, 1]} : vector<2x128xf32> to vector<2x32xf32>
    %196 = arith.negf %195 : vector<2x32xf32>
    %197 = math.exp %196 : vector<2x32xf32>
    %cst_64 = arith.constant 1.000000e+00 : f32
    %198 = vector.broadcast %cst_64 : f32 to vector<2x32xf32>
    %199 = arith.addf %198, %197 : vector<2x32xf32>
    %200 = arith.divf %198, %199 : vector<2x32xf32>
    %201 = vector.extract_strided_slice %194 {offsets = [0, 32], sizes = [2, 32], strides = [1, 1]} : vector<2x128xf32> to vector<2x32xf32>
    %202 = arith.negf %201 : vector<2x32xf32>
    %203 = math.exp %202 : vector<2x32xf32>
    %cst_65 = arith.constant 1.000000e+00 : f32
    %204 = vector.broadcast %cst_65 : f32 to vector<2x32xf32>
    %205 = arith.addf %204, %203 : vector<2x32xf32>
    %206 = arith.divf %204, %205 : vector<2x32xf32>
    %207 = vector.extract_strided_slice %194 {offsets = [0, 64], sizes = [2, 32], strides = [1, 1]} : vector<2x128xf32> to vector<2x32xf32>
    %208 = math.tanh %207 : vector<2x32xf32>
    %209 = vector.extract_strided_slice %194 {offsets = [0, 96], sizes = [2, 32], strides = [1, 1]} : vector<2x128xf32> to vector<2x32xf32>
    %210 = arith.negf %209 : vector<2x32xf32>
    %211 = math.exp %210 : vector<2x32xf32>
    %cst_66 = arith.constant 1.000000e+00 : f32
    %212 = vector.broadcast %cst_66 : f32 to vector<2x32xf32>
    %213 = arith.addf %212, %211 : vector<2x32xf32>
    %214 = arith.divf %212, %213 : vector<2x32xf32>
    %215 = arith.mulf %206, %137 : vector<2x32xf32>
    %216 = arith.mulf %200, %208 : vector<2x32xf32>
    %217 = arith.addf %215, %216 : vector<2x32xf32>
    %218 = math.tanh %217 : vector<2x32xf32>
    %219 = arith.mulf %214, %218 : vector<2x32xf32>
    %220 = arith.truncf %219 : vector<2x32xf32> to vector<2x32xbf16>
    %221 = vector.broadcast %189 : i32 to vector<2x1xi32>
    %222 = arith.cmpi slt, %221, %3 : vector<2x1xi32>
    %223 = vector.shape_cast %222 : vector<2x1xi1> to vector<2x1xi1>
    %224 = vector.broadcast %223 : vector<2x1xi1> to vector<2x32xi1>
    %225 = arith.select %224, %220, %136 : vector<2x32xi1>, vector<2x32xbf16>
    %226 = arith.select %224, %217, %137 : vector<2x32xi1>, vector<2x32xf32>
    %cst_67 = arith.constant 0.000000e+00 : bf16
    %227 = vector.broadcast %cst_67 : bf16 to vector<2x32xbf16>
    %228 = arith.select %224, %220, %227 : vector<2x32xi1>, vector<2x32xbf16>
    %c2_68 = arith.constant 2 : index
    %c0_69 = arith.constant 0 : index
    %c0_70 = arith.constant 0 : index
    %229 = vector.load %arg7[%c2_68, %c0_69, %c0_70] : memref<8x2x32xbf16, #tpu.memory_space<vmem>>, vector<1x2x32xbf16>
    %230 = vector.shape_cast %229 : vector<1x2x32xbf16> to vector<2x32xbf16>
    %231 = vector.shape_cast %228 : vector<2x32xbf16> to vector<1x2x32xbf16>
    tpu.vector_store %arg7[%c2_68, %c0_69, %c0_70], %231 {strides = array<i32>} : memref<8x2x32xbf16, #tpu.memory_space<vmem>>, vector<1x2x32xbf16>,
    %c0_i32_71 = arith.constant 0 : i32
    %232 = arith.subi %c0_i32_71, %arg1 : i32
    %c8_i32_72 = arith.constant 8 : i32
    %233 = arith.muli %232, %c8_i32_72 : i32
    %c5_i32 = arith.constant 5 : i32
    %234 = arith.addi %233, %c5_i32 : i32
    %c5 = arith.constant 5 : index
    %c0_73 = arith.constant 0 : index
    %c0_74 = arith.constant 0 : index
    %235 = vector.load %arg4[%c5, %c0_73, %c0_74] : memref<8x2x128xbf16, #tpu.memory_space<vmem>>, vector<1x2x128xbf16>
    %236 = vector.shape_cast %235 : vector<1x2x128xbf16> to vector<2x128xbf16>
    %cst_75 = arith.constant dense<0.000000e+00> : vector<2x128xf32>
    %237 = tpu.matmul %181, %5, %cst_75 {dimension_numbers = #tpu.dot_dimension_numbers<[1], [0], [0], [1], [0, 0, 1, 1], [], []>} : vector<2x32xbf16>, vector<32x128xbf16>, vector<2x128xf32> -> vector<2x128xf32>
    %238 = arith.extf %236 : vector<2x128xbf16> to vector<2x128xf32>
    %239 = arith.addf %237, %238 : vector<2x128xf32>
    %240 = vector.extract_strided_slice %239 {offsets = [0, 0], sizes = [2, 32], strides = [1, 1]} : vector<2x128xf32> to vector<2x32xf32>
    %241 = arith.negf %240 : vector<2x32xf32>
    %242 = math.exp %241 : vector<2x32xf32>
    %cst_76 = arith.constant 1.000000e+00 : f32
    %243 = vector.broadcast %cst_76 : f32 to vector<2x32xf32>
    %244 = arith.addf %243, %242 : vector<2x32xf32>
    %245 = arith.divf %243, %244 : vector<2x32xf32>
    %246 = vector.extract_strided_slice %239 {offsets = [0, 32], sizes = [2, 32], strides = [1, 1]} : vector<2x128xf32> to vector<2x32xf32>
    %247 = arith.negf %246 : vector<2x32xf32>
    %248 = math.exp %247 : vector<2x32xf32>
    %cst_77 = arith.constant 1.000000e+00 : f32
    %249 = vector.broadcast %cst_77 : f32 to vector<2x32xf32>
    %250 = arith.addf %249, %248 : vector<2x32xf32>
    %251 = arith.divf %249, %250 : vector<2x32xf32>
    %252 = vector.extract_strided_slice %239 {offsets = [0, 64], sizes = [2, 32], strides = [1, 1]} : vector<2x128xf32> to vector<2x32xf32>
    %253 = math.tanh %252 : vector<2x32xf32>
    %254 = vector.extract_strided_slice %239 {offsets = [0, 96], sizes = [2, 32], strides = [1, 1]} : vector<2x128xf32> to vector<2x32xf32>
    %255 = arith.negf %254 : vector<2x32xf32>
    %256 = math.exp %255 : vector<2x32xf32>
    %cst_78 = arith.constant 1.000000e+00 : f32
    %257 = vector.broadcast %cst_78 : f32 to vector<2x32xf32>
    %258 = arith.addf %257, %256 : vector<2x32xf32>
    %259 = arith.divf %257, %258 : vector<2x32xf32>
    %260 = arith.mulf %251, %182 : vector<2x32xf32>
    %261 = arith.mulf %245, %253 : vector<2x32xf32>
    %262 = arith.addf %260, %261 : vector<2x32xf32>
    %263 = math.tanh %262 : vector<2x32xf32>
    %264 = arith.mulf %259, %263 : vector<2x32xf32>
    %265 = arith.truncf %264 : vector<2x32xf32> to vector<2x32xbf16>
    %266 = vector.broadcast %234 : i32 to vector<2x1xi32>
    %267 = arith.cmpi slt, %266, %3 : vector<2x1xi32>
    %268 = vector.shape_cast %267 : vector<2x1xi1> to vector<2x1xi1>
    %269 = vector.broadcast %268 : vector<2x1xi1> to vector<2x32xi1>
    %270 = arith.select %269, %265, %181 : vector<2x32xi1>, vector<2x32xbf16>
    %271 = arith.select %269, %262, %182 : vector<2x32xi1>, vector<2x32xf32>
    %cst_79 = arith.constant 0.000000e+00 : bf16
    %272 = vector.broadcast %cst_79 : bf16 to vector<2x32xbf16>
    %273 = arith.select %269, %265, %272 : vector<2x32xi1>, vector<2x32xbf16>
    %c5_80 = arith.constant 5 : index
    %c0_81 = arith.constant 0 : index
    %c0_82 = arith.constant 0 : index
    %274 = vector.load %arg8[%c5_80, %c0_81, %c0_82] : memref<8x2x32xbf16, #tpu.memory_space<vmem>>, vector<1x2x32xbf16>
    %275 = vector.shape_cast %274 : vector<1x2x32xbf16> to vector<2x32xbf16>
    %276 = vector.shape_cast %273 : vector<2x32xbf16> to vector<1x2x32xbf16>
    tpu.vector_store %arg8[%c5_80, %c0_81, %c0_82], %276 {strides = array<i32>} : memref<8x2x32xbf16, #tpu.memory_space<vmem>>, vector<1x2x32xbf16>,
    %c8_i32_83 = arith.constant 8 : i32
    %277 = arith.muli %arg1, %c8_i32_83 : i32
    %c3_i32 = arith.constant 3 : i32
    %278 = arith.addi %277, %c3_i32 : i32
    %c3 = arith.constant 3 : index
    %c0_84 = arith.constant 0 : index
    %c0_85 = arith.constant 0 : index
    %279 = vector.load %arg3[%c3, %c0_84, %c0_85] : memref<8x2x128xbf16, #tpu.memory_space<vmem>>, vector<1x2x128xbf16>
    %280 = vector.shape_cast %279 : vector<1x2x128xbf16> to vector<2x128xbf16>
    %cst_86 = arith.constant dense<0.000000e+00> : vector<2x128xf32>
    %281 = tpu.matmul %225, %4, %cst_86 {dimension_numbers = #tpu.dot_dimension_numbers<[1], [0], [0], [1], [0, 0, 1, 1], [], []>} : vector<2x32xbf16>, vector<32x128xbf16>, vector<2x128xf32> -> vector<2x128xf32>
    %282 = arith.extf %280 : vector<2x128xbf16> to vector<2x128xf32>
    %283 = arith.addf %281, %282 : vector<2x128xf32>
    %284 = vector.extract_strided_slice %283 {offsets = [0, 0], sizes = [2, 32], strides = [1, 1]} : vector<2x128xf32> to vector<2x32xf32>
    %285 = arith.negf %284 : vector<2x32xf32>
    %286 = math.exp %285 : vector<2x32xf32>
    %cst_87 = arith.constant 1.000000e+00 : f32
    %287 = vector.broadcast %cst_87 : f32 to vector<2x32xf32>
    %288 = arith.addf %287, %286 : vector<2x32xf32>
    %289 = arith.divf %287, %288 : vector<2x32xf32>
    %290 = vector.extract_strided_slice %283 {offsets = [0, 32], sizes = [2, 32], strides = [1, 1]} : vector<2x128xf32> to vector<2x32xf32>
    %291 = arith.negf %290 : vector<2x32xf32>
    %292 = math.exp %291 : vector<2x32xf32>
    %cst_88 = arith.constant 1.000000e+00 : f32
    %293 = vector.broadcast %cst_88 : f32 to vector<2x32xf32>
    %294 = arith.addf %293, %292 : vector<2x32xf32>
    %295 = arith.divf %293, %294 : vector<2x32xf32>
    %296 = vector.extract_strided_slice %283 {offsets = [0, 64], sizes = [2, 32], strides = [1, 1]} : vector<2x128xf32> to vector<2x32xf32>
    %297 = math.tanh %296 : vector<2x32xf32>
    %298 = vector.extract_strided_slice %283 {offsets = [0, 96], sizes = [2, 32], strides = [1, 1]} : vector<2x128xf32> to vector<2x32xf32>
    %299 = arith.negf %298 : vector<2x32xf32>
    %300 = math.exp %299 : vector<2x32xf32>
    %cst_89 = arith.constant 1.000000e+00 : f32
    %301 = vector.broadcast %cst_89 : f32 to vector<2x32xf32>
    %302 = arith.addf %301, %300 : vector<2x32xf32>
    %303 = arith.divf %301, %302 : vector<2x32xf32>
    %304 = arith.mulf %295, %226 : vector<2x32xf32>
    %305 = arith.mulf %289, %297 : vector<2x32xf32>
    %306 = arith.addf %304, %305 : vector<2x32xf32>
    %307 = math.tanh %306 : vector<2x32xf32>
    %308 = arith.mulf %303, %307 : vector<2x32xf32>
    %309 = arith.truncf %308 : vector<2x32xf32> to vector<2x32xbf16>
    %310 = vector.broadcast %278 : i32 to vector<2x1xi32>
    %311 = arith.cmpi slt, %310, %3 : vector<2x1xi32>
    %312 = vector.shape_cast %311 : vector<2x1xi1> to vector<2x1xi1>
    %313 = vector.broadcast %312 : vector<2x1xi1> to vector<2x32xi1>
    %314 = arith.select %313, %309, %225 : vector<2x32xi1>, vector<2x32xbf16>
    %315 = arith.select %313, %306, %226 : vector<2x32xi1>, vector<2x32xf32>
    %cst_90 = arith.constant 0.000000e+00 : bf16
    %316 = vector.broadcast %cst_90 : bf16 to vector<2x32xbf16>
    %317 = arith.select %313, %309, %316 : vector<2x32xi1>, vector<2x32xbf16>
    %c3_91 = arith.constant 3 : index
    %c0_92 = arith.constant 0 : index
    %c0_93 = arith.constant 0 : index
    %318 = vector.load %arg7[%c3_91, %c0_92, %c0_93] : memref<8x2x32xbf16, #tpu.memory_space<vmem>>, vector<1x2x32xbf16>
    %319 = vector.shape_cast %318 : vector<1x2x32xbf16> to vector<2x32xbf16>
    %320 = vector.shape_cast %317 : vector<2x32xbf16> to vector<1x2x32xbf16>
    tpu.vector_store %arg7[%c3_91, %c0_92, %c0_93], %320 {strides = array<i32>} : memref<8x2x32xbf16, #tpu.memory_space<vmem>>, vector<1x2x32xbf16>,
    %c0_i32_94 = arith.constant 0 : i32
    %321 = arith.subi %c0_i32_94, %arg1 : i32
    %c8_i32_95 = arith.constant 8 : i32
    %322 = arith.muli %321, %c8_i32_95 : i32
    %c4_i32 = arith.constant 4 : i32
    %323 = arith.addi %322, %c4_i32 : i32
    %c4 = arith.constant 4 : index
    %c0_96 = arith.constant 0 : index
    %c0_97 = arith.constant 0 : index
    %324 = vector.load %arg4[%c4, %c0_96, %c0_97] : memref<8x2x128xbf16, #tpu.memory_space<vmem>>, vector<1x2x128xbf16>
    %325 = vector.shape_cast %324 : vector<1x2x128xbf16> to vector<2x128xbf16>
    %cst_98 = arith.constant dense<0.000000e+00> : vector<2x128xf32>
    %326 = tpu.matmul %270, %5, %cst_98 {dimension_numbers = #tpu.dot_dimension_numbers<[1], [0], [0], [1], [0, 0, 1, 1], [], []>} : vector<2x32xbf16>, vector<32x128xbf16>, vector<2x128xf32> -> vector<2x128xf32>
    %327 = arith.extf %325 : vector<2x128xbf16> to vector<2x128xf32>
    %328 = arith.addf %326, %327 : vector<2x128xf32>
    %329 = vector.extract_strided_slice %328 {offsets = [0, 0], sizes = [2, 32], strides = [1, 1]} : vector<2x128xf32> to vector<2x32xf32>
    %330 = arith.negf %329 : vector<2x32xf32>
    %331 = math.exp %330 : vector<2x32xf32>
    %cst_99 = arith.constant 1.000000e+00 : f32
    %332 = vector.broadcast %cst_99 : f32 to vector<2x32xf32>
    %333 = arith.addf %332, %331 : vector<2x32xf32>
    %334 = arith.divf %332, %333 : vector<2x32xf32>
    %335 = vector.extract_strided_slice %328 {offsets = [0, 32], sizes = [2, 32], strides = [1, 1]} : vector<2x128xf32> to vector<2x32xf32>
    %336 = arith.negf %335 : vector<2x32xf32>
    %337 = math.exp %336 : vector<2x32xf32>
    %cst_100 = arith.constant 1.000000e+00 : f32
    %338 = vector.broadcast %cst_100 : f32 to vector<2x32xf32>
    %339 = arith.addf %338, %337 : vector<2x32xf32>
    %340 = arith.divf %338, %339 : vector<2x32xf32>
    %341 = vector.extract_strided_slice %328 {offsets = [0, 64], sizes = [2, 32], strides = [1, 1]} : vector<2x128xf32> to vector<2x32xf32>
    %342 = math.tanh %341 : vector<2x32xf32>
    %343 = vector.extract_strided_slice %328 {offsets = [0, 96], sizes = [2, 32], strides = [1, 1]} : vector<2x128xf32> to vector<2x32xf32>
    %344 = arith.negf %343 : vector<2x32xf32>
    %345 = math.exp %344 : vector<2x32xf32>
    %cst_101 = arith.constant 1.000000e+00 : f32
    %346 = vector.broadcast %cst_101 : f32 to vector<2x32xf32>
    %347 = arith.addf %346, %345 : vector<2x32xf32>
    %348 = arith.divf %346, %347 : vector<2x32xf32>
    %349 = arith.mulf %340, %271 : vector<2x32xf32>
    %350 = arith.mulf %334, %342 : vector<2x32xf32>
    %351 = arith.addf %349, %350 : vector<2x32xf32>
    %352 = math.tanh %351 : vector<2x32xf32>
    %353 = arith.mulf %348, %352 : vector<2x32xf32>
    %354 = arith.truncf %353 : vector<2x32xf32> to vector<2x32xbf16>
    %355 = vector.broadcast %323 : i32 to vector<2x1xi32>
    %356 = arith.cmpi slt, %355, %3 : vector<2x1xi32>
    %357 = vector.shape_cast %356 : vector<2x1xi1> to vector<2x1xi1>
    %358 = vector.broadcast %357 : vector<2x1xi1> to vector<2x32xi1>
    %359 = arith.select %358, %354, %270 : vector<2x32xi1>, vector<2x32xbf16>
    %360 = arith.select %358, %351, %271 : vector<2x32xi1>, vector<2x32xf32>
    %cst_102 = arith.constant 0.000000e+00 : bf16
    %361 = vector.broadcast %cst_102 : bf16 to vector<2x32xbf16>
    %362 = arith.select %358, %354, %361 : vector<2x32xi1>, vector<2x32xbf16>
    %c4_103 = arith.constant 4 : index
    %c0_104 = arith.constant 0 : index
    %c0_105 = arith.constant 0 : index
    %363 = vector.load %arg8[%c4_103, %c0_104, %c0_105] : memref<8x2x32xbf16, #tpu.memory_space<vmem>>, vector<1x2x32xbf16>
    %364 = vector.shape_cast %363 : vector<1x2x32xbf16> to vector<2x32xbf16>
    %365 = vector.shape_cast %362 : vector<2x32xbf16> to vector<1x2x32xbf16>
    tpu.vector_store %arg8[%c4_103, %c0_104, %c0_105], %365 {strides = array<i32>} : memref<8x2x32xbf16, #tpu.memory_space<vmem>>, vector<1x2x32xbf16>,
    %c8_i32_106 = arith.constant 8 : i32
    %366 = arith.muli %arg1, %c8_i32_106 : i32
    %c4_i32_107 = arith.constant 4 : i32
    %367 = arith.addi %366, %c4_i32_107 : i32
    %c4_108 = arith.constant 4 : index
    %c0_109 = arith.constant 0 : index
    %c0_110 = arith.constant 0 : index
    %368 = vector.load %arg3[%c4_108, %c0_109, %c0_110] : memref<8x2x128xbf16, #tpu.memory_space<vmem>>, vector<1x2x128xbf16>
    %369 = vector.shape_cast %368 : vector<1x2x128xbf16> to vector<2x128xbf16>
    %cst_111 = arith.constant dense<0.000000e+00> : vector<2x128xf32>
    %370 = tpu.matmul %314, %4, %cst_111 {dimension_numbers = #tpu.dot_dimension_numbers<[1], [0], [0], [1], [0, 0, 1, 1], [], []>} : vector<2x32xbf16>, vector<32x128xbf16>, vector<2x128xf32> -> vector<2x128xf32>
    %371 = arith.extf %369 : vector<2x128xbf16> to vector<2x128xf32>
    %372 = arith.addf %370, %371 : vector<2x128xf32>
    %373 = vector.extract_strided_slice %372 {offsets = [0, 0], sizes = [2, 32], strides = [1, 1]} : vector<2x128xf32> to vector<2x32xf32>
    %374 = arith.negf %373 : vector<2x32xf32>
    %375 = math.exp %374 : vector<2x32xf32>
    %cst_112 = arith.constant 1.000000e+00 : f32
    %376 = vector.broadcast %cst_112 : f32 to vector<2x32xf32>
    %377 = arith.addf %376, %375 : vector<2x32xf32>
    %378 = arith.divf %376, %377 : vector<2x32xf32>
    %379 = vector.extract_strided_slice %372 {offsets = [0, 32], sizes = [2, 32], strides = [1, 1]} : vector<2x128xf32> to vector<2x32xf32>
    %380 = arith.negf %379 : vector<2x32xf32>
    %381 = math.exp %380 : vector<2x32xf32>
    %cst_113 = arith.constant 1.000000e+00 : f32
    %382 = vector.broadcast %cst_113 : f32 to vector<2x32xf32>
    %383 = arith.addf %382, %381 : vector<2x32xf32>
    %384 = arith.divf %382, %383 : vector<2x32xf32>
    %385 = vector.extract_strided_slice %372 {offsets = [0, 64], sizes = [2, 32], strides = [1, 1]} : vector<2x128xf32> to vector<2x32xf32>
    %386 = math.tanh %385 : vector<2x32xf32>
    %387 = vector.extract_strided_slice %372 {offsets = [0, 96], sizes = [2, 32], strides = [1, 1]} : vector<2x128xf32> to vector<2x32xf32>
    %388 = arith.negf %387 : vector<2x32xf32>
    %389 = math.exp %388 : vector<2x32xf32>
    %cst_114 = arith.constant 1.000000e+00 : f32
    %390 = vector.broadcast %cst_114 : f32 to vector<2x32xf32>
    %391 = arith.addf %390, %389 : vector<2x32xf32>
    %392 = arith.divf %390, %391 : vector<2x32xf32>
    %393 = arith.mulf %384, %315 : vector<2x32xf32>
    %394 = arith.mulf %378, %386 : vector<2x32xf32>
    %395 = arith.addf %393, %394 : vector<2x32xf32>
    %396 = math.tanh %395 : vector<2x32xf32>
    %397 = arith.mulf %392, %396 : vector<2x32xf32>
    %398 = arith.truncf %397 : vector<2x32xf32> to vector<2x32xbf16>
    %399 = vector.broadcast %367 : i32 to vector<2x1xi32>
    %400 = arith.cmpi slt, %399, %3 : vector<2x1xi32>
    %401 = vector.shape_cast %400 : vector<2x1xi1> to vector<2x1xi1>
    %402 = vector.broadcast %401 : vector<2x1xi1> to vector<2x32xi1>
    %403 = arith.select %402, %398, %314 : vector<2x32xi1>, vector<2x32xbf16>
    %404 = arith.select %402, %395, %315 : vector<2x32xi1>, vector<2x32xf32>
    %cst_115 = arith.constant 0.000000e+00 : bf16
    %405 = vector.broadcast %cst_115 : bf16 to vector<2x32xbf16>
    %406 = arith.select %402, %398, %405 : vector<2x32xi1>, vector<2x32xbf16>
    %c4_116 = arith.constant 4 : index
    %c0_117 = arith.constant 0 : index
    %c0_118 = arith.constant 0 : index
    %407 = vector.load %arg7[%c4_116, %c0_117, %c0_118] : memref<8x2x32xbf16, #tpu.memory_space<vmem>>, vector<1x2x32xbf16>
    %408 = vector.shape_cast %407 : vector<1x2x32xbf16> to vector<2x32xbf16>
    %409 = vector.shape_cast %406 : vector<2x32xbf16> to vector<1x2x32xbf16>
    tpu.vector_store %arg7[%c4_116, %c0_117, %c0_118], %409 {strides = array<i32>} : memref<8x2x32xbf16, #tpu.memory_space<vmem>>, vector<1x2x32xbf16>,
    %c0_i32_119 = arith.constant 0 : i32
    %410 = arith.subi %c0_i32_119, %arg1 : i32
    %c8_i32_120 = arith.constant 8 : i32
    %411 = arith.muli %410, %c8_i32_120 : i32
    %c3_i32_121 = arith.constant 3 : i32
    %412 = arith.addi %411, %c3_i32_121 : i32
    %c3_122 = arith.constant 3 : index
    %c0_123 = arith.constant 0 : index
    %c0_124 = arith.constant 0 : index
    %413 = vector.load %arg4[%c3_122, %c0_123, %c0_124] : memref<8x2x128xbf16, #tpu.memory_space<vmem>>, vector<1x2x128xbf16>
    %414 = vector.shape_cast %413 : vector<1x2x128xbf16> to vector<2x128xbf16>
    %cst_125 = arith.constant dense<0.000000e+00> : vector<2x128xf32>
    %415 = tpu.matmul %359, %5, %cst_125 {dimension_numbers = #tpu.dot_dimension_numbers<[1], [0], [0], [1], [0, 0, 1, 1], [], []>} : vector<2x32xbf16>, vector<32x128xbf16>, vector<2x128xf32> -> vector<2x128xf32>
    %416 = arith.extf %414 : vector<2x128xbf16> to vector<2x128xf32>
    %417 = arith.addf %415, %416 : vector<2x128xf32>
    %418 = vector.extract_strided_slice %417 {offsets = [0, 0], sizes = [2, 32], strides = [1, 1]} : vector<2x128xf32> to vector<2x32xf32>
    %419 = arith.negf %418 : vector<2x32xf32>
    %420 = math.exp %419 : vector<2x32xf32>
    %cst_126 = arith.constant 1.000000e+00 : f32
    %421 = vector.broadcast %cst_126 : f32 to vector<2x32xf32>
    %422 = arith.addf %421, %420 : vector<2x32xf32>
    %423 = arith.divf %421, %422 : vector<2x32xf32>
    %424 = vector.extract_strided_slice %417 {offsets = [0, 32], sizes = [2, 32], strides = [1, 1]} : vector<2x128xf32> to vector<2x32xf32>
    %425 = arith.negf %424 : vector<2x32xf32>
    %426 = math.exp %425 : vector<2x32xf32>
    %cst_127 = arith.constant 1.000000e+00 : f32
    %427 = vector.broadcast %cst_127 : f32 to vector<2x32xf32>
    %428 = arith.addf %427, %426 : vector<2x32xf32>
    %429 = arith.divf %427, %428 : vector<2x32xf32>
    %430 = vector.extract_strided_slice %417 {offsets = [0, 64], sizes = [2, 32], strides = [1, 1]} : vector<2x128xf32> to vector<2x32xf32>
    %431 = math.tanh %430 : vector<2x32xf32>
    %432 = vector.extract_strided_slice %417 {offsets = [0, 96], sizes = [2, 32], strides = [1, 1]} : vector<2x128xf32> to vector<2x32xf32>
    %433 = arith.negf %432 : vector<2x32xf32>
    %434 = math.exp %433 : vector<2x32xf32>
    %cst_128 = arith.constant 1.000000e+00 : f32
    %435 = vector.broadcast %cst_128 : f32 to vector<2x32xf32>
    %436 = arith.addf %435, %434 : vector<2x32xf32>
    %437 = arith.divf %435, %436 : vector<2x32xf32>
    %438 = arith.mulf %429, %360 : vector<2x32xf32>
    %439 = arith.mulf %423, %431 : vector<2x32xf32>
    %440 = arith.addf %438, %439 : vector<2x32xf32>
    %441 = math.tanh %440 : vector<2x32xf32>
    %442 = arith.mulf %437, %441 : vector<2x32xf32>
    %443 = arith.truncf %442 : vector<2x32xf32> to vector<2x32xbf16>
    %444 = vector.broadcast %412 : i32 to vector<2x1xi32>
    %445 = arith.cmpi slt, %444, %3 : vector<2x1xi32>
    %446 = vector.shape_cast %445 : vector<2x1xi1> to vector<2x1xi1>
    %447 = vector.broadcast %446 : vector<2x1xi1> to vector<2x32xi1>
    %448 = arith.select %447, %443, %359 : vector<2x32xi1>, vector<2x32xbf16>
    %449 = arith.select %447, %440, %360 : vector<2x32xi1>, vector<2x32xf32>
    %cst_129 = arith.constant 0.000000e+00 : bf16
    %450 = vector.broadcast %cst_129 : bf16 to vector<2x32xbf16>
    %451 = arith.select %447, %443, %450 : vector<2x32xi1>, vector<2x32xbf16>
    %c3_130 = arith.constant 3 : index
    %c0_131 = arith.constant 0 : index
    %c0_132 = arith.constant 0 : index
    %452 = vector.load %arg8[%c3_130, %c0_131, %c0_132] : memref<8x2x32xbf16, #tpu.memory_space<vmem>>, vector<1x2x32xbf16>
    %453 = vector.shape_cast %452 : vector<1x2x32xbf16> to vector<2x32xbf16>
    %454 = vector.shape_cast %451 : vector<2x32xbf16> to vector<1x2x32xbf16>
    tpu.vector_store %arg8[%c3_130, %c0_131, %c0_132], %454 {strides = array<i32>} : memref<8x2x32xbf16, #tpu.memory_space<vmem>>, vector<1x2x32xbf16>,
    %c8_i32_133 = arith.constant 8 : i32
    %455 = arith.muli %arg1, %c8_i32_133 : i32
    %c5_i32_134 = arith.constant 5 : i32
    %456 = arith.addi %455, %c5_i32_134 : i32
    %c5_135 = arith.constant 5 : index
    %c0_136 = arith.constant 0 : index
    %c0_137 = arith.constant 0 : index
    %457 = vector.load %arg3[%c5_135, %c0_136, %c0_137] : memref<8x2x128xbf16, #tpu.memory_space<vmem>>, vector<1x2x128xbf16>
    %458 = vector.shape_cast %457 : vector<1x2x128xbf16> to vector<2x128xbf16>
    %cst_138 = arith.constant dense<0.000000e+00> : vector<2x128xf32>
    %459 = tpu.matmul %403, %4, %cst_138 {dimension_numbers = #tpu.dot_dimension_numbers<[1], [0], [0], [1], [0, 0, 1, 1], [], []>} : vector<2x32xbf16>, vector<32x128xbf16>, vector<2x128xf32> -> vector<2x128xf32>
    %460 = arith.extf %458 : vector<2x128xbf16> to vector<2x128xf32>
    %461 = arith.addf %459, %460 : vector<2x128xf32>
    %462 = vector.extract_strided_slice %461 {offsets = [0, 0], sizes = [2, 32], strides = [1, 1]} : vector<2x128xf32> to vector<2x32xf32>
    %463 = arith.negf %462 : vector<2x32xf32>
    %464 = math.exp %463 : vector<2x32xf32>
    %cst_139 = arith.constant 1.000000e+00 : f32
    %465 = vector.broadcast %cst_139 : f32 to vector<2x32xf32>
    %466 = arith.addf %465, %464 : vector<2x32xf32>
    %467 = arith.divf %465, %466 : vector<2x32xf32>
    %468 = vector.extract_strided_slice %461 {offsets = [0, 32], sizes = [2, 32], strides = [1, 1]} : vector<2x128xf32> to vector<2x32xf32>
    %469 = arith.negf %468 : vector<2x32xf32>
    %470 = math.exp %469 : vector<2x32xf32>
    %cst_140 = arith.constant 1.000000e+00 : f32
    %471 = vector.broadcast %cst_140 : f32 to vector<2x32xf32>
    %472 = arith.addf %471, %470 : vector<2x32xf32>
    %473 = arith.divf %471, %472 : vector<2x32xf32>
    %474 = vector.extract_strided_slice %461 {offsets = [0, 64], sizes = [2, 32], strides = [1, 1]} : vector<2x128xf32> to vector<2x32xf32>
    %475 = math.tanh %474 : vector<2x32xf32>
    %476 = vector.extract_strided_slice %461 {offsets = [0, 96], sizes = [2, 32], strides = [1, 1]} : vector<2x128xf32> to vector<2x32xf32>
    %477 = arith.negf %476 : vector<2x32xf32>
    %478 = math.exp %477 : vector<2x32xf32>
    %cst_141 = arith.constant 1.000000e+00 : f32
    %479 = vector.broadcast %cst_141 : f32 to vector<2x32xf32>
    %480 = arith.addf %479, %478 : vector<2x32xf32>
    %481 = arith.divf %479, %480 : vector<2x32xf32>
    %482 = arith.mulf %473, %404 : vector<2x32xf32>
    %483 = arith.mulf %467, %475 : vector<2x32xf32>
    %484 = arith.addf %482, %483 : vector<2x32xf32>
    %485 = math.tanh %484 : vector<2x32xf32>
    %486 = arith.mulf %481, %485 : vector<2x32xf32>
    %487 = arith.truncf %486 : vector<2x32xf32> to vector<2x32xbf16>
    %488 = vector.broadcast %456 : i32 to vector<2x1xi32>
    %489 = arith.cmpi slt, %488, %3 : vector<2x1xi32>
    %490 = vector.shape_cast %489 : vector<2x1xi1> to vector<2x1xi1>
    %491 = vector.broadcast %490 : vector<2x1xi1> to vector<2x32xi1>
    %492 = arith.select %491, %487, %403 : vector<2x32xi1>, vector<2x32xbf16>
    %493 = arith.select %491, %484, %404 : vector<2x32xi1>, vector<2x32xf32>
    %cst_142 = arith.constant 0.000000e+00 : bf16
    %494 = vector.broadcast %cst_142 : bf16 to vector<2x32xbf16>
    %495 = arith.select %491, %487, %494 : vector<2x32xi1>, vector<2x32xbf16>
    %c5_143 = arith.constant 5 : index
    %c0_144 = arith.constant 0 : index
    %c0_145 = arith.constant 0 : index
    %496 = vector.load %arg7[%c5_143, %c0_144, %c0_145] : memref<8x2x32xbf16, #tpu.memory_space<vmem>>, vector<1x2x32xbf16>
    %497 = vector.shape_cast %496 : vector<1x2x32xbf16> to vector<2x32xbf16>
    %498 = vector.shape_cast %495 : vector<2x32xbf16> to vector<1x2x32xbf16>
    tpu.vector_store %arg7[%c5_143, %c0_144, %c0_145], %498 {strides = array<i32>} : memref<8x2x32xbf16, #tpu.memory_space<vmem>>, vector<1x2x32xbf16>,
    %c0_i32_146 = arith.constant 0 : i32
    %499 = arith.subi %c0_i32_146, %arg1 : i32
    %c8_i32_147 = arith.constant 8 : i32
    %500 = arith.muli %499, %c8_i32_147 : i32
    %c2_i32_148 = arith.constant 2 : i32
    %501 = arith.addi %500, %c2_i32_148 : i32
    %c2_149 = arith.constant 2 : index
    %c0_150 = arith.constant 0 : index
    %c0_151 = arith.constant 0 : index
    %502 = vector.load %arg4[%c2_149, %c0_150, %c0_151] : memref<8x2x128xbf16, #tpu.memory_space<vmem>>, vector<1x2x128xbf16>
    %503 = vector.shape_cast %502 : vector<1x2x128xbf16> to vector<2x128xbf16>
    %cst_152 = arith.constant dense<0.000000e+00> : vector<2x128xf32>
    %504 = tpu.matmul %448, %5, %cst_152 {dimension_numbers = #tpu.dot_dimension_numbers<[1], [0], [0], [1], [0, 0, 1, 1], [], []>} : vector<2x32xbf16>, vector<32x128xbf16>, vector<2x128xf32> -> vector<2x128xf32>
    %505 = arith.extf %503 : vector<2x128xbf16> to vector<2x128xf32>
    %506 = arith.addf %504, %505 : vector<2x128xf32>
    %507 = vector.extract_strided_slice %506 {offsets = [0, 0], sizes = [2, 32], strides = [1, 1]} : vector<2x128xf32> to vector<2x32xf32>
    %508 = arith.negf %507 : vector<2x32xf32>
    %509 = math.exp %508 : vector<2x32xf32>
    %cst_153 = arith.constant 1.000000e+00 : f32
    %510 = vector.broadcast %cst_153 : f32 to vector<2x32xf32>
    %511 = arith.addf %510, %509 : vector<2x32xf32>
    %512 = arith.divf %510, %511 : vector<2x32xf32>
    %513 = vector.extract_strided_slice %506 {offsets = [0, 32], sizes = [2, 32], strides = [1, 1]} : vector<2x128xf32> to vector<2x32xf32>
    %514 = arith.negf %513 : vector<2x32xf32>
    %515 = math.exp %514 : vector<2x32xf32>
    %cst_154 = arith.constant 1.000000e+00 : f32
    %516 = vector.broadcast %cst_154 : f32 to vector<2x32xf32>
    %517 = arith.addf %516, %515 : vector<2x32xf32>
    %518 = arith.divf %516, %517 : vector<2x32xf32>
    %519 = vector.extract_strided_slice %506 {offsets = [0, 64], sizes = [2, 32], strides = [1, 1]} : vector<2x128xf32> to vector<2x32xf32>
    %520 = math.tanh %519 : vector<2x32xf32>
    %521 = vector.extract_strided_slice %506 {offsets = [0, 96], sizes = [2, 32], strides = [1, 1]} : vector<2x128xf32> to vector<2x32xf32>
    %522 = arith.negf %521 : vector<2x32xf32>
    %523 = math.exp %522 : vector<2x32xf32>
    %cst_155 = arith.constant 1.000000e+00 : f32
    %524 = vector.broadcast %cst_155 : f32 to vector<2x32xf32>
    %525 = arith.addf %524, %523 : vector<2x32xf32>
    %526 = arith.divf %524, %525 : vector<2x32xf32>
    %527 = arith.mulf %518, %449 : vector<2x32xf32>
    %528 = arith.mulf %512, %520 : vector<2x32xf32>
    %529 = arith.addf %527, %528 : vector<2x32xf32>
    %530 = math.tanh %529 : vector<2x32xf32>
    %531 = arith.mulf %526, %530 : vector<2x32xf32>
    %532 = arith.truncf %531 : vector<2x32xf32> to vector<2x32xbf16>
    %533 = vector.broadcast %501 : i32 to vector<2x1xi32>
    %534 = arith.cmpi slt, %533, %3 : vector<2x1xi32>
    %535 = vector.shape_cast %534 : vector<2x1xi1> to vector<2x1xi1>
    %536 = vector.broadcast %535 : vector<2x1xi1> to vector<2x32xi1>
    %537 = arith.select %536, %532, %448 : vector<2x32xi1>, vector<2x32xbf16>
    %538 = arith.select %536, %529, %449 : vector<2x32xi1>, vector<2x32xf32>
    %cst_156 = arith.constant 0.000000e+00 : bf16
    %539 = vector.broadcast %cst_156 : bf16 to vector<2x32xbf16>
    %540 = arith.select %536, %532, %539 : vector<2x32xi1>, vector<2x32xbf16>
    %c2_157 = arith.constant 2 : index
    %c0_158 = arith.constant 0 : index
    %c0_159 = arith.constant 0 : index
    %541 = vector.load %arg8[%c2_157, %c0_158, %c0_159] : memref<8x2x32xbf16, #tpu.memory_space<vmem>>, vector<1x2x32xbf16>
    %542 = vector.shape_cast %541 : vector<1x2x32xbf16> to vector<2x32xbf16>
    %543 = vector.shape_cast %540 : vector<2x32xbf16> to vector<1x2x32xbf16>
    tpu.vector_store %arg8[%c2_157, %c0_158, %c0_159], %543 {strides = array<i32>} : memref<8x2x32xbf16, #tpu.memory_space<vmem>>, vector<1x2x32xbf16>,
    %c8_i32_160 = arith.constant 8 : i32
    %544 = arith.muli %arg1, %c8_i32_160 : i32
    %c6_i32_161 = arith.constant 6 : i32
    %545 = arith.addi %544, %c6_i32_161 : i32
    %c6_162 = arith.constant 6 : index
    %c0_163 = arith.constant 0 : index
    %c0_164 = arith.constant 0 : index
    %546 = vector.load %arg3[%c6_162, %c0_163, %c0_164] : memref<8x2x128xbf16, #tpu.memory_space<vmem>>, vector<1x2x128xbf16>
    %547 = vector.shape_cast %546 : vector<1x2x128xbf16> to vector<2x128xbf16>
    %cst_165 = arith.constant dense<0.000000e+00> : vector<2x128xf32>
    %548 = tpu.matmul %492, %4, %cst_165 {dimension_numbers = #tpu.dot_dimension_numbers<[1], [0], [0], [1], [0, 0, 1, 1], [], []>} : vector<2x32xbf16>, vector<32x128xbf16>, vector<2x128xf32> -> vector<2x128xf32>
    %549 = arith.extf %547 : vector<2x128xbf16> to vector<2x128xf32>
    %550 = arith.addf %548, %549 : vector<2x128xf32>
    %551 = vector.extract_strided_slice %550 {offsets = [0, 0], sizes = [2, 32], strides = [1, 1]} : vector<2x128xf32> to vector<2x32xf32>
    %552 = arith.negf %551 : vector<2x32xf32>
    %553 = math.exp %552 : vector<2x32xf32>
    %cst_166 = arith.constant 1.000000e+00 : f32
    %554 = vector.broadcast %cst_166 : f32 to vector<2x32xf32>
    %555 = arith.addf %554, %553 : vector<2x32xf32>
    %556 = arith.divf %554, %555 : vector<2x32xf32>
    %557 = vector.extract_strided_slice %550 {offsets = [0, 32], sizes = [2, 32], strides = [1, 1]} : vector<2x128xf32> to vector<2x32xf32>
    %558 = arith.negf %557 : vector<2x32xf32>
    %559 = math.exp %558 : vector<2x32xf32>
    %cst_167 = arith.constant 1.000000e+00 : f32
    %560 = vector.broadcast %cst_167 : f32 to vector<2x32xf32>
    %561 = arith.addf %560, %559 : vector<2x32xf32>
    %562 = arith.divf %560, %561 : vector<2x32xf32>
    %563 = vector.extract_strided_slice %550 {offsets = [0, 64], sizes = [2, 32], strides = [1, 1]} : vector<2x128xf32> to vector<2x32xf32>
    %564 = math.tanh %563 : vector<2x32xf32>
    %565 = vector.extract_strided_slice %550 {offsets = [0, 96], sizes = [2, 32], strides = [1, 1]} : vector<2x128xf32> to vector<2x32xf32>
    %566 = arith.negf %565 : vector<2x32xf32>
    %567 = math.exp %566 : vector<2x32xf32>
    %cst_168 = arith.constant 1.000000e+00 : f32
    %568 = vector.broadcast %cst_168 : f32 to vector<2x32xf32>
    %569 = arith.addf %568, %567 : vector<2x32xf32>
    %570 = arith.divf %568, %569 : vector<2x32xf32>
    %571 = arith.mulf %562, %493 : vector<2x32xf32>
    %572 = arith.mulf %556, %564 : vector<2x32xf32>
    %573 = arith.addf %571, %572 : vector<2x32xf32>
    %574 = math.tanh %573 : vector<2x32xf32>
    %575 = arith.mulf %570, %574 : vector<2x32xf32>
    %576 = arith.truncf %575 : vector<2x32xf32> to vector<2x32xbf16>
    %577 = vector.broadcast %545 : i32 to vector<2x1xi32>
    %578 = arith.cmpi slt, %577, %3 : vector<2x1xi32>
    %579 = vector.shape_cast %578 : vector<2x1xi1> to vector<2x1xi1>
    %580 = vector.broadcast %579 : vector<2x1xi1> to vector<2x32xi1>
    %581 = arith.select %580, %576, %492 : vector<2x32xi1>, vector<2x32xbf16>
    %582 = arith.select %580, %573, %493 : vector<2x32xi1>, vector<2x32xf32>
    %cst_169 = arith.constant 0.000000e+00 : bf16
    %583 = vector.broadcast %cst_169 : bf16 to vector<2x32xbf16>
    %584 = arith.select %580, %576, %583 : vector<2x32xi1>, vector<2x32xbf16>
    %c6_170 = arith.constant 6 : index
    %c0_171 = arith.constant 0 : index
    %c0_172 = arith.constant 0 : index
    %585 = vector.load %arg7[%c6_170, %c0_171, %c0_172] : memref<8x2x32xbf16, #tpu.memory_space<vmem>>, vector<1x2x32xbf16>
    %586 = vector.shape_cast %585 : vector<1x2x32xbf16> to vector<2x32xbf16>
    %587 = vector.shape_cast %584 : vector<2x32xbf16> to vector<1x2x32xbf16>
    tpu.vector_store %arg7[%c6_170, %c0_171, %c0_172], %587 {strides = array<i32>} : memref<8x2x32xbf16, #tpu.memory_space<vmem>>, vector<1x2x32xbf16>,
    %c0_i32_173 = arith.constant 0 : i32
    %588 = arith.subi %c0_i32_173, %arg1 : i32
    %c8_i32_174 = arith.constant 8 : i32
    %589 = arith.muli %588, %c8_i32_174 : i32
    %c1_i32_175 = arith.constant 1 : i32
    %590 = arith.addi %589, %c1_i32_175 : i32
    %c1_176 = arith.constant 1 : index
    %c0_177 = arith.constant 0 : index
    %c0_178 = arith.constant 0 : index
    %591 = vector.load %arg4[%c1_176, %c0_177, %c0_178] : memref<8x2x128xbf16, #tpu.memory_space<vmem>>, vector<1x2x128xbf16>
    %592 = vector.shape_cast %591 : vector<1x2x128xbf16> to vector<2x128xbf16>
    %cst_179 = arith.constant dense<0.000000e+00> : vector<2x128xf32>
    %593 = tpu.matmul %537, %5, %cst_179 {dimension_numbers = #tpu.dot_dimension_numbers<[1], [0], [0], [1], [0, 0, 1, 1], [], []>} : vector<2x32xbf16>, vector<32x128xbf16>, vector<2x128xf32> -> vector<2x128xf32>
    %594 = arith.extf %592 : vector<2x128xbf16> to vector<2x128xf32>
    %595 = arith.addf %593, %594 : vector<2x128xf32>
    %596 = vector.extract_strided_slice %595 {offsets = [0, 0], sizes = [2, 32], strides = [1, 1]} : vector<2x128xf32> to vector<2x32xf32>
    %597 = arith.negf %596 : vector<2x32xf32>
    %598 = math.exp %597 : vector<2x32xf32>
    %cst_180 = arith.constant 1.000000e+00 : f32
    %599 = vector.broadcast %cst_180 : f32 to vector<2x32xf32>
    %600 = arith.addf %599, %598 : vector<2x32xf32>
    %601 = arith.divf %599, %600 : vector<2x32xf32>
    %602 = vector.extract_strided_slice %595 {offsets = [0, 32], sizes = [2, 32], strides = [1, 1]} : vector<2x128xf32> to vector<2x32xf32>
    %603 = arith.negf %602 : vector<2x32xf32>
    %604 = math.exp %603 : vector<2x32xf32>
    %cst_181 = arith.constant 1.000000e+00 : f32
    %605 = vector.broadcast %cst_181 : f32 to vector<2x32xf32>
    %606 = arith.addf %605, %604 : vector<2x32xf32>
    %607 = arith.divf %605, %606 : vector<2x32xf32>
    %608 = vector.extract_strided_slice %595 {offsets = [0, 64], sizes = [2, 32], strides = [1, 1]} : vector<2x128xf32> to vector<2x32xf32>
    %609 = math.tanh %608 : vector<2x32xf32>
    %610 = vector.extract_strided_slice %595 {offsets = [0, 96], sizes = [2, 32], strides = [1, 1]} : vector<2x128xf32> to vector<2x32xf32>
    %611 = arith.negf %610 : vector<2x32xf32>
    %612 = math.exp %611 : vector<2x32xf32>
    %cst_182 = arith.constant 1.000000e+00 : f32
    %613 = vector.broadcast %cst_182 : f32 to vector<2x32xf32>
    %614 = arith.addf %613, %612 : vector<2x32xf32>
    %615 = arith.divf %613, %614 : vector<2x32xf32>
    %616 = arith.mulf %607, %538 : vector<2x32xf32>
    %617 = arith.mulf %601, %609 : vector<2x32xf32>
    %618 = arith.addf %616, %617 : vector<2x32xf32>
    %619 = math.tanh %618 : vector<2x32xf32>
    %620 = arith.mulf %615, %619 : vector<2x32xf32>
    %621 = arith.truncf %620 : vector<2x32xf32> to vector<2x32xbf16>
    %622 = vector.broadcast %590 : i32 to vector<2x1xi32>
    %623 = arith.cmpi slt, %622, %3 : vector<2x1xi32>
    %624 = vector.shape_cast %623 : vector<2x1xi1> to vector<2x1xi1>
    %625 = vector.broadcast %624 : vector<2x1xi1> to vector<2x32xi1>
    %626 = arith.select %625, %621, %537 : vector<2x32xi1>, vector<2x32xbf16>
    %627 = arith.select %625, %618, %538 : vector<2x32xi1>, vector<2x32xf32>
    %cst_183 = arith.constant 0.000000e+00 : bf16
    %628 = vector.broadcast %cst_183 : bf16 to vector<2x32xbf16>
    %629 = arith.select %625, %621, %628 : vector<2x32xi1>, vector<2x32xbf16>
    %c1_184 = arith.constant 1 : index
    %c0_185 = arith.constant 0 : index
    %c0_186 = arith.constant 0 : index
    %630 = vector.load %arg8[%c1_184, %c0_185, %c0_186] : memref<8x2x32xbf16, #tpu.memory_space<vmem>>, vector<1x2x32xbf16>
    %631 = vector.shape_cast %630 : vector<1x2x32xbf16> to vector<2x32xbf16>
    %632 = vector.shape_cast %629 : vector<2x32xbf16> to vector<1x2x32xbf16>
    tpu.vector_store %arg8[%c1_184, %c0_185, %c0_186], %632 {strides = array<i32>} : memref<8x2x32xbf16, #tpu.memory_space<vmem>>, vector<1x2x32xbf16>,
    %c8_i32_187 = arith.constant 8 : i32
    %633 = arith.muli %arg1, %c8_i32_187 : i32
    %c7_i32_188 = arith.constant 7 : i32
    %634 = arith.addi %633, %c7_i32_188 : i32
    %c7_189 = arith.constant 7 : index
    %c0_190 = arith.constant 0 : index
    %c0_191 = arith.constant 0 : index
    %635 = vector.load %arg3[%c7_189, %c0_190, %c0_191] : memref<8x2x128xbf16, #tpu.memory_space<vmem>>, vector<1x2x128xbf16>
    %636 = vector.shape_cast %635 : vector<1x2x128xbf16> to vector<2x128xbf16>
    %cst_192 = arith.constant dense<0.000000e+00> : vector<2x128xf32>
    %637 = tpu.matmul %581, %4, %cst_192 {dimension_numbers = #tpu.dot_dimension_numbers<[1], [0], [0], [1], [0, 0, 1, 1], [], []>} : vector<2x32xbf16>, vector<32x128xbf16>, vector<2x128xf32> -> vector<2x128xf32>
    %638 = arith.extf %636 : vector<2x128xbf16> to vector<2x128xf32>
    %639 = arith.addf %637, %638 : vector<2x128xf32>
    %640 = vector.extract_strided_slice %639 {offsets = [0, 0], sizes = [2, 32], strides = [1, 1]} : vector<2x128xf32> to vector<2x32xf32>
    %641 = arith.negf %640 : vector<2x32xf32>
    %642 = math.exp %641 : vector<2x32xf32>
    %cst_193 = arith.constant 1.000000e+00 : f32
    %643 = vector.broadcast %cst_193 : f32 to vector<2x32xf32>
    %644 = arith.addf %643, %642 : vector<2x32xf32>
    %645 = arith.divf %643, %644 : vector<2x32xf32>
    %646 = vector.extract_strided_slice %639 {offsets = [0, 32], sizes = [2, 32], strides = [1, 1]} : vector<2x128xf32> to vector<2x32xf32>
    %647 = arith.negf %646 : vector<2x32xf32>
    %648 = math.exp %647 : vector<2x32xf32>
    %cst_194 = arith.constant 1.000000e+00 : f32
    %649 = vector.broadcast %cst_194 : f32 to vector<2x32xf32>
    %650 = arith.addf %649, %648 : vector<2x32xf32>
    %651 = arith.divf %649, %650 : vector<2x32xf32>
    %652 = vector.extract_strided_slice %639 {offsets = [0, 64], sizes = [2, 32], strides = [1, 1]} : vector<2x128xf32> to vector<2x32xf32>
    %653 = math.tanh %652 : vector<2x32xf32>
    %654 = vector.extract_strided_slice %639 {offsets = [0, 96], sizes = [2, 32], strides = [1, 1]} : vector<2x128xf32> to vector<2x32xf32>
    %655 = arith.negf %654 : vector<2x32xf32>
    %656 = math.exp %655 : vector<2x32xf32>
    %cst_195 = arith.constant 1.000000e+00 : f32
    %657 = vector.broadcast %cst_195 : f32 to vector<2x32xf32>
    %658 = arith.addf %657, %656 : vector<2x32xf32>
    %659 = arith.divf %657, %658 : vector<2x32xf32>
    %660 = arith.mulf %651, %582 : vector<2x32xf32>
    %661 = arith.mulf %645, %653 : vector<2x32xf32>
    %662 = arith.addf %660, %661 : vector<2x32xf32>
    %663 = math.tanh %662 : vector<2x32xf32>
    %664 = arith.mulf %659, %663 : vector<2x32xf32>
    %665 = arith.truncf %664 : vector<2x32xf32> to vector<2x32xbf16>
    %666 = vector.broadcast %634 : i32 to vector<2x1xi32>
    %667 = arith.cmpi slt, %666, %3 : vector<2x1xi32>
    %668 = vector.shape_cast %667 : vector<2x1xi1> to vector<2x1xi1>
    %669 = vector.broadcast %668 : vector<2x1xi1> to vector<2x32xi1>
    %670 = arith.select %669, %665, %581 : vector<2x32xi1>, vector<2x32xbf16>
    %671 = arith.select %669, %662, %582 : vector<2x32xi1>, vector<2x32xf32>
    %cst_196 = arith.constant 0.000000e+00 : bf16
    %672 = vector.broadcast %cst_196 : bf16 to vector<2x32xbf16>
    %673 = arith.select %669, %665, %672 : vector<2x32xi1>, vector<2x32xbf16>
    %c7_197 = arith.constant 7 : index
    %c0_198 = arith.constant 0 : index
    %c0_199 = arith.constant 0 : index
    %674 = vector.load %arg7[%c7_197, %c0_198, %c0_199] : memref<8x2x32xbf16, #tpu.memory_space<vmem>>, vector<1x2x32xbf16>
    %675 = vector.shape_cast %674 : vector<1x2x32xbf16> to vector<2x32xbf16>
    %676 = vector.shape_cast %673 : vector<2x32xbf16> to vector<1x2x32xbf16>
    tpu.vector_store %arg7[%c7_197, %c0_198, %c0_199], %676 {strides = array<i32>} : memref<8x2x32xbf16, #tpu.memory_space<vmem>>, vector<1x2x32xbf16>,
    %c0_i32_200 = arith.constant 0 : i32
    %677 = arith.subi %c0_i32_200, %arg1 : i32
    %c8_i32_201 = arith.constant 8 : i32
    %678 = arith.muli %677, %c8_i32_201 : i32
    %c0_i32_202 = arith.constant 0 : i32
    %679 = arith.addi %678, %c0_i32_202 : i32
    %c0_203 = arith.constant 0 : index
    %c0_204 = arith.constant 0 : index
    %c0_205 = arith.constant 0 : index
    %680 = vector.load %arg4[%c0_203, %c0_204, %c0_205] : memref<8x2x128xbf16, #tpu.memory_space<vmem>>, vector<1x2x128xbf16>
    %681 = vector.shape_cast %680 : vector<1x2x128xbf16> to vector<2x128xbf16>
    %cst_206 = arith.constant dense<0.000000e+00> : vector<2x128xf32>
    %682 = tpu.matmul %626, %5, %cst_206 {dimension_numbers = #tpu.dot_dimension_numbers<[1], [0], [0], [1], [0, 0, 1, 1], [], []>} : vector<2x32xbf16>, vector<32x128xbf16>, vector<2x128xf32> -> vector<2x128xf32>
    %683 = arith.extf %681 : vector<2x128xbf16> to vector<2x128xf32>
    %684 = arith.addf %682, %683 : vector<2x128xf32>
    %685 = vector.extract_strided_slice %684 {offsets = [0, 0], sizes = [2, 32], strides = [1, 1]} : vector<2x128xf32> to vector<2x32xf32>
    %686 = arith.negf %685 : vector<2x32xf32>
    %687 = math.exp %686 : vector<2x32xf32>
    %cst_207 = arith.constant 1.000000e+00 : f32
    %688 = vector.broadcast %cst_207 : f32 to vector<2x32xf32>
    %689 = arith.addf %688, %687 : vector<2x32xf32>
    %690 = arith.divf %688, %689 : vector<2x32xf32>
    %691 = vector.extract_strided_slice %684 {offsets = [0, 32], sizes = [2, 32], strides = [1, 1]} : vector<2x128xf32> to vector<2x32xf32>
    %692 = arith.negf %691 : vector<2x32xf32>
    %693 = math.exp %692 : vector<2x32xf32>
    %cst_208 = arith.constant 1.000000e+00 : f32
    %694 = vector.broadcast %cst_208 : f32 to vector<2x32xf32>
    %695 = arith.addf %694, %693 : vector<2x32xf32>
    %696 = arith.divf %694, %695 : vector<2x32xf32>
    %697 = vector.extract_strided_slice %684 {offsets = [0, 64], sizes = [2, 32], strides = [1, 1]} : vector<2x128xf32> to vector<2x32xf32>
    %698 = math.tanh %697 : vector<2x32xf32>
    %699 = vector.extract_strided_slice %684 {offsets = [0, 96], sizes = [2, 32], strides = [1, 1]} : vector<2x128xf32> to vector<2x32xf32>
    %700 = arith.negf %699 : vector<2x32xf32>
    %701 = math.exp %700 : vector<2x32xf32>
    %cst_209 = arith.constant 1.000000e+00 : f32
    %702 = vector.broadcast %cst_209 : f32 to vector<2x32xf32>
    %703 = arith.addf %702, %701 : vector<2x32xf32>
    %704 = arith.divf %702, %703 : vector<2x32xf32>
    %705 = arith.mulf %696, %627 : vector<2x32xf32>
    %706 = arith.mulf %690, %698 : vector<2x32xf32>
    %707 = arith.addf %705, %706 : vector<2x32xf32>
    %708 = math.tanh %707 : vector<2x32xf32>
    %709 = arith.mulf %704, %708 : vector<2x32xf32>
    %710 = arith.truncf %709 : vector<2x32xf32> to vector<2x32xbf16>
    %711 = vector.broadcast %679 : i32 to vector<2x1xi32>
    %712 = arith.cmpi slt, %711, %3 : vector<2x1xi32>
    %713 = vector.shape_cast %712 : vector<2x1xi1> to vector<2x1xi1>
    %714 = vector.broadcast %713 : vector<2x1xi1> to vector<2x32xi1>
    %715 = arith.select %714, %710, %626 : vector<2x32xi1>, vector<2x32xbf16>
    %716 = arith.select %714, %707, %627 : vector<2x32xi1>, vector<2x32xf32>
    %cst_210 = arith.constant 0.000000e+00 : bf16
    %717 = vector.broadcast %cst_210 : bf16 to vector<2x32xbf16>
    %718 = arith.select %714, %710, %717 : vector<2x32xi1>, vector<2x32xbf16>
    %c0_211 = arith.constant 0 : index
    %c0_212 = arith.constant 0 : index
    %c0_213 = arith.constant 0 : index
    %719 = vector.load %arg8[%c0_211, %c0_212, %c0_213] : memref<8x2x32xbf16, #tpu.memory_space<vmem>>, vector<1x2x32xbf16>
    %720 = vector.shape_cast %719 : vector<1x2x32xbf16> to vector<2x32xbf16>
    %721 = vector.shape_cast %718 : vector<2x32xbf16> to vector<1x2x32xbf16>
    tpu.vector_store %arg8[%c0_211, %c0_212, %c0_213], %721 {strides = array<i32>} : memref<8x2x32xbf16, #tpu.memory_space<vmem>>, vector<1x2x32xbf16>,
    %c0_214 = arith.constant 0 : index
    %c0_215 = arith.constant 0 : index
    %722 = vector.load %arg11[%c0_214, %c0_215] : memref<2x32xbf16, #tpu.memory_space<vmem>>, vector<2x32xbf16>
    tpu.vector_store %arg11[%c0_214, %c0_215], %670 {strides = array<i32>} : memref<2x32xbf16, #tpu.memory_space<vmem>>, vector<2x32xbf16>,
    %c0_216 = arith.constant 0 : index
    %c0_217 = arith.constant 0 : index
    %723 = vector.load %arg12[%c0_216, %c0_217] : memref<2x32xf32, #tpu.memory_space<vmem>>, vector<2x32xf32>
    tpu.vector_store %arg12[%c0_216, %c0_217], %671 {strides = array<i32>} : memref<2x32xf32, #tpu.memory_space<vmem>>, vector<2x32xf32>,
    %c0_218 = arith.constant 0 : index
    %c0_219 = arith.constant 0 : index
    %724 = vector.load %arg13[%c0_218, %c0_219] : memref<2x32xbf16, #tpu.memory_space<vmem>>, vector<2x32xbf16>
    tpu.vector_store %arg13[%c0_218, %c0_219], %715 {strides = array<i32>} : memref<2x32xbf16, #tpu.memory_space<vmem>>, vector<2x32xbf16>,
    %c0_220 = arith.constant 0 : index
    %c0_221 = arith.constant 0 : index
    %725 = vector.load %arg14[%c0_220, %c0_221] : memref<2x32xf32, #tpu.memory_space<vmem>>, vector<2x32xf32>
    tpu.vector_store %arg14[%c0_220, %c0_221], %716 {strides = array<i32>} : memref<2x32xf32, #tpu.memory_space<vmem>>, vector<2x32xf32>,
    %c0_i32_222 = arith.constant 0 : i32
    %726 = arith.cmpi eq, %arg1, %c0_i32_222 : i32
    %727 = arith.extui %726 : i1 to i32
    %c0_i32_223 = arith.constant 0 : i32
    %728 = arith.cmpi ne, %727, %c0_i32_223 : i32
    scf.if %728 {
      %729 = arith.extf %670 : vector<2x32xbf16> to vector<2x32xf32>
      %c0_224 = arith.constant 0 : index
      %c0_225 = arith.constant 0 : index
      %c0_226 = arith.constant 0 : index
      %730 = vector.load %arg9[%c0_224, %c0_225, %c0_226] : memref<2x2x32xf32, #tpu.memory_space<vmem>>, vector<1x2x32xf32>
      %731 = vector.shape_cast %730 : vector<1x2x32xf32> to vector<2x32xf32>
      %732 = vector.shape_cast %729 : vector<2x32xf32> to vector<1x2x32xf32>
      tpu.vector_store %arg9[%c0_224, %c0_225, %c0_226], %732 {strides = array<i32>} : memref<2x2x32xf32, #tpu.memory_space<vmem>>, vector<1x2x32xf32>,
      %733 = arith.extf %715 : vector<2x32xbf16> to vector<2x32xf32>
      %c1_227 = arith.constant 1 : index
      %c0_228 = arith.constant 0 : index
      %c0_229 = arith.constant 0 : index
      %734 = vector.load %arg9[%c1_227, %c0_228, %c0_229] : memref<2x2x32xf32, #tpu.memory_space<vmem>>, vector<1x2x32xf32>
      %735 = vector.shape_cast %734 : vector<1x2x32xf32> to vector<2x32xf32>
      %736 = vector.shape_cast %733 : vector<2x32xf32> to vector<1x2x32xf32>
      tpu.vector_store %arg9[%c1_227, %c0_228, %c0_229], %736 {strides = array<i32>} : memref<2x2x32xf32, #tpu.memory_space<vmem>>, vector<1x2x32xf32>,
      %c0_230 = arith.constant 0 : index
      %c0_231 = arith.constant 0 : index
      %c0_232 = arith.constant 0 : index
      %737 = vector.load %arg10[%c0_230, %c0_231, %c0_232] : memref<2x2x32xf32, #tpu.memory_space<vmem>>, vector<1x2x32xf32>
      %738 = vector.shape_cast %737 : vector<1x2x32xf32> to vector<2x32xf32>
      %739 = vector.shape_cast %671 : vector<2x32xf32> to vector<1x2x32xf32>
      tpu.vector_store %arg10[%c0_230, %c0_231, %c0_232], %739 {strides = array<i32>} : memref<2x2x32xf32, #tpu.memory_space<vmem>>, vector<1x2x32xf32>,
      %c1_233 = arith.constant 1 : index
      %c0_234 = arith.constant 0 : index
      %c0_235 = arith.constant 0 : index
      %740 = vector.load %arg10[%c1_233, %c0_234, %c0_235] : memref<2x2x32xf32, #tpu.memory_space<vmem>>, vector<1x2x32xf32>
      %741 = vector.shape_cast %740 : vector<1x2x32xf32> to vector<2x32xf32>
      %742 = vector.shape_cast %716 : vector<2x32xf32> to vector<1x2x32xf32>
      tpu.vector_store %arg10[%c1_233, %c0_234, %c0_235], %742 {strides = array<i32>} : memref<2x2x32xf32, #tpu.memory_space<vmem>>, vector<1x2x32xf32>,
    } else {
    }
    return
  }
  func.func @transform_0(%arg0: i32, %arg1: i32) -> (i32, i32) {
    %c0_i32 = arith.constant 0 : i32
    %c0_i32_0 = arith.constant 0 : i32
    return %arg0, %c0_i32 : i32, i32
  }
  func.func @transform_1(%arg0: i32, %arg1: i32) -> (i32, i32, i32) {
    %c0_i32 = arith.constant 0 : i32
    %c0_i32_0 = arith.constant 0 : i32
    return %arg1, %arg0, %c0_i32 : i32, i32, i32
  }
  func.func @transform_2(%arg0: i32, %arg1: i32) -> (i32, i32, i32) {
    %c0_i32 = arith.constant 0 : i32
    %0 = arith.subi %c0_i32, %arg1 : i32
    %c1_i32 = arith.constant 1 : i32
    %c0_i32_0 = arith.constant 0 : i32
    return %0, %arg0, %c1_i32 : i32, i32, i32
  }
  func.func @transform_5(%arg0: i32, %arg1: i32) -> (i32, i32, i32) {
    %c0_i32 = arith.constant 0 : i32
    %c0_i32_0 = arith.constant 0 : i32
    return %arg1, %arg0, %c0_i32 : i32, i32, i32
  }
  func.func @transform_6(%arg0: i32, %arg1: i32) -> (i32, i32, i32) {
    %c0_i32 = arith.constant 0 : i32
    %0 = arith.subi %c0_i32, %arg1 : i32
    %c0_i32_0 = arith.constant 0 : i32
    %c0_i32_1 = arith.constant 0 : i32
    return %0, %arg0, %c0_i32_0 : i32, i32, i32
  }
  func.func @transform_7(%arg0: i32, %arg1: i32) -> (i32, i32, i32) {
    %c0_i32 = arith.constant 0 : i32
    %c0_i32_0 = arith.constant 0 : i32
    %c0_i32_1 = arith.constant 0 : i32
    return %c0_i32, %arg0, %c0_i32_0 : i32, i32, i32
  }
  func.func @transform_8(%arg0: i32, %arg1: i32) -> (i32, i32, i32) {
    %c0_i32 = arith.constant 0 : i32
    %c0_i32_0 = arith.constant 0 : i32
    %c0_i32_1 = arith.constant 0 : i32
    return %c0_i32, %arg0, %c0_i32_0 : i32, i32, i32
  }
}

module attributes {stable_mosaic.version = 11 : i64} {
  func.func @_bilstm_rec_kernel(%arg0: i32, %arg1: i32, %arg2: memref<2x1xi32, #tpu.memory_space<vmem>>, %arg3: memref<8x2x128xbf16, #tpu.memory_space<vmem>>, %arg4: memref<8x2x128xbf16, #tpu.memory_space<vmem>>, %arg5: memref<32x128xbf16, #tpu.memory_space<any>>, %arg6: memref<32x128xbf16, #tpu.memory_space<any>>, %arg7: memref<8x2x32xf32, #tpu.memory_space<vmem>>, %arg8: memref<8x2x32xf32, #tpu.memory_space<vmem>>, %arg9: memref<2x2x32xf32, #tpu.memory_space<vmem>>, %arg10: memref<2x2x32xf32, #tpu.memory_space<vmem>>, %arg11: memref<2x32xbf16, #tpu.memory_space<vmem>>, %arg12: memref<2x32xf32, #tpu.memory_space<vmem>>, %arg13: memref<2x32xbf16, #tpu.memory_space<vmem>>, %arg14: memref<2x32xf32, #tpu.memory_space<vmem>>, %arg15: memref<32x128xbf16, #tpu.memory_space<vmem>>, %arg16: memref<32x128xbf16, #tpu.memory_space<vmem>>, %arg17: memref<2x!tpu.dma_semaphore, #tpu.memory_space<semaphore_mem>>) attributes {dimension_semantics = [#tpu.dimension_semantics<parallel>, #tpu.dimension_semantics<arbitrary>], iteration_bounds = array<i64: 1, 1>, scalar_prefetch = 0 : i64, scratch_operands = 7 : i64, tpu.core_type = #tpu.core_type<tc>, window_params = [{transform_indices = @transform_0, window_bounds = array<i64: 2, 1>}, {transform_indices = @transform_1, window_bounds = array<i64: 8, 2, 128>}, {transform_indices = @transform_2, window_bounds = array<i64: 8, 2, 128>}, {}, {}, {transform_indices = @transform_5, window_bounds = array<i64: 8, 2, 32>}, {transform_indices = @transform_6, window_bounds = array<i64: 8, 2, 32>}, {transform_indices = @transform_7, window_bounds = array<i64: 2, 2, 32>}, {transform_indices = @transform_8, window_bounds = array<i64: 2, 2, 32>}]} {
    %c0_i32 = arith.constant 0 : i32
    %0 = arith.cmpi eq, %arg1, %c0_i32 : i32
    %1 = arith.extui %0 : i1 to i32
    %c0_i32_0 = arith.constant 0 : i32
    %2 = arith.cmpi ne, %1, %c0_i32_0 : i32
    scf.if %2 {
      %cst_224 = arith.constant 0.000000e+00 : bf16
      %745 = vector.broadcast %cst_224 : bf16 to vector<2x32xbf16>
      %c0_225 = arith.constant 0 : index
      %c0_226 = arith.constant 0 : index
      %746 = vector.load %arg11[%c0_225, %c0_226] : memref<2x32xbf16, #tpu.memory_space<vmem>>, vector<2x32xbf16>
      tpu.vector_store %arg11[%c0_225, %c0_226], %745 {strides = array<i32>} : memref<2x32xbf16, #tpu.memory_space<vmem>>, vector<2x32xbf16>,
      %cst_227 = arith.constant 0.000000e+00 : f32
      %747 = vector.broadcast %cst_227 : f32 to vector<2x32xf32>
      %c0_228 = arith.constant 0 : index
      %c0_229 = arith.constant 0 : index
      %748 = vector.load %arg12[%c0_228, %c0_229] : memref<2x32xf32, #tpu.memory_space<vmem>>, vector<2x32xf32>
      tpu.vector_store %arg12[%c0_228, %c0_229], %747 {strides = array<i32>} : memref<2x32xf32, #tpu.memory_space<vmem>>, vector<2x32xf32>,
      %cst_230 = arith.constant 0.000000e+00 : bf16
      %749 = vector.broadcast %cst_230 : bf16 to vector<2x32xbf16>
      %c0_231 = arith.constant 0 : index
      %c0_232 = arith.constant 0 : index
      %750 = vector.load %arg13[%c0_231, %c0_232] : memref<2x32xbf16, #tpu.memory_space<vmem>>, vector<2x32xbf16>
      tpu.vector_store %arg13[%c0_231, %c0_232], %749 {strides = array<i32>} : memref<2x32xbf16, #tpu.memory_space<vmem>>, vector<2x32xbf16>,
      %cst_233 = arith.constant 0.000000e+00 : f32
      %751 = vector.broadcast %cst_233 : f32 to vector<2x32xf32>
      %c0_234 = arith.constant 0 : index
      %c0_235 = arith.constant 0 : index
      %752 = vector.load %arg14[%c0_234, %c0_235] : memref<2x32xf32, #tpu.memory_space<vmem>>, vector<2x32xf32>
      tpu.vector_store %arg14[%c0_234, %c0_235], %751 {strides = array<i32>} : memref<2x32xf32, #tpu.memory_space<vmem>>, vector<2x32xf32>,
      %c0_i32_236 = arith.constant 0 : i32
      %753 = tpu.memref_slice %arg17[%c0_i32_236] : memref<2x!tpu.dma_semaphore, #tpu.memory_space<semaphore_mem>> -> memref<1x!tpu.dma_semaphore, #tpu.memory_space<semaphore_mem>>
      %754 = tpu.memref_squeeze %753 : memref<1x!tpu.dma_semaphore, #tpu.memory_space<semaphore_mem>> -> memref<!tpu.dma_semaphore, #tpu.memory_space<semaphore_mem>>
      tpu.enqueue_dma source(%arg5 : memref<32x128xbf16, #tpu.memory_space<any>>) target(%arg15 : memref<32x128xbf16, #tpu.memory_space<vmem>>) target_semaphore(%754 : memref<!tpu.dma_semaphore, #tpu.memory_space<semaphore_mem>>)
      %c1_i32_237 = arith.constant 1 : i32
      %755 = tpu.memref_slice %arg17[%c1_i32_237] : memref<2x!tpu.dma_semaphore, #tpu.memory_space<semaphore_mem>> -> memref<1x!tpu.dma_semaphore, #tpu.memory_space<semaphore_mem>>
      %756 = tpu.memref_squeeze %755 : memref<1x!tpu.dma_semaphore, #tpu.memory_space<semaphore_mem>> -> memref<!tpu.dma_semaphore, #tpu.memory_space<semaphore_mem>>
      tpu.enqueue_dma source(%arg6 : memref<32x128xbf16, #tpu.memory_space<any>>) target(%arg16 : memref<32x128xbf16, #tpu.memory_space<vmem>>) target_semaphore(%756 : memref<!tpu.dma_semaphore, #tpu.memory_space<semaphore_mem>>)
      %c0_i32_238 = arith.constant 0 : i32
      %757 = tpu.memref_slice %arg17[%c0_i32_238] : memref<2x!tpu.dma_semaphore, #tpu.memory_space<semaphore_mem>> -> memref<1x!tpu.dma_semaphore, #tpu.memory_space<semaphore_mem>>
      %758 = tpu.memref_squeeze %757 : memref<1x!tpu.dma_semaphore, #tpu.memory_space<semaphore_mem>> -> memref<!tpu.dma_semaphore, #tpu.memory_space<semaphore_mem>>
      tpu.wait_dma2 semaphore(%758 : memref<!tpu.dma_semaphore, #tpu.memory_space<semaphore_mem>>) src(%arg5 : memref<32x128xbf16, #tpu.memory_space<any>>) dst(%arg15 : memref<32x128xbf16, #tpu.memory_space<vmem>>)
      %c1_i32_239 = arith.constant 1 : i32
      %759 = tpu.memref_slice %arg17[%c1_i32_239] : memref<2x!tpu.dma_semaphore, #tpu.memory_space<semaphore_mem>> -> memref<1x!tpu.dma_semaphore, #tpu.memory_space<semaphore_mem>>
      %760 = tpu.memref_squeeze %759 : memref<1x!tpu.dma_semaphore, #tpu.memory_space<semaphore_mem>> -> memref<!tpu.dma_semaphore, #tpu.memory_space<semaphore_mem>>
      tpu.wait_dma2 semaphore(%760 : memref<!tpu.dma_semaphore, #tpu.memory_space<semaphore_mem>>) src(%arg6 : memref<32x128xbf16, #tpu.memory_space<any>>) dst(%arg16 : memref<32x128xbf16, #tpu.memory_space<vmem>>)
    } else {
    }
    %c0 = arith.constant 0 : index
    %c0_1 = arith.constant 0 : index
    %3 = vector.load %arg2[%c0, %c0_1] : memref<2x1xi32, #tpu.memory_space<vmem>>, vector<2x1xi32>
    %c0_2 = arith.constant 0 : index
    %c0_3 = arith.constant 0 : index
    %4 = vector.load %arg15[%c0_2, %c0_3] : memref<32x128xbf16, #tpu.memory_space<vmem>>, vector<32x128xbf16>
    %c0_4 = arith.constant 0 : index
    %c0_5 = arith.constant 0 : index
    %5 = vector.load %arg16[%c0_4, %c0_5] : memref<32x128xbf16, #tpu.memory_space<vmem>>, vector<32x128xbf16>
    %c0_6 = arith.constant 0 : index
    %c0_7 = arith.constant 0 : index
    %6 = vector.load %arg11[%c0_6, %c0_7] : memref<2x32xbf16, #tpu.memory_space<vmem>>, vector<2x32xbf16>
    %c0_8 = arith.constant 0 : index
    %c0_9 = arith.constant 0 : index
    %7 = vector.load %arg12[%c0_8, %c0_9] : memref<2x32xf32, #tpu.memory_space<vmem>>, vector<2x32xf32>
    %c0_10 = arith.constant 0 : index
    %c0_11 = arith.constant 0 : index
    %8 = vector.load %arg13[%c0_10, %c0_11] : memref<2x32xbf16, #tpu.memory_space<vmem>>, vector<2x32xbf16>
    %c0_12 = arith.constant 0 : index
    %c0_13 = arith.constant 0 : index
    %9 = vector.load %arg14[%c0_12, %c0_13] : memref<2x32xf32, #tpu.memory_space<vmem>>, vector<2x32xf32>
    %c8_i32 = arith.constant 8 : i32
    %10 = arith.muli %arg1, %c8_i32 : i32
    %c0_i32_14 = arith.constant 0 : i32
    %11 = arith.addi %10, %c0_i32_14 : i32
    %c0_15 = arith.constant 0 : index
    %c0_16 = arith.constant 0 : index
    %c0_17 = arith.constant 0 : index
    %12 = vector.load %arg3[%c0_15, %c0_16, %c0_17] : memref<8x2x128xbf16, #tpu.memory_space<vmem>>, vector<1x2x128xbf16>
    %13 = vector.shape_cast %12 : vector<1x2x128xbf16> to vector<2x128xbf16>
    %cst = arith.constant dense<0.000000e+00> : vector<2x128xf32>
    %14 = tpu.matmul %6, %4, %cst {dimension_numbers = #tpu.dot_dimension_numbers<[1], [0], [0], [1], [0, 0, 1, 1], [], []>} : vector<2x32xbf16>, vector<32x128xbf16>, vector<2x128xf32> -> vector<2x128xf32>
    %15 = arith.extf %13 : vector<2x128xbf16> to vector<2x128xf32>
    %16 = arith.addf %14, %15 : vector<2x128xf32>
    %17 = vector.extract_strided_slice %16 {offsets = [0, 0], sizes = [2, 32], strides = [1, 1]} : vector<2x128xf32> to vector<2x32xf32>
    %18 = arith.negf %17 : vector<2x32xf32>
    %19 = math.exp %18 : vector<2x32xf32>
    %cst_18 = arith.constant 1.000000e+00 : f32
    %20 = vector.broadcast %cst_18 : f32 to vector<2x32xf32>
    %21 = arith.addf %20, %19 : vector<2x32xf32>
    %22 = arith.divf %20, %21 : vector<2x32xf32>
    %23 = vector.extract_strided_slice %16 {offsets = [0, 32], sizes = [2, 32], strides = [1, 1]} : vector<2x128xf32> to vector<2x32xf32>
    %24 = arith.negf %23 : vector<2x32xf32>
    %25 = math.exp %24 : vector<2x32xf32>
    %cst_19 = arith.constant 1.000000e+00 : f32
    %26 = vector.broadcast %cst_19 : f32 to vector<2x32xf32>
    %27 = arith.addf %26, %25 : vector<2x32xf32>
    %28 = arith.divf %26, %27 : vector<2x32xf32>
    %29 = vector.extract_strided_slice %16 {offsets = [0, 64], sizes = [2, 32], strides = [1, 1]} : vector<2x128xf32> to vector<2x32xf32>
    %30 = math.tanh %29 : vector<2x32xf32>
    %31 = vector.extract_strided_slice %16 {offsets = [0, 96], sizes = [2, 32], strides = [1, 1]} : vector<2x128xf32> to vector<2x32xf32>
    %32 = arith.negf %31 : vector<2x32xf32>
    %33 = math.exp %32 : vector<2x32xf32>
    %cst_20 = arith.constant 1.000000e+00 : f32
    %34 = vector.broadcast %cst_20 : f32 to vector<2x32xf32>
    %35 = arith.addf %34, %33 : vector<2x32xf32>
    %36 = arith.divf %34, %35 : vector<2x32xf32>
    %37 = arith.mulf %28, %7 : vector<2x32xf32>
    %38 = arith.mulf %22, %30 : vector<2x32xf32>
    %39 = arith.addf %37, %38 : vector<2x32xf32>
    %40 = math.tanh %39 : vector<2x32xf32>
    %41 = arith.mulf %36, %40 : vector<2x32xf32>
    %42 = arith.truncf %41 : vector<2x32xf32> to vector<2x32xbf16>
    %43 = vector.broadcast %11 : i32 to vector<2x1xi32>
    %44 = arith.cmpi slt, %43, %3 : vector<2x1xi32>
    %45 = vector.shape_cast %44 : vector<2x1xi1> to vector<2x1xi1>
    %46 = vector.broadcast %45 : vector<2x1xi1> to vector<2x32xi1>
    %47 = arith.select %46, %42, %6 : vector<2x32xi1>, vector<2x32xbf16>
    %48 = arith.select %46, %39, %7 : vector<2x32xi1>, vector<2x32xf32>
    %cst_21 = arith.constant 0.000000e+00 : bf16
    %49 = vector.broadcast %cst_21 : bf16 to vector<2x32xbf16>
    %50 = arith.select %46, %42, %49 : vector<2x32xi1>, vector<2x32xbf16>
    %51 = arith.extf %50 : vector<2x32xbf16> to vector<2x32xf32>
    %c0_22 = arith.constant 0 : index
    %c0_23 = arith.constant 0 : index
    %c0_24 = arith.constant 0 : index
    %52 = vector.load %arg7[%c0_22, %c0_23, %c0_24] : memref<8x2x32xf32, #tpu.memory_space<vmem>>, vector<1x2x32xf32>
    %53 = vector.shape_cast %52 : vector<1x2x32xf32> to vector<2x32xf32>
    %54 = vector.shape_cast %51 : vector<2x32xf32> to vector<1x2x32xf32>
    tpu.vector_store %arg7[%c0_22, %c0_23, %c0_24], %54 {strides = array<i32>} : memref<8x2x32xf32, #tpu.memory_space<vmem>>, vector<1x2x32xf32>,
    %c0_i32_25 = arith.constant 0 : i32
    %55 = arith.subi %c0_i32_25, %arg1 : i32
    %c8_i32_26 = arith.constant 8 : i32
    %56 = arith.muli %55, %c8_i32_26 : i32
    %c7_i32 = arith.constant 7 : i32
    %57 = arith.addi %56, %c7_i32 : i32
    %c7 = arith.constant 7 : index
    %c0_27 = arith.constant 0 : index
    %c0_28 = arith.constant 0 : index
    %58 = vector.load %arg4[%c7, %c0_27, %c0_28] : memref<8x2x128xbf16, #tpu.memory_space<vmem>>, vector<1x2x128xbf16>
    %59 = vector.shape_cast %58 : vector<1x2x128xbf16> to vector<2x128xbf16>
    %cst_29 = arith.constant dense<0.000000e+00> : vector<2x128xf32>
    %60 = tpu.matmul %8, %5, %cst_29 {dimension_numbers = #tpu.dot_dimension_numbers<[1], [0], [0], [1], [0, 0, 1, 1], [], []>} : vector<2x32xbf16>, vector<32x128xbf16>, vector<2x128xf32> -> vector<2x128xf32>
    %61 = arith.extf %59 : vector<2x128xbf16> to vector<2x128xf32>
    %62 = arith.addf %60, %61 : vector<2x128xf32>
    %63 = vector.extract_strided_slice %62 {offsets = [0, 0], sizes = [2, 32], strides = [1, 1]} : vector<2x128xf32> to vector<2x32xf32>
    %64 = arith.negf %63 : vector<2x32xf32>
    %65 = math.exp %64 : vector<2x32xf32>
    %cst_30 = arith.constant 1.000000e+00 : f32
    %66 = vector.broadcast %cst_30 : f32 to vector<2x32xf32>
    %67 = arith.addf %66, %65 : vector<2x32xf32>
    %68 = arith.divf %66, %67 : vector<2x32xf32>
    %69 = vector.extract_strided_slice %62 {offsets = [0, 32], sizes = [2, 32], strides = [1, 1]} : vector<2x128xf32> to vector<2x32xf32>
    %70 = arith.negf %69 : vector<2x32xf32>
    %71 = math.exp %70 : vector<2x32xf32>
    %cst_31 = arith.constant 1.000000e+00 : f32
    %72 = vector.broadcast %cst_31 : f32 to vector<2x32xf32>
    %73 = arith.addf %72, %71 : vector<2x32xf32>
    %74 = arith.divf %72, %73 : vector<2x32xf32>
    %75 = vector.extract_strided_slice %62 {offsets = [0, 64], sizes = [2, 32], strides = [1, 1]} : vector<2x128xf32> to vector<2x32xf32>
    %76 = math.tanh %75 : vector<2x32xf32>
    %77 = vector.extract_strided_slice %62 {offsets = [0, 96], sizes = [2, 32], strides = [1, 1]} : vector<2x128xf32> to vector<2x32xf32>
    %78 = arith.negf %77 : vector<2x32xf32>
    %79 = math.exp %78 : vector<2x32xf32>
    %cst_32 = arith.constant 1.000000e+00 : f32
    %80 = vector.broadcast %cst_32 : f32 to vector<2x32xf32>
    %81 = arith.addf %80, %79 : vector<2x32xf32>
    %82 = arith.divf %80, %81 : vector<2x32xf32>
    %83 = arith.mulf %74, %9 : vector<2x32xf32>
    %84 = arith.mulf %68, %76 : vector<2x32xf32>
    %85 = arith.addf %83, %84 : vector<2x32xf32>
    %86 = math.tanh %85 : vector<2x32xf32>
    %87 = arith.mulf %82, %86 : vector<2x32xf32>
    %88 = arith.truncf %87 : vector<2x32xf32> to vector<2x32xbf16>
    %89 = vector.broadcast %57 : i32 to vector<2x1xi32>
    %90 = arith.cmpi slt, %89, %3 : vector<2x1xi32>
    %91 = vector.shape_cast %90 : vector<2x1xi1> to vector<2x1xi1>
    %92 = vector.broadcast %91 : vector<2x1xi1> to vector<2x32xi1>
    %93 = arith.select %92, %88, %8 : vector<2x32xi1>, vector<2x32xbf16>
    %94 = arith.select %92, %85, %9 : vector<2x32xi1>, vector<2x32xf32>
    %cst_33 = arith.constant 0.000000e+00 : bf16
    %95 = vector.broadcast %cst_33 : bf16 to vector<2x32xbf16>
    %96 = arith.select %92, %88, %95 : vector<2x32xi1>, vector<2x32xbf16>
    %97 = arith.extf %96 : vector<2x32xbf16> to vector<2x32xf32>
    %c7_34 = arith.constant 7 : index
    %c0_35 = arith.constant 0 : index
    %c0_36 = arith.constant 0 : index
    %98 = vector.load %arg8[%c7_34, %c0_35, %c0_36] : memref<8x2x32xf32, #tpu.memory_space<vmem>>, vector<1x2x32xf32>
    %99 = vector.shape_cast %98 : vector<1x2x32xf32> to vector<2x32xf32>
    %100 = vector.shape_cast %97 : vector<2x32xf32> to vector<1x2x32xf32>
    tpu.vector_store %arg8[%c7_34, %c0_35, %c0_36], %100 {strides = array<i32>} : memref<8x2x32xf32, #tpu.memory_space<vmem>>, vector<1x2x32xf32>,
    %c8_i32_37 = arith.constant 8 : i32
    %101 = arith.muli %arg1, %c8_i32_37 : i32
    %c1_i32 = arith.constant 1 : i32
    %102 = arith.addi %101, %c1_i32 : i32
    %c1 = arith.constant 1 : index
    %c0_38 = arith.constant 0 : index
    %c0_39 = arith.constant 0 : index
    %103 = vector.load %arg3[%c1, %c0_38, %c0_39] : memref<8x2x128xbf16, #tpu.memory_space<vmem>>, vector<1x2x128xbf16>
    %104 = vector.shape_cast %103 : vector<1x2x128xbf16> to vector<2x128xbf16>
    %cst_40 = arith.constant dense<0.000000e+00> : vector<2x128xf32>
    %105 = tpu.matmul %47, %4, %cst_40 {dimension_numbers = #tpu.dot_dimension_numbers<[1], [0], [0], [1], [0, 0, 1, 1], [], []>} : vector<2x32xbf16>, vector<32x128xbf16>, vector<2x128xf32> -> vector<2x128xf32>
    %106 = arith.extf %104 : vector<2x128xbf16> to vector<2x128xf32>
    %107 = arith.addf %105, %106 : vector<2x128xf32>
    %108 = vector.extract_strided_slice %107 {offsets = [0, 0], sizes = [2, 32], strides = [1, 1]} : vector<2x128xf32> to vector<2x32xf32>
    %109 = arith.negf %108 : vector<2x32xf32>
    %110 = math.exp %109 : vector<2x32xf32>
    %cst_41 = arith.constant 1.000000e+00 : f32
    %111 = vector.broadcast %cst_41 : f32 to vector<2x32xf32>
    %112 = arith.addf %111, %110 : vector<2x32xf32>
    %113 = arith.divf %111, %112 : vector<2x32xf32>
    %114 = vector.extract_strided_slice %107 {offsets = [0, 32], sizes = [2, 32], strides = [1, 1]} : vector<2x128xf32> to vector<2x32xf32>
    %115 = arith.negf %114 : vector<2x32xf32>
    %116 = math.exp %115 : vector<2x32xf32>
    %cst_42 = arith.constant 1.000000e+00 : f32
    %117 = vector.broadcast %cst_42 : f32 to vector<2x32xf32>
    %118 = arith.addf %117, %116 : vector<2x32xf32>
    %119 = arith.divf %117, %118 : vector<2x32xf32>
    %120 = vector.extract_strided_slice %107 {offsets = [0, 64], sizes = [2, 32], strides = [1, 1]} : vector<2x128xf32> to vector<2x32xf32>
    %121 = math.tanh %120 : vector<2x32xf32>
    %122 = vector.extract_strided_slice %107 {offsets = [0, 96], sizes = [2, 32], strides = [1, 1]} : vector<2x128xf32> to vector<2x32xf32>
    %123 = arith.negf %122 : vector<2x32xf32>
    %124 = math.exp %123 : vector<2x32xf32>
    %cst_43 = arith.constant 1.000000e+00 : f32
    %125 = vector.broadcast %cst_43 : f32 to vector<2x32xf32>
    %126 = arith.addf %125, %124 : vector<2x32xf32>
    %127 = arith.divf %125, %126 : vector<2x32xf32>
    %128 = arith.mulf %119, %48 : vector<2x32xf32>
    %129 = arith.mulf %113, %121 : vector<2x32xf32>
    %130 = arith.addf %128, %129 : vector<2x32xf32>
    %131 = math.tanh %130 : vector<2x32xf32>
    %132 = arith.mulf %127, %131 : vector<2x32xf32>
    %133 = arith.truncf %132 : vector<2x32xf32> to vector<2x32xbf16>
    %134 = vector.broadcast %102 : i32 to vector<2x1xi32>
    %135 = arith.cmpi slt, %134, %3 : vector<2x1xi32>
    %136 = vector.shape_cast %135 : vector<2x1xi1> to vector<2x1xi1>
    %137 = vector.broadcast %136 : vector<2x1xi1> to vector<2x32xi1>
    %138 = arith.select %137, %133, %47 : vector<2x32xi1>, vector<2x32xbf16>
    %139 = arith.select %137, %130, %48 : vector<2x32xi1>, vector<2x32xf32>
    %cst_44 = arith.constant 0.000000e+00 : bf16
    %140 = vector.broadcast %cst_44 : bf16 to vector<2x32xbf16>
    %141 = arith.select %137, %133, %140 : vector<2x32xi1>, vector<2x32xbf16>
    %142 = arith.extf %141 : vector<2x32xbf16> to vector<2x32xf32>
    %c1_45 = arith.constant 1 : index
    %c0_46 = arith.constant 0 : index
    %c0_47 = arith.constant 0 : index
    %143 = vector.load %arg7[%c1_45, %c0_46, %c0_47] : memref<8x2x32xf32, #tpu.memory_space<vmem>>, vector<1x2x32xf32>
    %144 = vector.shape_cast %143 : vector<1x2x32xf32> to vector<2x32xf32>
    %145 = vector.shape_cast %142 : vector<2x32xf32> to vector<1x2x32xf32>
    tpu.vector_store %arg7[%c1_45, %c0_46, %c0_47], %145 {strides = array<i32>} : memref<8x2x32xf32, #tpu.memory_space<vmem>>, vector<1x2x32xf32>,
    %c0_i32_48 = arith.constant 0 : i32
    %146 = arith.subi %c0_i32_48, %arg1 : i32
    %c8_i32_49 = arith.constant 8 : i32
    %147 = arith.muli %146, %c8_i32_49 : i32
    %c6_i32 = arith.constant 6 : i32
    %148 = arith.addi %147, %c6_i32 : i32
    %c6 = arith.constant 6 : index
    %c0_50 = arith.constant 0 : index
    %c0_51 = arith.constant 0 : index
    %149 = vector.load %arg4[%c6, %c0_50, %c0_51] : memref<8x2x128xbf16, #tpu.memory_space<vmem>>, vector<1x2x128xbf16>
    %150 = vector.shape_cast %149 : vector<1x2x128xbf16> to vector<2x128xbf16>
    %cst_52 = arith.constant dense<0.000000e+00> : vector<2x128xf32>
    %151 = tpu.matmul %93, %5, %cst_52 {dimension_numbers = #tpu.dot_dimension_numbers<[1], [0], [0], [1], [0, 0, 1, 1], [], []>} : vector<2x32xbf16>, vector<32x128xbf16>, vector<2x128xf32> -> vector<2x128xf32>
    %152 = arith.extf %150 : vector<2x128xbf16> to vector<2x128xf32>
    %153 = arith.addf %151, %152 : vector<2x128xf32>
    %154 = vector.extract_strided_slice %153 {offsets = [0, 0], sizes = [2, 32], strides = [1, 1]} : vector<2x128xf32> to vector<2x32xf32>
    %155 = arith.negf %154 : vector<2x32xf32>
    %156 = math.exp %155 : vector<2x32xf32>
    %cst_53 = arith.constant 1.000000e+00 : f32
    %157 = vector.broadcast %cst_53 : f32 to vector<2x32xf32>
    %158 = arith.addf %157, %156 : vector<2x32xf32>
    %159 = arith.divf %157, %158 : vector<2x32xf32>
    %160 = vector.extract_strided_slice %153 {offsets = [0, 32], sizes = [2, 32], strides = [1, 1]} : vector<2x128xf32> to vector<2x32xf32>
    %161 = arith.negf %160 : vector<2x32xf32>
    %162 = math.exp %161 : vector<2x32xf32>
    %cst_54 = arith.constant 1.000000e+00 : f32
    %163 = vector.broadcast %cst_54 : f32 to vector<2x32xf32>
    %164 = arith.addf %163, %162 : vector<2x32xf32>
    %165 = arith.divf %163, %164 : vector<2x32xf32>
    %166 = vector.extract_strided_slice %153 {offsets = [0, 64], sizes = [2, 32], strides = [1, 1]} : vector<2x128xf32> to vector<2x32xf32>
    %167 = math.tanh %166 : vector<2x32xf32>
    %168 = vector.extract_strided_slice %153 {offsets = [0, 96], sizes = [2, 32], strides = [1, 1]} : vector<2x128xf32> to vector<2x32xf32>
    %169 = arith.negf %168 : vector<2x32xf32>
    %170 = math.exp %169 : vector<2x32xf32>
    %cst_55 = arith.constant 1.000000e+00 : f32
    %171 = vector.broadcast %cst_55 : f32 to vector<2x32xf32>
    %172 = arith.addf %171, %170 : vector<2x32xf32>
    %173 = arith.divf %171, %172 : vector<2x32xf32>
    %174 = arith.mulf %165, %94 : vector<2x32xf32>
    %175 = arith.mulf %159, %167 : vector<2x32xf32>
    %176 = arith.addf %174, %175 : vector<2x32xf32>
    %177 = math.tanh %176 : vector<2x32xf32>
    %178 = arith.mulf %173, %177 : vector<2x32xf32>
    %179 = arith.truncf %178 : vector<2x32xf32> to vector<2x32xbf16>
    %180 = vector.broadcast %148 : i32 to vector<2x1xi32>
    %181 = arith.cmpi slt, %180, %3 : vector<2x1xi32>
    %182 = vector.shape_cast %181 : vector<2x1xi1> to vector<2x1xi1>
    %183 = vector.broadcast %182 : vector<2x1xi1> to vector<2x32xi1>
    %184 = arith.select %183, %179, %93 : vector<2x32xi1>, vector<2x32xbf16>
    %185 = arith.select %183, %176, %94 : vector<2x32xi1>, vector<2x32xf32>
    %cst_56 = arith.constant 0.000000e+00 : bf16
    %186 = vector.broadcast %cst_56 : bf16 to vector<2x32xbf16>
    %187 = arith.select %183, %179, %186 : vector<2x32xi1>, vector<2x32xbf16>
    %188 = arith.extf %187 : vector<2x32xbf16> to vector<2x32xf32>
    %c6_57 = arith.constant 6 : index
    %c0_58 = arith.constant 0 : index
    %c0_59 = arith.constant 0 : index
    %189 = vector.load %arg8[%c6_57, %c0_58, %c0_59] : memref<8x2x32xf32, #tpu.memory_space<vmem>>, vector<1x2x32xf32>
    %190 = vector.shape_cast %189 : vector<1x2x32xf32> to vector<2x32xf32>
    %191 = vector.shape_cast %188 : vector<2x32xf32> to vector<1x2x32xf32>
    tpu.vector_store %arg8[%c6_57, %c0_58, %c0_59], %191 {strides = array<i32>} : memref<8x2x32xf32, #tpu.memory_space<vmem>>, vector<1x2x32xf32>,
    %c8_i32_60 = arith.constant 8 : i32
    %192 = arith.muli %arg1, %c8_i32_60 : i32
    %c2_i32 = arith.constant 2 : i32
    %193 = arith.addi %192, %c2_i32 : i32
    %c2 = arith.constant 2 : index
    %c0_61 = arith.constant 0 : index
    %c0_62 = arith.constant 0 : index
    %194 = vector.load %arg3[%c2, %c0_61, %c0_62] : memref<8x2x128xbf16, #tpu.memory_space<vmem>>, vector<1x2x128xbf16>
    %195 = vector.shape_cast %194 : vector<1x2x128xbf16> to vector<2x128xbf16>
    %cst_63 = arith.constant dense<0.000000e+00> : vector<2x128xf32>
    %196 = tpu.matmul %138, %4, %cst_63 {dimension_numbers = #tpu.dot_dimension_numbers<[1], [0], [0], [1], [0, 0, 1, 1], [], []>} : vector<2x32xbf16>, vector<32x128xbf16>, vector<2x128xf32> -> vector<2x128xf32>
    %197 = arith.extf %195 : vector<2x128xbf16> to vector<2x128xf32>
    %198 = arith.addf %196, %197 : vector<2x128xf32>
    %199 = vector.extract_strided_slice %198 {offsets = [0, 0], sizes = [2, 32], strides = [1, 1]} : vector<2x128xf32> to vector<2x32xf32>
    %200 = arith.negf %199 : vector<2x32xf32>
    %201 = math.exp %200 : vector<2x32xf32>
    %cst_64 = arith.constant 1.000000e+00 : f32
    %202 = vector.broadcast %cst_64 : f32 to vector<2x32xf32>
    %203 = arith.addf %202, %201 : vector<2x32xf32>
    %204 = arith.divf %202, %203 : vector<2x32xf32>
    %205 = vector.extract_strided_slice %198 {offsets = [0, 32], sizes = [2, 32], strides = [1, 1]} : vector<2x128xf32> to vector<2x32xf32>
    %206 = arith.negf %205 : vector<2x32xf32>
    %207 = math.exp %206 : vector<2x32xf32>
    %cst_65 = arith.constant 1.000000e+00 : f32
    %208 = vector.broadcast %cst_65 : f32 to vector<2x32xf32>
    %209 = arith.addf %208, %207 : vector<2x32xf32>
    %210 = arith.divf %208, %209 : vector<2x32xf32>
    %211 = vector.extract_strided_slice %198 {offsets = [0, 64], sizes = [2, 32], strides = [1, 1]} : vector<2x128xf32> to vector<2x32xf32>
    %212 = math.tanh %211 : vector<2x32xf32>
    %213 = vector.extract_strided_slice %198 {offsets = [0, 96], sizes = [2, 32], strides = [1, 1]} : vector<2x128xf32> to vector<2x32xf32>
    %214 = arith.negf %213 : vector<2x32xf32>
    %215 = math.exp %214 : vector<2x32xf32>
    %cst_66 = arith.constant 1.000000e+00 : f32
    %216 = vector.broadcast %cst_66 : f32 to vector<2x32xf32>
    %217 = arith.addf %216, %215 : vector<2x32xf32>
    %218 = arith.divf %216, %217 : vector<2x32xf32>
    %219 = arith.mulf %210, %139 : vector<2x32xf32>
    %220 = arith.mulf %204, %212 : vector<2x32xf32>
    %221 = arith.addf %219, %220 : vector<2x32xf32>
    %222 = math.tanh %221 : vector<2x32xf32>
    %223 = arith.mulf %218, %222 : vector<2x32xf32>
    %224 = arith.truncf %223 : vector<2x32xf32> to vector<2x32xbf16>
    %225 = vector.broadcast %193 : i32 to vector<2x1xi32>
    %226 = arith.cmpi slt, %225, %3 : vector<2x1xi32>
    %227 = vector.shape_cast %226 : vector<2x1xi1> to vector<2x1xi1>
    %228 = vector.broadcast %227 : vector<2x1xi1> to vector<2x32xi1>
    %229 = arith.select %228, %224, %138 : vector<2x32xi1>, vector<2x32xbf16>
    %230 = arith.select %228, %221, %139 : vector<2x32xi1>, vector<2x32xf32>
    %cst_67 = arith.constant 0.000000e+00 : bf16
    %231 = vector.broadcast %cst_67 : bf16 to vector<2x32xbf16>
    %232 = arith.select %228, %224, %231 : vector<2x32xi1>, vector<2x32xbf16>
    %233 = arith.extf %232 : vector<2x32xbf16> to vector<2x32xf32>
    %c2_68 = arith.constant 2 : index
    %c0_69 = arith.constant 0 : index
    %c0_70 = arith.constant 0 : index
    %234 = vector.load %arg7[%c2_68, %c0_69, %c0_70] : memref<8x2x32xf32, #tpu.memory_space<vmem>>, vector<1x2x32xf32>
    %235 = vector.shape_cast %234 : vector<1x2x32xf32> to vector<2x32xf32>
    %236 = vector.shape_cast %233 : vector<2x32xf32> to vector<1x2x32xf32>
    tpu.vector_store %arg7[%c2_68, %c0_69, %c0_70], %236 {strides = array<i32>} : memref<8x2x32xf32, #tpu.memory_space<vmem>>, vector<1x2x32xf32>,
    %c0_i32_71 = arith.constant 0 : i32
    %237 = arith.subi %c0_i32_71, %arg1 : i32
    %c8_i32_72 = arith.constant 8 : i32
    %238 = arith.muli %237, %c8_i32_72 : i32
    %c5_i32 = arith.constant 5 : i32
    %239 = arith.addi %238, %c5_i32 : i32
    %c5 = arith.constant 5 : index
    %c0_73 = arith.constant 0 : index
    %c0_74 = arith.constant 0 : index
    %240 = vector.load %arg4[%c5, %c0_73, %c0_74] : memref<8x2x128xbf16, #tpu.memory_space<vmem>>, vector<1x2x128xbf16>
    %241 = vector.shape_cast %240 : vector<1x2x128xbf16> to vector<2x128xbf16>
    %cst_75 = arith.constant dense<0.000000e+00> : vector<2x128xf32>
    %242 = tpu.matmul %184, %5, %cst_75 {dimension_numbers = #tpu.dot_dimension_numbers<[1], [0], [0], [1], [0, 0, 1, 1], [], []>} : vector<2x32xbf16>, vector<32x128xbf16>, vector<2x128xf32> -> vector<2x128xf32>
    %243 = arith.extf %241 : vector<2x128xbf16> to vector<2x128xf32>
    %244 = arith.addf %242, %243 : vector<2x128xf32>
    %245 = vector.extract_strided_slice %244 {offsets = [0, 0], sizes = [2, 32], strides = [1, 1]} : vector<2x128xf32> to vector<2x32xf32>
    %246 = arith.negf %245 : vector<2x32xf32>
    %247 = math.exp %246 : vector<2x32xf32>
    %cst_76 = arith.constant 1.000000e+00 : f32
    %248 = vector.broadcast %cst_76 : f32 to vector<2x32xf32>
    %249 = arith.addf %248, %247 : vector<2x32xf32>
    %250 = arith.divf %248, %249 : vector<2x32xf32>
    %251 = vector.extract_strided_slice %244 {offsets = [0, 32], sizes = [2, 32], strides = [1, 1]} : vector<2x128xf32> to vector<2x32xf32>
    %252 = arith.negf %251 : vector<2x32xf32>
    %253 = math.exp %252 : vector<2x32xf32>
    %cst_77 = arith.constant 1.000000e+00 : f32
    %254 = vector.broadcast %cst_77 : f32 to vector<2x32xf32>
    %255 = arith.addf %254, %253 : vector<2x32xf32>
    %256 = arith.divf %254, %255 : vector<2x32xf32>
    %257 = vector.extract_strided_slice %244 {offsets = [0, 64], sizes = [2, 32], strides = [1, 1]} : vector<2x128xf32> to vector<2x32xf32>
    %258 = math.tanh %257 : vector<2x32xf32>
    %259 = vector.extract_strided_slice %244 {offsets = [0, 96], sizes = [2, 32], strides = [1, 1]} : vector<2x128xf32> to vector<2x32xf32>
    %260 = arith.negf %259 : vector<2x32xf32>
    %261 = math.exp %260 : vector<2x32xf32>
    %cst_78 = arith.constant 1.000000e+00 : f32
    %262 = vector.broadcast %cst_78 : f32 to vector<2x32xf32>
    %263 = arith.addf %262, %261 : vector<2x32xf32>
    %264 = arith.divf %262, %263 : vector<2x32xf32>
    %265 = arith.mulf %256, %185 : vector<2x32xf32>
    %266 = arith.mulf %250, %258 : vector<2x32xf32>
    %267 = arith.addf %265, %266 : vector<2x32xf32>
    %268 = math.tanh %267 : vector<2x32xf32>
    %269 = arith.mulf %264, %268 : vector<2x32xf32>
    %270 = arith.truncf %269 : vector<2x32xf32> to vector<2x32xbf16>
    %271 = vector.broadcast %239 : i32 to vector<2x1xi32>
    %272 = arith.cmpi slt, %271, %3 : vector<2x1xi32>
    %273 = vector.shape_cast %272 : vector<2x1xi1> to vector<2x1xi1>
    %274 = vector.broadcast %273 : vector<2x1xi1> to vector<2x32xi1>
    %275 = arith.select %274, %270, %184 : vector<2x32xi1>, vector<2x32xbf16>
    %276 = arith.select %274, %267, %185 : vector<2x32xi1>, vector<2x32xf32>
    %cst_79 = arith.constant 0.000000e+00 : bf16
    %277 = vector.broadcast %cst_79 : bf16 to vector<2x32xbf16>
    %278 = arith.select %274, %270, %277 : vector<2x32xi1>, vector<2x32xbf16>
    %279 = arith.extf %278 : vector<2x32xbf16> to vector<2x32xf32>
    %c5_80 = arith.constant 5 : index
    %c0_81 = arith.constant 0 : index
    %c0_82 = arith.constant 0 : index
    %280 = vector.load %arg8[%c5_80, %c0_81, %c0_82] : memref<8x2x32xf32, #tpu.memory_space<vmem>>, vector<1x2x32xf32>
    %281 = vector.shape_cast %280 : vector<1x2x32xf32> to vector<2x32xf32>
    %282 = vector.shape_cast %279 : vector<2x32xf32> to vector<1x2x32xf32>
    tpu.vector_store %arg8[%c5_80, %c0_81, %c0_82], %282 {strides = array<i32>} : memref<8x2x32xf32, #tpu.memory_space<vmem>>, vector<1x2x32xf32>,
    %c8_i32_83 = arith.constant 8 : i32
    %283 = arith.muli %arg1, %c8_i32_83 : i32
    %c3_i32 = arith.constant 3 : i32
    %284 = arith.addi %283, %c3_i32 : i32
    %c3 = arith.constant 3 : index
    %c0_84 = arith.constant 0 : index
    %c0_85 = arith.constant 0 : index
    %285 = vector.load %arg3[%c3, %c0_84, %c0_85] : memref<8x2x128xbf16, #tpu.memory_space<vmem>>, vector<1x2x128xbf16>
    %286 = vector.shape_cast %285 : vector<1x2x128xbf16> to vector<2x128xbf16>
    %cst_86 = arith.constant dense<0.000000e+00> : vector<2x128xf32>
    %287 = tpu.matmul %229, %4, %cst_86 {dimension_numbers = #tpu.dot_dimension_numbers<[1], [0], [0], [1], [0, 0, 1, 1], [], []>} : vector<2x32xbf16>, vector<32x128xbf16>, vector<2x128xf32> -> vector<2x128xf32>
    %288 = arith.extf %286 : vector<2x128xbf16> to vector<2x128xf32>
    %289 = arith.addf %287, %288 : vector<2x128xf32>
    %290 = vector.extract_strided_slice %289 {offsets = [0, 0], sizes = [2, 32], strides = [1, 1]} : vector<2x128xf32> to vector<2x32xf32>
    %291 = arith.negf %290 : vector<2x32xf32>
    %292 = math.exp %291 : vector<2x32xf32>
    %cst_87 = arith.constant 1.000000e+00 : f32
    %293 = vector.broadcast %cst_87 : f32 to vector<2x32xf32>
    %294 = arith.addf %293, %292 : vector<2x32xf32>
    %295 = arith.divf %293, %294 : vector<2x32xf32>
    %296 = vector.extract_strided_slice %289 {offsets = [0, 32], sizes = [2, 32], strides = [1, 1]} : vector<2x128xf32> to vector<2x32xf32>
    %297 = arith.negf %296 : vector<2x32xf32>
    %298 = math.exp %297 : vector<2x32xf32>
    %cst_88 = arith.constant 1.000000e+00 : f32
    %299 = vector.broadcast %cst_88 : f32 to vector<2x32xf32>
    %300 = arith.addf %299, %298 : vector<2x32xf32>
    %301 = arith.divf %299, %300 : vector<2x32xf32>
    %302 = vector.extract_strided_slice %289 {offsets = [0, 64], sizes = [2, 32], strides = [1, 1]} : vector<2x128xf32> to vector<2x32xf32>
    %303 = math.tanh %302 : vector<2x32xf32>
    %304 = vector.extract_strided_slice %289 {offsets = [0, 96], sizes = [2, 32], strides = [1, 1]} : vector<2x128xf32> to vector<2x32xf32>
    %305 = arith.negf %304 : vector<2x32xf32>
    %306 = math.exp %305 : vector<2x32xf32>
    %cst_89 = arith.constant 1.000000e+00 : f32
    %307 = vector.broadcast %cst_89 : f32 to vector<2x32xf32>
    %308 = arith.addf %307, %306 : vector<2x32xf32>
    %309 = arith.divf %307, %308 : vector<2x32xf32>
    %310 = arith.mulf %301, %230 : vector<2x32xf32>
    %311 = arith.mulf %295, %303 : vector<2x32xf32>
    %312 = arith.addf %310, %311 : vector<2x32xf32>
    %313 = math.tanh %312 : vector<2x32xf32>
    %314 = arith.mulf %309, %313 : vector<2x32xf32>
    %315 = arith.truncf %314 : vector<2x32xf32> to vector<2x32xbf16>
    %316 = vector.broadcast %284 : i32 to vector<2x1xi32>
    %317 = arith.cmpi slt, %316, %3 : vector<2x1xi32>
    %318 = vector.shape_cast %317 : vector<2x1xi1> to vector<2x1xi1>
    %319 = vector.broadcast %318 : vector<2x1xi1> to vector<2x32xi1>
    %320 = arith.select %319, %315, %229 : vector<2x32xi1>, vector<2x32xbf16>
    %321 = arith.select %319, %312, %230 : vector<2x32xi1>, vector<2x32xf32>
    %cst_90 = arith.constant 0.000000e+00 : bf16
    %322 = vector.broadcast %cst_90 : bf16 to vector<2x32xbf16>
    %323 = arith.select %319, %315, %322 : vector<2x32xi1>, vector<2x32xbf16>
    %324 = arith.extf %323 : vector<2x32xbf16> to vector<2x32xf32>
    %c3_91 = arith.constant 3 : index
    %c0_92 = arith.constant 0 : index
    %c0_93 = arith.constant 0 : index
    %325 = vector.load %arg7[%c3_91, %c0_92, %c0_93] : memref<8x2x32xf32, #tpu.memory_space<vmem>>, vector<1x2x32xf32>
    %326 = vector.shape_cast %325 : vector<1x2x32xf32> to vector<2x32xf32>
    %327 = vector.shape_cast %324 : vector<2x32xf32> to vector<1x2x32xf32>
    tpu.vector_store %arg7[%c3_91, %c0_92, %c0_93], %327 {strides = array<i32>} : memref<8x2x32xf32, #tpu.memory_space<vmem>>, vector<1x2x32xf32>,
    %c0_i32_94 = arith.constant 0 : i32
    %328 = arith.subi %c0_i32_94, %arg1 : i32
    %c8_i32_95 = arith.constant 8 : i32
    %329 = arith.muli %328, %c8_i32_95 : i32
    %c4_i32 = arith.constant 4 : i32
    %330 = arith.addi %329, %c4_i32 : i32
    %c4 = arith.constant 4 : index
    %c0_96 = arith.constant 0 : index
    %c0_97 = arith.constant 0 : index
    %331 = vector.load %arg4[%c4, %c0_96, %c0_97] : memref<8x2x128xbf16, #tpu.memory_space<vmem>>, vector<1x2x128xbf16>
    %332 = vector.shape_cast %331 : vector<1x2x128xbf16> to vector<2x128xbf16>
    %cst_98 = arith.constant dense<0.000000e+00> : vector<2x128xf32>
    %333 = tpu.matmul %275, %5, %cst_98 {dimension_numbers = #tpu.dot_dimension_numbers<[1], [0], [0], [1], [0, 0, 1, 1], [], []>} : vector<2x32xbf16>, vector<32x128xbf16>, vector<2x128xf32> -> vector<2x128xf32>
    %334 = arith.extf %332 : vector<2x128xbf16> to vector<2x128xf32>
    %335 = arith.addf %333, %334 : vector<2x128xf32>
    %336 = vector.extract_strided_slice %335 {offsets = [0, 0], sizes = [2, 32], strides = [1, 1]} : vector<2x128xf32> to vector<2x32xf32>
    %337 = arith.negf %336 : vector<2x32xf32>
    %338 = math.exp %337 : vector<2x32xf32>
    %cst_99 = arith.constant 1.000000e+00 : f32
    %339 = vector.broadcast %cst_99 : f32 to vector<2x32xf32>
    %340 = arith.addf %339, %338 : vector<2x32xf32>
    %341 = arith.divf %339, %340 : vector<2x32xf32>
    %342 = vector.extract_strided_slice %335 {offsets = [0, 32], sizes = [2, 32], strides = [1, 1]} : vector<2x128xf32> to vector<2x32xf32>
    %343 = arith.negf %342 : vector<2x32xf32>
    %344 = math.exp %343 : vector<2x32xf32>
    %cst_100 = arith.constant 1.000000e+00 : f32
    %345 = vector.broadcast %cst_100 : f32 to vector<2x32xf32>
    %346 = arith.addf %345, %344 : vector<2x32xf32>
    %347 = arith.divf %345, %346 : vector<2x32xf32>
    %348 = vector.extract_strided_slice %335 {offsets = [0, 64], sizes = [2, 32], strides = [1, 1]} : vector<2x128xf32> to vector<2x32xf32>
    %349 = math.tanh %348 : vector<2x32xf32>
    %350 = vector.extract_strided_slice %335 {offsets = [0, 96], sizes = [2, 32], strides = [1, 1]} : vector<2x128xf32> to vector<2x32xf32>
    %351 = arith.negf %350 : vector<2x32xf32>
    %352 = math.exp %351 : vector<2x32xf32>
    %cst_101 = arith.constant 1.000000e+00 : f32
    %353 = vector.broadcast %cst_101 : f32 to vector<2x32xf32>
    %354 = arith.addf %353, %352 : vector<2x32xf32>
    %355 = arith.divf %353, %354 : vector<2x32xf32>
    %356 = arith.mulf %347, %276 : vector<2x32xf32>
    %357 = arith.mulf %341, %349 : vector<2x32xf32>
    %358 = arith.addf %356, %357 : vector<2x32xf32>
    %359 = math.tanh %358 : vector<2x32xf32>
    %360 = arith.mulf %355, %359 : vector<2x32xf32>
    %361 = arith.truncf %360 : vector<2x32xf32> to vector<2x32xbf16>
    %362 = vector.broadcast %330 : i32 to vector<2x1xi32>
    %363 = arith.cmpi slt, %362, %3 : vector<2x1xi32>
    %364 = vector.shape_cast %363 : vector<2x1xi1> to vector<2x1xi1>
    %365 = vector.broadcast %364 : vector<2x1xi1> to vector<2x32xi1>
    %366 = arith.select %365, %361, %275 : vector<2x32xi1>, vector<2x32xbf16>
    %367 = arith.select %365, %358, %276 : vector<2x32xi1>, vector<2x32xf32>
    %cst_102 = arith.constant 0.000000e+00 : bf16
    %368 = vector.broadcast %cst_102 : bf16 to vector<2x32xbf16>
    %369 = arith.select %365, %361, %368 : vector<2x32xi1>, vector<2x32xbf16>
    %370 = arith.extf %369 : vector<2x32xbf16> to vector<2x32xf32>
    %c4_103 = arith.constant 4 : index
    %c0_104 = arith.constant 0 : index
    %c0_105 = arith.constant 0 : index
    %371 = vector.load %arg8[%c4_103, %c0_104, %c0_105] : memref<8x2x32xf32, #tpu.memory_space<vmem>>, vector<1x2x32xf32>
    %372 = vector.shape_cast %371 : vector<1x2x32xf32> to vector<2x32xf32>
    %373 = vector.shape_cast %370 : vector<2x32xf32> to vector<1x2x32xf32>
    tpu.vector_store %arg8[%c4_103, %c0_104, %c0_105], %373 {strides = array<i32>} : memref<8x2x32xf32, #tpu.memory_space<vmem>>, vector<1x2x32xf32>,
    %c8_i32_106 = arith.constant 8 : i32
    %374 = arith.muli %arg1, %c8_i32_106 : i32
    %c4_i32_107 = arith.constant 4 : i32
    %375 = arith.addi %374, %c4_i32_107 : i32
    %c4_108 = arith.constant 4 : index
    %c0_109 = arith.constant 0 : index
    %c0_110 = arith.constant 0 : index
    %376 = vector.load %arg3[%c4_108, %c0_109, %c0_110] : memref<8x2x128xbf16, #tpu.memory_space<vmem>>, vector<1x2x128xbf16>
    %377 = vector.shape_cast %376 : vector<1x2x128xbf16> to vector<2x128xbf16>
    %cst_111 = arith.constant dense<0.000000e+00> : vector<2x128xf32>
    %378 = tpu.matmul %320, %4, %cst_111 {dimension_numbers = #tpu.dot_dimension_numbers<[1], [0], [0], [1], [0, 0, 1, 1], [], []>} : vector<2x32xbf16>, vector<32x128xbf16>, vector<2x128xf32> -> vector<2x128xf32>
    %379 = arith.extf %377 : vector<2x128xbf16> to vector<2x128xf32>
    %380 = arith.addf %378, %379 : vector<2x128xf32>
    %381 = vector.extract_strided_slice %380 {offsets = [0, 0], sizes = [2, 32], strides = [1, 1]} : vector<2x128xf32> to vector<2x32xf32>
    %382 = arith.negf %381 : vector<2x32xf32>
    %383 = math.exp %382 : vector<2x32xf32>
    %cst_112 = arith.constant 1.000000e+00 : f32
    %384 = vector.broadcast %cst_112 : f32 to vector<2x32xf32>
    %385 = arith.addf %384, %383 : vector<2x32xf32>
    %386 = arith.divf %384, %385 : vector<2x32xf32>
    %387 = vector.extract_strided_slice %380 {offsets = [0, 32], sizes = [2, 32], strides = [1, 1]} : vector<2x128xf32> to vector<2x32xf32>
    %388 = arith.negf %387 : vector<2x32xf32>
    %389 = math.exp %388 : vector<2x32xf32>
    %cst_113 = arith.constant 1.000000e+00 : f32
    %390 = vector.broadcast %cst_113 : f32 to vector<2x32xf32>
    %391 = arith.addf %390, %389 : vector<2x32xf32>
    %392 = arith.divf %390, %391 : vector<2x32xf32>
    %393 = vector.extract_strided_slice %380 {offsets = [0, 64], sizes = [2, 32], strides = [1, 1]} : vector<2x128xf32> to vector<2x32xf32>
    %394 = math.tanh %393 : vector<2x32xf32>
    %395 = vector.extract_strided_slice %380 {offsets = [0, 96], sizes = [2, 32], strides = [1, 1]} : vector<2x128xf32> to vector<2x32xf32>
    %396 = arith.negf %395 : vector<2x32xf32>
    %397 = math.exp %396 : vector<2x32xf32>
    %cst_114 = arith.constant 1.000000e+00 : f32
    %398 = vector.broadcast %cst_114 : f32 to vector<2x32xf32>
    %399 = arith.addf %398, %397 : vector<2x32xf32>
    %400 = arith.divf %398, %399 : vector<2x32xf32>
    %401 = arith.mulf %392, %321 : vector<2x32xf32>
    %402 = arith.mulf %386, %394 : vector<2x32xf32>
    %403 = arith.addf %401, %402 : vector<2x32xf32>
    %404 = math.tanh %403 : vector<2x32xf32>
    %405 = arith.mulf %400, %404 : vector<2x32xf32>
    %406 = arith.truncf %405 : vector<2x32xf32> to vector<2x32xbf16>
    %407 = vector.broadcast %375 : i32 to vector<2x1xi32>
    %408 = arith.cmpi slt, %407, %3 : vector<2x1xi32>
    %409 = vector.shape_cast %408 : vector<2x1xi1> to vector<2x1xi1>
    %410 = vector.broadcast %409 : vector<2x1xi1> to vector<2x32xi1>
    %411 = arith.select %410, %406, %320 : vector<2x32xi1>, vector<2x32xbf16>
    %412 = arith.select %410, %403, %321 : vector<2x32xi1>, vector<2x32xf32>
    %cst_115 = arith.constant 0.000000e+00 : bf16
    %413 = vector.broadcast %cst_115 : bf16 to vector<2x32xbf16>
    %414 = arith.select %410, %406, %413 : vector<2x32xi1>, vector<2x32xbf16>
    %415 = arith.extf %414 : vector<2x32xbf16> to vector<2x32xf32>
    %c4_116 = arith.constant 4 : index
    %c0_117 = arith.constant 0 : index
    %c0_118 = arith.constant 0 : index
    %416 = vector.load %arg7[%c4_116, %c0_117, %c0_118] : memref<8x2x32xf32, #tpu.memory_space<vmem>>, vector<1x2x32xf32>
    %417 = vector.shape_cast %416 : vector<1x2x32xf32> to vector<2x32xf32>
    %418 = vector.shape_cast %415 : vector<2x32xf32> to vector<1x2x32xf32>
    tpu.vector_store %arg7[%c4_116, %c0_117, %c0_118], %418 {strides = array<i32>} : memref<8x2x32xf32, #tpu.memory_space<vmem>>, vector<1x2x32xf32>,
    %c0_i32_119 = arith.constant 0 : i32
    %419 = arith.subi %c0_i32_119, %arg1 : i32
    %c8_i32_120 = arith.constant 8 : i32
    %420 = arith.muli %419, %c8_i32_120 : i32
    %c3_i32_121 = arith.constant 3 : i32
    %421 = arith.addi %420, %c3_i32_121 : i32
    %c3_122 = arith.constant 3 : index
    %c0_123 = arith.constant 0 : index
    %c0_124 = arith.constant 0 : index
    %422 = vector.load %arg4[%c3_122, %c0_123, %c0_124] : memref<8x2x128xbf16, #tpu.memory_space<vmem>>, vector<1x2x128xbf16>
    %423 = vector.shape_cast %422 : vector<1x2x128xbf16> to vector<2x128xbf16>
    %cst_125 = arith.constant dense<0.000000e+00> : vector<2x128xf32>
    %424 = tpu.matmul %366, %5, %cst_125 {dimension_numbers = #tpu.dot_dimension_numbers<[1], [0], [0], [1], [0, 0, 1, 1], [], []>} : vector<2x32xbf16>, vector<32x128xbf16>, vector<2x128xf32> -> vector<2x128xf32>
    %425 = arith.extf %423 : vector<2x128xbf16> to vector<2x128xf32>
    %426 = arith.addf %424, %425 : vector<2x128xf32>
    %427 = vector.extract_strided_slice %426 {offsets = [0, 0], sizes = [2, 32], strides = [1, 1]} : vector<2x128xf32> to vector<2x32xf32>
    %428 = arith.negf %427 : vector<2x32xf32>
    %429 = math.exp %428 : vector<2x32xf32>
    %cst_126 = arith.constant 1.000000e+00 : f32
    %430 = vector.broadcast %cst_126 : f32 to vector<2x32xf32>
    %431 = arith.addf %430, %429 : vector<2x32xf32>
    %432 = arith.divf %430, %431 : vector<2x32xf32>
    %433 = vector.extract_strided_slice %426 {offsets = [0, 32], sizes = [2, 32], strides = [1, 1]} : vector<2x128xf32> to vector<2x32xf32>
    %434 = arith.negf %433 : vector<2x32xf32>
    %435 = math.exp %434 : vector<2x32xf32>
    %cst_127 = arith.constant 1.000000e+00 : f32
    %436 = vector.broadcast %cst_127 : f32 to vector<2x32xf32>
    %437 = arith.addf %436, %435 : vector<2x32xf32>
    %438 = arith.divf %436, %437 : vector<2x32xf32>
    %439 = vector.extract_strided_slice %426 {offsets = [0, 64], sizes = [2, 32], strides = [1, 1]} : vector<2x128xf32> to vector<2x32xf32>
    %440 = math.tanh %439 : vector<2x32xf32>
    %441 = vector.extract_strided_slice %426 {offsets = [0, 96], sizes = [2, 32], strides = [1, 1]} : vector<2x128xf32> to vector<2x32xf32>
    %442 = arith.negf %441 : vector<2x32xf32>
    %443 = math.exp %442 : vector<2x32xf32>
    %cst_128 = arith.constant 1.000000e+00 : f32
    %444 = vector.broadcast %cst_128 : f32 to vector<2x32xf32>
    %445 = arith.addf %444, %443 : vector<2x32xf32>
    %446 = arith.divf %444, %445 : vector<2x32xf32>
    %447 = arith.mulf %438, %367 : vector<2x32xf32>
    %448 = arith.mulf %432, %440 : vector<2x32xf32>
    %449 = arith.addf %447, %448 : vector<2x32xf32>
    %450 = math.tanh %449 : vector<2x32xf32>
    %451 = arith.mulf %446, %450 : vector<2x32xf32>
    %452 = arith.truncf %451 : vector<2x32xf32> to vector<2x32xbf16>
    %453 = vector.broadcast %421 : i32 to vector<2x1xi32>
    %454 = arith.cmpi slt, %453, %3 : vector<2x1xi32>
    %455 = vector.shape_cast %454 : vector<2x1xi1> to vector<2x1xi1>
    %456 = vector.broadcast %455 : vector<2x1xi1> to vector<2x32xi1>
    %457 = arith.select %456, %452, %366 : vector<2x32xi1>, vector<2x32xbf16>
    %458 = arith.select %456, %449, %367 : vector<2x32xi1>, vector<2x32xf32>
    %cst_129 = arith.constant 0.000000e+00 : bf16
    %459 = vector.broadcast %cst_129 : bf16 to vector<2x32xbf16>
    %460 = arith.select %456, %452, %459 : vector<2x32xi1>, vector<2x32xbf16>
    %461 = arith.extf %460 : vector<2x32xbf16> to vector<2x32xf32>
    %c3_130 = arith.constant 3 : index
    %c0_131 = arith.constant 0 : index
    %c0_132 = arith.constant 0 : index
    %462 = vector.load %arg8[%c3_130, %c0_131, %c0_132] : memref<8x2x32xf32, #tpu.memory_space<vmem>>, vector<1x2x32xf32>
    %463 = vector.shape_cast %462 : vector<1x2x32xf32> to vector<2x32xf32>
    %464 = vector.shape_cast %461 : vector<2x32xf32> to vector<1x2x32xf32>
    tpu.vector_store %arg8[%c3_130, %c0_131, %c0_132], %464 {strides = array<i32>} : memref<8x2x32xf32, #tpu.memory_space<vmem>>, vector<1x2x32xf32>,
    %c8_i32_133 = arith.constant 8 : i32
    %465 = arith.muli %arg1, %c8_i32_133 : i32
    %c5_i32_134 = arith.constant 5 : i32
    %466 = arith.addi %465, %c5_i32_134 : i32
    %c5_135 = arith.constant 5 : index
    %c0_136 = arith.constant 0 : index
    %c0_137 = arith.constant 0 : index
    %467 = vector.load %arg3[%c5_135, %c0_136, %c0_137] : memref<8x2x128xbf16, #tpu.memory_space<vmem>>, vector<1x2x128xbf16>
    %468 = vector.shape_cast %467 : vector<1x2x128xbf16> to vector<2x128xbf16>
    %cst_138 = arith.constant dense<0.000000e+00> : vector<2x128xf32>
    %469 = tpu.matmul %411, %4, %cst_138 {dimension_numbers = #tpu.dot_dimension_numbers<[1], [0], [0], [1], [0, 0, 1, 1], [], []>} : vector<2x32xbf16>, vector<32x128xbf16>, vector<2x128xf32> -> vector<2x128xf32>
    %470 = arith.extf %468 : vector<2x128xbf16> to vector<2x128xf32>
    %471 = arith.addf %469, %470 : vector<2x128xf32>
    %472 = vector.extract_strided_slice %471 {offsets = [0, 0], sizes = [2, 32], strides = [1, 1]} : vector<2x128xf32> to vector<2x32xf32>
    %473 = arith.negf %472 : vector<2x32xf32>
    %474 = math.exp %473 : vector<2x32xf32>
    %cst_139 = arith.constant 1.000000e+00 : f32
    %475 = vector.broadcast %cst_139 : f32 to vector<2x32xf32>
    %476 = arith.addf %475, %474 : vector<2x32xf32>
    %477 = arith.divf %475, %476 : vector<2x32xf32>
    %478 = vector.extract_strided_slice %471 {offsets = [0, 32], sizes = [2, 32], strides = [1, 1]} : vector<2x128xf32> to vector<2x32xf32>
    %479 = arith.negf %478 : vector<2x32xf32>
    %480 = math.exp %479 : vector<2x32xf32>
    %cst_140 = arith.constant 1.000000e+00 : f32
    %481 = vector.broadcast %cst_140 : f32 to vector<2x32xf32>
    %482 = arith.addf %481, %480 : vector<2x32xf32>
    %483 = arith.divf %481, %482 : vector<2x32xf32>
    %484 = vector.extract_strided_slice %471 {offsets = [0, 64], sizes = [2, 32], strides = [1, 1]} : vector<2x128xf32> to vector<2x32xf32>
    %485 = math.tanh %484 : vector<2x32xf32>
    %486 = vector.extract_strided_slice %471 {offsets = [0, 96], sizes = [2, 32], strides = [1, 1]} : vector<2x128xf32> to vector<2x32xf32>
    %487 = arith.negf %486 : vector<2x32xf32>
    %488 = math.exp %487 : vector<2x32xf32>
    %cst_141 = arith.constant 1.000000e+00 : f32
    %489 = vector.broadcast %cst_141 : f32 to vector<2x32xf32>
    %490 = arith.addf %489, %488 : vector<2x32xf32>
    %491 = arith.divf %489, %490 : vector<2x32xf32>
    %492 = arith.mulf %483, %412 : vector<2x32xf32>
    %493 = arith.mulf %477, %485 : vector<2x32xf32>
    %494 = arith.addf %492, %493 : vector<2x32xf32>
    %495 = math.tanh %494 : vector<2x32xf32>
    %496 = arith.mulf %491, %495 : vector<2x32xf32>
    %497 = arith.truncf %496 : vector<2x32xf32> to vector<2x32xbf16>
    %498 = vector.broadcast %466 : i32 to vector<2x1xi32>
    %499 = arith.cmpi slt, %498, %3 : vector<2x1xi32>
    %500 = vector.shape_cast %499 : vector<2x1xi1> to vector<2x1xi1>
    %501 = vector.broadcast %500 : vector<2x1xi1> to vector<2x32xi1>
    %502 = arith.select %501, %497, %411 : vector<2x32xi1>, vector<2x32xbf16>
    %503 = arith.select %501, %494, %412 : vector<2x32xi1>, vector<2x32xf32>
    %cst_142 = arith.constant 0.000000e+00 : bf16
    %504 = vector.broadcast %cst_142 : bf16 to vector<2x32xbf16>
    %505 = arith.select %501, %497, %504 : vector<2x32xi1>, vector<2x32xbf16>
    %506 = arith.extf %505 : vector<2x32xbf16> to vector<2x32xf32>
    %c5_143 = arith.constant 5 : index
    %c0_144 = arith.constant 0 : index
    %c0_145 = arith.constant 0 : index
    %507 = vector.load %arg7[%c5_143, %c0_144, %c0_145] : memref<8x2x32xf32, #tpu.memory_space<vmem>>, vector<1x2x32xf32>
    %508 = vector.shape_cast %507 : vector<1x2x32xf32> to vector<2x32xf32>
    %509 = vector.shape_cast %506 : vector<2x32xf32> to vector<1x2x32xf32>
    tpu.vector_store %arg7[%c5_143, %c0_144, %c0_145], %509 {strides = array<i32>} : memref<8x2x32xf32, #tpu.memory_space<vmem>>, vector<1x2x32xf32>,
    %c0_i32_146 = arith.constant 0 : i32
    %510 = arith.subi %c0_i32_146, %arg1 : i32
    %c8_i32_147 = arith.constant 8 : i32
    %511 = arith.muli %510, %c8_i32_147 : i32
    %c2_i32_148 = arith.constant 2 : i32
    %512 = arith.addi %511, %c2_i32_148 : i32
    %c2_149 = arith.constant 2 : index
    %c0_150 = arith.constant 0 : index
    %c0_151 = arith.constant 0 : index
    %513 = vector.load %arg4[%c2_149, %c0_150, %c0_151] : memref<8x2x128xbf16, #tpu.memory_space<vmem>>, vector<1x2x128xbf16>
    %514 = vector.shape_cast %513 : vector<1x2x128xbf16> to vector<2x128xbf16>
    %cst_152 = arith.constant dense<0.000000e+00> : vector<2x128xf32>
    %515 = tpu.matmul %457, %5, %cst_152 {dimension_numbers = #tpu.dot_dimension_numbers<[1], [0], [0], [1], [0, 0, 1, 1], [], []>} : vector<2x32xbf16>, vector<32x128xbf16>, vector<2x128xf32> -> vector<2x128xf32>
    %516 = arith.extf %514 : vector<2x128xbf16> to vector<2x128xf32>
    %517 = arith.addf %515, %516 : vector<2x128xf32>
    %518 = vector.extract_strided_slice %517 {offsets = [0, 0], sizes = [2, 32], strides = [1, 1]} : vector<2x128xf32> to vector<2x32xf32>
    %519 = arith.negf %518 : vector<2x32xf32>
    %520 = math.exp %519 : vector<2x32xf32>
    %cst_153 = arith.constant 1.000000e+00 : f32
    %521 = vector.broadcast %cst_153 : f32 to vector<2x32xf32>
    %522 = arith.addf %521, %520 : vector<2x32xf32>
    %523 = arith.divf %521, %522 : vector<2x32xf32>
    %524 = vector.extract_strided_slice %517 {offsets = [0, 32], sizes = [2, 32], strides = [1, 1]} : vector<2x128xf32> to vector<2x32xf32>
    %525 = arith.negf %524 : vector<2x32xf32>
    %526 = math.exp %525 : vector<2x32xf32>
    %cst_154 = arith.constant 1.000000e+00 : f32
    %527 = vector.broadcast %cst_154 : f32 to vector<2x32xf32>
    %528 = arith.addf %527, %526 : vector<2x32xf32>
    %529 = arith.divf %527, %528 : vector<2x32xf32>
    %530 = vector.extract_strided_slice %517 {offsets = [0, 64], sizes = [2, 32], strides = [1, 1]} : vector<2x128xf32> to vector<2x32xf32>
    %531 = math.tanh %530 : vector<2x32xf32>
    %532 = vector.extract_strided_slice %517 {offsets = [0, 96], sizes = [2, 32], strides = [1, 1]} : vector<2x128xf32> to vector<2x32xf32>
    %533 = arith.negf %532 : vector<2x32xf32>
    %534 = math.exp %533 : vector<2x32xf32>
    %cst_155 = arith.constant 1.000000e+00 : f32
    %535 = vector.broadcast %cst_155 : f32 to vector<2x32xf32>
    %536 = arith.addf %535, %534 : vector<2x32xf32>
    %537 = arith.divf %535, %536 : vector<2x32xf32>
    %538 = arith.mulf %529, %458 : vector<2x32xf32>
    %539 = arith.mulf %523, %531 : vector<2x32xf32>
    %540 = arith.addf %538, %539 : vector<2x32xf32>
    %541 = math.tanh %540 : vector<2x32xf32>
    %542 = arith.mulf %537, %541 : vector<2x32xf32>
    %543 = arith.truncf %542 : vector<2x32xf32> to vector<2x32xbf16>
    %544 = vector.broadcast %512 : i32 to vector<2x1xi32>
    %545 = arith.cmpi slt, %544, %3 : vector<2x1xi32>
    %546 = vector.shape_cast %545 : vector<2x1xi1> to vector<2x1xi1>
    %547 = vector.broadcast %546 : vector<2x1xi1> to vector<2x32xi1>
    %548 = arith.select %547, %543, %457 : vector<2x32xi1>, vector<2x32xbf16>
    %549 = arith.select %547, %540, %458 : vector<2x32xi1>, vector<2x32xf32>
    %cst_156 = arith.constant 0.000000e+00 : bf16
    %550 = vector.broadcast %cst_156 : bf16 to vector<2x32xbf16>
    %551 = arith.select %547, %543, %550 : vector<2x32xi1>, vector<2x32xbf16>
    %552 = arith.extf %551 : vector<2x32xbf16> to vector<2x32xf32>
    %c2_157 = arith.constant 2 : index
    %c0_158 = arith.constant 0 : index
    %c0_159 = arith.constant 0 : index
    %553 = vector.load %arg8[%c2_157, %c0_158, %c0_159] : memref<8x2x32xf32, #tpu.memory_space<vmem>>, vector<1x2x32xf32>
    %554 = vector.shape_cast %553 : vector<1x2x32xf32> to vector<2x32xf32>
    %555 = vector.shape_cast %552 : vector<2x32xf32> to vector<1x2x32xf32>
    tpu.vector_store %arg8[%c2_157, %c0_158, %c0_159], %555 {strides = array<i32>} : memref<8x2x32xf32, #tpu.memory_space<vmem>>, vector<1x2x32xf32>,
    %c8_i32_160 = arith.constant 8 : i32
    %556 = arith.muli %arg1, %c8_i32_160 : i32
    %c6_i32_161 = arith.constant 6 : i32
    %557 = arith.addi %556, %c6_i32_161 : i32
    %c6_162 = arith.constant 6 : index
    %c0_163 = arith.constant 0 : index
    %c0_164 = arith.constant 0 : index
    %558 = vector.load %arg3[%c6_162, %c0_163, %c0_164] : memref<8x2x128xbf16, #tpu.memory_space<vmem>>, vector<1x2x128xbf16>
    %559 = vector.shape_cast %558 : vector<1x2x128xbf16> to vector<2x128xbf16>
    %cst_165 = arith.constant dense<0.000000e+00> : vector<2x128xf32>
    %560 = tpu.matmul %502, %4, %cst_165 {dimension_numbers = #tpu.dot_dimension_numbers<[1], [0], [0], [1], [0, 0, 1, 1], [], []>} : vector<2x32xbf16>, vector<32x128xbf16>, vector<2x128xf32> -> vector<2x128xf32>
    %561 = arith.extf %559 : vector<2x128xbf16> to vector<2x128xf32>
    %562 = arith.addf %560, %561 : vector<2x128xf32>
    %563 = vector.extract_strided_slice %562 {offsets = [0, 0], sizes = [2, 32], strides = [1, 1]} : vector<2x128xf32> to vector<2x32xf32>
    %564 = arith.negf %563 : vector<2x32xf32>
    %565 = math.exp %564 : vector<2x32xf32>
    %cst_166 = arith.constant 1.000000e+00 : f32
    %566 = vector.broadcast %cst_166 : f32 to vector<2x32xf32>
    %567 = arith.addf %566, %565 : vector<2x32xf32>
    %568 = arith.divf %566, %567 : vector<2x32xf32>
    %569 = vector.extract_strided_slice %562 {offsets = [0, 32], sizes = [2, 32], strides = [1, 1]} : vector<2x128xf32> to vector<2x32xf32>
    %570 = arith.negf %569 : vector<2x32xf32>
    %571 = math.exp %570 : vector<2x32xf32>
    %cst_167 = arith.constant 1.000000e+00 : f32
    %572 = vector.broadcast %cst_167 : f32 to vector<2x32xf32>
    %573 = arith.addf %572, %571 : vector<2x32xf32>
    %574 = arith.divf %572, %573 : vector<2x32xf32>
    %575 = vector.extract_strided_slice %562 {offsets = [0, 64], sizes = [2, 32], strides = [1, 1]} : vector<2x128xf32> to vector<2x32xf32>
    %576 = math.tanh %575 : vector<2x32xf32>
    %577 = vector.extract_strided_slice %562 {offsets = [0, 96], sizes = [2, 32], strides = [1, 1]} : vector<2x128xf32> to vector<2x32xf32>
    %578 = arith.negf %577 : vector<2x32xf32>
    %579 = math.exp %578 : vector<2x32xf32>
    %cst_168 = arith.constant 1.000000e+00 : f32
    %580 = vector.broadcast %cst_168 : f32 to vector<2x32xf32>
    %581 = arith.addf %580, %579 : vector<2x32xf32>
    %582 = arith.divf %580, %581 : vector<2x32xf32>
    %583 = arith.mulf %574, %503 : vector<2x32xf32>
    %584 = arith.mulf %568, %576 : vector<2x32xf32>
    %585 = arith.addf %583, %584 : vector<2x32xf32>
    %586 = math.tanh %585 : vector<2x32xf32>
    %587 = arith.mulf %582, %586 : vector<2x32xf32>
    %588 = arith.truncf %587 : vector<2x32xf32> to vector<2x32xbf16>
    %589 = vector.broadcast %557 : i32 to vector<2x1xi32>
    %590 = arith.cmpi slt, %589, %3 : vector<2x1xi32>
    %591 = vector.shape_cast %590 : vector<2x1xi1> to vector<2x1xi1>
    %592 = vector.broadcast %591 : vector<2x1xi1> to vector<2x32xi1>
    %593 = arith.select %592, %588, %502 : vector<2x32xi1>, vector<2x32xbf16>
    %594 = arith.select %592, %585, %503 : vector<2x32xi1>, vector<2x32xf32>
    %cst_169 = arith.constant 0.000000e+00 : bf16
    %595 = vector.broadcast %cst_169 : bf16 to vector<2x32xbf16>
    %596 = arith.select %592, %588, %595 : vector<2x32xi1>, vector<2x32xbf16>
    %597 = arith.extf %596 : vector<2x32xbf16> to vector<2x32xf32>
    %c6_170 = arith.constant 6 : index
    %c0_171 = arith.constant 0 : index
    %c0_172 = arith.constant 0 : index
    %598 = vector.load %arg7[%c6_170, %c0_171, %c0_172] : memref<8x2x32xf32, #tpu.memory_space<vmem>>, vector<1x2x32xf32>
    %599 = vector.shape_cast %598 : vector<1x2x32xf32> to vector<2x32xf32>
    %600 = vector.shape_cast %597 : vector<2x32xf32> to vector<1x2x32xf32>
    tpu.vector_store %arg7[%c6_170, %c0_171, %c0_172], %600 {strides = array<i32>} : memref<8x2x32xf32, #tpu.memory_space<vmem>>, vector<1x2x32xf32>,
    %c0_i32_173 = arith.constant 0 : i32
    %601 = arith.subi %c0_i32_173, %arg1 : i32
    %c8_i32_174 = arith.constant 8 : i32
    %602 = arith.muli %601, %c8_i32_174 : i32
    %c1_i32_175 = arith.constant 1 : i32
    %603 = arith.addi %602, %c1_i32_175 : i32
    %c1_176 = arith.constant 1 : index
    %c0_177 = arith.constant 0 : index
    %c0_178 = arith.constant 0 : index
    %604 = vector.load %arg4[%c1_176, %c0_177, %c0_178] : memref<8x2x128xbf16, #tpu.memory_space<vmem>>, vector<1x2x128xbf16>
    %605 = vector.shape_cast %604 : vector<1x2x128xbf16> to vector<2x128xbf16>
    %cst_179 = arith.constant dense<0.000000e+00> : vector<2x128xf32>
    %606 = tpu.matmul %548, %5, %cst_179 {dimension_numbers = #tpu.dot_dimension_numbers<[1], [0], [0], [1], [0, 0, 1, 1], [], []>} : vector<2x32xbf16>, vector<32x128xbf16>, vector<2x128xf32> -> vector<2x128xf32>
    %607 = arith.extf %605 : vector<2x128xbf16> to vector<2x128xf32>
    %608 = arith.addf %606, %607 : vector<2x128xf32>
    %609 = vector.extract_strided_slice %608 {offsets = [0, 0], sizes = [2, 32], strides = [1, 1]} : vector<2x128xf32> to vector<2x32xf32>
    %610 = arith.negf %609 : vector<2x32xf32>
    %611 = math.exp %610 : vector<2x32xf32>
    %cst_180 = arith.constant 1.000000e+00 : f32
    %612 = vector.broadcast %cst_180 : f32 to vector<2x32xf32>
    %613 = arith.addf %612, %611 : vector<2x32xf32>
    %614 = arith.divf %612, %613 : vector<2x32xf32>
    %615 = vector.extract_strided_slice %608 {offsets = [0, 32], sizes = [2, 32], strides = [1, 1]} : vector<2x128xf32> to vector<2x32xf32>
    %616 = arith.negf %615 : vector<2x32xf32>
    %617 = math.exp %616 : vector<2x32xf32>
    %cst_181 = arith.constant 1.000000e+00 : f32
    %618 = vector.broadcast %cst_181 : f32 to vector<2x32xf32>
    %619 = arith.addf %618, %617 : vector<2x32xf32>
    %620 = arith.divf %618, %619 : vector<2x32xf32>
    %621 = vector.extract_strided_slice %608 {offsets = [0, 64], sizes = [2, 32], strides = [1, 1]} : vector<2x128xf32> to vector<2x32xf32>
    %622 = math.tanh %621 : vector<2x32xf32>
    %623 = vector.extract_strided_slice %608 {offsets = [0, 96], sizes = [2, 32], strides = [1, 1]} : vector<2x128xf32> to vector<2x32xf32>
    %624 = arith.negf %623 : vector<2x32xf32>
    %625 = math.exp %624 : vector<2x32xf32>
    %cst_182 = arith.constant 1.000000e+00 : f32
    %626 = vector.broadcast %cst_182 : f32 to vector<2x32xf32>
    %627 = arith.addf %626, %625 : vector<2x32xf32>
    %628 = arith.divf %626, %627 : vector<2x32xf32>
    %629 = arith.mulf %620, %549 : vector<2x32xf32>
    %630 = arith.mulf %614, %622 : vector<2x32xf32>
    %631 = arith.addf %629, %630 : vector<2x32xf32>
    %632 = math.tanh %631 : vector<2x32xf32>
    %633 = arith.mulf %628, %632 : vector<2x32xf32>
    %634 = arith.truncf %633 : vector<2x32xf32> to vector<2x32xbf16>
    %635 = vector.broadcast %603 : i32 to vector<2x1xi32>
    %636 = arith.cmpi slt, %635, %3 : vector<2x1xi32>
    %637 = vector.shape_cast %636 : vector<2x1xi1> to vector<2x1xi1>
    %638 = vector.broadcast %637 : vector<2x1xi1> to vector<2x32xi1>
    %639 = arith.select %638, %634, %548 : vector<2x32xi1>, vector<2x32xbf16>
    %640 = arith.select %638, %631, %549 : vector<2x32xi1>, vector<2x32xf32>
    %cst_183 = arith.constant 0.000000e+00 : bf16
    %641 = vector.broadcast %cst_183 : bf16 to vector<2x32xbf16>
    %642 = arith.select %638, %634, %641 : vector<2x32xi1>, vector<2x32xbf16>
    %643 = arith.extf %642 : vector<2x32xbf16> to vector<2x32xf32>
    %c1_184 = arith.constant 1 : index
    %c0_185 = arith.constant 0 : index
    %c0_186 = arith.constant 0 : index
    %644 = vector.load %arg8[%c1_184, %c0_185, %c0_186] : memref<8x2x32xf32, #tpu.memory_space<vmem>>, vector<1x2x32xf32>
    %645 = vector.shape_cast %644 : vector<1x2x32xf32> to vector<2x32xf32>
    %646 = vector.shape_cast %643 : vector<2x32xf32> to vector<1x2x32xf32>
    tpu.vector_store %arg8[%c1_184, %c0_185, %c0_186], %646 {strides = array<i32>} : memref<8x2x32xf32, #tpu.memory_space<vmem>>, vector<1x2x32xf32>,
    %c8_i32_187 = arith.constant 8 : i32
    %647 = arith.muli %arg1, %c8_i32_187 : i32
    %c7_i32_188 = arith.constant 7 : i32
    %648 = arith.addi %647, %c7_i32_188 : i32
    %c7_189 = arith.constant 7 : index
    %c0_190 = arith.constant 0 : index
    %c0_191 = arith.constant 0 : index
    %649 = vector.load %arg3[%c7_189, %c0_190, %c0_191] : memref<8x2x128xbf16, #tpu.memory_space<vmem>>, vector<1x2x128xbf16>
    %650 = vector.shape_cast %649 : vector<1x2x128xbf16> to vector<2x128xbf16>
    %cst_192 = arith.constant dense<0.000000e+00> : vector<2x128xf32>
    %651 = tpu.matmul %593, %4, %cst_192 {dimension_numbers = #tpu.dot_dimension_numbers<[1], [0], [0], [1], [0, 0, 1, 1], [], []>} : vector<2x32xbf16>, vector<32x128xbf16>, vector<2x128xf32> -> vector<2x128xf32>
    %652 = arith.extf %650 : vector<2x128xbf16> to vector<2x128xf32>
    %653 = arith.addf %651, %652 : vector<2x128xf32>
    %654 = vector.extract_strided_slice %653 {offsets = [0, 0], sizes = [2, 32], strides = [1, 1]} : vector<2x128xf32> to vector<2x32xf32>
    %655 = arith.negf %654 : vector<2x32xf32>
    %656 = math.exp %655 : vector<2x32xf32>
    %cst_193 = arith.constant 1.000000e+00 : f32
    %657 = vector.broadcast %cst_193 : f32 to vector<2x32xf32>
    %658 = arith.addf %657, %656 : vector<2x32xf32>
    %659 = arith.divf %657, %658 : vector<2x32xf32>
    %660 = vector.extract_strided_slice %653 {offsets = [0, 32], sizes = [2, 32], strides = [1, 1]} : vector<2x128xf32> to vector<2x32xf32>
    %661 = arith.negf %660 : vector<2x32xf32>
    %662 = math.exp %661 : vector<2x32xf32>
    %cst_194 = arith.constant 1.000000e+00 : f32
    %663 = vector.broadcast %cst_194 : f32 to vector<2x32xf32>
    %664 = arith.addf %663, %662 : vector<2x32xf32>
    %665 = arith.divf %663, %664 : vector<2x32xf32>
    %666 = vector.extract_strided_slice %653 {offsets = [0, 64], sizes = [2, 32], strides = [1, 1]} : vector<2x128xf32> to vector<2x32xf32>
    %667 = math.tanh %666 : vector<2x32xf32>
    %668 = vector.extract_strided_slice %653 {offsets = [0, 96], sizes = [2, 32], strides = [1, 1]} : vector<2x128xf32> to vector<2x32xf32>
    %669 = arith.negf %668 : vector<2x32xf32>
    %670 = math.exp %669 : vector<2x32xf32>
    %cst_195 = arith.constant 1.000000e+00 : f32
    %671 = vector.broadcast %cst_195 : f32 to vector<2x32xf32>
    %672 = arith.addf %671, %670 : vector<2x32xf32>
    %673 = arith.divf %671, %672 : vector<2x32xf32>
    %674 = arith.mulf %665, %594 : vector<2x32xf32>
    %675 = arith.mulf %659, %667 : vector<2x32xf32>
    %676 = arith.addf %674, %675 : vector<2x32xf32>
    %677 = math.tanh %676 : vector<2x32xf32>
    %678 = arith.mulf %673, %677 : vector<2x32xf32>
    %679 = arith.truncf %678 : vector<2x32xf32> to vector<2x32xbf16>
    %680 = vector.broadcast %648 : i32 to vector<2x1xi32>
    %681 = arith.cmpi slt, %680, %3 : vector<2x1xi32>
    %682 = vector.shape_cast %681 : vector<2x1xi1> to vector<2x1xi1>
    %683 = vector.broadcast %682 : vector<2x1xi1> to vector<2x32xi1>
    %684 = arith.select %683, %679, %593 : vector<2x32xi1>, vector<2x32xbf16>
    %685 = arith.select %683, %676, %594 : vector<2x32xi1>, vector<2x32xf32>
    %cst_196 = arith.constant 0.000000e+00 : bf16
    %686 = vector.broadcast %cst_196 : bf16 to vector<2x32xbf16>
    %687 = arith.select %683, %679, %686 : vector<2x32xi1>, vector<2x32xbf16>
    %688 = arith.extf %687 : vector<2x32xbf16> to vector<2x32xf32>
    %c7_197 = arith.constant 7 : index
    %c0_198 = arith.constant 0 : index
    %c0_199 = arith.constant 0 : index
    %689 = vector.load %arg7[%c7_197, %c0_198, %c0_199] : memref<8x2x32xf32, #tpu.memory_space<vmem>>, vector<1x2x32xf32>
    %690 = vector.shape_cast %689 : vector<1x2x32xf32> to vector<2x32xf32>
    %691 = vector.shape_cast %688 : vector<2x32xf32> to vector<1x2x32xf32>
    tpu.vector_store %arg7[%c7_197, %c0_198, %c0_199], %691 {strides = array<i32>} : memref<8x2x32xf32, #tpu.memory_space<vmem>>, vector<1x2x32xf32>,
    %c0_i32_200 = arith.constant 0 : i32
    %692 = arith.subi %c0_i32_200, %arg1 : i32
    %c8_i32_201 = arith.constant 8 : i32
    %693 = arith.muli %692, %c8_i32_201 : i32
    %c0_i32_202 = arith.constant 0 : i32
    %694 = arith.addi %693, %c0_i32_202 : i32
    %c0_203 = arith.constant 0 : index
    %c0_204 = arith.constant 0 : index
    %c0_205 = arith.constant 0 : index
    %695 = vector.load %arg4[%c0_203, %c0_204, %c0_205] : memref<8x2x128xbf16, #tpu.memory_space<vmem>>, vector<1x2x128xbf16>
    %696 = vector.shape_cast %695 : vector<1x2x128xbf16> to vector<2x128xbf16>
    %cst_206 = arith.constant dense<0.000000e+00> : vector<2x128xf32>
    %697 = tpu.matmul %639, %5, %cst_206 {dimension_numbers = #tpu.dot_dimension_numbers<[1], [0], [0], [1], [0, 0, 1, 1], [], []>} : vector<2x32xbf16>, vector<32x128xbf16>, vector<2x128xf32> -> vector<2x128xf32>
    %698 = arith.extf %696 : vector<2x128xbf16> to vector<2x128xf32>
    %699 = arith.addf %697, %698 : vector<2x128xf32>
    %700 = vector.extract_strided_slice %699 {offsets = [0, 0], sizes = [2, 32], strides = [1, 1]} : vector<2x128xf32> to vector<2x32xf32>
    %701 = arith.negf %700 : vector<2x32xf32>
    %702 = math.exp %701 : vector<2x32xf32>
    %cst_207 = arith.constant 1.000000e+00 : f32
    %703 = vector.broadcast %cst_207 : f32 to vector<2x32xf32>
    %704 = arith.addf %703, %702 : vector<2x32xf32>
    %705 = arith.divf %703, %704 : vector<2x32xf32>
    %706 = vector.extract_strided_slice %699 {offsets = [0, 32], sizes = [2, 32], strides = [1, 1]} : vector<2x128xf32> to vector<2x32xf32>
    %707 = arith.negf %706 : vector<2x32xf32>
    %708 = math.exp %707 : vector<2x32xf32>
    %cst_208 = arith.constant 1.000000e+00 : f32
    %709 = vector.broadcast %cst_208 : f32 to vector<2x32xf32>
    %710 = arith.addf %709, %708 : vector<2x32xf32>
    %711 = arith.divf %709, %710 : vector<2x32xf32>
    %712 = vector.extract_strided_slice %699 {offsets = [0, 64], sizes = [2, 32], strides = [1, 1]} : vector<2x128xf32> to vector<2x32xf32>
    %713 = math.tanh %712 : vector<2x32xf32>
    %714 = vector.extract_strided_slice %699 {offsets = [0, 96], sizes = [2, 32], strides = [1, 1]} : vector<2x128xf32> to vector<2x32xf32>
    %715 = arith.negf %714 : vector<2x32xf32>
    %716 = math.exp %715 : vector<2x32xf32>
    %cst_209 = arith.constant 1.000000e+00 : f32
    %717 = vector.broadcast %cst_209 : f32 to vector<2x32xf32>
    %718 = arith.addf %717, %716 : vector<2x32xf32>
    %719 = arith.divf %717, %718 : vector<2x32xf32>
    %720 = arith.mulf %711, %640 : vector<2x32xf32>
    %721 = arith.mulf %705, %713 : vector<2x32xf32>
    %722 = arith.addf %720, %721 : vector<2x32xf32>
    %723 = math.tanh %722 : vector<2x32xf32>
    %724 = arith.mulf %719, %723 : vector<2x32xf32>
    %725 = arith.truncf %724 : vector<2x32xf32> to vector<2x32xbf16>
    %726 = vector.broadcast %694 : i32 to vector<2x1xi32>
    %727 = arith.cmpi slt, %726, %3 : vector<2x1xi32>
    %728 = vector.shape_cast %727 : vector<2x1xi1> to vector<2x1xi1>
    %729 = vector.broadcast %728 : vector<2x1xi1> to vector<2x32xi1>
    %730 = arith.select %729, %725, %639 : vector<2x32xi1>, vector<2x32xbf16>
    %731 = arith.select %729, %722, %640 : vector<2x32xi1>, vector<2x32xf32>
    %cst_210 = arith.constant 0.000000e+00 : bf16
    %732 = vector.broadcast %cst_210 : bf16 to vector<2x32xbf16>
    %733 = arith.select %729, %725, %732 : vector<2x32xi1>, vector<2x32xbf16>
    %734 = arith.extf %733 : vector<2x32xbf16> to vector<2x32xf32>
    %c0_211 = arith.constant 0 : index
    %c0_212 = arith.constant 0 : index
    %c0_213 = arith.constant 0 : index
    %735 = vector.load %arg8[%c0_211, %c0_212, %c0_213] : memref<8x2x32xf32, #tpu.memory_space<vmem>>, vector<1x2x32xf32>
    %736 = vector.shape_cast %735 : vector<1x2x32xf32> to vector<2x32xf32>
    %737 = vector.shape_cast %734 : vector<2x32xf32> to vector<1x2x32xf32>
    tpu.vector_store %arg8[%c0_211, %c0_212, %c0_213], %737 {strides = array<i32>} : memref<8x2x32xf32, #tpu.memory_space<vmem>>, vector<1x2x32xf32>,
    %c0_214 = arith.constant 0 : index
    %c0_215 = arith.constant 0 : index
    %738 = vector.load %arg11[%c0_214, %c0_215] : memref<2x32xbf16, #tpu.memory_space<vmem>>, vector<2x32xbf16>
    tpu.vector_store %arg11[%c0_214, %c0_215], %684 {strides = array<i32>} : memref<2x32xbf16, #tpu.memory_space<vmem>>, vector<2x32xbf16>,
    %c0_216 = arith.constant 0 : index
    %c0_217 = arith.constant 0 : index
    %739 = vector.load %arg12[%c0_216, %c0_217] : memref<2x32xf32, #tpu.memory_space<vmem>>, vector<2x32xf32>
    tpu.vector_store %arg12[%c0_216, %c0_217], %685 {strides = array<i32>} : memref<2x32xf32, #tpu.memory_space<vmem>>, vector<2x32xf32>,
    %c0_218 = arith.constant 0 : index
    %c0_219 = arith.constant 0 : index
    %740 = vector.load %arg13[%c0_218, %c0_219] : memref<2x32xbf16, #tpu.memory_space<vmem>>, vector<2x32xbf16>
    tpu.vector_store %arg13[%c0_218, %c0_219], %730 {strides = array<i32>} : memref<2x32xbf16, #tpu.memory_space<vmem>>, vector<2x32xbf16>,
    %c0_220 = arith.constant 0 : index
    %c0_221 = arith.constant 0 : index
    %741 = vector.load %arg14[%c0_220, %c0_221] : memref<2x32xf32, #tpu.memory_space<vmem>>, vector<2x32xf32>
    tpu.vector_store %arg14[%c0_220, %c0_221], %731 {strides = array<i32>} : memref<2x32xf32, #tpu.memory_space<vmem>>, vector<2x32xf32>,
    %c0_i32_222 = arith.constant 0 : i32
    %742 = arith.cmpi eq, %arg1, %c0_i32_222 : i32
    %743 = arith.extui %742 : i1 to i32
    %c0_i32_223 = arith.constant 0 : i32
    %744 = arith.cmpi ne, %743, %c0_i32_223 : i32
    scf.if %744 {
      %745 = arith.extf %684 : vector<2x32xbf16> to vector<2x32xf32>
      %c0_224 = arith.constant 0 : index
      %c0_225 = arith.constant 0 : index
      %c0_226 = arith.constant 0 : index
      %746 = vector.load %arg9[%c0_224, %c0_225, %c0_226] : memref<2x2x32xf32, #tpu.memory_space<vmem>>, vector<1x2x32xf32>
      %747 = vector.shape_cast %746 : vector<1x2x32xf32> to vector<2x32xf32>
      %748 = vector.shape_cast %745 : vector<2x32xf32> to vector<1x2x32xf32>
      tpu.vector_store %arg9[%c0_224, %c0_225, %c0_226], %748 {strides = array<i32>} : memref<2x2x32xf32, #tpu.memory_space<vmem>>, vector<1x2x32xf32>,
      %749 = arith.extf %730 : vector<2x32xbf16> to vector<2x32xf32>
      %c1_227 = arith.constant 1 : index
      %c0_228 = arith.constant 0 : index
      %c0_229 = arith.constant 0 : index
      %750 = vector.load %arg9[%c1_227, %c0_228, %c0_229] : memref<2x2x32xf32, #tpu.memory_space<vmem>>, vector<1x2x32xf32>
      %751 = vector.shape_cast %750 : vector<1x2x32xf32> to vector<2x32xf32>
      %752 = vector.shape_cast %749 : vector<2x32xf32> to vector<1x2x32xf32>
      tpu.vector_store %arg9[%c1_227, %c0_228, %c0_229], %752 {strides = array<i32>} : memref<2x2x32xf32, #tpu.memory_space<vmem>>, vector<1x2x32xf32>,
      %c0_230 = arith.constant 0 : index
      %c0_231 = arith.constant 0 : index
      %c0_232 = arith.constant 0 : index
      %753 = vector.load %arg10[%c0_230, %c0_231, %c0_232] : memref<2x2x32xf32, #tpu.memory_space<vmem>>, vector<1x2x32xf32>
      %754 = vector.shape_cast %753 : vector<1x2x32xf32> to vector<2x32xf32>
      %755 = vector.shape_cast %685 : vector<2x32xf32> to vector<1x2x32xf32>
      tpu.vector_store %arg10[%c0_230, %c0_231, %c0_232], %755 {strides = array<i32>} : memref<2x2x32xf32, #tpu.memory_space<vmem>>, vector<1x2x32xf32>,
      %c1_233 = arith.constant 1 : index
      %c0_234 = arith.constant 0 : index
      %c0_235 = arith.constant 0 : index
      %756 = vector.load %arg10[%c1_233, %c0_234, %c0_235] : memref<2x2x32xf32, #tpu.memory_space<vmem>>, vector<1x2x32xf32>
      %757 = vector.shape_cast %756 : vector<1x2x32xf32> to vector<2x32xf32>
      %758 = vector.shape_cast %731 : vector<2x32xf32> to vector<1x2x32xf32>
      tpu.vector_store %arg10[%c1_233, %c0_234, %c0_235], %758 {strides = array<i32>} : memref<2x2x32xf32, #tpu.memory_space<vmem>>, vector<1x2x32xf32>,
    } else {
    }
    return
  }
  func.func @transform_0(%arg0: i32, %arg1: i32) -> (i32, i32) {
    %c0_i32 = arith.constant 0 : i32
    %c0_i32_0 = arith.constant 0 : i32
    return %arg0, %c0_i32 : i32, i32
  }
  func.func @transform_1(%arg0: i32, %arg1: i32) -> (i32, i32, i32) {
    %c0_i32 = arith.constant 0 : i32
    %c0_i32_0 = arith.constant 0 : i32
    return %arg1, %arg0, %c0_i32 : i32, i32, i32
  }
  func.func @transform_2(%arg0: i32, %arg1: i32) -> (i32, i32, i32) {
    %c0_i32 = arith.constant 0 : i32
    %0 = arith.subi %c0_i32, %arg1 : i32
    %c1_i32 = arith.constant 1 : i32
    %c0_i32_0 = arith.constant 0 : i32
    return %0, %arg0, %c1_i32 : i32, i32, i32
  }
  func.func @transform_5(%arg0: i32, %arg1: i32) -> (i32, i32, i32) {
    %c0_i32 = arith.constant 0 : i32
    %c0_i32_0 = arith.constant 0 : i32
    return %arg1, %arg0, %c0_i32 : i32, i32, i32
  }
  func.func @transform_6(%arg0: i32, %arg1: i32) -> (i32, i32, i32) {
    %c0_i32 = arith.constant 0 : i32
    %0 = arith.subi %c0_i32, %arg1 : i32
    %c0_i32_0 = arith.constant 0 : i32
    %c0_i32_1 = arith.constant 0 : i32
    return %0, %arg0, %c0_i32_0 : i32, i32, i32
  }
  func.func @transform_7(%arg0: i32, %arg1: i32) -> (i32, i32, i32) {
    %c0_i32 = arith.constant 0 : i32
    %c0_i32_0 = arith.constant 0 : i32
    %c0_i32_1 = arith.constant 0 : i32
    return %c0_i32, %arg0, %c0_i32_0 : i32, i32, i32
  }
  func.func @transform_8(%arg0: i32, %arg1: i32) -> (i32, i32, i32) {
    %c0_i32 = arith.constant 0 : i32
    %c0_i32_0 = arith.constant 0 : i32
    %c0_i32_1 = arith.constant 0 : i32
    return %c0_i32, %arg0, %c0_i32_0 : i32, i32, i32
  }
}

</mosaic_0001>

<llo_original>
// kernel: encoder_forward.2
$region0: #{encoder_forward.2}
  #allocation0 [shape = 'u32[]', space=smem, size = 0x4, offset = 0x4, fixed_abs, tag = 'smem constant byte address 0x4 - core index']
  #allocation1 [shape = 'u32[144,128]{1,0:T(1,128)}', space=vmem, size = 0x12000, scoped, tag = 'internal scratch']
  #allocation2 [shape = 'bf16[2,32]{1,0:T(2,128)(2,1)}', space=vmem, size = 0x200, scoped, tag = 'scratch operand']
  #allocation3 [shape = 'f32[2,32]{1,0:T(2,128)}', space=vmem, size = 0x400, scoped, tag = 'scratch operand']
  #allocation4 [shape = 'bf16[2,32]{1,0:T(2,128)(2,1)}', space=vmem, size = 0x200, scoped, tag = 'scratch operand']
  #allocation5 [shape = 'f32[2,32]{1,0:T(2,128)}', space=vmem, size = 0x400, scoped, tag = 'scratch operand']
  #allocation6 [shape = 'bf16[32,128]{1,0:T(16,128)(2,1)}', space=vmem, size = 0x2000, scoped, tag = 'scratch operand']
  #allocation7 [shape = 'bf16[32,128]{1,0:T(16,128)(2,1)}', space=vmem, size = 0x2000, scoped, tag = 'scratch operand']
  #allocation8 [shape = 's32[2]{0}', space=sflag, size = 0x8, scoped, tag = 'scratch operand']
  #allocation11 [shape = 's32[]', space=sflag, size = 0x4, offset = 0, fixed_abs, tag = 'sflag constant byte address 0x0 - dummy sync flag']
  #allocation12 [shape = 's32[]', space=sflag, size = 0x4, offset = 0, fixed_abs, tag = 'sflag constant byte address 0x0 - dummy sync flag']
  %s0 = inlined_call_operand.vmem [shape: s32[2,1], index: 0, kind: input, shape index: {}]
  %s1 = inlined_call_operand.vmem [shape: bf16[8,2,256], index: 1, kind: input, shape index: {}, may-alias: {1,2}]
  %s2 = inlined_call_operand.vmem [shape: bf16[8,2,256], index: 2, kind: input, shape index: {}, may-alias: {1,2}]
  %s3 = inlined_call_operand.vmem [shape: bf16[32,128], index: 3, kind: input, shape index: {}]
  %s4 = inlined_call_operand.vmem [shape: bf16[32,128], index: 4, kind: input, shape index: {}]
  %s5 = inlined_call_operand.vmem [shape: bf16[8,2,32], index: 5, kind: output, shape index: {0}]
  %s6 = inlined_call_operand.vmem [shape: bf16[8,2,32], index: 6, kind: output, shape index: {1}]
  %s7 = inlined_call_operand.vmem [shape: f32[2,2,32], index: 7, kind: output, shape index: {2}]
  %s8 = inlined_call_operand.vmem [shape: f32[2,2,32], index: 8, kind: output, shape index: {3}]
  %9 = xla_tuple %s5, %s6, %s7, %s8
  %s10 = sld [smem:[#allocation0]]
  $region204: #{encoder_forward.2} parent=0
    _
  %s12 = ssub.s32 1, %s10
  %s13 = scalar_select 0, %s12, %s10
  $region1: #{encoder_forward.2} parent=0
    #allocation9 [shape = 'u8[4096]{0}', space=vmem, size = 0x1000, scoped, tag = 'input window, operand 1, single buffered']
    #allocation10 [shape = 'u8[4096]{0}', space=vmem, size = 0x1000, scoped, tag = 'input window, operand 2, single buffered']
    // Predicated region
    $region2: #{encoder_forward.2} parent=1 // pred_check
      _
    $region3: #{encoder_forward.2} parent=1 // pred_check_branch
      %15 = sbr.rel (0) target = $region5
    $region4: #{encoder_forward.2} parent=1 // pred_region
      _
    $region5: #{encoder_forward.2} parent=1 // pred_fallthru
      _
    // Predicated region
    $region6: #{encoder_forward.2} parent=1 // pred_check
      _
    $region7: #{encoder_forward.2} parent=1 // pred_check_branch
      %17 = sbr.rel (0) target = $region9
    $region8: #{encoder_forward.2} parent=1 // pred_region
      // Predicated region
      $region10: #{encoder_forward.2} parent=8 // pred_check
        _
      $region11: #{encoder_forward.2} parent=8 // pred_check_branch
        %19 = sbr.rel (0) target = $region13
      $region12: #{encoder_forward.2} parent=8 // pred_region
        // Predicated region
        $region14: #{encoder_forward.2} parent=12 // pred_check
          _
        $region15: #{encoder_forward.2} parent=12 // pred_check_branch
          %21 = sbr.rel target = $region17
        $region16: #{encoder_forward.2} parent=12 // pred_region
          // Predicated region
          $region29: #{encoder_forward.2} parent=16 // pred_check
            _
          $region30: #{encoder_forward.2} parent=16 // pred_check_branch
            %50 = sbr.rel (0) target = $region32
          $region31: #{encoder_forward.2} parent=16 // pred_region
            loop: start=0, step=1, limit=1
            $region33: #{encoder_forward.2} parent=31 // loop_pre_header
              _
            $region34: #{encoder_forward.2} parent=31 // loop_header
              %s52 = sphi 0, %s56
              %p53 = scmp.ge.s32.totalorder %s52, 1
              %s57 = sphi %s1, %s1
              %s58 = sphi [#allocation9], [#allocation9]
            $region35: #{encoder_forward.2} parent=31 // loop_header_branch
              %55 = sbr.rel (%p53) target = $region39
            $region36: #{encoder_forward.2} parent=31 // loop_body
              _
            $region37: #{encoder_forward.2} parent=31 // loop_footer
              %s56 = sadd.s32 1, %s52
            $region38: #{encoder_forward.2} parent=31 // loop_footer_branch
              %51 = sbr.rel target = $region34
            $region39: #{encoder_forward.2} parent=31 // loop_exit
              _
            loop: start=0, step=1, limit=1
            $region40: #{encoder_forward.2} parent=31 // loop_pre_header
              _
            $region41: #{encoder_forward.2} parent=31 // loop_header
              %s61 = sphi 0, %s65
              %p62 = scmp.ge.s32.totalorder %s61, 1
              %s66 = sphi %s1, %s1
              %s67 = sphi [#allocation9], [#allocation9]
            $region42: #{encoder_forward.2} parent=31 // loop_header_branch
              %64 = sbr.rel (%p62) target = $region46
            $region43: #{encoder_forward.2} parent=31 // loop_body
              %v68 = vld [vmem:[%s66] sm:$0x1]
              %69 = vst [vmem:[%s67] sm:$0x1] %v68
              %v70 = vld [vmem:[%s66 + $0x2] sm:$0x1]
              %71 = vst [vmem:[%s67 + $0x1] sm:$0x1] %v70
              %v72 = vld [vmem:[%s66 + $0x4] sm:$0x1]
              %73 = vst [vmem:[%s67 + $0x2] sm:$0x1] %v72
              %v74 = vld [vmem:[%s66 + $0x6] sm:$0x1]
              %75 = vst [vmem:[%s67 + $0x3] sm:$0x1] %v74
              %v76 = vld [vmem:[%s66 + $0x8] sm:$0x1]
              %77 = vst [vmem:[%s67 + $0x4] sm:$0x1] %v76
              %v78 = vld [vmem:[%s66 + $0xa] sm:$0x1]
              %79 = vst [vmem:[%s67 + $0x5] sm:$0x1] %v78
              %v80 = vld [vmem:[%s66 + $0xc] sm:$0x1]
              %81 = vst [vmem:[%s67 + $0x6] sm:$0x1] %v80
              %v82 = vld [vmem:[%s66 + $0xe] sm:$0x1]
              %83 = vst [vmem:[%s67 + $0x7] sm:$0x1] %v82
            $region44: #{encoder_forward.2} parent=31 // loop_footer
              %s65 = sadd.s32 1, %s61
            $region45: #{encoder_forward.2} parent=31 // loop_footer_branch
              %60 = sbr.rel target = $region41
            $region46: #{encoder_forward.2} parent=31 // loop_exit
              _
          $region32: #{encoder_forward.2} parent=16 // pred_fallthru
            _
        $region17: #{encoder_forward.2} parent=12 // pred_fallthru
          _
        // Predicated region
        $region18: #{encoder_forward.2} parent=12 // pred_check
          _
        $region19: #{encoder_forward.2} parent=12 // pred_check_branch
          %23 = sbr.rel (0) target = $region21
        $region20: #{encoder_forward.2} parent=12 // pred_region
          loop: start=0, step=1, limit=1
          $region22: #{encoder_forward.2} parent=20 // loop_pre_header
            _
          $region23: #{encoder_forward.2} parent=20 // loop_header
            %s26 = sphi 0, %s30
            %p27 = scmp.ge.s32.totalorder %s26, 1
            %s31 = sphi %s1, %s1
            %s32 = sphi [#allocation9], [#allocation9]
          $region24: #{encoder_forward.2} parent=20 // loop_header_branch
            %29 = sbr.rel (%p27) target = $region28
          $region25: #{encoder_forward.2} parent=20 // loop_body
            %v33 = vld [vmem:[%s31] sm:$0x1]
            %34 = vst [vmem:[%s32] sm:$0x1] %v33
            %v35 = vld [vmem:[%s31 + $0x2] sm:$0x1]
            %36 = vst [vmem:[%s32 + $0x1] sm:$0x1] %v35
            %v37 = vld [vmem:[%s31 + $0x4] sm:$0x1]
            %38 = vst [vmem:[%s32 + $0x2] sm:$0x1] %v37
            %v39 = vld [vmem:[%s31 + $0x6] sm:$0x1]
            %40 = vst [vmem:[%s32 + $0x3] sm:$0x1] %v39
            %v41 = vld [vmem:[%s31 + $0x8] sm:$0x1]
            %42 = vst [vmem:[%s32 + $0x4] sm:$0x1] %v41
            %v43 = vld [vmem:[%s31 + $0xa] sm:$0x1]
            %44 = vst [vmem:[%s32 + $0x5] sm:$0x1] %v43
            %v45 = vld [vmem:[%s31 + $0xc] sm:$0x1]
            %46 = vst [vmem:[%s32 + $0x6] sm:$0x1] %v45
            %v47 = vld [vmem:[%s31 + $0xe] sm:$0x1]
            %48 = vst [vmem:[%s32 + $0x7] sm:$0x1] %v47
          $region26: #{encoder_forward.2} parent=20 // loop_footer
            %s30 = sadd.s32 1, %s26
          $region27: #{encoder_forward.2} parent=20 // loop_footer_branch
            %25 = sbr.rel target = $region23
          $region28: #{encoder_forward.2} parent=20 // loop_exit
            _
        $region21: #{encoder_forward.2} parent=12 // pred_fallthru
          _
      $region13: #{encoder_forward.2} parent=8 // pred_fallthru
        _
      %84 = vnop
    $region9: #{encoder_forward.2} parent=1 // pred_fallthru
      _
    // Predicated region
    $region47: #{encoder_forward.2} parent=1 // pred_check
      _
    $region48: #{encoder_forward.2} parent=1 // pred_check_branch
      %86 = sbr.rel (0) target = $region50
    $region49: #{encoder_forward.2} parent=1 // pred_region
      %s87 = ssub.s32 0, 0
      %s88 = smul.u32 8, %s87
      %s89 = smul.addr %s88, 2
      %s90 = sadd.s32 1, %s89
      %s91 = scalar_lea.vmem %s2, %s90
      // Predicated region
      $region51: #{encoder_forward.2} parent=49 // pred_check
        _
      $region52: #{encoder_forward.2} parent=49 // pred_check_branch
        %93 = sbr.rel (0) target = $region54
      $region53: #{encoder_forward.2} parent=49 // pred_region
        // Predicated region
        $region55: #{encoder_forward.2} parent=53 // pred_check
          _
        $region56: #{encoder_forward.2} parent=53 // pred_check_branch
          %95 = sbr.rel target = $region58
        $region57: #{encoder_forward.2} parent=53 // pred_region
          // Predicated region
          $region70: #{encoder_forward.2} parent=57 // pred_check
            _
          $region71: #{encoder_forward.2} parent=57 // pred_check_branch
            %124 = sbr.rel (0) target = $region73
          $region72: #{encoder_forward.2} parent=57 // pred_region
            loop: start=0, step=1, limit=1
            $region74: #{encoder_forward.2} parent=72 // loop_pre_header
              _
            $region75: #{encoder_forward.2} parent=72 // loop_header
              %s126 = sphi 0, %s130
              %p127 = scmp.ge.s32.totalorder %s126, 1
              %s131 = sphi %s91, %s91
              %s132 = sphi [#allocation10], [#allocation10]
            $region76: #{encoder_forward.2} parent=72 // loop_header_branch
              %129 = sbr.rel (%p127) target = $region80
            $region77: #{encoder_forward.2} parent=72 // loop_body
              _
            $region78: #{encoder_forward.2} parent=72 // loop_footer
              %s130 = sadd.s32 1, %s126
            $region79: #{encoder_forward.2} parent=72 // loop_footer_branch
              %125 = sbr.rel target = $region75
            $region80: #{encoder_forward.2} parent=72 // loop_exit
              _
            loop: start=0, step=1, limit=1
            $region81: #{encoder_forward.2} parent=72 // loop_pre_header
              _
            $region82: #{encoder_forward.2} parent=72 // loop_header
              %s135 = sphi 0, %s139
              %p136 = scmp.ge.s32.totalorder %s135, 1
              %s140 = sphi %s91, %s91
              %s141 = sphi [#allocation10], [#allocation10]
            $region83: #{encoder_forward.2} parent=72 // loop_header_branch
              %138 = sbr.rel (%p136) target = $region87
            $region84: #{encoder_forward.2} parent=72 // loop_body
              %v142 = vld [vmem:[%s140] sm:$0x1]
              %143 = vst [vmem:[%s141] sm:$0x1] %v142
              %v144 = vld [vmem:[%s140 + $0x2] sm:$0x1]
              %145 = vst [vmem:[%s141 + $0x1] sm:$0x1] %v144
              %v146 = vld [vmem:[%s140 + $0x4] sm:$0x1]
              %147 = vst [vmem:[%s141 + $0x2] sm:$0x1] %v146
              %v148 = vld [vmem:[%s140 + $0x6] sm:$0x1]
              %149 = vst [vmem:[%s141 + $0x3] sm:$0x1] %v148
              %v150 = vld [vmem:[%s140 + $0x8] sm:$0x1]
              %151 = vst [vmem:[%s141 + $0x4] sm:$0x1] %v150
              %v152 = vld [vmem:[%s140 + $0xa] sm:$0x1]
              %153 = vst [vmem:[%s141 + $0x5] sm:$0x1] %v152
              %v154 = vld [vmem:[%s140 + $0xc] sm:$0x1]
              %155 = vst [vmem:[%s141 + $0x6] sm:$0x1] %v154
              %v156 = vld [vmem:[%s140 + $0xe] sm:$0x1]
              %157 = vst [vmem:[%s141 + $0x7] sm:$0x1] %v156
            $region85: #{encoder_forward.2} parent=72 // loop_footer
              %s139 = sadd.s32 1, %s135
            $region86: #{encoder_forward.2} parent=72 // loop_footer_branch
              %134 = sbr.rel target = $region82
            $region87: #{encoder_forward.2} parent=72 // loop_exit
              _
          $region73: #{encoder_forward.2} parent=57 // pred_fallthru
            _
        $region58: #{encoder_forward.2} parent=53 // pred_fallthru
          _
        // Predicated region
        $region59: #{encoder_forward.2} parent=53 // pred_check
          _
        $region60: #{encoder_forward.2} parent=53 // pred_check_branch
          %97 = sbr.rel (0) target = $region62
        $region61: #{encoder_forward.2} parent=53 // pred_region
          loop: start=0, step=1, limit=1
          $region63: #{encoder_forward.2} parent=61 // loop_pre_header
            _
          $region64: #{encoder_forward.2} parent=61 // loop_header
            %s100 = sphi 0, %s104
            %p101 = scmp.ge.s32.totalorder %s100, 1
            %s105 = sphi %s91, %s91
            %s106 = sphi [#allocation10], [#allocation10]
          $region65: #{encoder_forward.2} parent=61 // loop_header_branch
            %103 = sbr.rel (%p101) target = $region69
          $region66: #{encoder_forward.2} parent=61 // loop_body
            %v107 = vld [vmem:[%s105] sm:$0x1]
            %108 = vst [vmem:[%s106] sm:$0x1] %v107
            %v109 = vld [vmem:[%s105 + $0x2] sm:$0x1]
            %110 = vst [vmem:[%s106 + $0x1] sm:$0x1] %v109
            %v111 = vld [vmem:[%s105 + $0x4] sm:$0x1]
            %112 = vst [vmem:[%s106 + $0x2] sm:$0x1] %v111
            %v113 = vld [vmem:[%s105 + $0x6] sm:$0x1]
            %114 = vst [vmem:[%s106 + $0x3] sm:$0x1] %v113
            %v115 = vld [vmem:[%s105 + $0x8] sm:$0x1]
            %116 = vst [vmem:[%s106 + $0x4] sm:$0x1] %v115
            %v117 = vld [vmem:[%s105 + $0xa] sm:$0x1]
            %118 = vst [vmem:[%s106 + $0x5] sm:$0x1] %v117
            %v119 = vld [vmem:[%s105 + $0xc] sm:$0x1]
            %120 = vst [vmem:[%s106 + $0x6] sm:$0x1] %v119
            %v121 = vld [vmem:[%s105 + $0xe] sm:$0x1]
            %122 = vst [vmem:[%s106 + $0x7] sm:$0x1] %v121
          $region67: #{encoder_forward.2} parent=61 // loop_footer
            %s104 = sadd.s32 1, %s100
          $region68: #{encoder_forward.2} parent=61 // loop_footer_branch
            %99 = sbr.rel target = $region64
          $region69: #{encoder_forward.2} parent=61 // loop_exit
            _
        $region62: #{encoder_forward.2} parent=53 // pred_fallthru
          _
      $region54: #{encoder_forward.2} parent=49 // pred_fallthru
        _
      %158 = vnop
    $region50: #{encoder_forward.2} parent=1 // pred_fallthru
      _
    // Predicated region
    $region88: #{encoder_forward.2} parent=1 // pred_check
      _
    $region89: #{encoder_forward.2} parent=1 // pred_check_branch
      %160 = sbr.rel (0) target = $region91
    $region90: #{encoder_forward.2} parent=1 // pred_region
      _
    $region91: #{encoder_forward.2} parent=1 // pred_fallthru
      _
    // Predicated region
    $region92: #{encoder_forward.2} parent=1 // pred_check
      _
    $region93: #{encoder_forward.2} parent=1 // pred_check_branch
      %162 = sbr.rel (0) target = $region95
    $region94: #{encoder_forward.2} parent=1 // pred_region
      _
    $region95: #{encoder_forward.2} parent=1 // pred_fallthru
      _
    %s163 = ssub.s32 0, 0
    %s164 = smul.u32 8, %s163
    %p165 = scmp.lt.s32.totalorder %s164, 7
    %s166 = scalar_select %p165, %s164, 7
    %s167 = scalar_lea.vmem %s6, %s166
    %s168 = ssub.s32 0, 0
    %s169 = smul.u32 8, %s168
    %s170 = ssub.s32 0, 0
    %s171 = smul.u32 8, %s170
    %p172 = scmp.lt.s32.totalorder %s171, 7
    %s173 = scalar_select %p172, %s171, 7
    %s174 = scalar_lea.vmem %s6, %s173
    %s175 = ssub.s32 0, 0
    %s176 = smul.u32 8, %s175
    %p178 = scmp.eq.s32.totalorder 0, 0
    // Predicated region
    $region96: #{encoder_forward.2} parent=1 // pred_check
      %p179 = pneg %p178
    $region97: #{encoder_forward.2} parent=1 // pred_check_branch
      %181 = sbr.rel (%p179) target = $region99
    $region98: #{encoder_forward.2} parent=1 // pred_region
      %vm182 = vcmask 253952
      %183 = vst.msk [vmem:[#allocation2] sm:$0x1] %vm182, 0
      %vm184 = vcmask 254976
      %185 = vst.msk [vmem:[#allocation3] sm:$0x3] %vm184, 0.0
      %186 = vst.msk [vmem:[#allocation4] sm:$0x1] %vm182, 0
      %187 = vst.msk [vmem:[#allocation5] sm:$0x3] %vm184, 0.0
      %p189 = scmp.lt.u32.totalorder 16, 8
      %p190 = pneg %p189
      // Predicated region
      $region100: #{encoder_forward.2} parent=98 // pred_check
        _
      $region101: #{encoder_forward.2} parent=98 // pred_check_branch
        %192 = sbr.rel (%p189) target = $region103
      $region102: #{encoder_forward.2} parent=98 // pred_region
        %s207 = sand.u32 16, 7
        %p208 = scmp.eq.s32.totalorder %s207, 0
        // Predicated region
        $region115: #{encoder_forward.2} parent=102 // pred_check
          %p209 = pneg %p208
        $region116: #{encoder_forward.2} parent=102 // pred_check_branch
          %211 = sbr.rel (%p209) target = $region118
        $region117: #{encoder_forward.2} parent=102 // pred_region
          loop: start=0, step=1, limit=1
          $region119: #{encoder_forward.2} parent=117 // loop_pre_header
            _
          $region120: #{encoder_forward.2} parent=117 // loop_header
            %s213 = sphi 0, %s217
            %p214 = scmp.ge.s32.totalorder %s213, 1
            %s218 = sphi %s3, %s3
            %s219 = sphi [#allocation6], [#allocation6]
          $region121: #{encoder_forward.2} parent=117 // loop_header_branch
            %216 = sbr.rel (%p214) target = $region125
          $region122: #{encoder_forward.2} parent=117 // loop_body
            %v220 = vld [vmem:[%s218] sm:$0xff]
            %221 = vst [vmem:[%s219] sm:$0xff] %v220
            %v222 = vld [vmem:[%s218 + $0x8] sm:$0xff]
            %223 = vst [vmem:[%s219 + $0x8] sm:$0xff] %v222
          $region123: #{encoder_forward.2} parent=117 // loop_footer
            %s217 = sadd.s32 1, %s213
          $region124: #{encoder_forward.2} parent=117 // loop_footer_branch
            %212 = sbr.rel target = $region120
          $region125: #{encoder_forward.2} parent=117 // loop_exit
            _
        $region118: #{encoder_forward.2} parent=102 // pred_fallthru
          _
        %p224 = pneg %p208
        // Predicated region
        $region126: #{encoder_forward.2} parent=102 // pred_check
          _
        $region127: #{encoder_forward.2} parent=102 // pred_check_branch
          %226 = sbr.rel (%p208) target = $region129
        $region128: #{encoder_forward.2} parent=102 // pred_region
          %s227 = sand.u32 16, 7
        $region129: #{encoder_forward.2} parent=102 // pred_fallthru
          _
      $region103: #{encoder_forward.2} parent=98 // pred_fallthru
        _
      // Predicated region
      $region104: #{encoder_forward.2} parent=98 // pred_check
        %p193 = pneg %p189
      $region105: #{encoder_forward.2} parent=98 // pred_check_branch
        %195 = sbr.rel (%p193) target = $region107
      $region106: #{encoder_forward.2} parent=98 // pred_region
        %s196 = sshllo.u32 0, 16
        loop: start=0, step=1, limit=1
        $region108: #{encoder_forward.2} parent=106 // loop_pre_header
          _
        $region109: #{encoder_forward.2} parent=106 // loop_header
          %s198 = sphi 0, %s202
          %p199 = scmp.ge.s32.totalorder %s198, 1
          %s203 = sphi %s3, %s3
          %s204 = sphi [#allocation6], [#allocation6]
        $region110: #{encoder_forward.2} parent=106 // loop_header_branch
          %201 = sbr.rel (%p199) target = $region114
        $region111: #{encoder_forward.2} parent=106 // loop_body
          %v205 = vld [vmem:[%s203] sm:%s196]
          %206 = vst [vmem:[%s204] sm:%s196] %v205
        $region112: #{encoder_forward.2} parent=106 // loop_footer
          %s202 = sadd.s32 1, %s198
        $region113: #{encoder_forward.2} parent=106 // loop_footer_branch
          %197 = sbr.rel target = $region109
        $region114: #{encoder_forward.2} parent=106 // loop_exit
          _
      $region107: #{encoder_forward.2} parent=98 // pred_fallthru
        _
      // Predicated region
      $region130: #{encoder_forward.2} parent=98 // pred_check
        _
      $region131: #{encoder_forward.2} parent=98 // pred_check_branch
        %230 = sbr.rel (0) target = $region133
      $region132: #{encoder_forward.2} parent=98 // pred_region
        %231 = vsyncadd [#allocation8], 256
      $region133: #{encoder_forward.2} parent=98 // pred_fallthru
        _
      %s232 = scalar_lea.sflag [#allocation8], 1
      %p234 = scmp.lt.u32.totalorder 16, 8
      %p235 = pneg %p234
      // Predicated region
      $region134: #{encoder_forward.2} parent=98 // pred_check
        _
      $region135: #{encoder_forward.2} parent=98 // pred_check_branch
        %237 = sbr.rel (%p234) target = $region137
      $region136: #{encoder_forward.2} parent=98 // pred_region
        %s252 = sand.u32 16, 7
        %p253 = scmp.eq.s32.totalorder %s252, 0
        // Predicated region
        $region149: #{encoder_forward.2} parent=136 // pred_check
          %p254 = pneg %p253
        $region150: #{encoder_forward.2} parent=136 // pred_check_branch
          %256 = sbr.rel (%p254) target = $region152
        $region151: #{encoder_forward.2} parent=136 // pred_region
          loop: start=0, step=1, limit=1
          $region153: #{encoder_forward.2} parent=151 // loop_pre_header
            _
          $region154: #{encoder_forward.2} parent=151 // loop_header
            %s258 = sphi 0, %s262
            %p259 = scmp.ge.s32.totalorder %s258, 1
            %s263 = sphi %s4, %s4
            %s264 = sphi [#allocation7], [#allocation7]
          $region155: #{encoder_forward.2} parent=151 // loop_header_branch
            %261 = sbr.rel (%p259) target = $region159
          $region156: #{encoder_forward.2} parent=151 // loop_body
            %v265 = vld [vmem:[%s263] sm:$0xff]
            %266 = vst [vmem:[%s264] sm:$0xff] %v265
            %v267 = vld [vmem:[%s263 + $0x8] sm:$0xff]
            %268 = vst [vmem:[%s264 + $0x8] sm:$0xff] %v267
          $region157: #{encoder_forward.2} parent=151 // loop_footer
            %s262 = sadd.s32 1, %s258
          $region158: #{encoder_forward.2} parent=151 // loop_footer_branch
            %257 = sbr.rel target = $region154
          $region159: #{encoder_forward.2} parent=151 // loop_exit
            _
        $region152: #{encoder_forward.2} parent=136 // pred_fallthru
          _
        %p269 = pneg %p253
        // Predicated region
        $region160: #{encoder_forward.2} parent=136 // pred_check
          _
        $region161: #{encoder_forward.2} parent=136 // pred_check_branch
          %271 = sbr.rel (%p253) target = $region163
        $region162: #{encoder_forward.2} parent=136 // pred_region
          %s272 = sand.u32 16, 7
        $region163: #{encoder_forward.2} parent=136 // pred_fallthru
          _
      $region137: #{encoder_forward.2} parent=98 // pred_fallthru
        _
      // Predicated region
      $region138: #{encoder_forward.2} parent=98 // pred_check
        %p238 = pneg %p234
      $region139: #{encoder_forward.2} parent=98 // pred_check_branch
        %240 = sbr.rel (%p238) target = $region141
      $region140: #{encoder_forward.2} parent=98 // pred_region
        %s241 = sshllo.u32 0, 16
        loop: start=0, step=1, limit=1
        $region142: #{encoder_forward.2} parent=140 // loop_pre_header
          _
        $region143: #{encoder_forward.2} parent=140 // loop_header
          %s243 = sphi 0, %s247
          %p244 = scmp.ge.s32.totalorder %s243, 1
          %s248 = sphi %s4, %s4
          %s249 = sphi [#allocation7], [#allocation7]
        $region144: #{encoder_forward.2} parent=140 // loop_header_branch
          %246 = sbr.rel (%p244) target = $region148
        $region145: #{encoder_forward.2} parent=140 // loop_body
          %v250 = vld [vmem:[%s248] sm:%s241]
          %251 = vst [vmem:[%s249] sm:%s241] %v250
        $region146: #{encoder_forward.2} parent=140 // loop_footer
          %s247 = sadd.s32 1, %s243
        $region147: #{encoder_forward.2} parent=140 // loop_footer_branch
          %242 = sbr.rel target = $region143
        $region148: #{encoder_forward.2} parent=140 // loop_exit
          _
      $region141: #{encoder_forward.2} parent=98 // pred_fallthru
        _
      // Predicated region
      $region164: #{encoder_forward.2} parent=98 // pred_check
        _
      $region165: #{encoder_forward.2} parent=98 // pred_check_branch
        %275 = sbr.rel (0) target = $region167
      $region166: #{encoder_forward.2} parent=98 // pred_region
        %276 = vsyncadd %s232, 256
      $region167: #{encoder_forward.2} parent=98 // pred_fallthru
        _
      %s277 = smul.u32 4, 4
      %s278 = smul.u32 %s277, 1
      %s279 = sshll.u32 %s278, 4
      %280 = dma.done [#allocation8], %s279
      %s281 = sshll.u32 %s278, 4
      %282 = dma.done %s232, %s281
    $region99: #{encoder_forward.2} parent=1 // pred_fallthru
      _
    %v283 = vld [vmem:[%s0] sm:$0x3]
    %v284 = vld [vmem:[#allocation6] sm:$0xff]
    %v285 = vld [vmem:[#allocation6 + $0x8] sm:$0xff]
    %v286 = vld [vmem:[#allocation7] sm:$0xff]
    %v287 = vld [vmem:[#allocation7 + $0x8] sm:$0xff]
    %v288 = vld [vmem:[#allocation2] sm:$0x1]
    %v289 = vld [vmem:[#allocation3] sm:$0x3]
    %v290 = vld [vmem:[#allocation4] sm:$0x1]
    %v291 = vld [vmem:[#allocation5] sm:$0x3]
    %s292 = smul.u32 0, 8
    %v293 = vld [vmem:[#allocation9] sm:$0x1]
    %v294 = vunpack.c.l.bf16 %v293
    %vm295 = vcmask 261120
    %v297 = vsel %vm295, %v288, 0
    %299 = vmatprep.subr.bf16.mxu0 0
    %300 = vmatpush1.bf16.msra.mxu0 %v284
    %301 = vmatprep.subr.bf16.mxu0 0
    %302 = vmatpush1.bf16.msra.mxu0 %v285
    %303 = vmatprep.subr.bf16.mxu0 0
    %304 = vmatpush1.bf16.msra.mxu0 0
    %305 = vmatprep.subr.bf16.mxu0 0
    %306 = vmatpush1.bf16.msra.mxu0 0
    %307 = vmatprep.subr.bf16.mxu0 0
    %308 = vmatpush1.bf16.msra.mxu0 0
    %309 = vmatprep.subr.bf16.mxu0 0
    %310 = vmatpush1.bf16.msra.mxu0 0
    %311 = vmatprep.subr.bf16.mxu0 0
    %312 = vmatpush1.bf16.msra.mxu0 0
    %313 = vmatprep.subr.bf16.mxu0 0
    %314 = vmatpush1.bf16.msra.mxu0 0
    %315 = vmatprep.subr.bf16.mxu0 0
    %316 = vmatpush1.bf16.msra.mxu0 0
    %317 = vmatprep.subr.bf16.mxu0 0
    %318 = vmatpush1.bf16.msra.mxu0 0
    %319 = vmatprep.subr.bf16.mxu0 0
    %320 = vmatpush1.bf16.msra.mxu0 0
    %321 = vmatprep.subr.bf16.mxu0 0
    %322 = vmatpush1.bf16.msra.mxu0 0
    %323 = vmatprep.subr.bf16.mxu0 0
    %324 = vmatpush1.bf16.msra.mxu0 0
    %325 = vmatprep.subr.bf16.mxu0 0
    %326 = vmatpush1.bf16.msra.mxu0 0
    %327 = vmatprep.subr.bf16.mxu0 0
    %328 = vmatpush1.bf16.msra.mxu0 0
    %329 = vmatprep.subr.bf16.mxu0 0
    %330 = vmatpush1.bf16.msra.mxu0 0
    %331 = vmatprep.mubr.bf16.mxu0 0
    %332 = vmatmul.mubr.bf16.gmra.mrb[0].mxu0 %v297
    %v333 = vpop.f32.mrb[0].mxu0
    %v334 = vadd.f32 %v294, %v333
    %v335 = vpop.f32.mrb[0].mxu0
    %v336 = vpop.f32.mrb[0].mxu0
    %v337 = vpop.f32.mrb[0].mxu0
    %338 = vdwg.mxu0
    %v339 = vxor.u32 %v334, 2147483648
    %v340 = vmul.f32 %v339, 1.442695
    %v341 = vpow.pop %v340
    %v342 = vadd.f32 %v341, 1.0
    %v343 = vrcp.pop %v342
    %v344 = vmul.f32 1.0, %v343
    %v345 = vtanh.pop %v334
    %347 = vrot.lane.b32.xlu0 %v289, 32
    %v348 = vpop.permute.xlu0 %347
    %v350 = vmul.f32 %v344, %v348
    %352 = vrot.lane.b32.xlu0 %v345, 64
    %v353 = vpop.permute.xlu0 %352
    %v355 = vmul.f32 %v344, %v353
    %357 = vrot.lane.b32.xlu0 %v355, 32
    %v358 = vpop.permute.xlu0 %357
    %v360 = vadd.f32 %v350, %v358
    %v361 = vtanh.pop %v360
    %363 = vrot.lane.b32.xlu0 %v361, 64
    %v364 = vpop.permute.xlu0 %363
    %v366 = vmul.f32 %v344, %v364
    %v367 = vpack.c.bf16 %v366, %v366
    %v368 = vstv %s292
    %vm369 = vcmp.lt.s32.totalorder %v368, %v283
    %v370 = vsel %vm369, 1, 0
    %371 = vset.pattern.permute.xlu0 0
    %372 = vperm.xlu0 %371, %v370
    %v373 = vpop.permute.xlu0 %372
    %vm374 = vcmp.eq.s32.totalorder %v373, 1
    %vm375 = vmpackc.low %vm374, %vm374
    %v378 = vunpack.c.l.s4 1966171168
    %v379 = vunpack.c.0.s8 %v378
    %v380 = vlaneseq
    %v381 = vshrl.u32 %v380, 7
    %v382 = vsub.s32 %v379, %v381
    %v383 = vrot.slane %v288, %v382
    %v385 = vunpack.c.l.s4 1966171168
    %v386 = vunpack.c.0.s8 %v385
    %v387 = vlaneseq
    %v388 = vshrl.u32 %v387, 7
    %v389 = vsub.s32 %v386, %v388
    %v390 = vrot.slane %v383, %v389
    %391 = vrot.lane.b32.xlu0 %v390, 96
    %v392 = vpop.permute.xlu0 %391
    %v394 = vsel %vm375, %v367, %v392
    %v395 = vsel %vm374, %v360, %v348
    %v396 = vsel %vm375, %v367, 0
    %v399 = vunpack.c.l.s4 1966171168
    %v400 = vunpack.c.0.s8 %v399
    %v401 = vlaneseq
    %v402 = vshrl.u32 %v401, 7
    %v403 = vsub.s32 %v400, %v402
    %v404 = vrot.slane %v396, %v403
    %v406 = vunpack.c.l.s4 1966171168
    %v407 = vunpack.c.0.s8 %v406
    %v408 = vlaneseq
    %v409 = vshrl.u32 %v408, 7
    %v410 = vsub.s32 %v407, %v409
    %v411 = vrot.slane %v404, %v410
    %412 = vrot.lane.b32.xlu0 %v411, 32
    %v413 = vpop.permute.xlu0 %412
    %vm415 = vcmask 253952
    %416 = vst.msk [vmem:[%s5] sm:$0x1] %vm415, %v413
    %s417 = ssub.s32 0, 0
    %s418 = smul.u32 %s417, 8
    %s419 = sadd.s32 %s418, 7
    %s420 = scalar_lea.vmem [#allocation10], 7
    %v421 = vld [vmem:[%s420] sm:$0x1]
    %v422 = vunpack.c.l.bf16 %v421
    %v424 = vsel %vm295, %v290, 0
    %426 = vmatprep.subr.bf16.mxu0 0
    %427 = vmatpush1.bf16.msra.mxu0 %v286
    %428 = vmatprep.subr.bf16.mxu0 0
    %429 = vmatpush1.bf16.msra.mxu0 %v287
    %430 = vmatprep.subr.bf16.mxu0 0
    %431 = vmatpush1.bf16.msra.mxu0 0
    %432 = vmatprep.subr.bf16.mxu0 0
    %433 = vmatpush1.bf16.msra.mxu0 0
    %434 = vmatprep.subr.bf16.mxu0 0
    %435 = vmatpush1.bf16.msra.mxu0 0
    %436 = vmatprep.subr.bf16.mxu0 0
    %437 = vmatpush1.bf16.msra.mxu0 0
    %438 = vmatprep.subr.bf16.mxu0 0
    %439 = vmatpush1.bf16.msra.mxu0 0
    %440 = vmatprep.subr.bf16.mxu0 0
    %441 = vmatpush1.bf16.msra.mxu0 0
    %442 = vmatprep.subr.bf16.mxu0 0
    %443 = vmatpush1.bf16.msra.mxu0 0
    %444 = vmatprep.subr.bf16.mxu0 0
    %445 = vmatpush1.bf16.msra.mxu0 0
    %446 = vmatprep.subr.bf16.mxu0 0
    %447 = vmatpush1.bf16.msra.mxu0 0
    %448 = vmatprep.subr.bf16.mxu0 0
    %449 = vmatpush1.bf16.msra.mxu0 0
    %450 = vmatprep.subr.bf16.mxu0 0
    %451 = vmatpush1.bf16.msra.mxu0 0
    %452 = vmatprep.subr.bf16.mxu0 0
    %453 = vmatpush1.bf16.msra.mxu0 0
    %454 = vmatprep.subr.bf16.mxu0 0
    %455 = vmatpush1.bf16.msra.mxu0 0
    %456 = vmatprep.subr.bf16.mxu0 0
    %457 = vmatpush1.bf16.msra.mxu0 0
    %458 = vmatprep.mubr.bf16.mxu0 0
    %459 = vmatmul.mubr.bf16.gmra.mrb[0].mxu0 %v424
    %v460 = vpop.f32.mrb[0].mxu0
    %v461 = vadd.f32 %v422, %v460
    %v462 = vpop.f32.mrb[0].mxu0
    %v463 = vpop.f32.mrb[0].mxu0
    %v464 = vpop.f32.mrb[0].mxu0
    %465 = vdwg.mxu0
    %v466 = vxor.u32 %v461, 2147483648
    %v467 = vmul.f32 %v466, 1.442695
    %v468 = vpow.pop %v467
    %v469 = vadd.f32 %v468, 1.0
    %v470 = vrcp.pop %v469
    %v471 = vmul.f32 1.0, %v470
    %v472 = vtanh.pop %v461
    %474 = vrot.lane.b32.xlu0 %v291, 32
    %v475 = vpop.permute.xlu0 %474
    %v477 = vmul.f32 %v471, %v475
    %479 = vrot.lane.b32.xlu0 %v472, 64
    %v480 = vpop.permute.xlu0 %479
    %v482 = vmul.f32 %v471, %v480
    %484 = vrot.lane.b32.xlu0 %v482, 32
    %v485 = vpop.permute.xlu0 %484
    %v487 = vadd.f32 %v477, %v485
    %v488 = vtanh.pop %v487
    %490 = vrot.lane.b32.xlu0 %v488, 64
    %v491 = vpop.permute.xlu0 %490
    %v493 = vmul.f32 %v471, %v491
    %v494 = vpack.c.bf16 %v493, %v493
    %v495 = vstv %s419
    %vm496 = vcmp.lt.s32.totalorder %v495, %v283
    %v497 = vsel %vm496, 1, 0
    %498 = vset.pattern.permute.xlu0 0
    %499 = vperm.xlu0 %498, %v497
    %v500 = vpop.permute.xlu0 %499
    %vm501 = vcmp.eq.s32.totalorder %v500, 1
    %vm502 = vmpackc.low %vm501, %vm501
    %v505 = vunpack.c.l.s4 1966171168
    %v506 = vunpack.c.0.s8 %v505
    %v507 = vlaneseq
    %v508 = vshrl.u32 %v507, 7
    %v509 = vsub.s32 %v506, %v508
    %v510 = vrot.slane %v290, %v509
    %v512 = vunpack.c.l.s4 1966171168
    %v513 = vunpack.c.0.s8 %v512
    %v514 = vlaneseq
    %v515 = vshrl.u32 %v514, 7
    %v516 = vsub.s32 %v513, %v515
    %v517 = vrot.slane %v510, %v516
    %518 = vrot.lane.b32.xlu0 %v517, 96
    %v519 = vpop.permute.xlu0 %518
    %v521 = vsel %vm502, %v494, %v519
    %v522 = vsel %vm501, %v487, %v475
    %v523 = vsel %vm502, %v494, 0
    %v526 = vunpack.c.l.s4 1966171168
    %v527 = vunpack.c.0.s8 %v526
    %v528 = vlaneseq
    %v529 = vshrl.u32 %v528, 7
    %v530 = vsub.s32 %v527, %v529
    %v531 = vrot.slane %v523, %v530
    %v533 = vunpack.c.l.s4 1966171168
    %v534 = vunpack.c.0.s8 %v533
    %v535 = vlaneseq
    %v536 = vshrl.u32 %v535, 7
    %v537 = vsub.s32 %v534, %v536
    %v538 = vrot.slane %v531, %v537
    %539 = vrot.lane.b32.xlu0 %v538, 32
    %v540 = vpop.permute.xlu0 %539
    %s542 = scalar_lea.vmem %s174, 7
    %543 = vst.msk [vmem:[%s542] sm:$0x1] %vm415, %v540
    %s544 = sadd.s32 %s292, 1
    %s545 = scalar_lea.vmem [#allocation9], 1
    %v546 = vld [vmem:[%s545] sm:$0x1]
    %v547 = vunpack.c.l.bf16 %v546
    %549 = vrot.lane.b32.xlu0 %v394, 32
    %v550 = vpop.permute.xlu0 %549
    %v552 = vsel %vm295, %v550, 0
    %554 = vmatprep.subr.bf16.mxu0 0
    %555 = vmatpush1.bf16.msra.mxu0 %v284
    %556 = vmatprep.subr.bf16.mxu0 0
    %557 = vmatpush1.bf16.msra.mxu0 %v285
    %558 = vmatprep.subr.bf16.mxu0 0
    %559 = vmatpush1.bf16.msra.mxu0 0
    %560 = vmatprep.subr.bf16.mxu0 0
    %561 = vmatpush1.bf16.msra.mxu0 0
    %562 = vmatprep.subr.bf16.mxu0 0
    %563 = vmatpush1.bf16.msra.mxu0 0
    %564 = vmatprep.subr.bf16.mxu0 0
    %565 = vmatpush1.bf16.msra.mxu0 0
    %566 = vmatprep.subr.bf16.mxu0 0
    %567 = vmatpush1.bf16.msra.mxu0 0
    %568 = vmatprep.subr.bf16.mxu0 0
    %569 = vmatpush1.bf16.msra.mxu0 0
    %570 = vmatprep.subr.bf16.mxu0 0
    %571 = vmatpush1.bf16.msra.mxu0 0
    %572 = vmatprep.subr.bf16.mxu0 0
    %573 = vmatpush1.bf16.msra.mxu0 0
    %574 = vmatprep.subr.bf16.mxu0 0
    %575 = vmatpush1.bf16.msra.mxu0 0
    %576 = vmatprep.subr.bf16.mxu0 0
    %577 = vmatpush1.bf16.msra.mxu0 0
    %578 = vmatprep.subr.bf16.mxu0 0
    %579 = vmatpush1.bf16.msra.mxu0 0
    %580 = vmatprep.subr.bf16.mxu0 0
    %581 = vmatpush1.bf16.msra.mxu0 0
    %582 = vmatprep.subr.bf16.mxu0 0
    %583 = vmatpush1.bf16.msra.mxu0 0
    %584 = vmatprep.subr.bf16.mxu0 0
    %585 = vmatpush1.bf16.msra.mxu0 0
    %586 = vmatprep.mubr.bf16.mxu0 0
    %587 = vmatmul.mubr.bf16.gmra.mrb[0].mxu0 %v552
    %v588 = vpop.f32.mrb[0].mxu0
    %v589 = vadd.f32 %v547, %v588
    %v590 = vpop.f32.mrb[0].mxu0
    %v591 = vpop.f32.mrb[0].mxu0
    %v592 = vpop.f32.mrb[0].mxu0
    %593 = vdwg.mxu0
    %v594 = vxor.u32 %v589, 2147483648
    %v595 = vmul.f32 %v594, 1.442695
    %v596 = vpow.pop %v595
    %v597 = vadd.f32 %v596, 1.0
    %v598 = vrcp.pop %v597
    %v599 = vmul.f32 1.0, %v598
    %v600 = vtanh.pop %v589
    %v601 = vmul.f32 %v599, %v395
    %603 = vrot.lane.b32.xlu0 %v600, 64
    %v604 = vpop.permute.xlu0 %603
    %v606 = vmul.f32 %v599, %v604
    %608 = vrot.lane.b32.xlu0 %v606, 32
    %v609 = vpop.permute.xlu0 %608
    %v611 = vadd.f32 %v601, %v609
    %v612 = vtanh.pop %v611
    %614 = vrot.lane.b32.xlu0 %v612, 64
    %v615 = vpop.permute.xlu0 %614
    %v617 = vmul.f32 %v599, %v615
    %v618 = vpack.c.bf16 %v617, %v617
    %v619 = vstv %s544
    %vm620 = vcmp.lt.s32.totalorder %v619, %v283
    %v621 = vsel %vm620, 1, 0
    %622 = vset.pattern.permute.xlu0 0
    %623 = vperm.xlu0 %622, %v621
    %v624 = vpop.permute.xlu0 %623
    %vm625 = vcmp.eq.s32.totalorder %v624, 1
    %vm626 = vmpackc.low %vm625, %vm625
    %v627 = vsel %vm626, %v618, %v394
    %v628 = vsel %vm625, %v611, %v395
    %v629 = vsel %vm626, %v618, 0
    %v632 = vunpack.c.l.s4 1966171168
    %v633 = vunpack.c.0.s8 %v632
    %v634 = vlaneseq
    %v635 = vshrl.u32 %v634, 7
    %v636 = vsub.s32 %v633, %v635
    %v637 = vrot.slane %v629, %v636
    %v639 = vunpack.c.l.s4 1966171168
    %v640 = vunpack.c.0.s8 %v639
    %v641 = vlaneseq
    %v642 = vshrl.u32 %v641, 7
    %v643 = vsub.s32 %v640, %v642
    %v644 = vrot.slane %v637, %v643
    %645 = vrot.lane.b32.xlu0 %v644, 32
    %v646 = vpop.permute.xlu0 %645
    %s648 = scalar_lea.vmem %s5, 1
    %649 = vst.msk [vmem:[%s648] sm:$0x1] %vm415, %v646
    %s650 = sadd.s32 %s418, 6
    %s651 = scalar_lea.vmem [#allocation10], 6
    %v652 = vld [vmem:[%s651] sm:$0x1]
    %v653 = vunpack.c.l.bf16 %v652
    %655 = vrot.lane.b32.xlu0 %v521, 32
    %v656 = vpop.permute.xlu0 %655
    %v658 = vsel %vm295, %v656, 0
    %660 = vmatprep.subr.bf16.mxu0 0
    %661 = vmatpush1.bf16.msra.mxu0 %v286
    %662 = vmatprep.subr.bf16.mxu0 0
    %663 = vmatpush1.bf16.msra.mxu0 %v287
    %664 = vmatprep.subr.bf16.mxu0 0
    %665 = vmatpush1.bf16.msra.mxu0 0
    %666 = vmatprep.subr.bf16.mxu0 0
    %667 = vmatpush1.bf16.msra.mxu0 0
    %668 = vmatprep.subr.bf16.mxu0 0
    %669 = vmatpush1.bf16.msra.mxu0 0
    %670 = vmatprep.subr.bf16.mxu0 0
    %671 = vmatpush1.bf16.msra.mxu0 0
    %672 = vmatprep.subr.bf16.mxu0 0
    %673 = vmatpush1.bf16.msra.mxu0 0
    %674 = vmatprep.subr.bf16.mxu0 0
    %675 = vmatpush1.bf16.msra.mxu0 0
    %676 = vmatprep.subr.bf16.mxu0 0
    %677 = vmatpush1.bf16.msra.mxu0 0
    %678 = vmatprep.subr.bf16.mxu0 0
    %679 = vmatpush1.bf16.msra.mxu0 0
    %680 = vmatprep.subr.bf16.mxu0 0
    %681 = vmatpush1.bf16.msra.mxu0 0
    %682 = vmatprep.subr.bf16.mxu0 0
    %683 = vmatpush1.bf16.msra.mxu0 0
    %684 = vmatprep.subr.bf16.mxu0 0
    %685 = vmatpush1.bf16.msra.mxu0 0
    %686 = vmatprep.subr.bf16.mxu0 0
    %687 = vmatpush1.bf16.msra.mxu0 0
    %688 = vmatprep.subr.bf16.mxu0 0
    %689 = vmatpush1.bf16.msra.mxu0 0
    %690 = vmatprep.subr.bf16.mxu0 0
    %691 = vmatpush1.bf16.msra.mxu0 0
    %692 = vmatprep.mubr.bf16.mxu0 0
    %693 = vmatmul.mubr.bf16.gmra.mrb[0].mxu0 %v658
    %v694 = vpop.f32.mrb[0].mxu0
    %v695 = vadd.f32 %v653, %v694
    %v696 = vpop.f32.mrb[0].mxu0
    %v697 = vpop.f32.mrb[0].mxu0
    %v698 = vpop.f32.mrb[0].mxu0
    %699 = vdwg.mxu0
    %v700 = vxor.u32 %v695, 2147483648
    %v701 = vmul.f32 %v700, 1.442695
    %v702 = vpow.pop %v701
    %v703 = vadd.f32 %v702, 1.0
    %v704 = vrcp.pop %v703
    %v705 = vmul.f32 1.0, %v704
    %v706 = vtanh.pop %v695
    %v707 = vmul.f32 %v705, %v522
    %709 = vrot.lane.b32.xlu0 %v706, 64
    %v710 = vpop.permute.xlu0 %709
    %v712 = vmul.f32 %v705, %v710
    %714 = vrot.lane.b32.xlu0 %v712, 32
    %v715 = vpop.permute.xlu0 %714
    %v717 = vadd.f32 %v707, %v715
    %v718 = vtanh.pop %v717
    %720 = vrot.lane.b32.xlu0 %v718, 64
    %v721 = vpop.permute.xlu0 %720
    %v723 = vmul.f32 %v705, %v721
    %v724 = vpack.c.bf16 %v723, %v723
    %v725 = vstv %s650
    %vm726 = vcmp.lt.s32.totalorder %v725, %v283
    %v727 = vsel %vm726, 1, 0
    %728 = vset.pattern.permute.xlu0 0
    %729 = vperm.xlu0 %728, %v727
    %v730 = vpop.permute.xlu0 %729
    %vm731 = vcmp.eq.s32.totalorder %v730, 1
    %vm732 = vmpackc.low %vm731, %vm731
    %v733 = vsel %vm732, %v724, %v521
    %v734 = vsel %vm731, %v717, %v522
    %v735 = vsel %vm732, %v724, 0
    %v738 = vunpack.c.l.s4 1966171168
    %v739 = vunpack.c.0.s8 %v738
    %v740 = vlaneseq
    %v741 = vshrl.u32 %v740, 7
    %v742 = vsub.s32 %v739, %v741
    %v743 = vrot.slane %v735, %v742
    %v745 = vunpack.c.l.s4 1966171168
    %v746 = vunpack.c.0.s8 %v745
    %v747 = vlaneseq
    %v748 = vshrl.u32 %v747, 7
    %v749 = vsub.s32 %v746, %v748
    %v750 = vrot.slane %v743, %v749
    %751 = vrot.lane.b32.xlu0 %v750, 32
    %v752 = vpop.permute.xlu0 %751
    %s754 = scalar_lea.vmem %s174, 6
    %755 = vst.msk [vmem:[%s754] sm:$0x1] %vm415, %v752
    %s756 = sadd.s32 %s292, 2
    %s757 = scalar_lea.vmem [#allocation9], 2
    %v758 = vld [vmem:[%s757] sm:$0x1]
    %v759 = vunpack.c.l.bf16 %v758
    %761 = vrot.lane.b32.xlu0 %v627, 32
    %v762 = vpop.permute.xlu0 %761
    %v764 = vsel %vm295, %v762, 0
    %766 = vmatprep.subr.bf16.mxu0 0
    %767 = vmatpush1.bf16.msra.mxu0 %v284
    %768 = vmatprep.subr.bf16.mxu0 0
    %769 = vmatpush1.bf16.msra.mxu0 %v285
    %770 = vmatprep.subr.bf16.mxu0 0
    %771 = vmatpush1.bf16.msra.mxu0 0
    %772 = vmatprep.subr.bf16.mxu0 0
    %773 = vmatpush1.bf16.msra.mxu0 0
    %774 = vmatprep.subr.bf16.mxu0 0
    %775 = vmatpush1.bf16.msra.mxu0 0
    %776 = vmatprep.subr.bf16.mxu0 0
    %777 = vmatpush1.bf16.msra.mxu0 0
    %778 = vmatprep.subr.bf16.mxu0 0
    %779 = vmatpush1.bf16.msra.mxu0 0
    %780 = vmatprep.subr.bf16.mxu0 0
    %781 = vmatpush1.bf16.msra.mxu0 0
    %782 = vmatprep.subr.bf16.mxu0 0
    %783 = vmatpush1.bf16.msra.mxu0 0
    %784 = vmatprep.subr.bf16.mxu0 0
    %785 = vmatpush1.bf16.msra.mxu0 0
    %786 = vmatprep.subr.bf16.mxu0 0
    %787 = vmatpush1.bf16.msra.mxu0 0
    %788 = vmatprep.subr.bf16.mxu0 0
    %789 = vmatpush1.bf16.msra.mxu0 0
    %790 = vmatprep.subr.bf16.mxu0 0
    %791 = vmatpush1.bf16.msra.mxu0 0
    %792 = vmatprep.subr.bf16.mxu0 0
    %793 = vmatpush1.bf16.msra.mxu0 0
    %794 = vmatprep.subr.bf16.mxu0 0
    %795 = vmatpush1.bf16.msra.mxu0 0
    %796 = vmatprep.subr.bf16.mxu0 0
    %797 = vmatpush1.bf16.msra.mxu0 0
    %798 = vmatprep.mubr.bf16.mxu0 0
    %799 = vmatmul.mubr.bf16.gmra.mrb[0].mxu0 %v764
    %v800 = vpop.f32.mrb[0].mxu0
    %v801 = vadd.f32 %v759, %v800
    %v802 = vpop.f32.mrb[0].mxu0
    %v803 = vpop.f32.mrb[0].mxu0
    %v804 = vpop.f32.mrb[0].mxu0
    %805 = vdwg.mxu0
    %v806 = vxor.u32 %v801, 2147483648
    %v807 = vmul.f32 %v806, 1.442695
    %v808 = vpow.pop %v807
    %v809 = vadd.f32 %v808, 1.0
    %v810 = vrcp.pop %v809
    %v811 = vmul.f32 1.0, %v810
    %v812 = vtanh.pop %v801
    %v813 = vmul.f32 %v811, %v628
    %815 = vrot.lane.b32.xlu0 %v812, 64
    %v816 = vpop.permute.xlu0 %815
    %v818 = vmul.f32 %v811, %v816
    %820 = vrot.lane.b32.xlu0 %v818, 32
    %v821 = vpop.permute.xlu0 %820
    %v823 = vadd.f32 %v813, %v821
    %v824 = vtanh.pop %v823
    %826 = vrot.lane.b32.xlu0 %v824, 64
    %v827 = vpop.permute.xlu0 %826
    %v829 = vmul.f32 %v811, %v827
    %v830 = vpack.c.bf16 %v829, %v829
    %v831 = vstv %s756
    %vm832 = vcmp.lt.s32.totalorder %v831, %v283
    %v833 = vsel %vm832, 1, 0
    %834 = vset.pattern.permute.xlu0 0
    %835 = vperm.xlu0 %834, %v833
    %v836 = vpop.permute.xlu0 %835
    %vm837 = vcmp.eq.s32.totalorder %v836, 1
    %vm838 = vmpackc.low %vm837, %vm837
    %v839 = vsel %vm838, %v830, %v627
    %v840 = vsel %vm837, %v823, %v628
    %v841 = vsel %vm838, %v830, 0
    %v844 = vunpack.c.l.s4 1966171168
    %v845 = vunpack.c.0.s8 %v844
    %v846 = vlaneseq
    %v847 = vshrl.u32 %v846, 7
    %v848 = vsub.s32 %v845, %v847
    %v849 = vrot.slane %v841, %v848
    %v851 = vunpack.c.l.s4 1966171168
    %v852 = vunpack.c.0.s8 %v851
    %v853 = vlaneseq
    %v854 = vshrl.u32 %v853, 7
    %v855 = vsub.s32 %v852, %v854
    %v856 = vrot.slane %v849, %v855
    %857 = vrot.lane.b32.xlu0 %v856, 32
    %v858 = vpop.permute.xlu0 %857
    %s860 = scalar_lea.vmem %s5, 2
    %861 = vst.msk [vmem:[%s860] sm:$0x1] %vm415, %v858
    %s862 = sadd.s32 %s418, 5
    %s863 = scalar_lea.vmem [#allocation10], 5
    %v864 = vld [vmem:[%s863] sm:$0x1]
    %v865 = vunpack.c.l.bf16 %v864
    %867 = vrot.lane.b32.xlu0 %v733, 32
    %v868 = vpop.permute.xlu0 %867
    %v870 = vsel %vm295, %v868, 0
    %872 = vmatprep.subr.bf16.mxu0 0
    %873 = vmatpush1.bf16.msra.mxu0 %v286
    %874 = vmatprep.subr.bf16.mxu0 0
    %875 = vmatpush1.bf16.msra.mxu0 %v287
    %876 = vmatprep.subr.bf16.mxu0 0
    %877 = vmatpush1.bf16.msra.mxu0 0
    %878 = vmatprep.subr.bf16.mxu0 0
    %879 = vmatpush1.bf16.msra.mxu0 0
    %880 = vmatprep.subr.bf16.mxu0 0
    %881 = vmatpush1.bf16.msra.mxu0 0
    %882 = vmatprep.subr.bf16.mxu0 0
    %883 = vmatpush1.bf16.msra.mxu0 0
    %884 = vmatprep.subr.bf16.mxu0 0
    %885 = vmatpush1.bf16.msra.mxu0 0
    %886 = vmatprep.subr.bf16.mxu0 0
    %887 = vmatpush1.bf16.msra.mxu0 0
    %888 = vmatprep.subr.bf16.mxu0 0
    %889 = vmatpush1.bf16.msra.mxu0 0
    %890 = vmatprep.subr.bf16.mxu0 0
    %891 = vmatpush1.bf16.msra.mxu0 0
    %892 = vmatprep.subr.bf16.mxu0 0
    %893 = vmatpush1.bf16.msra.mxu0 0
    %894 = vmatprep.subr.bf16.mxu0 0
    %895 = vmatpush1.bf16.msra.mxu0 0
    %896 = vmatprep.subr.bf16.mxu0 0
    %897 = vmatpush1.bf16.msra.mxu0 0
    %898 = vmatprep.subr.bf16.mxu0 0
    %899 = vmatpush1.bf16.msra.mxu0 0
    %900 = vmatprep.subr.bf16.mxu0 0
    %901 = vmatpush1.bf16.msra.mxu0 0
    %902 = vmatprep.subr.bf16.mxu0 0
    %903 = vmatpush1.bf16.msra.mxu0 0
    %904 = vmatprep.mubr.bf16.mxu0 0
    %905 = vmatmul.mubr.bf16.gmra.mrb[0].mxu0 %v870
    %v906 = vpop.f32.mrb[0].mxu0
    %v907 = vadd.f32 %v865, %v906
    %v908 = vpop.f32.mrb[0].mxu0
    %v909 = vpop.f32.mrb[0].mxu0
    %v910 = vpop.f32.mrb[0].mxu0
    %911 = vdwg.mxu0
    %v912 = vxor.u32 %v907, 2147483648
    %v913 = vmul.f32 %v912, 1.442695
    %v914 = vpow.pop %v913
    %v915 = vadd.f32 %v914, 1.0
    %v916 = vrcp.pop %v915
    %v917 = vmul.f32 1.0, %v916
    %v918 = vtanh.pop %v907
    %v919 = vmul.f32 %v917, %v734
    %921 = vrot.lane.b32.xlu0 %v918, 64
    %v922 = vpop.permute.xlu0 %921
    %v924 = vmul.f32 %v917, %v922
    %926 = vrot.lane.b32.xlu0 %v924, 32
    %v927 = vpop.permute.xlu0 %926
    %v929 = vadd.f32 %v919, %v927
    %v930 = vtanh.pop %v929
    %932 = vrot.lane.b32.xlu0 %v930, 64
    %v933 = vpop.permute.xlu0 %932
    %v935 = vmul.f32 %v917, %v933
    %v936 = vpack.c.bf16 %v935, %v935
    %v937 = vstv %s862
    %vm938 = vcmp.lt.s32.totalorder %v937, %v283
    %v939 = vsel %vm938, 1, 0
    %940 = vset.pattern.permute.xlu0 0
    %941 = vperm.xlu0 %940, %v939
    %v942 = vpop.permute.xlu0 %941
    %vm943 = vcmp.eq.s32.totalorder %v942, 1
    %vm944 = vmpackc.low %vm943, %vm943
    %v945 = vsel %vm944, %v936, %v733
    %v946 = vsel %vm943, %v929, %v734
    %v947 = vsel %vm944, %v936, 0
    %v950 = vunpack.c.l.s4 1966171168
    %v951 = vunpack.c.0.s8 %v950
    %v952 = vlaneseq
    %v953 = vshrl.u32 %v952, 7
    %v954 = vsub.s32 %v951, %v953
    %v955 = vrot.slane %v947, %v954
    %v957 = vunpack.c.l.s4 1966171168
    %v958 = vunpack.c.0.s8 %v957
    %v959 = vlaneseq
    %v960 = vshrl.u32 %v959, 7
    %v961 = vsub.s32 %v958, %v960
    %v962 = vrot.slane %v955, %v961
    %963 = vrot.lane.b32.xlu0 %v962, 32
    %v964 = vpop.permute.xlu0 %963
    %s966 = scalar_lea.vmem %s174, 5
    %967 = vst.msk [vmem:[%s966] sm:$0x1] %vm415, %v964
    %s968 = sadd.s32 %s292, 3
    %s969 = scalar_lea.vmem [#allocation9], 3
    %v970 = vld [vmem:[%s969] sm:$0x1]
    %v971 = vunpack.c.l.bf16 %v970
    %973 = vrot.lane.b32.xlu0 %v839, 32
    %v974 = vpop.permute.xlu0 %973
    %v976 = vsel %vm295, %v974, 0
    %978 = vmatprep.subr.bf16.mxu0 0
    %979 = vmatpush1.bf16.msra.mxu0 %v284
    %980 = vmatprep.subr.bf16.mxu0 0
    %981 = vmatpush1.bf16.msra.mxu0 %v285
    %982 = vmatprep.subr.bf16.mxu0 0
    %983 = vmatpush1.bf16.msra.mxu0 0
    %984 = vmatprep.subr.bf16.mxu0 0
    %985 = vmatpush1.bf16.msra.mxu0 0
    %986 = vmatprep.subr.bf16.mxu0 0
    %987 = vmatpush1.bf16.msra.mxu0 0
    %988 = vmatprep.subr.bf16.mxu0 0
    %989 = vmatpush1.bf16.msra.mxu0 0
    %990 = vmatprep.subr.bf16.mxu0 0
    %991 = vmatpush1.bf16.msra.mxu0 0
    %992 = vmatprep.subr.bf16.mxu0 0
    %993 = vmatpush1.bf16.msra.mxu0 0
    %994 = vmatprep.subr.bf16.mxu0 0
    %995 = vmatpush1.bf16.msra.mxu0 0
    %996 = vmatprep.subr.bf16.mxu0 0
    %997 = vmatpush1.bf16.msra.mxu0 0
    %998 = vmatprep.subr.bf16.mxu0 0
    %999 = vmatpush1.bf16.msra.mxu0 0
    %1000 = vmatprep.subr.bf16.mxu0 0
    %1001 = vmatpush1.bf16.msra.mxu0 0
    %1002 = vmatprep.subr.bf16.mxu0 0
    %1003 = vmatpush1.bf16.msra.mxu0 0
    %1004 = vmatprep.subr.bf16.mxu0 0
    %1005 = vmatpush1.bf16.msra.mxu0 0
    %1006 = vmatprep.subr.bf16.mxu0 0
    %1007 = vmatpush1.bf16.msra.mxu0 0
    %1008 = vmatprep.subr.bf16.mxu0 0
    %1009 = vmatpush1.bf16.msra.mxu0 0
    %1010 = vmatprep.mubr.bf16.mxu0 0
    %1011 = vmatmul.mubr.bf16.gmra.mrb[0].mxu0 %v976
    %v1012 = vpop.f32.mrb[0].mxu0
    %v1013 = vadd.f32 %v971, %v1012
    %v1014 = vpop.f32.mrb[0].mxu0
    %v1015 = vpop.f32.mrb[0].mxu0
    %v1016 = vpop.f32.mrb[0].mxu0
    %1017 = vdwg.mxu0
    %v1018 = vxor.u32 %v1013, 2147483648
    %v1019 = vmul.f32 %v1018, 1.442695
    %v1020 = vpow.pop %v1019
    %v1021 = vadd.f32 %v1020, 1.0
    %v1022 = vrcp.pop %v1021
    %v1023 = vmul.f32 1.0, %v1022
    %v1024 = vtanh.pop %v1013
    %v1025 = vmul.f32 %v1023, %v840
    %1027 = vrot.lane.b32.xlu0 %v1024, 64
    %v1028 = vpop.permute.xlu0 %1027
    %v1030 = vmul.f32 %v1023, %v1028
    %1032 = vrot.lane.b32.xlu0 %v1030, 32
    %v1033 = vpop.permute.xlu0 %1032
    %v1035 = vadd.f32 %v1025, %v1033
    %v1036 = vtanh.pop %v1035
    %1038 = vrot.lane.b32.xlu0 %v1036, 64
    %v1039 = vpop.permute.xlu0 %1038
    %v1041 = vmul.f32 %v1023, %v1039
    %v1042 = vpack.c.bf16 %v1041, %v1041
    %v1043 = vstv %s968
    %vm1044 = vcmp.lt.s32.totalorder %v1043, %v283
    %v1045 = vsel %vm1044, 1, 0
    %1046 = vset.pattern.permute.xlu0 0
    %1047 = vperm.xlu0 %1046, %v1045
    %v1048 = vpop.permute.xlu0 %1047
    %vm1049 = vcmp.eq.s32.totalorder %v1048, 1
    %vm1050 = vmpackc.low %vm1049, %vm1049
    %v1051 = vsel %vm1050, %v1042, %v839
    %v1052 = vsel %vm1049, %v1035, %v840
    %v1053 = vsel %vm1050, %v1042, 0
    %v1056 = vunpack.c.l.s4 1966171168
    %v1057 = vunpack.c.0.s8 %v1056
    %v1058 = vlaneseq
    %v1059 = vshrl.u32 %v1058, 7
    %v1060 = vsub.s32 %v1057, %v1059
    %v1061 = vrot.slane %v1053, %v1060
    %v1063 = vunpack.c.l.s4 1966171168
    %v1064 = vunpack.c.0.s8 %v1063
    %v1065 = vlaneseq
    %v1066 = vshrl.u32 %v1065, 7
    %v1067 = vsub.s32 %v1064, %v1066
    %v1068 = vrot.slane %v1061, %v1067
    %1069 = vrot.lane.b32.xlu0 %v1068, 32
    %v1070 = vpop.permute.xlu0 %1069
    %s1072 = scalar_lea.vmem %s5, 3
    %1073 = vst.msk [vmem:[%s1072] sm:$0x1] %vm415, %v1070
    %s1074 = sadd.s32 %s418, 4
    %s1075 = scalar_lea.vmem [#allocation10], 4
    %v1076 = vld [vmem:[%s1075] sm:$0x1]
    %v1077 = vunpack.c.l.bf16 %v1076
    %1079 = vrot.lane.b32.xlu0 %v945, 32
    %v1080 = vpop.permute.xlu0 %1079
    %v1082 = vsel %vm295, %v1080, 0
    %1084 = vmatprep.subr.bf16.mxu0 0
    %1085 = vmatpush1.bf16.msra.mxu0 %v286
    %1086 = vmatprep.subr.bf16.mxu0 0
    %1087 = vmatpush1.bf16.msra.mxu0 %v287
    %1088 = vmatprep.subr.bf16.mxu0 0
    %1089 = vmatpush1.bf16.msra.mxu0 0
    %1090 = vmatprep.subr.bf16.mxu0 0
    %1091 = vmatpush1.bf16.msra.mxu0 0
    %1092 = vmatprep.subr.bf16.mxu0 0
    %1093 = vmatpush1.bf16.msra.mxu0 0
    %1094 = vmatprep.subr.bf16.mxu0 0
    %1095 = vmatpush1.bf16.msra.mxu0 0
    %1096 = vmatprep.subr.bf16.mxu0 0
    %1097 = vmatpush1.bf16.msra.mxu0 0
    %1098 = vmatprep.subr.bf16.mxu0 0
    %1099 = vmatpush1.bf16.msra.mxu0 0
    %1100 = vmatprep.subr.bf16.mxu0 0
    %1101 = vmatpush1.bf16.msra.mxu0 0
    %1102 = vmatprep.subr.bf16.mxu0 0
    %1103 = vmatpush1.bf16.msra.mxu0 0
    %1104 = vmatprep.subr.bf16.mxu0 0
    %1105 = vmatpush1.bf16.msra.mxu0 0
    %1106 = vmatprep.subr.bf16.mxu0 0
    %1107 = vmatpush1.bf16.msra.mxu0 0
    %1108 = vmatprep.subr.bf16.mxu0 0
    %1109 = vmatpush1.bf16.msra.mxu0 0
    %1110 = vmatprep.subr.bf16.mxu0 0
    %1111 = vmatpush1.bf16.msra.mxu0 0
    %1112 = vmatprep.subr.bf16.mxu0 0
    %1113 = vmatpush1.bf16.msra.mxu0 0
    %1114 = vmatprep.subr.bf16.mxu0 0
    %1115 = vmatpush1.bf16.msra.mxu0 0
    %1116 = vmatprep.mubr.bf16.mxu0 0
    %1117 = vmatmul.mubr.bf16.gmra.mrb[0].mxu0 %v1082
    %v1118 = vpop.f32.mrb[0].mxu0
    %v1119 = vadd.f32 %v1077, %v1118
    %v1120 = vpop.f32.mrb[0].mxu0
    %v1121 = vpop.f32.mrb[0].mxu0
    %v1122 = vpop.f32.mrb[0].mxu0
    %1123 = vdwg.mxu0
    %v1124 = vxor.u32 %v1119, 2147483648
    %v1125 = vmul.f32 %v1124, 1.442695
    %v1126 = vpow.pop %v1125
    %v1127 = vadd.f32 %v1126, 1.0
    %v1128 = vrcp.pop %v1127
    %v1129 = vmul.f32 1.0, %v1128
    %v1130 = vtanh.pop %v1119
    %v1131 = vmul.f32 %v1129, %v946
    %1133 = vrot.lane.b32.xlu0 %v1130, 64
    %v1134 = vpop.permute.xlu0 %1133
    %v1136 = vmul.f32 %v1129, %v1134
    %1138 = vrot.lane.b32.xlu0 %v1136, 32
    %v1139 = vpop.permute.xlu0 %1138
    %v1141 = vadd.f32 %v1131, %v1139
    %v1142 = vtanh.pop %v1141
    %1144 = vrot.lane.b32.xlu0 %v1142, 64
    %v1145 = vpop.permute.xlu0 %1144
    %v1147 = vmul.f32 %v1129, %v1145
    %v1148 = vpack.c.bf16 %v1147, %v1147
    %v1149 = vstv %s1074
    %vm1150 = vcmp.lt.s32.totalorder %v1149, %v283
    %v1151 = vsel %vm1150, 1, 0
    %1152 = vset.pattern.permute.xlu0 0
    %1153 = vperm.xlu0 %1152, %v1151
    %v1154 = vpop.permute.xlu0 %1153
    %vm1155 = vcmp.eq.s32.totalorder %v1154, 1
    %vm1156 = vmpackc.low %vm1155, %vm1155
    %v1157 = vsel %vm1156, %v1148, %v945
    %v1158 = vsel %vm1155, %v1141, %v946
    %v1159 = vsel %vm1156, %v1148, 0
    %v1162 = vunpack.c.l.s4 1966171168
    %v1163 = vunpack.c.0.s8 %v1162
    %v1164 = vlaneseq
    %v1165 = vshrl.u32 %v1164, 7
    %v1166 = vsub.s32 %v1163, %v1165
    %v1167 = vrot.slane %v1159, %v1166
    %v1169 = vunpack.c.l.s4 1966171168
    %v1170 = vunpack.c.0.s8 %v1169
    %v1171 = vlaneseq
    %v1172 = vshrl.u32 %v1171, 7
    %v1173 = vsub.s32 %v1170, %v1172
    %v1174 = vrot.slane %v1167, %v1173
    %1175 = vrot.lane.b32.xlu0 %v1174, 32
    %v1176 = vpop.permute.xlu0 %1175
    %s1178 = scalar_lea.vmem %s174, 4
    %1179 = vst.msk [vmem:[%s1178] sm:$0x1] %vm415, %v1176
    %s1180 = sadd.s32 %s292, 4
    %s1181 = scalar_lea.vmem [#allocation9], 4
    %v1182 = vld [vmem:[%s1181] sm:$0x1]
    %v1183 = vunpack.c.l.bf16 %v1182
    %1185 = vrot.lane.b32.xlu0 %v1051, 32
    %v1186 = vpop.permute.xlu0 %1185
    %v1188 = vsel %vm295, %v1186, 0
    %1190 = vmatprep.subr.bf16.mxu0 0
    %1191 = vmatpush1.bf16.msra.mxu0 %v284
    %1192 = vmatprep.subr.bf16.mxu0 0
    %1193 = vmatpush1.bf16.msra.mxu0 %v285
    %1194 = vmatprep.subr.bf16.mxu0 0
    %1195 = vmatpush1.bf16.msra.mxu0 0
    %1196 = vmatprep.subr.bf16.mxu0 0
    %1197 = vmatpush1.bf16.msra.mxu0 0
    %1198 = vmatprep.subr.bf16.mxu0 0
    %1199 = vmatpush1.bf16.msra.mxu0 0
    %1200 = vmatprep.subr.bf16.mxu0 0
    %1201 = vmatpush1.bf16.msra.mxu0 0
    %1202 = vmatprep.subr.bf16.mxu0 0
    %1203 = vmatpush1.bf16.msra.mxu0 0
    %1204 = vmatprep.subr.bf16.mxu0 0
    %1205 = vmatpush1.bf16.msra.mxu0 0
    %1206 = vmatprep.subr.bf16.mxu0 0
    %1207 = vmatpush1.bf16.msra.mxu0 0
    %1208 = vmatprep.subr.bf16.mxu0 0
    %1209 = vmatpush1.bf16.msra.mxu0 0
    %1210 = vmatprep.subr.bf16.mxu0 0
    %1211 = vmatpush1.bf16.msra.mxu0 0
    %1212 = vmatprep.subr.bf16.mxu0 0
    %1213 = vmatpush1.bf16.msra.mxu0 0
    %1214 = vmatprep.subr.bf16.mxu0 0
    %1215 = vmatpush1.bf16.msra.mxu0 0
    %1216 = vmatprep.subr.bf16.mxu0 0
    %1217 = vmatpush1.bf16.msra.mxu0 0
    %1218 = vmatprep.subr.bf16.mxu0 0
    %1219 = vmatpush1.bf16.msra.mxu0 0
    %1220 = vmatprep.subr.bf16.mxu0 0
    %1221 = vmatpush1.bf16.msra.mxu0 0
    %1222 = vmatprep.mubr.bf16.mxu0 0
    %1223 = vmatmul.mubr.bf16.gmra.mrb[0].mxu0 %v1188
    %v1224 = vpop.f32.mrb[0].mxu0
    %v1225 = vadd.f32 %v1183, %v1224
    %v1226 = vpop.f32.mrb[0].mxu0
    %v1227 = vpop.f32.mrb[0].mxu0
    %v1228 = vpop.f32.mrb[0].mxu0
    %1229 = vdwg.mxu0
    %v1230 = vxor.u32 %v1225, 2147483648
    %v1231 = vmul.f32 %v1230, 1.442695
    %v1232 = vpow.pop %v1231
    %v1233 = vadd.f32 %v1232, 1.0
    %v1234 = vrcp.pop %v1233
    %v1235 = vmul.f32 1.0, %v1234
    %v1236 = vtanh.pop %v1225
    %v1237 = vmul.f32 %v1235, %v1052
    %1239 = vrot.lane.b32.xlu0 %v1236, 64
    %v1240 = vpop.permute.xlu0 %1239
    %v1242 = vmul.f32 %v1235, %v1240
    %1244 = vrot.lane.b32.xlu0 %v1242, 32
    %v1245 = vpop.permute.xlu0 %1244
    %v1247 = vadd.f32 %v1237, %v1245
    %v1248 = vtanh.pop %v1247
    %1250 = vrot.lane.b32.xlu0 %v1248, 64
    %v1251 = vpop.permute.xlu0 %1250
    %v1253 = vmul.f32 %v1235, %v1251
    %v1254 = vpack.c.bf16 %v1253, %v1253
    %v1255 = vstv %s1180
    %vm1256 = vcmp.lt.s32.totalorder %v1255, %v283
    %v1257 = vsel %vm1256, 1, 0
    %1258 = vset.pattern.permute.xlu0 0
    %1259 = vperm.xlu0 %1258, %v1257
    %v1260 = vpop.permute.xlu0 %1259
    %vm1261 = vcmp.eq.s32.totalorder %v1260, 1
    %vm1262 = vmpackc.low %vm1261, %vm1261
    %v1263 = vsel %vm1262, %v1254, %v1051
    %v1264 = vsel %vm1261, %v1247, %v1052
    %v1265 = vsel %vm1262, %v1254, 0
    %v1268 = vunpack.c.l.s4 1966171168
    %v1269 = vunpack.c.0.s8 %v1268
    %v1270 = vlaneseq
    %v1271 = vshrl.u32 %v1270, 7
    %v1272 = vsub.s32 %v1269, %v1271
    %v1273 = vrot.slane %v1265, %v1272
    %v1275 = vunpack.c.l.s4 1966171168
    %v1276 = vunpack.c.0.s8 %v1275
    %v1277 = vlaneseq
    %v1278 = vshrl.u32 %v1277, 7
    %v1279 = vsub.s32 %v1276, %v1278
    %v1280 = vrot.slane %v1273, %v1279
    %1281 = vrot.lane.b32.xlu0 %v1280, 32
    %v1282 = vpop.permute.xlu0 %1281
    %s1284 = scalar_lea.vmem %s5, 4
    %1285 = vst.msk [vmem:[%s1284] sm:$0x1] %vm415, %v1282
    %s1286 = sadd.s32 %s418, 3
    %s1287 = scalar_lea.vmem [#allocation10], 3
    %v1288 = vld [vmem:[%s1287] sm:$0x1]
    %v1289 = vunpack.c.l.bf16 %v1288
    %1291 = vrot.lane.b32.xlu0 %v1157, 32
    %v1292 = vpop.permute.xlu0 %1291
    %v1294 = vsel %vm295, %v1292, 0
    %1296 = vmatprep.subr.bf16.mxu0 0
    %1297 = vmatpush1.bf16.msra.mxu0 %v286
    %1298 = vmatprep.subr.bf16.mxu0 0
    %1299 = vmatpush1.bf16.msra.mxu0 %v287
    %1300 = vmatprep.subr.bf16.mxu0 0
    %1301 = vmatpush1.bf16.msra.mxu0 0
    %1302 = vmatprep.subr.bf16.mxu0 0
    %1303 = vmatpush1.bf16.msra.mxu0 0
    %1304 = vmatprep.subr.bf16.mxu0 0
    %1305 = vmatpush1.bf16.msra.mxu0 0
    %1306 = vmatprep.subr.bf16.mxu0 0
    %1307 = vmatpush1.bf16.msra.mxu0 0
    %1308 = vmatprep.subr.bf16.mxu0 0
    %1309 = vmatpush1.bf16.msra.mxu0 0
    %1310 = vmatprep.subr.bf16.mxu0 0
    %1311 = vmatpush1.bf16.msra.mxu0 0
    %1312 = vmatprep.subr.bf16.mxu0 0
    %1313 = vmatpush1.bf16.msra.mxu0 0
    %1314 = vmatprep.subr.bf16.mxu0 0
    %1315 = vmatpush1.bf16.msra.mxu0 0
    %1316 = vmatprep.subr.bf16.mxu0 0
    %1317 = vmatpush1.bf16.msra.mxu0 0
    %1318 = vmatprep.subr.bf16.mxu0 0
    %1319 = vmatpush1.bf16.msra.mxu0 0
    %1320 = vmatprep.subr.bf16.mxu0 0
    %1321 = vmatpush1.bf16.msra.mxu0 0
    %1322 = vmatprep.subr.bf16.mxu0 0
    %1323 = vmatpush1.bf16.msra.mxu0 0
    %1324 = vmatprep.subr.bf16.mxu0 0
    %1325 = vmatpush1.bf16.msra.mxu0 0
    %1326 = vmatprep.subr.bf16.mxu0 0
    %1327 = vmatpush1.bf16.msra.mxu0 0
    %1328 = vmatprep.mubr.bf16.mxu0 0
    %1329 = vmatmul.mubr.bf16.gmra.mrb[0].mxu0 %v1294
    %v1330 = vpop.f32.mrb[0].mxu0
    %v1331 = vadd.f32 %v1289, %v1330
    %v1332 = vpop.f32.mrb[0].mxu0
    %v1333 = vpop.f32.mrb[0].mxu0
    %v1334 = vpop.f32.mrb[0].mxu0
    %1335 = vdwg.mxu0
    %v1336 = vxor.u32 %v1331, 2147483648
    %v1337 = vmul.f32 %v1336, 1.442695
    %v1338 = vpow.pop %v1337
    %v1339 = vadd.f32 %v1338, 1.0
    %v1340 = vrcp.pop %v1339
    %v1341 = vmul.f32 1.0, %v1340
    %v1342 = vtanh.pop %v1331
    %v1343 = vmul.f32 %v1341, %v1158
    %1345 = vrot.lane.b32.xlu0 %v1342, 64
    %v1346 = vpop.permute.xlu0 %1345
    %v1348 = vmul.f32 %v1341, %v1346
    %1350 = vrot.lane.b32.xlu0 %v1348, 32
    %v1351 = vpop.permute.xlu0 %1350
    %v1353 = vadd.f32 %v1343, %v1351
    %v1354 = vtanh.pop %v1353
    %1356 = vrot.lane.b32.xlu0 %v1354, 64
    %v1357 = vpop.permute.xlu0 %1356
    %v1359 = vmul.f32 %v1341, %v1357
    %v1360 = vpack.c.bf16 %v1359, %v1359
    %v1361 = vstv %s1286
    %vm1362 = vcmp.lt.s32.totalorder %v1361, %v283
    %v1363 = vsel %vm1362, 1, 0
    %1364 = vset.pattern.permute.xlu0 0
    %1365 = vperm.xlu0 %1364, %v1363
    %v1366 = vpop.permute.xlu0 %1365
    %vm1367 = vcmp.eq.s32.totalorder %v1366, 1
    %vm1368 = vmpackc.low %vm1367, %vm1367
    %v1369 = vsel %vm1368, %v1360, %v1157
    %v1370 = vsel %vm1367, %v1353, %v1158
    %v1371 = vsel %vm1368, %v1360, 0
    %v1374 = vunpack.c.l.s4 1966171168
    %v1375 = vunpack.c.0.s8 %v1374
    %v1376 = vlaneseq
    %v1377 = vshrl.u32 %v1376, 7
    %v1378 = vsub.s32 %v1375, %v1377
    %v1379 = vrot.slane %v1371, %v1378
    %v1381 = vunpack.c.l.s4 1966171168
    %v1382 = vunpack.c.0.s8 %v1381
    %v1383 = vlaneseq
    %v1384 = vshrl.u32 %v1383, 7
    %v1385 = vsub.s32 %v1382, %v1384
    %v1386 = vrot.slane %v1379, %v1385
    %1387 = vrot.lane.b32.xlu0 %v1386, 32
    %v1388 = vpop.permute.xlu0 %1387
    %s1390 = scalar_lea.vmem %s174, 3
    %1391 = vst.msk [vmem:[%s1390] sm:$0x1] %vm415, %v1388
    %s1392 = sadd.s32 %s292, 5
    %s1393 = scalar_lea.vmem [#allocation9], 5
    %v1394 = vld [vmem:[%s1393] sm:$0x1]
    %v1395 = vunpack.c.l.bf16 %v1394
    %1397 = vrot.lane.b32.xlu0 %v1263, 32
    %v1398 = vpop.permute.xlu0 %1397
    %v1400 = vsel %vm295, %v1398, 0
    %1402 = vmatprep.subr.bf16.mxu0 0
    %1403 = vmatpush1.bf16.msra.mxu0 %v284
    %1404 = vmatprep.subr.bf16.mxu0 0
    %1405 = vmatpush1.bf16.msra.mxu0 %v285
    %1406 = vmatprep.subr.bf16.mxu0 0
    %1407 = vmatpush1.bf16.msra.mxu0 0
    %1408 = vmatprep.subr.bf16.mxu0 0
    %1409 = vmatpush1.bf16.msra.mxu0 0
    %1410 = vmatprep.subr.bf16.mxu0 0
    %1411 = vmatpush1.bf16.msra.mxu0 0
    %1412 = vmatprep.subr.bf16.mxu0 0
    %1413 = vmatpush1.bf16.msra.mxu0 0
    %1414 = vmatprep.subr.bf16.mxu0 0
    %1415 = vmatpush1.bf16.msra.mxu0 0
    %1416 = vmatprep.subr.bf16.mxu0 0
    %1417 = vmatpush1.bf16.msra.mxu0 0
    %1418 = vmatprep.subr.bf16.mxu0 0
    %1419 = vmatpush1.bf16.msra.mxu0 0
    %1420 = vmatprep.subr.bf16.mxu0 0
    %1421 = vmatpush1.bf16.msra.mxu0 0
    %1422 = vmatprep.subr.bf16.mxu0 0
    %1423 = vmatpush1.bf16.msra.mxu0 0
    %1424 = vmatprep.subr.bf16.mxu0 0
    %1425 = vmatpush1.bf16.msra.mxu0 0
    %1426 = vmatprep.subr.bf16.mxu0 0
    %1427 = vmatpush1.bf16.msra.mxu0 0
    %1428 = vmatprep.subr.bf16.mxu0 0
    %1429 = vmatpush1.bf16.msra.mxu0 0
    %1430 = vmatprep.subr.bf16.mxu0 0
    %1431 = vmatpush1.bf16.msra.mxu0 0
    %1432 = vmatprep.subr.bf16.mxu0 0
    %1433 = vmatpush1.bf16.msra.mxu0 0
    %1434 = vmatprep.mubr.bf16.mxu0 0
    %1435 = vmatmul.mubr.bf16.gmra.mrb[0].mxu0 %v1400
    %v1436 = vpop.f32.mrb[0].mxu0
    %v1437 = vadd.f32 %v1395, %v1436
    %v1438 = vpop.f32.mrb[0].mxu0
    %v1439 = vpop.f32.mrb[0].mxu0
    %v1440 = vpop.f32.mrb[0].mxu0
    %1441 = vdwg.mxu0
    %v1442 = vxor.u32 %v1437, 2147483648
    %v1443 = vmul.f32 %v1442, 1.442695
    %v1444 = vpow.pop %v1443
    %v1445 = vadd.f32 %v1444, 1.0
    %v1446 = vrcp.pop %v1445
    %v1447 = vmul.f32 1.0, %v1446
    %v1448 = vtanh.pop %v1437
    %v1449 = vmul.f32 %v1447, %v1264
    %1451 = vrot.lane.b32.xlu0 %v1448, 64
    %v1452 = vpop.permute.xlu0 %1451
    %v1454 = vmul.f32 %v1447, %v1452
    %1456 = vrot.lane.b32.xlu0 %v1454, 32
    %v1457 = vpop.permute.xlu0 %1456
    %v1459 = vadd.f32 %v1449, %v1457
    %v1460 = vtanh.pop %v1459
    %1462 = vrot.lane.b32.xlu0 %v1460, 64
    %v1463 = vpop.permute.xlu0 %1462
    %v1465 = vmul.f32 %v1447, %v1463
    %v1466 = vpack.c.bf16 %v1465, %v1465
    %v1467 = vstv %s1392
    %vm1468 = vcmp.lt.s32.totalorder %v1467, %v283
    %v1469 = vsel %vm1468, 1, 0
    %1470 = vset.pattern.permute.xlu0 0
    %1471 = vperm.xlu0 %1470, %v1469
    %v1472 = vpop.permute.xlu0 %1471
    %vm1473 = vcmp.eq.s32.totalorder %v1472, 1
    %vm1474 = vmpackc.low %vm1473, %vm1473
    %v1475 = vsel %vm1474, %v1466, %v1263
    %v1476 = vsel %vm1473, %v1459, %v1264
    %v1477 = vsel %vm1474, %v1466, 0
    %v1480 = vunpack.c.l.s4 1966171168
    %v1481 = vunpack.c.0.s8 %v1480
    %v1482 = vlaneseq
    %v1483 = vshrl.u32 %v1482, 7
    %v1484 = vsub.s32 %v1481, %v1483
    %v1485 = vrot.slane %v1477, %v1484
    %v1487 = vunpack.c.l.s4 1966171168
    %v1488 = vunpack.c.0.s8 %v1487
    %v1489 = vlaneseq
    %v1490 = vshrl.u32 %v1489, 7
    %v1491 = vsub.s32 %v1488, %v1490
    %v1492 = vrot.slane %v1485, %v1491
    %1493 = vrot.lane.b32.xlu0 %v1492, 32
    %v1494 = vpop.permute.xlu0 %1493
    %s1496 = scalar_lea.vmem %s5, 5
    %1497 = vst.msk [vmem:[%s1496] sm:$0x1] %vm415, %v1494
    %s1498 = sadd.s32 %s418, 2
    %s1499 = scalar_lea.vmem [#allocation10], 2
    %v1500 = vld [vmem:[%s1499] sm:$0x1]
    %v1501 = vunpack.c.l.bf16 %v1500
    %1503 = vrot.lane.b32.xlu0 %v1369, 32
    %v1504 = vpop.permute.xlu0 %1503
    %v1506 = vsel %vm295, %v1504, 0
    %1508 = vmatprep.subr.bf16.mxu0 0
    %1509 = vmatpush1.bf16.msra.mxu0 %v286
    %1510 = vmatprep.subr.bf16.mxu0 0
    %1511 = vmatpush1.bf16.msra.mxu0 %v287
    %1512 = vmatprep.subr.bf16.mxu0 0
    %1513 = vmatpush1.bf16.msra.mxu0 0
    %1514 = vmatprep.subr.bf16.mxu0 0
    %1515 = vmatpush1.bf16.msra.mxu0 0
    %1516 = vmatprep.subr.bf16.mxu0 0
    %1517 = vmatpush1.bf16.msra.mxu0 0
    %1518 = vmatprep.subr.bf16.mxu0 0
    %1519 = vmatpush1.bf16.msra.mxu0 0
    %1520 = vmatprep.subr.bf16.mxu0 0
    %1521 = vmatpush1.bf16.msra.mxu0 0
    %1522 = vmatprep.subr.bf16.mxu0 0
    %1523 = vmatpush1.bf16.msra.mxu0 0
    %1524 = vmatprep.subr.bf16.mxu0 0
    %1525 = vmatpush1.bf16.msra.mxu0 0
    %1526 = vmatprep.subr.bf16.mxu0 0
    %1527 = vmatpush1.bf16.msra.mxu0 0
    %1528 = vmatprep.subr.bf16.mxu0 0
    %1529 = vmatpush1.bf16.msra.mxu0 0
    %1530 = vmatprep.subr.bf16.mxu0 0
    %1531 = vmatpush1.bf16.msra.mxu0 0
    %1532 = vmatprep.subr.bf16.mxu0 0
    %1533 = vmatpush1.bf16.msra.mxu0 0
    %1534 = vmatprep.subr.bf16.mxu0 0
    %1535 = vmatpush1.bf16.msra.mxu0 0
    %1536 = vmatprep.subr.bf16.mxu0 0
    %1537 = vmatpush1.bf16.msra.mxu0 0
    %1538 = vmatprep.subr.bf16.mxu0 0
    %1539 = vmatpush1.bf16.msra.mxu0 0
    %1540 = vmatprep.mubr.bf16.mxu0 0
    %1541 = vmatmul.mubr.bf16.gmra.mrb[0].mxu0 %v1506
    %v1542 = vpop.f32.mrb[0].mxu0
    %v1543 = vadd.f32 %v1501, %v1542
    %v1544 = vpop.f32.mrb[0].mxu0
    %v1545 = vpop.f32.mrb[0].mxu0
    %v1546 = vpop.f32.mrb[0].mxu0
    %1547 = vdwg.mxu0
    %v1548 = vxor.u32 %v1543, 2147483648
    %v1549 = vmul.f32 %v1548, 1.442695
    %v1550 = vpow.pop %v1549
    %v1551 = vadd.f32 %v1550, 1.0
    %v1552 = vrcp.pop %v1551
    %v1553 = vmul.f32 1.0, %v1552
    %v1554 = vtanh.pop %v1543
    %v1555 = vmul.f32 %v1553, %v1370
    %1557 = vrot.lane.b32.xlu0 %v1554, 64
    %v1558 = vpop.permute.xlu0 %1557
    %v1560 = vmul.f32 %v1553, %v1558
    %1562 = vrot.lane.b32.xlu0 %v1560, 32
    %v1563 = vpop.permute.xlu0 %1562
    %v1565 = vadd.f32 %v1555, %v1563
    %v1566 = vtanh.pop %v1565
    %1568 = vrot.lane.b32.xlu0 %v1566, 64
    %v1569 = vpop.permute.xlu0 %1568
    %v1571 = vmul.f32 %v1553, %v1569
    %v1572 = vpack.c.bf16 %v1571, %v1571
    %v1573 = vstv %s1498
    %vm1574 = vcmp.lt.s32.totalorder %v1573, %v283
    %v1575 = vsel %vm1574, 1, 0
    %1576 = vset.pattern.permute.xlu0 0
    %1577 = vperm.xlu0 %1576, %v1575
    %v1578 = vpop.permute.xlu0 %1577
    %vm1579 = vcmp.eq.s32.totalorder %v1578, 1
    %vm1580 = vmpackc.low %vm1579, %vm1579
    %v1581 = vsel %vm1580, %v1572, %v1369
    %v1582 = vsel %vm1579, %v1565, %v1370
    %v1583 = vsel %vm1580, %v1572, 0
    %v1586 = vunpack.c.l.s4 1966171168
    %v1587 = vunpack.c.0.s8 %v1586
    %v1588 = vlaneseq
    %v1589 = vshrl.u32 %v1588, 7
    %v1590 = vsub.s32 %v1587, %v1589
    %v1591 = vrot.slane %v1583, %v1590
    %v1593 = vunpack.c.l.s4 1966171168
    %v1594 = vunpack.c.0.s8 %v1593
    %v1595 = vlaneseq
    %v1596 = vshrl.u32 %v1595, 7
    %v1597 = vsub.s32 %v1594, %v1596
    %v1598 = vrot.slane %v1591, %v1597
    %1599 = vrot.lane.b32.xlu0 %v1598, 32
    %v1600 = vpop.permute.xlu0 %1599
    %s1602 = scalar_lea.vmem %s174, 2
    %1603 = vst.msk [vmem:[%s1602] sm:$0x1] %vm415, %v1600
    %s1604 = sadd.s32 %s292, 6
    %s1605 = scalar_lea.vmem [#allocation9], 6
    %v1606 = vld [vmem:[%s1605] sm:$0x1]
    %v1607 = vunpack.c.l.bf16 %v1606
    %1609 = vrot.lane.b32.xlu0 %v1475, 32
    %v1610 = vpop.permute.xlu0 %1609
    %v1612 = vsel %vm295, %v1610, 0
    %1614 = vmatprep.subr.bf16.mxu0 0
    %1615 = vmatpush1.bf16.msra.mxu0 %v284
    %1616 = vmatprep.subr.bf16.mxu0 0
    %1617 = vmatpush1.bf16.msra.mxu0 %v285
    %1618 = vmatprep.subr.bf16.mxu0 0
    %1619 = vmatpush1.bf16.msra.mxu0 0
    %1620 = vmatprep.subr.bf16.mxu0 0
    %1621 = vmatpush1.bf16.msra.mxu0 0
    %1622 = vmatprep.subr.bf16.mxu0 0
    %1623 = vmatpush1.bf16.msra.mxu0 0
    %1624 = vmatprep.subr.bf16.mxu0 0
    %1625 = vmatpush1.bf16.msra.mxu0 0
    %1626 = vmatprep.subr.bf16.mxu0 0
    %1627 = vmatpush1.bf16.msra.mxu0 0
    %1628 = vmatprep.subr.bf16.mxu0 0
    %1629 = vmatpush1.bf16.msra.mxu0 0
    %1630 = vmatprep.subr.bf16.mxu0 0
    %1631 = vmatpush1.bf16.msra.mxu0 0
    %1632 = vmatprep.subr.bf16.mxu0 0
    %1633 = vmatpush1.bf16.msra.mxu0 0
    %1634 = vmatprep.subr.bf16.mxu0 0
    %1635 = vmatpush1.bf16.msra.mxu0 0
    %1636 = vmatprep.subr.bf16.mxu0 0
    %1637 = vmatpush1.bf16.msra.mxu0 0
    %1638 = vmatprep.subr.bf16.mxu0 0
    %1639 = vmatpush1.bf16.msra.mxu0 0
    %1640 = vmatprep.subr.bf16.mxu0 0
    %1641 = vmatpush1.bf16.msra.mxu0 0
    %1642 = vmatprep.subr.bf16.mxu0 0
    %1643 = vmatpush1.bf16.msra.mxu0 0
    %1644 = vmatprep.subr.bf16.mxu0 0
    %1645 = vmatpush1.bf16.msra.mxu0 0
    %1646 = vmatprep.mubr.bf16.mxu0 0
    %1647 = vmatmul.mubr.bf16.gmra.mrb[0].mxu0 %v1612
    %v1648 = vpop.f32.mrb[0].mxu0
    %v1649 = vadd.f32 %v1607, %v1648
    %v1650 = vpop.f32.mrb[0].mxu0
    %v1651 = vpop.f32.mrb[0].mxu0
    %v1652 = vpop.f32.mrb[0].mxu0
    %1653 = vdwg.mxu0
    %v1654 = vxor.u32 %v1649, 2147483648
    %v1655 = vmul.f32 %v1654, 1.442695
    %v1656 = vpow.pop %v1655
    %v1657 = vadd.f32 %v1656, 1.0
    %v1658 = vrcp.pop %v1657
    %v1659 = vmul.f32 1.0, %v1658
    %v1660 = vtanh.pop %v1649
    %v1661 = vmul.f32 %v1659, %v1476
    %1663 = vrot.lane.b32.xlu0 %v1660, 64
    %v1664 = vpop.permute.xlu0 %1663
    %v1666 = vmul.f32 %v1659, %v1664
    %1668 = vrot.lane.b32.xlu0 %v1666, 32
    %v1669 = vpop.permute.xlu0 %1668
    %v1671 = vadd.f32 %v1661, %v1669
    %v1672 = vtanh.pop %v1671
    %1674 = vrot.lane.b32.xlu0 %v1672, 64
    %v1675 = vpop.permute.xlu0 %1674
    %v1677 = vmul.f32 %v1659, %v1675
    %v1678 = vpack.c.bf16 %v1677, %v1677
    %v1679 = vstv %s1604
    %vm1680 = vcmp.lt.s32.totalorder %v1679, %v283
    %v1681 = vsel %vm1680, 1, 0
    %1682 = vset.pattern.permute.xlu0 0
    %1683 = vperm.xlu0 %1682, %v1681
    %v1684 = vpop.permute.xlu0 %1683
    %vm1685 = vcmp.eq.s32.totalorder %v1684, 1
    %vm1686 = vmpackc.low %vm1685, %vm1685
    %v1687 = vsel %vm1686, %v1678, %v1475
    %v1688 = vsel %vm1685, %v1671, %v1476
    %v1689 = vsel %vm1686, %v1678, 0
    %v1692 = vunpack.c.l.s4 1966171168
    %v1693 = vunpack.c.0.s8 %v1692
    %v1694 = vlaneseq
    %v1695 = vshrl.u32 %v1694, 7
    %v1696 = vsub.s32 %v1693, %v1695
    %v1697 = vrot.slane %v1689, %v1696
    %v1699 = vunpack.c.l.s4 1966171168
    %v1700 = vunpack.c.0.s8 %v1699
    %v1701 = vlaneseq
    %v1702 = vshrl.u32 %v1701, 7
    %v1703 = vsub.s32 %v1700, %v1702
    %v1704 = vrot.slane %v1697, %v1703
    %1705 = vrot.lane.b32.xlu0 %v1704, 32
    %v1706 = vpop.permute.xlu0 %1705
    %s1708 = scalar_lea.vmem %s5, 6
    %1709 = vst.msk [vmem:[%s1708] sm:$0x1] %vm415, %v1706
    %s1710 = sadd.s32 %s418, 1
    %s1711 = scalar_lea.vmem [#allocation10], 1
    %v1712 = vld [vmem:[%s1711] sm:$0x1]
    %v1713 = vunpack.c.l.bf16 %v1712
    %1715 = vrot.lane.b32.xlu0 %v1581, 32
    %v1716 = vpop.permute.xlu0 %1715
    %v1718 = vsel %vm295, %v1716, 0
    %1720 = vmatprep.subr.bf16.mxu0 0
    %1721 = vmatpush1.bf16.msra.mxu0 %v286
    %1722 = vmatprep.subr.bf16.mxu0 0
    %1723 = vmatpush1.bf16.msra.mxu0 %v287
    %1724 = vmatprep.subr.bf16.mxu0 0
    %1725 = vmatpush1.bf16.msra.mxu0 0
    %1726 = vmatprep.subr.bf16.mxu0 0
    %1727 = vmatpush1.bf16.msra.mxu0 0
    %1728 = vmatprep.subr.bf16.mxu0 0
    %1729 = vmatpush1.bf16.msra.mxu0 0
    %1730 = vmatprep.subr.bf16.mxu0 0
    %1731 = vmatpush1.bf16.msra.mxu0 0
    %1732 = vmatprep.subr.bf16.mxu0 0
    %1733 = vmatpush1.bf16.msra.mxu0 0
    %1734 = vmatprep.subr.bf16.mxu0 0
    %1735 = vmatpush1.bf16.msra.mxu0 0
    %1736 = vmatprep.subr.bf16.mxu0 0
    %1737 = vmatpush1.bf16.msra.mxu0 0
    %1738 = vmatprep.subr.bf16.mxu0 0
    %1739 = vmatpush1.bf16.msra.mxu0 0
    %1740 = vmatprep.subr.bf16.mxu0 0
    %1741 = vmatpush1.bf16.msra.mxu0 0
    %1742 = vmatprep.subr.bf16.mxu0 0
    %1743 = vmatpush1.bf16.msra.mxu0 0
    %1744 = vmatprep.subr.bf16.mxu0 0
    %1745 = vmatpush1.bf16.msra.mxu0 0
    %1746 = vmatprep.subr.bf16.mxu0 0
    %1747 = vmatpush1.bf16.msra.mxu0 0
    %1748 = vmatprep.subr.bf16.mxu0 0
    %1749 = vmatpush1.bf16.msra.mxu0 0
    %1750 = vmatprep.subr.bf16.mxu0 0
    %1751 = vmatpush1.bf16.msra.mxu0 0
    %1752 = vmatprep.mubr.bf16.mxu0 0
    %1753 = vmatmul.mubr.bf16.gmra.mrb[0].mxu0 %v1718
    %v1754 = vpop.f32.mrb[0].mxu0
    %v1755 = vadd.f32 %v1713, %v1754
    %v1756 = vpop.f32.mrb[0].mxu0
    %v1757 = vpop.f32.mrb[0].mxu0
    %v1758 = vpop.f32.mrb[0].mxu0
    %1759 = vdwg.mxu0
    %v1760 = vxor.u32 %v1755, 2147483648
    %v1761 = vmul.f32 %v1760, 1.442695
    %v1762 = vpow.pop %v1761
    %v1763 = vadd.f32 %v1762, 1.0
    %v1764 = vrcp.pop %v1763
    %v1765 = vmul.f32 1.0, %v1764
    %v1766 = vtanh.pop %v1755
    %v1767 = vmul.f32 %v1765, %v1582
    %1769 = vrot.lane.b32.xlu0 %v1766, 64
    %v1770 = vpop.permute.xlu0 %1769
    %v1772 = vmul.f32 %v1765, %v1770
    %1774 = vrot.lane.b32.xlu0 %v1772, 32
    %v1775 = vpop.permute.xlu0 %1774
    %v1777 = vadd.f32 %v1767, %v1775
    %v1778 = vtanh.pop %v1777
    %1780 = vrot.lane.b32.xlu0 %v1778, 64
    %v1781 = vpop.permute.xlu0 %1780
    %v1783 = vmul.f32 %v1765, %v1781
    %v1784 = vpack.c.bf16 %v1783, %v1783
    %v1785 = vstv %s1710
    %vm1786 = vcmp.lt.s32.totalorder %v1785, %v283
    %v1787 = vsel %vm1786, 1, 0
    %1788 = vset.pattern.permute.xlu0 0
    %1789 = vperm.xlu0 %1788, %v1787
    %v1790 = vpop.permute.xlu0 %1789
    %vm1791 = vcmp.eq.s32.totalorder %v1790, 1
    %vm1792 = vmpackc.low %vm1791, %vm1791
    %v1793 = vsel %vm1792, %v1784, %v1581
    %v1794 = vsel %vm1791, %v1777, %v1582
    %v1795 = vsel %vm1792, %v1784, 0
    %v1798 = vunpack.c.l.s4 1966171168
    %v1799 = vunpack.c.0.s8 %v1798
    %v1800 = vlaneseq
    %v1801 = vshrl.u32 %v1800, 7
    %v1802 = vsub.s32 %v1799, %v1801
    %v1803 = vrot.slane %v1795, %v1802
    %v1805 = vunpack.c.l.s4 1966171168
    %v1806 = vunpack.c.0.s8 %v1805
    %v1807 = vlaneseq
    %v1808 = vshrl.u32 %v1807, 7
    %v1809 = vsub.s32 %v1806, %v1808
    %v1810 = vrot.slane %v1803, %v1809
    %1811 = vrot.lane.b32.xlu0 %v1810, 32
    %v1812 = vpop.permute.xlu0 %1811
    %s1814 = scalar_lea.vmem %s174, 1
    %1815 = vst.msk [vmem:[%s1814] sm:$0x1] %vm415, %v1812
    %s1816 = sadd.s32 %s292, 7
    %s1817 = scalar_lea.vmem [#allocation9], 7
    %v1818 = vld [vmem:[%s1817] sm:$0x1]
    %v1819 = vunpack.c.l.bf16 %v1818
    %1821 = vrot.lane.b32.xlu0 %v1687, 32
    %v1822 = vpop.permute.xlu0 %1821
    %v1824 = vsel %vm295, %v1822, 0
    %1826 = vmatprep.subr.bf16.mxu0 0
    %1827 = vmatpush1.bf16.msra.mxu0 %v284
    %1828 = vmatprep.subr.bf16.mxu0 0
    %1829 = vmatpush1.bf16.msra.mxu0 %v285
    %1830 = vmatprep.subr.bf16.mxu0 0
    %1831 = vmatpush1.bf16.msra.mxu0 0
    %1832 = vmatprep.subr.bf16.mxu0 0
    %1833 = vmatpush1.bf16.msra.mxu0 0
    %1834 = vmatprep.subr.bf16.mxu0 0
    %1835 = vmatpush1.bf16.msra.mxu0 0
    %1836 = vmatprep.subr.bf16.mxu0 0
    %1837 = vmatpush1.bf16.msra.mxu0 0
    %1838 = vmatprep.subr.bf16.mxu0 0
    %1839 = vmatpush1.bf16.msra.mxu0 0
    %1840 = vmatprep.subr.bf16.mxu0 0
    %1841 = vmatpush1.bf16.msra.mxu0 0
    %1842 = vmatprep.subr.bf16.mxu0 0
    %1843 = vmatpush1.bf16.msra.mxu0 0
    %1844 = vmatprep.subr.bf16.mxu0 0
    %1845 = vmatpush1.bf16.msra.mxu0 0
    %1846 = vmatprep.subr.bf16.mxu0 0
    %1847 = vmatpush1.bf16.msra.mxu0 0
    %1848 = vmatprep.subr.bf16.mxu0 0
    %1849 = vmatpush1.bf16.msra.mxu0 0
    %1850 = vmatprep.subr.bf16.mxu0 0
    %1851 = vmatpush1.bf16.msra.mxu0 0
    %1852 = vmatprep.subr.bf16.mxu0 0
    %1853 = vmatpush1.bf16.msra.mxu0 0
    %1854 = vmatprep.subr.bf16.mxu0 0
    %1855 = vmatpush1.bf16.msra.mxu0 0
    %1856 = vmatprep.subr.bf16.mxu0 0
    %1857 = vmatpush1.bf16.msra.mxu0 0
    %1858 = vmatprep.mubr.bf16.mxu0 0
    %1859 = vmatmul.mubr.bf16.gmra.mrb[0].mxu0 %v1824
    %v1860 = vpop.f32.mrb[0].mxu0
    %v1861 = vadd.f32 %v1819, %v1860
    %v1862 = vpop.f32.mrb[0].mxu0
    %v1863 = vpop.f32.mrb[0].mxu0
    %v1864 = vpop.f32.mrb[0].mxu0
    %1865 = vdwg.mxu0
    %v1866 = vxor.u32 %v1861, 2147483648
    %v1867 = vmul.f32 %v1866, 1.442695
    %v1868 = vpow.pop %v1867
    %v1869 = vadd.f32 %v1868, 1.0
    %v1870 = vrcp.pop %v1869
    %v1871 = vmul.f32 1.0, %v1870
    %v1872 = vtanh.pop %v1861
    %v1873 = vmul.f32 %v1871, %v1688
    %1875 = vrot.lane.b32.xlu0 %v1872, 64
    %v1876 = vpop.permute.xlu0 %1875
    %v1878 = vmul.f32 %v1871, %v1876
    %1880 = vrot.lane.b32.xlu0 %v1878, 32
    %v1881 = vpop.permute.xlu0 %1880
    %v1883 = vadd.f32 %v1873, %v1881
    %v1884 = vtanh.pop %v1883
    %1886 = vrot.lane.b32.xlu0 %v1884, 64
    %v1887 = vpop.permute.xlu0 %1886
    %v1889 = vmul.f32 %v1871, %v1887
    %v1890 = vpack.c.bf16 %v1889, %v1889
    %v1891 = vstv %s1816
    %vm1892 = vcmp.lt.s32.totalorder %v1891, %v283
    %v1893 = vsel %vm1892, 1, 0
    %1894 = vset.pattern.permute.xlu0 0
    %1895 = vperm.xlu0 %1894, %v1893
    %v1896 = vpop.permute.xlu0 %1895
    %vm1897 = vcmp.eq.s32.totalorder %v1896, 1
    %vm1898 = vmpackc.low %vm1897, %vm1897
    %v1899 = vsel %vm1898, %v1890, %v1687
    %v1900 = vsel %vm1897, %v1883, %v1688
    %v1901 = vsel %vm1898, %v1890, 0
    %v1904 = vunpack.c.l.s4 1966171168
    %v1905 = vunpack.c.0.s8 %v1904
    %v1906 = vlaneseq
    %v1907 = vshrl.u32 %v1906, 7
    %v1908 = vsub.s32 %v1905, %v1907
    %v1909 = vrot.slane %v1901, %v1908
    %v1911 = vunpack.c.l.s4 1966171168
    %v1912 = vunpack.c.0.s8 %v1911
    %v1913 = vlaneseq
    %v1914 = vshrl.u32 %v1913, 7
    %v1915 = vsub.s32 %v1912, %v1914
    %v1916 = vrot.slane %v1909, %v1915
    %1917 = vrot.lane.b32.xlu0 %v1916, 32
    %v1918 = vpop.permute.xlu0 %1917
    %s1920 = scalar_lea.vmem %s5, 7
    %1921 = vst.msk [vmem:[%s1920] sm:$0x1] %vm415, %v1918
    %v1922 = vld [vmem:[#allocation10] sm:$0x1]
    %v1923 = vunpack.c.l.bf16 %v1922
    %1925 = vrot.lane.b32.xlu0 %v1793, 32
    %v1926 = vpop.permute.xlu0 %1925
    %v1928 = vsel %vm295, %v1926, 0
    %1930 = vmatprep.subr.bf16.mxu0 0
    %1931 = vmatpush1.bf16.msra.mxu0 %v286
    %1932 = vmatprep.subr.bf16.mxu0 0
    %1933 = vmatpush1.bf16.msra.mxu0 %v287
    %1934 = vmatprep.subr.bf16.mxu0 0
    %1935 = vmatpush1.bf16.msra.mxu0 0
    %1936 = vmatprep.subr.bf16.mxu0 0
    %1937 = vmatpush1.bf16.msra.mxu0 0
    %1938 = vmatprep.subr.bf16.mxu0 0
    %1939 = vmatpush1.bf16.msra.mxu0 0
    %1940 = vmatprep.subr.bf16.mxu0 0
    %1941 = vmatpush1.bf16.msra.mxu0 0
    %1942 = vmatprep.subr.bf16.mxu0 0
    %1943 = vmatpush1.bf16.msra.mxu0 0
    %1944 = vmatprep.subr.bf16.mxu0 0
    %1945 = vmatpush1.bf16.msra.mxu0 0
    %1946 = vmatprep.subr.bf16.mxu0 0
    %1947 = vmatpush1.bf16.msra.mxu0 0
    %1948 = vmatprep.subr.bf16.mxu0 0
    %1949 = vmatpush1.bf16.msra.mxu0 0
    %1950 = vmatprep.subr.bf16.mxu0 0
    %1951 = vmatpush1.bf16.msra.mxu0 0
    %1952 = vmatprep.subr.bf16.mxu0 0
    %1953 = vmatpush1.bf16.msra.mxu0 0
    %1954 = vmatprep.subr.bf16.mxu0 0
    %1955 = vmatpush1.bf16.msra.mxu0 0
    %1956 = vmatprep.subr.bf16.mxu0 0
    %1957 = vmatpush1.bf16.msra.mxu0 0
    %1958 = vmatprep.subr.bf16.mxu0 0
    %1959 = vmatpush1.bf16.msra.mxu0 0
    %1960 = vmatprep.subr.bf16.mxu0 0
    %1961 = vmatpush1.bf16.msra.mxu0 0
    %1962 = vmatprep.mubr.bf16.mxu0 0
    %1963 = vmatmul.mubr.bf16.gmra.mrb[0].mxu0 %v1928
    %v1964 = vpop.f32.mrb[0].mxu0
    %v1965 = vadd.f32 %v1923, %v1964
    %v1966 = vpop.f32.mrb[0].mxu0
    %v1967 = vpop.f32.mrb[0].mxu0
    %v1968 = vpop.f32.mrb[0].mxu0
    %1969 = vdwg.mxu0
    %v1970 = vxor.u32 %v1965, 2147483648
    %v1971 = vmul.f32 %v1970, 1.442695
    %v1972 = vpow.pop %v1971
    %v1973 = vadd.f32 %v1972, 1.0
    %v1974 = vrcp.pop %v1973
    %v1975 = vmul.f32 1.0, %v1974
    %v1976 = vtanh.pop %v1965
    %v1977 = vmul.f32 %v1975, %v1794
    %1979 = vrot.lane.b32.xlu0 %v1976, 64
    %v1980 = vpop.permute.xlu0 %1979
    %v1982 = vmul.f32 %v1975, %v1980
    %1984 = vrot.lane.b32.xlu0 %v1982, 32
    %v1985 = vpop.permute.xlu0 %1984
    %v1987 = vadd.f32 %v1977, %v1985
    %v1988 = vtanh.pop %v1987
    %1990 = vrot.lane.b32.xlu0 %v1988, 64
    %v1991 = vpop.permute.xlu0 %1990
    %v1993 = vmul.f32 %v1975, %v1991
    %v1994 = vpack.c.bf16 %v1993, %v1993
    %v1995 = vstv %s418
    %vm1996 = vcmp.lt.s32.totalorder %v1995, %v283
    %v1997 = vsel %vm1996, 1, 0
    %1998 = vset.pattern.permute.xlu0 0
    %1999 = vperm.xlu0 %1998, %v1997
    %v2000 = vpop.permute.xlu0 %1999
    %vm2001 = vcmp.eq.s32.totalorder %v2000, 1
    %vm2002 = vmpackc.low %vm2001, %vm2001
    %v2003 = vsel %vm2002, %v1994, %v1793
    %v2004 = vsel %vm2001, %v1987, %v1794
    %v2005 = vsel %vm2002, %v1994, 0
    %v2008 = vunpack.c.l.s4 1966171168
    %v2009 = vunpack.c.0.s8 %v2008
    %v2010 = vlaneseq
    %v2011 = vshrl.u32 %v2010, 7
    %v2012 = vsub.s32 %v2009, %v2011
    %v2013 = vrot.slane %v2005, %v2012
    %v2015 = vunpack.c.l.s4 1966171168
    %v2016 = vunpack.c.0.s8 %v2015
    %v2017 = vlaneseq
    %v2018 = vshrl.u32 %v2017, 7
    %v2019 = vsub.s32 %v2016, %v2018
    %v2020 = vrot.slane %v2013, %v2019
    %2021 = vrot.lane.b32.xlu0 %v2020, 32
    %v2022 = vpop.permute.xlu0 %2021
    %2024 = vst.msk [vmem:[%s174] sm:$0x1] %vm415, %v2022
    %v2027 = vunpack.c.l.s4 1966171168
    %v2028 = vunpack.c.0.s8 %v2027
    %v2029 = vlaneseq
    %v2030 = vshrl.u32 %v2029, 7
    %v2031 = vsub.s32 %v2028, %v2030
    %v2032 = vrot.slane %v1899, %v2031
    %v2034 = vunpack.c.l.s4 1966171168
    %v2035 = vunpack.c.0.s8 %v2034
    %v2036 = vlaneseq
    %v2037 = vshrl.u32 %v2036, 7
    %v2038 = vsub.s32 %v2035, %v2037
    %v2039 = vrot.slane %v2032, %v2038
    %2040 = vrot.lane.b32.xlu0 %v2039, 32
    %v2041 = vpop.permute.xlu0 %2040
    %2043 = vst.msk [vmem:[#allocation2] sm:$0x1] %vm415, %v2041
    %2045 = vrot.lane.b32.xlu0 %v1900, 96
    %v2046 = vpop.permute.xlu0 %2045
    %vm2048 = vcmask 254976
    %2049 = vst.msk [vmem:[#allocation3] sm:$0x3] %vm2048, %v2046
    %v2052 = vunpack.c.l.s4 1966171168
    %v2053 = vunpack.c.0.s8 %v2052
    %v2054 = vlaneseq
    %v2055 = vshrl.u32 %v2054, 7
    %v2056 = vsub.s32 %v2053, %v2055
    %v2057 = vrot.slane %v2003, %v2056
    %v2059 = vunpack.c.l.s4 1966171168
    %v2060 = vunpack.c.0.s8 %v2059
    %v2061 = vlaneseq
    %v2062 = vshrl.u32 %v2061, 7
    %v2063 = vsub.s32 %v2060, %v2062
    %v2064 = vrot.slane %v2057, %v2063
    %2065 = vrot.lane.b32.xlu0 %v2064, 32
    %v2066 = vpop.permute.xlu0 %2065
    %2068 = vst.msk [vmem:[#allocation4] sm:$0x1] %vm415, %v2066
    %2070 = vrot.lane.b32.xlu0 %v2004, 96
    %v2071 = vpop.permute.xlu0 %2070
    %2073 = vst.msk [vmem:[#allocation5] sm:$0x3] %vm2048, %v2071
    // Predicated region
    $region168: #{encoder_forward.2} parent=1 // pred_check
      %p2074 = pneg %p178
    $region169: #{encoder_forward.2} parent=1 // pred_check_branch
      %2076 = sbr.rel (%p2074) target = $region171
    $region170: #{encoder_forward.2} parent=1 // pred_region
      %v2077 = vunpack.c.l.bf16 %v1899
      %2079 = vrot.lane.b32.xlu0 %v2077, 32
      %v2080 = vpop.permute.xlu0 %2079
      %2082 = vst.msk [vmem:[%s7] sm:$0x3] %vm2048, %v2080
      %v2083 = vunpack.c.l.bf16 %v2003
      %2085 = vrot.lane.b32.xlu0 %v2083, 32
      %v2086 = vpop.permute.xlu0 %2085
      %s2088 = scalar_lea.vmem %s7, 2
      %2089 = vst.msk [vmem:[%s2088] sm:$0x3] %vm2048, %v2086
      %2090 = vst.msk [vmem:[%s8] sm:$0x3] %vm2048, %v2046
      %s2091 = scalar_lea.vmem %s8, 2
      %2092 = vst.msk [vmem:[%s2091] sm:$0x3] %vm2048, %v2071
    $region171: #{encoder_forward.2} parent=1 // pred_fallthru
      _
    %s2093 = ssub.s32 0, 0
    %s2094 = smul.u32 8, %s2093
    %p2095 = scmp.lt.s32.totalorder %s2094, 7
    %s2096 = scalar_select %p2095, %s2094, 7
    %s2097 = scalar_lea.vmem %s6, %s2096
    // Predicated region
    $region172: #{encoder_forward.2} parent=1 // pred_check
      _
    $region173: #{encoder_forward.2} parent=1 // pred_check_branch
      %2099 = sbr.rel (0) target = $region175
    $region174: #{encoder_forward.2} parent=1 // pred_region
      _
    $region175: #{encoder_forward.2} parent=1 // pred_fallthru
      _
    // Predicated region
    $region176: #{encoder_forward.2} parent=1 // pred_check
      _
    $region177: #{encoder_forward.2} parent=1 // pred_check_branch
      %2101 = sbr.rel (0) target = $region179
    $region178: #{encoder_forward.2} parent=1 // pred_region
      %s2102 = ssub.s32 0, 0
      %s2103 = smul.u32 8, %s2102
    $region179: #{encoder_forward.2} parent=1 // pred_fallthru
      _
    // Predicated region
    $region180: #{encoder_forward.2} parent=1 // pred_check
      _
    $region181: #{encoder_forward.2} parent=1 // pred_check_branch
      %2105 = sbr.rel (0) target = $region183
    $region182: #{encoder_forward.2} parent=1 // pred_region
      _
    $region183: #{encoder_forward.2} parent=1 // pred_fallthru
      _
    // Predicated region
    $region184: #{encoder_forward.2} parent=1 // pred_check
      _
    $region185: #{encoder_forward.2} parent=1 // pred_check_branch
      %2107 = sbr.rel (0) target = $region187
    $region186: #{encoder_forward.2} parent=1 // pred_region
      _
    $region187: #{encoder_forward.2} parent=1 // pred_fallthru
      _
    // Predicated region
    $region188: #{encoder_forward.2} parent=1 // pred_check
      _
    $region189: #{encoder_forward.2} parent=1 // pred_check_branch
      %2109 = sbr.rel (0) target = $region191
    $region190: #{encoder_forward.2} parent=1 // pred_region
      _
    $region191: #{encoder_forward.2} parent=1 // pred_fallthru
      _
    // Predicated region
    $region192: #{encoder_forward.2} parent=1 // pred_check
      _
    $region193: #{encoder_forward.2} parent=1 // pred_check_branch
      %2111 = sbr.rel (0) target = $region195
    $region194: #{encoder_forward.2} parent=1 // pred_region
      %s2112 = ssub.s32 0, 0
      %s2113 = smul.u32 8, %s2112
      %p2114 = scmp.lt.s32.totalorder %s2113, 7
      %s2115 = scalar_select %p2114, %s2113, 7
      %s2116 = scalar_lea.vmem %s6, %s2115
    $region195: #{encoder_forward.2} parent=1 // pred_fallthru
      _
    // Predicated region
    $region196: #{encoder_forward.2} parent=1 // pred_check
      _
    $region197: #{encoder_forward.2} parent=1 // pred_check_branch
      %2118 = sbr.rel (0) target = $region199
    $region198: #{encoder_forward.2} parent=1 // pred_region
      _
    $region199: #{encoder_forward.2} parent=1 // pred_fallthru
      _
    // Predicated region
    $region200: #{encoder_forward.2} parent=1 // pred_check
      _
    $region201: #{encoder_forward.2} parent=1 // pred_check_branch
      %2120 = sbr.rel (0) target = $region203
    $region202: #{encoder_forward.2} parent=1 // pred_region
      _
    $region203: #{encoder_forward.2} parent=1 // pred_fallthru
      _
  %2121 = vsyncmov [#allocation8]
  %s2122 = vpop.sfrf %2121
  %p2123 = scmp.eq.s32.totalorder %s2122, 0
  %p2124 = pneg %p2123
  %2126 = shalt.err (%p2124)
  %s2127 = scalar_lea.sflag [#allocation8], 1
  %2128 = vsyncmov %s2127
  %s2129 = vpop.sfrf %2128
  %p2130 = scmp.eq.s32.totalorder %s2129, 0
  %p2131 = pneg %p2130
  %2133 = shalt.err (%p2131)

// kernel: encoder_forward.3
$region0: #{encoder_forward.3}
  #allocation0 [shape = 'u32[]', space=smem, size = 0x4, offset = 0x4, fixed_abs, tag = 'smem constant byte address 0x4 - core index']
  #allocation1 [shape = 'u32[144,128]{1,0:T(1,128)}', space=vmem, size = 0x12000, scoped, tag = 'internal scratch']
  #allocation2 [shape = 'bf16[2,32]{1,0:T(2,128)(2,1)}', space=vmem, size = 0x200, scoped, tag = 'scratch operand']
  #allocation3 [shape = 'f32[2,32]{1,0:T(2,128)}', space=vmem, size = 0x400, scoped, tag = 'scratch operand']
  #allocation4 [shape = 'bf16[2,32]{1,0:T(2,128)(2,1)}', space=vmem, size = 0x200, scoped, tag = 'scratch operand']
  #allocation5 [shape = 'f32[2,32]{1,0:T(2,128)}', space=vmem, size = 0x400, scoped, tag = 'scratch operand']
  #allocation6 [shape = 'bf16[32,128]{1,0:T(16,128)(2,1)}', space=vmem, size = 0x2000, scoped, tag = 'scratch operand']
  #allocation7 [shape = 'bf16[32,128]{1,0:T(16,128)(2,1)}', space=vmem, size = 0x2000, scoped, tag = 'scratch operand']
  #allocation8 [shape = 's32[2]{0}', space=sflag, size = 0x8, scoped, tag = 'scratch operand']
  #allocation11 [shape = 's32[]', space=sflag, size = 0x4, offset = 0, fixed_abs, tag = 'sflag constant byte address 0x0 - dummy sync flag']
  #allocation12 [shape = 's32[]', space=sflag, size = 0x4, offset = 0, fixed_abs, tag = 'sflag constant byte address 0x0 - dummy sync flag']
  %s0 = inlined_call_operand.vmem [shape: s32[2,1], index: 0, kind: input, shape index: {}]
  %s1 = inlined_call_operand.vmem [shape: bf16[8,2,256], index: 1, kind: input, shape index: {}, may-alias: {1,2}]
  %s2 = inlined_call_operand.vmem [shape: bf16[8,2,256], index: 2, kind: input, shape index: {}, may-alias: {1,2}]
  %s3 = inlined_call_operand.vmem [shape: bf16[32,128], index: 3, kind: input, shape index: {}]
  %s4 = inlined_call_operand.vmem [shape: bf16[32,128], index: 4, kind: input, shape index: {}]
  %s5 = inlined_call_operand.vmem [shape: f32[8,2,32], index: 5, kind: output, shape index: {0}]
  %s6 = inlined_call_operand.vmem [shape: f32[8,2,32], index: 6, kind: output, shape index: {1}]
  %s7 = inlined_call_operand.vmem [shape: f32[2,2,32], index: 7, kind: output, shape index: {2}]
  %s8 = inlined_call_operand.vmem [shape: f32[2,2,32], index: 8, kind: output, shape index: {3}]
  %9 = xla_tuple %s5, %s6, %s7, %s8
  %s10 = sld [smem:[#allocation0]]
  $region204: #{encoder_forward.3} parent=0
    _
  %s12 = ssub.s32 1, %s10
  %s13 = scalar_select 0, %s12, %s10
  $region1: #{encoder_forward.3} parent=0
    #allocation9 [shape = 'u8[4096]{0}', space=vmem, size = 0x1000, scoped, tag = 'input window, operand 1, single buffered']
    #allocation10 [shape = 'u8[4096]{0}', space=vmem, size = 0x1000, scoped, tag = 'input window, operand 2, single buffered']
    // Predicated region
    $region2: #{encoder_forward.3} parent=1 // pred_check
      _
    $region3: #{encoder_forward.3} parent=1 // pred_check_branch
      %15 = sbr.rel (0) target = $region5
    $region4: #{encoder_forward.3} parent=1 // pred_region
      _
    $region5: #{encoder_forward.3} parent=1 // pred_fallthru
      _
    // Predicated region
    $region6: #{encoder_forward.3} parent=1 // pred_check
      _
    $region7: #{encoder_forward.3} parent=1 // pred_check_branch
      %17 = sbr.rel (0) target = $region9
    $region8: #{encoder_forward.3} parent=1 // pred_region
      // Predicated region
      $region10: #{encoder_forward.3} parent=8 // pred_check
        _
      $region11: #{encoder_forward.3} parent=8 // pred_check_branch
        %19 = sbr.rel (0) target = $region13
      $region12: #{encoder_forward.3} parent=8 // pred_region
        // Predicated region
        $region14: #{encoder_forward.3} parent=12 // pred_check
          _
        $region15: #{encoder_forward.3} parent=12 // pred_check_branch
          %21 = sbr.rel target = $region17
        $region16: #{encoder_forward.3} parent=12 // pred_region
          // Predicated region
          $region29: #{encoder_forward.3} parent=16 // pred_check
            _
          $region30: #{encoder_forward.3} parent=16 // pred_check_branch
            %50 = sbr.rel (0) target = $region32
          $region31: #{encoder_forward.3} parent=16 // pred_region
            loop: start=0, step=1, limit=1
            $region33: #{encoder_forward.3} parent=31 // loop_pre_header
              _
            $region34: #{encoder_forward.3} parent=31 // loop_header
              %s52 = sphi 0, %s56
              %p53 = scmp.ge.s32.totalorder %s52, 1
              %s57 = sphi %s1, %s1
              %s58 = sphi [#allocation9], [#allocation9]
            $region35: #{encoder_forward.3} parent=31 // loop_header_branch
              %55 = sbr.rel (%p53) target = $region39
            $region36: #{encoder_forward.3} parent=31 // loop_body
              _
            $region37: #{encoder_forward.3} parent=31 // loop_footer
              %s56 = sadd.s32 1, %s52
            $region38: #{encoder_forward.3} parent=31 // loop_footer_branch
              %51 = sbr.rel target = $region34
            $region39: #{encoder_forward.3} parent=31 // loop_exit
              _
            loop: start=0, step=1, limit=1
            $region40: #{encoder_forward.3} parent=31 // loop_pre_header
              _
            $region41: #{encoder_forward.3} parent=31 // loop_header
              %s61 = sphi 0, %s65
              %p62 = scmp.ge.s32.totalorder %s61, 1
              %s66 = sphi %s1, %s1
              %s67 = sphi [#allocation9], [#allocation9]
            $region42: #{encoder_forward.3} parent=31 // loop_header_branch
              %64 = sbr.rel (%p62) target = $region46
            $region43: #{encoder_forward.3} parent=31 // loop_body
              %v68 = vld [vmem:[%s66] sm:$0x1]
              %69 = vst [vmem:[%s67] sm:$0x1] %v68
              %v70 = vld [vmem:[%s66 + $0x2] sm:$0x1]
              %71 = vst [vmem:[%s67 + $0x1] sm:$0x1] %v70
              %v72 = vld [vmem:[%s66 + $0x4] sm:$0x1]
              %73 = vst [vmem:[%s67 + $0x2] sm:$0x1] %v72
              %v74 = vld [vmem:[%s66 + $0x6] sm:$0x1]
              %75 = vst [vmem:[%s67 + $0x3] sm:$0x1] %v74
              %v76 = vld [vmem:[%s66 + $0x8] sm:$0x1]
              %77 = vst [vmem:[%s67 + $0x4] sm:$0x1] %v76
              %v78 = vld [vmem:[%s66 + $0xa] sm:$0x1]
              %79 = vst [vmem:[%s67 + $0x5] sm:$0x1] %v78
              %v80 = vld [vmem:[%s66 + $0xc] sm:$0x1]
              %81 = vst [vmem:[%s67 + $0x6] sm:$0x1] %v80
              %v82 = vld [vmem:[%s66 + $0xe] sm:$0x1]
              %83 = vst [vmem:[%s67 + $0x7] sm:$0x1] %v82
            $region44: #{encoder_forward.3} parent=31 // loop_footer
              %s65 = sadd.s32 1, %s61
            $region45: #{encoder_forward.3} parent=31 // loop_footer_branch
              %60 = sbr.rel target = $region41
            $region46: #{encoder_forward.3} parent=31 // loop_exit
              _
          $region32: #{encoder_forward.3} parent=16 // pred_fallthru
            _
        $region17: #{encoder_forward.3} parent=12 // pred_fallthru
          _
        // Predicated region
        $region18: #{encoder_forward.3} parent=12 // pred_check
          _
        $region19: #{encoder_forward.3} parent=12 // pred_check_branch
          %23 = sbr.rel (0) target = $region21
        $region20: #{encoder_forward.3} parent=12 // pred_region
          loop: start=0, step=1, limit=1
          $region22: #{encoder_forward.3} parent=20 // loop_pre_header
            _
          $region23: #{encoder_forward.3} parent=20 // loop_header
            %s26 = sphi 0, %s30
            %p27 = scmp.ge.s32.totalorder %s26, 1
            %s31 = sphi %s1, %s1
            %s32 = sphi [#allocation9], [#allocation9]
          $region24: #{encoder_forward.3} parent=20 // loop_header_branch
            %29 = sbr.rel (%p27) target = $region28
          $region25: #{encoder_forward.3} parent=20 // loop_body
            %v33 = vld [vmem:[%s31] sm:$0x1]
            %34 = vst [vmem:[%s32] sm:$0x1] %v33
            %v35 = vld [vmem:[%s31 + $0x2] sm:$0x1]
            %36 = vst [vmem:[%s32 + $0x1] sm:$0x1] %v35
            %v37 = vld [vmem:[%s31 + $0x4] sm:$0x1]
            %38 = vst [vmem:[%s32 + $0x2] sm:$0x1] %v37
            %v39 = vld [vmem:[%s31 + $0x6] sm:$0x1]
            %40 = vst [vmem:[%s32 + $0x3] sm:$0x1] %v39
            %v41 = vld [vmem:[%s31 + $0x8] sm:$0x1]
            %42 = vst [vmem:[%s32 + $0x4] sm:$0x1] %v41
            %v43 = vld [vmem:[%s31 + $0xa] sm:$0x1]
            %44 = vst [vmem:[%s32 + $0x5] sm:$0x1] %v43
            %v45 = vld [vmem:[%s31 + $0xc] sm:$0x1]
            %46 = vst [vmem:[%s32 + $0x6] sm:$0x1] %v45
            %v47 = vld [vmem:[%s31 + $0xe] sm:$0x1]
            %48 = vst [vmem:[%s32 + $0x7] sm:$0x1] %v47
          $region26: #{encoder_forward.3} parent=20 // loop_footer
            %s30 = sadd.s32 1, %s26
          $region27: #{encoder_forward.3} parent=20 // loop_footer_branch
            %25 = sbr.rel target = $region23
          $region28: #{encoder_forward.3} parent=20 // loop_exit
            _
        $region21: #{encoder_forward.3} parent=12 // pred_fallthru
          _
      $region13: #{encoder_forward.3} parent=8 // pred_fallthru
        _
      %84 = vnop
    $region9: #{encoder_forward.3} parent=1 // pred_fallthru
      _
    // Predicated region
    $region47: #{encoder_forward.3} parent=1 // pred_check
      _
    $region48: #{encoder_forward.3} parent=1 // pred_check_branch
      %86 = sbr.rel (0) target = $region50
    $region49: #{encoder_forward.3} parent=1 // pred_region
      %s87 = ssub.s32 0, 0
      %s88 = smul.u32 8, %s87
      %s89 = smul.addr %s88, 2
      %s90 = sadd.s32 1, %s89
      %s91 = scalar_lea.vmem %s2, %s90
      // Predicated region
      $region51: #{encoder_forward.3} parent=49 // pred_check
        _
      $region52: #{encoder_forward.3} parent=49 // pred_check_branch
        %93 = sbr.rel (0) target = $region54
      $region53: #{encoder_forward.3} parent=49 // pred_region
        // Predicated region
        $region55: #{encoder_forward.3} parent=53 // pred_check
          _
        $region56: #{encoder_forward.3} parent=53 // pred_check_branch
          %95 = sbr.rel target = $region58
        $region57: #{encoder_forward.3} parent=53 // pred_region
          // Predicated region
          $region70: #{encoder_forward.3} parent=57 // pred_check
            _
          $region71: #{encoder_forward.3} parent=57 // pred_check_branch
            %124 = sbr.rel (0) target = $region73
          $region72: #{encoder_forward.3} parent=57 // pred_region
            loop: start=0, step=1, limit=1
            $region74: #{encoder_forward.3} parent=72 // loop_pre_header
              _
            $region75: #{encoder_forward.3} parent=72 // loop_header
              %s126 = sphi 0, %s130
              %p127 = scmp.ge.s32.totalorder %s126, 1
              %s131 = sphi %s91, %s91
              %s132 = sphi [#allocation10], [#allocation10]
            $region76: #{encoder_forward.3} parent=72 // loop_header_branch
              %129 = sbr.rel (%p127) target = $region80
            $region77: #{encoder_forward.3} parent=72 // loop_body
              _
            $region78: #{encoder_forward.3} parent=72 // loop_footer
              %s130 = sadd.s32 1, %s126
            $region79: #{encoder_forward.3} parent=72 // loop_footer_branch
              %125 = sbr.rel target = $region75
            $region80: #{encoder_forward.3} parent=72 // loop_exit
              _
            loop: start=0, step=1, limit=1
            $region81: #{encoder_forward.3} parent=72 // loop_pre_header
              _
            $region82: #{encoder_forward.3} parent=72 // loop_header
              %s135 = sphi 0, %s139
              %p136 = scmp.ge.s32.totalorder %s135, 1
              %s140 = sphi %s91, %s91
              %s141 = sphi [#allocation10], [#allocation10]
            $region83: #{encoder_forward.3} parent=72 // loop_header_branch
              %138 = sbr.rel (%p136) target = $region87
            $region84: #{encoder_forward.3} parent=72 // loop_body
              %v142 = vld [vmem:[%s140] sm:$0x1]
              %143 = vst [vmem:[%s141] sm:$0x1] %v142
              %v144 = vld [vmem:[%s140 + $0x2] sm:$0x1]
              %145 = vst [vmem:[%s141 + $0x1] sm:$0x1] %v144
              %v146 = vld [vmem:[%s140 + $0x4] sm:$0x1]
              %147 = vst [vmem:[%s141 + $0x2] sm:$0x1] %v146
              %v148 = vld [vmem:[%s140 + $0x6] sm:$0x1]
              %149 = vst [vmem:[%s141 + $0x3] sm:$0x1] %v148
              %v150 = vld [vmem:[%s140 + $0x8] sm:$0x1]
              %151 = vst [vmem:[%s141 + $0x4] sm:$0x1] %v150
              %v152 = vld [vmem:[%s140 + $0xa] sm:$0x1]
              %153 = vst [vmem:[%s141 + $0x5] sm:$0x1] %v152
              %v154 = vld [vmem:[%s140 + $0xc] sm:$0x1]
              %155 = vst [vmem:[%s141 + $0x6] sm:$0x1] %v154
              %v156 = vld [vmem:[%s140 + $0xe] sm:$0x1]
              %157 = vst [vmem:[%s141 + $0x7] sm:$0x1] %v156
            $region85: #{encoder_forward.3} parent=72 // loop_footer
              %s139 = sadd.s32 1, %s135
            $region86: #{encoder_forward.3} parent=72 // loop_footer_branch
              %134 = sbr.rel target = $region82
            $region87: #{encoder_forward.3} parent=72 // loop_exit
              _
          $region73: #{encoder_forward.3} parent=57 // pred_fallthru
            _
        $region58: #{encoder_forward.3} parent=53 // pred_fallthru
          _
        // Predicated region
        $region59: #{encoder_forward.3} parent=53 // pred_check
          _
        $region60: #{encoder_forward.3} parent=53 // pred_check_branch
          %97 = sbr.rel (0) target = $region62
        $region61: #{encoder_forward.3} parent=53 // pred_region
          loop: start=0, step=1, limit=1
          $region63: #{encoder_forward.3} parent=61 // loop_pre_header
            _
          $region64: #{encoder_forward.3} parent=61 // loop_header
            %s100 = sphi 0, %s104
            %p101 = scmp.ge.s32.totalorder %s100, 1
            %s105 = sphi %s91, %s91
            %s106 = sphi [#allocation10], [#allocation10]
          $region65: #{encoder_forward.3} parent=61 // loop_header_branch
            %103 = sbr.rel (%p101) target = $region69
          $region66: #{encoder_forward.3} parent=61 // loop_body
            %v107 = vld [vmem:[%s105] sm:$0x1]
            %108 = vst [vmem:[%s106] sm:$0x1] %v107
            %v109 = vld [vmem:[%s105 + $0x2] sm:$0x1]
            %110 = vst [vmem:[%s106 + $0x1] sm:$0x1] %v109
            %v111 = vld [vmem:[%s105 + $0x4] sm:$0x1]
            %112 = vst [vmem:[%s106 + $0x2] sm:$0x1] %v111
            %v113 = vld [vmem:[%s105 + $0x6] sm:$0x1]
            %114 = vst [vmem:[%s106 + $0x3] sm:$0x1] %v113
            %v115 = vld [vmem:[%s105 + $0x8] sm:$0x1]
            %116 = vst [vmem:[%s106 + $0x4] sm:$0x1] %v115
            %v117 = vld [vmem:[%s105 + $0xa] sm:$0x1]
            %118 = vst [vmem:[%s106 + $0x5] sm:$0x1] %v117
            %v119 = vld [vmem:[%s105 + $0xc] sm:$0x1]
            %120 = vst [vmem:[%s106 + $0x6] sm:$0x1] %v119
            %v121 = vld [vmem:[%s105 + $0xe] sm:$0x1]
            %122 = vst [vmem:[%s106 + $0x7] sm:$0x1] %v121
          $region67: #{encoder_forward.3} parent=61 // loop_footer
            %s104 = sadd.s32 1, %s100
          $region68: #{encoder_forward.3} parent=61 // loop_footer_branch
            %99 = sbr.rel target = $region64
          $region69: #{encoder_forward.3} parent=61 // loop_exit
            _
        $region62: #{encoder_forward.3} parent=53 // pred_fallthru
          _
      $region54: #{encoder_forward.3} parent=49 // pred_fallthru
        _
      %158 = vnop
    $region50: #{encoder_forward.3} parent=1 // pred_fallthru
      _
    // Predicated region
    $region88: #{encoder_forward.3} parent=1 // pred_check
      _
    $region89: #{encoder_forward.3} parent=1 // pred_check_branch
      %160 = sbr.rel (0) target = $region91
    $region90: #{encoder_forward.3} parent=1 // pred_region
      _
    $region91: #{encoder_forward.3} parent=1 // pred_fallthru
      _
    // Predicated region
    $region92: #{encoder_forward.3} parent=1 // pred_check
      _
    $region93: #{encoder_forward.3} parent=1 // pred_check_branch
      %162 = sbr.rel (0) target = $region95
    $region94: #{encoder_forward.3} parent=1 // pred_region
      _
    $region95: #{encoder_forward.3} parent=1 // pred_fallthru
      _
    %s163 = ssub.s32 0, 0
    %s164 = smul.u32 8, %s163
    %p165 = scmp.lt.s32.totalorder %s164, 7
    %s166 = scalar_select %p165, %s164, 7
    %s167 = smul.addr %s166, 2
    %s168 = scalar_lea.vmem %s6, %s167
    %s169 = ssub.s32 0, 0
    %s170 = smul.u32 8, %s169
    %s171 = ssub.s32 0, 0
    %s172 = smul.u32 8, %s171
    %p173 = scmp.lt.s32.totalorder %s172, 7
    %s174 = scalar_select %p173, %s172, 7
    %s175 = smul.addr %s174, 2
    %s176 = scalar_lea.vmem %s6, %s175
    %s177 = ssub.s32 0, 0
    %s178 = smul.u32 8, %s177
    %p180 = scmp.eq.s32.totalorder 0, 0
    // Predicated region
    $region96: #{encoder_forward.3} parent=1 // pred_check
      %p181 = pneg %p180
    $region97: #{encoder_forward.3} parent=1 // pred_check_branch
      %183 = sbr.rel (%p181) target = $region99
    $region98: #{encoder_forward.3} parent=1 // pred_region
      %vm184 = vcmask 253952
      %185 = vst.msk [vmem:[#allocation2] sm:$0x1] %vm184, 0
      %vm186 = vcmask 254976
      %187 = vst.msk [vmem:[#allocation3] sm:$0x3] %vm186, 0.0
      %188 = vst.msk [vmem:[#allocation4] sm:$0x1] %vm184, 0
      %189 = vst.msk [vmem:[#allocation5] sm:$0x3] %vm186, 0.0
      %p191 = scmp.lt.u32.totalorder 16, 8
      %p192 = pneg %p191
      // Predicated region
      $region100: #{encoder_forward.3} parent=98 // pred_check
        _
      $region101: #{encoder_forward.3} parent=98 // pred_check_branch
        %194 = sbr.rel (%p191) target = $region103
      $region102: #{encoder_forward.3} parent=98 // pred_region
        %s209 = sand.u32 16, 7
        %p210 = scmp.eq.s32.totalorder %s209, 0
        // Predicated region
        $region115: #{encoder_forward.3} parent=102 // pred_check
          %p211 = pneg %p210
        $region116: #{encoder_forward.3} parent=102 // pred_check_branch
          %213 = sbr.rel (%p211) target = $region118
        $region117: #{encoder_forward.3} parent=102 // pred_region
          loop: start=0, step=1, limit=1
          $region119: #{encoder_forward.3} parent=117 // loop_pre_header
            _
          $region120: #{encoder_forward.3} parent=117 // loop_header
            %s215 = sphi 0, %s219
            %p216 = scmp.ge.s32.totalorder %s215, 1
            %s220 = sphi %s3, %s3
            %s221 = sphi [#allocation6], [#allocation6]
          $region121: #{encoder_forward.3} parent=117 // loop_header_branch
            %218 = sbr.rel (%p216) target = $region125
          $region122: #{encoder_forward.3} parent=117 // loop_body
            %v222 = vld [vmem:[%s220] sm:$0xff]
            %223 = vst [vmem:[%s221] sm:$0xff] %v222
            %v224 = vld [vmem:[%s220 + $0x8] sm:$0xff]
            %225 = vst [vmem:[%s221 + $0x8] sm:$0xff] %v224
          $region123: #{encoder_forward.3} parent=117 // loop_footer
            %s219 = sadd.s32 1, %s215
          $region124: #{encoder_forward.3} parent=117 // loop_footer_branch
            %214 = sbr.rel target = $region120
          $region125: #{encoder_forward.3} parent=117 // loop_exit
            _
        $region118: #{encoder_forward.3} parent=102 // pred_fallthru
          _
        %p226 = pneg %p210
        // Predicated region
        $region126: #{encoder_forward.3} parent=102 // pred_check
          _
        $region127: #{encoder_forward.3} parent=102 // pred_check_branch
          %228 = sbr.rel (%p210) target = $region129
        $region128: #{encoder_forward.3} parent=102 // pred_region
          %s229 = sand.u32 16, 7
        $region129: #{encoder_forward.3} parent=102 // pred_fallthru
          _
      $region103: #{encoder_forward.3} parent=98 // pred_fallthru
        _
      // Predicated region
      $region104: #{encoder_forward.3} parent=98 // pred_check
        %p195 = pneg %p191
      $region105: #{encoder_forward.3} parent=98 // pred_check_branch
        %197 = sbr.rel (%p195) target = $region107
      $region106: #{encoder_forward.3} parent=98 // pred_region
        %s198 = sshllo.u32 0, 16
        loop: start=0, step=1, limit=1
        $region108: #{encoder_forward.3} parent=106 // loop_pre_header
          _
        $region109: #{encoder_forward.3} parent=106 // loop_header
          %s200 = sphi 0, %s204
          %p201 = scmp.ge.s32.totalorder %s200, 1
          %s205 = sphi %s3, %s3
          %s206 = sphi [#allocation6], [#allocation6]
        $region110: #{encoder_forward.3} parent=106 // loop_header_branch
          %203 = sbr.rel (%p201) target = $region114
        $region111: #{encoder_forward.3} parent=106 // loop_body
          %v207 = vld [vmem:[%s205] sm:%s198]
          %208 = vst [vmem:[%s206] sm:%s198] %v207
        $region112: #{encoder_forward.3} parent=106 // loop_footer
          %s204 = sadd.s32 1, %s200
        $region113: #{encoder_forward.3} parent=106 // loop_footer_branch
          %199 = sbr.rel target = $region109
        $region114: #{encoder_forward.3} parent=106 // loop_exit
          _
      $region107: #{encoder_forward.3} parent=98 // pred_fallthru
        _
      // Predicated region
      $region130: #{encoder_forward.3} parent=98 // pred_check
        _
      $region131: #{encoder_forward.3} parent=98 // pred_check_branch
        %232 = sbr.rel (0) target = $region133
      $region132: #{encoder_forward.3} parent=98 // pred_region
        %233 = vsyncadd [#allocation8], 256
      $region133: #{encoder_forward.3} parent=98 // pred_fallthru
        _
      %s234 = scalar_lea.sflag [#allocation8], 1
      %p236 = scmp.lt.u32.totalorder 16, 8
      %p237 = pneg %p236
      // Predicated region
      $region134: #{encoder_forward.3} parent=98 // pred_check
        _
      $region135: #{encoder_forward.3} parent=98 // pred_check_branch
        %239 = sbr.rel (%p236) target = $region137
      $region136: #{encoder_forward.3} parent=98 // pred_region
        %s254 = sand.u32 16, 7
        %p255 = scmp.eq.s32.totalorder %s254, 0
        // Predicated region
        $region149: #{encoder_forward.3} parent=136 // pred_check
          %p256 = pneg %p255
        $region150: #{encoder_forward.3} parent=136 // pred_check_branch
          %258 = sbr.rel (%p256) target = $region152
        $region151: #{encoder_forward.3} parent=136 // pred_region
          loop: start=0, step=1, limit=1
          $region153: #{encoder_forward.3} parent=151 // loop_pre_header
            _
          $region154: #{encoder_forward.3} parent=151 // loop_header
            %s260 = sphi 0, %s264
            %p261 = scmp.ge.s32.totalorder %s260, 1
            %s265 = sphi %s4, %s4
            %s266 = sphi [#allocation7], [#allocation7]
          $region155: #{encoder_forward.3} parent=151 // loop_header_branch
            %263 = sbr.rel (%p261) target = $region159
          $region156: #{encoder_forward.3} parent=151 // loop_body
            %v267 = vld [vmem:[%s265] sm:$0xff]
            %268 = vst [vmem:[%s266] sm:$0xff] %v267
            %v269 = vld [vmem:[%s265 + $0x8] sm:$0xff]
            %270 = vst [vmem:[%s266 + $0x8] sm:$0xff] %v269
          $region157: #{encoder_forward.3} parent=151 // loop_footer
            %s264 = sadd.s32 1, %s260
          $region158: #{encoder_forward.3} parent=151 // loop_footer_branch
            %259 = sbr.rel target = $region154
          $region159: #{encoder_forward.3} parent=151 // loop_exit
            _
        $region152: #{encoder_forward.3} parent=136 // pred_fallthru
          _
        %p271 = pneg %p255
        // Predicated region
        $region160: #{encoder_forward.3} parent=136 // pred_check
          _
        $region161: #{encoder_forward.3} parent=136 // pred_check_branch
          %273 = sbr.rel (%p255) target = $region163
        $region162: #{encoder_forward.3} parent=136 // pred_region
          %s274 = sand.u32 16, 7
        $region163: #{encoder_forward.3} parent=136 // pred_fallthru
          _
      $region137: #{encoder_forward.3} parent=98 // pred_fallthru
        _
      // Predicated region
      $region138: #{encoder_forward.3} parent=98 // pred_check
        %p240 = pneg %p236
      $region139: #{encoder_forward.3} parent=98 // pred_check_branch
        %242 = sbr.rel (%p240) target = $region141
      $region140: #{encoder_forward.3} parent=98 // pred_region
        %s243 = sshllo.u32 0, 16
        loop: start=0, step=1, limit=1
        $region142: #{encoder_forward.3} parent=140 // loop_pre_header
          _
        $region143: #{encoder_forward.3} parent=140 // loop_header
          %s245 = sphi 0, %s249
          %p246 = scmp.ge.s32.totalorder %s245, 1
          %s250 = sphi %s4, %s4
          %s251 = sphi [#allocation7], [#allocation7]
        $region144: #{encoder_forward.3} parent=140 // loop_header_branch
          %248 = sbr.rel (%p246) target = $region148
        $region145: #{encoder_forward.3} parent=140 // loop_body
          %v252 = vld [vmem:[%s250] sm:%s243]
          %253 = vst [vmem:[%s251] sm:%s243] %v252
        $region146: #{encoder_forward.3} parent=140 // loop_footer
          %s249 = sadd.s32 1, %s245
        $region147: #{encoder_forward.3} parent=140 // loop_footer_branch
          %244 = sbr.rel target = $region143
        $region148: #{encoder_forward.3} parent=140 // loop_exit
          _
      $region141: #{encoder_forward.3} parent=98 // pred_fallthru
        _
      // Predicated region
      $region164: #{encoder_forward.3} parent=98 // pred_check
        _
      $region165: #{encoder_forward.3} parent=98 // pred_check_branch
        %277 = sbr.rel (0) target = $region167
      $region166: #{encoder_forward.3} parent=98 // pred_region
        %278 = vsyncadd %s234, 256
      $region167: #{encoder_forward.3} parent=98 // pred_fallthru
        _
      %s279 = smul.u32 4, 4
      %s280 = smul.u32 %s279, 1
      %s281 = sshll.u32 %s280, 4
      %282 = dma.done [#allocation8], %s281
      %s283 = sshll.u32 %s280, 4
      %284 = dma.done %s234, %s283
    $region99: #{encoder_forward.3} parent=1 // pred_fallthru
      _
    %v285 = vld [vmem:[%s0] sm:$0x3]
    %v286 = vld [vmem:[#allocation6] sm:$0xff]
    %v287 = vld [vmem:[#allocation6 + $0x8] sm:$0xff]
    %v288 = vld [vmem:[#allocation7] sm:$0xff]
    %v289 = vld [vmem:[#allocation7 + $0x8] sm:$0xff]
    %v290 = vld [vmem:[#allocation2] sm:$0x1]
    %v291 = vld [vmem:[#allocation3] sm:$0x3]
    %v292 = vld [vmem:[#allocation4] sm:$0x1]
    %v293 = vld [vmem:[#allocation5] sm:$0x3]
    %s294 = smul.u32 0, 8
    %v295 = vld [vmem:[#allocation9] sm:$0x1]
    %v296 = vunpack.c.l.bf16 %v295
    %vm297 = vcmask 261120
    %v299 = vsel %vm297, %v290, 0
    %301 = vmatprep.subr.bf16.mxu0 0
    %302 = vmatpush1.bf16.msra.mxu0 %v286
    %303 = vmatprep.subr.bf16.mxu0 0
    %304 = vmatpush1.bf16.msra.mxu0 %v287
    %305 = vmatprep.subr.bf16.mxu0 0
    %306 = vmatpush1.bf16.msra.mxu0 0
    %307 = vmatprep.subr.bf16.mxu0 0
    %308 = vmatpush1.bf16.msra.mxu0 0
    %309 = vmatprep.subr.bf16.mxu0 0
    %310 = vmatpush1.bf16.msra.mxu0 0
    %311 = vmatprep.subr.bf16.mxu0 0
    %312 = vmatpush1.bf16.msra.mxu0 0
    %313 = vmatprep.subr.bf16.mxu0 0
    %314 = vmatpush1.bf16.msra.mxu0 0
    %315 = vmatprep.subr.bf16.mxu0 0
    %316 = vmatpush1.bf16.msra.mxu0 0
    %317 = vmatprep.subr.bf16.mxu0 0
    %318 = vmatpush1.bf16.msra.mxu0 0
    %319 = vmatprep.subr.bf16.mxu0 0
    %320 = vmatpush1.bf16.msra.mxu0 0
    %321 = vmatprep.subr.bf16.mxu0 0
    %322 = vmatpush1.bf16.msra.mxu0 0
    %323 = vmatprep.subr.bf16.mxu0 0
    %324 = vmatpush1.bf16.msra.mxu0 0
    %325 = vmatprep.subr.bf16.mxu0 0
    %326 = vmatpush1.bf16.msra.mxu0 0
    %327 = vmatprep.subr.bf16.mxu0 0
    %328 = vmatpush1.bf16.msra.mxu0 0
    %329 = vmatprep.subr.bf16.mxu0 0
    %330 = vmatpush1.bf16.msra.mxu0 0
    %331 = vmatprep.subr.bf16.mxu0 0
    %332 = vmatpush1.bf16.msra.mxu0 0
    %333 = vmatprep.mubr.bf16.mxu0 0
    %334 = vmatmul.mubr.bf16.gmra.mrb[0].mxu0 %v299
    %v335 = vpop.f32.mrb[0].mxu0
    %v336 = vadd.f32 %v296, %v335
    %v337 = vpop.f32.mrb[0].mxu0
    %v338 = vpop.f32.mrb[0].mxu0
    %v339 = vpop.f32.mrb[0].mxu0
    %340 = vdwg.mxu0
    %v341 = vxor.u32 %v336, 2147483648
    %v342 = vmul.f32 %v341, 1.442695
    %v343 = vpow.pop %v342
    %v344 = vadd.f32 %v343, 1.0
    %v345 = vrcp.pop %v344
    %v346 = vmul.f32 1.0, %v345
    %v347 = vtanh.pop %v336
    %349 = vrot.lane.b32.xlu0 %v291, 32
    %v350 = vpop.permute.xlu0 %349
    %v352 = vmul.f32 %v346, %v350
    %354 = vrot.lane.b32.xlu0 %v347, 64
    %v355 = vpop.permute.xlu0 %354
    %v357 = vmul.f32 %v346, %v355
    %359 = vrot.lane.b32.xlu0 %v357, 32
    %v360 = vpop.permute.xlu0 %359
    %v362 = vadd.f32 %v352, %v360
    %v363 = vtanh.pop %v362
    %365 = vrot.lane.b32.xlu0 %v363, 64
    %v366 = vpop.permute.xlu0 %365
    %v368 = vmul.f32 %v346, %v366
    %v369 = vpack.c.bf16 %v368, %v368
    %v370 = vstv %s294
    %vm371 = vcmp.lt.s32.totalorder %v370, %v285
    %v372 = vsel %vm371, 1, 0
    %373 = vset.pattern.permute.xlu0 0
    %374 = vperm.xlu0 %373, %v372
    %v375 = vpop.permute.xlu0 %374
    %vm376 = vcmp.eq.s32.totalorder %v375, 1
    %vm377 = vmpackc.low %vm376, %vm376
    %v380 = vunpack.c.l.s4 1966171168
    %v381 = vunpack.c.0.s8 %v380
    %v382 = vlaneseq
    %v383 = vshrl.u32 %v382, 7
    %v384 = vsub.s32 %v381, %v383
    %v385 = vrot.slane %v290, %v384
    %v387 = vunpack.c.l.s4 1966171168
    %v388 = vunpack.c.0.s8 %v387
    %v389 = vlaneseq
    %v390 = vshrl.u32 %v389, 7
    %v391 = vsub.s32 %v388, %v390
    %v392 = vrot.slane %v385, %v391
    %393 = vrot.lane.b32.xlu0 %v392, 96
    %v394 = vpop.permute.xlu0 %393
    %v396 = vsel %vm377, %v369, %v394
    %v397 = vsel %vm376, %v362, %v350
    %v398 = vsel %vm377, %v369, 0
    %v399 = vunpack.c.l.bf16 %v398
    %401 = vrot.lane.b32.xlu0 %v399, 32
    %v402 = vpop.permute.xlu0 %401
    %vm404 = vcmask 254976
    %405 = vst.msk [vmem:[%s5] sm:$0x3] %vm404, %v402
    %s406 = ssub.s32 0, 0
    %s407 = smul.u32 %s406, 8
    %s408 = sadd.s32 %s407, 7
    %s409 = scalar_lea.vmem [#allocation10], 7
    %v410 = vld [vmem:[%s409] sm:$0x1]
    %v411 = vunpack.c.l.bf16 %v410
    %v413 = vsel %vm297, %v292, 0
    %415 = vmatprep.subr.bf16.mxu0 0
    %416 = vmatpush1.bf16.msra.mxu0 %v288
    %417 = vmatprep.subr.bf16.mxu0 0
    %418 = vmatpush1.bf16.msra.mxu0 %v289
    %419 = vmatprep.subr.bf16.mxu0 0
    %420 = vmatpush1.bf16.msra.mxu0 0
    %421 = vmatprep.subr.bf16.mxu0 0
    %422 = vmatpush1.bf16.msra.mxu0 0
    %423 = vmatprep.subr.bf16.mxu0 0
    %424 = vmatpush1.bf16.msra.mxu0 0
    %425 = vmatprep.subr.bf16.mxu0 0
    %426 = vmatpush1.bf16.msra.mxu0 0
    %427 = vmatprep.subr.bf16.mxu0 0
    %428 = vmatpush1.bf16.msra.mxu0 0
    %429 = vmatprep.subr.bf16.mxu0 0
    %430 = vmatpush1.bf16.msra.mxu0 0
    %431 = vmatprep.subr.bf16.mxu0 0
    %432 = vmatpush1.bf16.msra.mxu0 0
    %433 = vmatprep.subr.bf16.mxu0 0
    %434 = vmatpush1.bf16.msra.mxu0 0
    %435 = vmatprep.subr.bf16.mxu0 0
    %436 = vmatpush1.bf16.msra.mxu0 0
    %437 = vmatprep.subr.bf16.mxu0 0
    %438 = vmatpush1.bf16.msra.mxu0 0
    %439 = vmatprep.subr.bf16.mxu0 0
    %440 = vmatpush1.bf16.msra.mxu0 0
    %441 = vmatprep.subr.bf16.mxu0 0
    %442 = vmatpush1.bf16.msra.mxu0 0
    %443 = vmatprep.subr.bf16.mxu0 0
    %444 = vmatpush1.bf16.msra.mxu0 0
    %445 = vmatprep.subr.bf16.mxu0 0
    %446 = vmatpush1.bf16.msra.mxu0 0
    %447 = vmatprep.mubr.bf16.mxu0 0
    %448 = vmatmul.mubr.bf16.gmra.mrb[0].mxu0 %v413
    %v449 = vpop.f32.mrb[0].mxu0
    %v450 = vadd.f32 %v411, %v449
    %v451 = vpop.f32.mrb[0].mxu0
    %v452 = vpop.f32.mrb[0].mxu0
    %v453 = vpop.f32.mrb[0].mxu0
    %454 = vdwg.mxu0
    %v455 = vxor.u32 %v450, 2147483648
    %v456 = vmul.f32 %v455, 1.442695
    %v457 = vpow.pop %v456
    %v458 = vadd.f32 %v457, 1.0
    %v459 = vrcp.pop %v458
    %v460 = vmul.f32 1.0, %v459
    %v461 = vtanh.pop %v450
    %463 = vrot.lane.b32.xlu0 %v293, 32
    %v464 = vpop.permute.xlu0 %463
    %v466 = vmul.f32 %v460, %v464
    %468 = vrot.lane.b32.xlu0 %v461, 64
    %v469 = vpop.permute.xlu0 %468
    %v471 = vmul.f32 %v460, %v469
    %473 = vrot.lane.b32.xlu0 %v471, 32
    %v474 = vpop.permute.xlu0 %473
    %v476 = vadd.f32 %v466, %v474
    %v477 = vtanh.pop %v476
    %479 = vrot.lane.b32.xlu0 %v477, 64
    %v480 = vpop.permute.xlu0 %479
    %v482 = vmul.f32 %v460, %v480
    %v483 = vpack.c.bf16 %v482, %v482
    %v484 = vstv %s408
    %vm485 = vcmp.lt.s32.totalorder %v484, %v285
    %v486 = vsel %vm485, 1, 0
    %487 = vset.pattern.permute.xlu0 0
    %488 = vperm.xlu0 %487, %v486
    %v489 = vpop.permute.xlu0 %488
    %vm490 = vcmp.eq.s32.totalorder %v489, 1
    %vm491 = vmpackc.low %vm490, %vm490
    %v494 = vunpack.c.l.s4 1966171168
    %v495 = vunpack.c.0.s8 %v494
    %v496 = vlaneseq
    %v497 = vshrl.u32 %v496, 7
    %v498 = vsub.s32 %v495, %v497
    %v499 = vrot.slane %v292, %v498
    %v501 = vunpack.c.l.s4 1966171168
    %v502 = vunpack.c.0.s8 %v501
    %v503 = vlaneseq
    %v504 = vshrl.u32 %v503, 7
    %v505 = vsub.s32 %v502, %v504
    %v506 = vrot.slane %v499, %v505
    %507 = vrot.lane.b32.xlu0 %v506, 96
    %v508 = vpop.permute.xlu0 %507
    %v510 = vsel %vm491, %v483, %v508
    %v511 = vsel %vm490, %v476, %v464
    %v512 = vsel %vm491, %v483, 0
    %v513 = vunpack.c.l.bf16 %v512
    %515 = vrot.lane.b32.xlu0 %v513, 32
    %v516 = vpop.permute.xlu0 %515
    %s518 = scalar_lea.vmem %s176, 14
    %519 = vst.msk [vmem:[%s518] sm:$0x3] %vm404, %v516
    %s520 = sadd.s32 %s294, 1
    %s521 = scalar_lea.vmem [#allocation9], 1
    %v522 = vld [vmem:[%s521] sm:$0x1]
    %v523 = vunpack.c.l.bf16 %v522
    %525 = vrot.lane.b32.xlu0 %v396, 32
    %v526 = vpop.permute.xlu0 %525
    %v528 = vsel %vm297, %v526, 0
    %530 = vmatprep.subr.bf16.mxu0 0
    %531 = vmatpush1.bf16.msra.mxu0 %v286
    %532 = vmatprep.subr.bf16.mxu0 0
    %533 = vmatpush1.bf16.msra.mxu0 %v287
    %534 = vmatprep.subr.bf16.mxu0 0
    %535 = vmatpush1.bf16.msra.mxu0 0
    %536 = vmatprep.subr.bf16.mxu0 0
    %537 = vmatpush1.bf16.msra.mxu0 0
    %538 = vmatprep.subr.bf16.mxu0 0
    %539 = vmatpush1.bf16.msra.mxu0 0
    %540 = vmatprep.subr.bf16.mxu0 0
    %541 = vmatpush1.bf16.msra.mxu0 0
    %542 = vmatprep.subr.bf16.mxu0 0
    %543 = vmatpush1.bf16.msra.mxu0 0
    %544 = vmatprep.subr.bf16.mxu0 0
    %545 = vmatpush1.bf16.msra.mxu0 0
    %546 = vmatprep.subr.bf16.mxu0 0
    %547 = vmatpush1.bf16.msra.mxu0 0
    %548 = vmatprep.subr.bf16.mxu0 0
    %549 = vmatpush1.bf16.msra.mxu0 0
    %550 = vmatprep.subr.bf16.mxu0 0
    %551 = vmatpush1.bf16.msra.mxu0 0
    %552 = vmatprep.subr.bf16.mxu0 0
    %553 = vmatpush1.bf16.msra.mxu0 0
    %554 = vmatprep.subr.bf16.mxu0 0
    %555 = vmatpush1.bf16.msra.mxu0 0
    %556 = vmatprep.subr.bf16.mxu0 0
    %557 = vmatpush1.bf16.msra.mxu0 0
    %558 = vmatprep.subr.bf16.mxu0 0
    %559 = vmatpush1.bf16.msra.mxu0 0
    %560 = vmatprep.subr.bf16.mxu0 0
    %561 = vmatpush1.bf16.msra.mxu0 0
    %562 = vmatprep.mubr.bf16.mxu0 0
    %563 = vmatmul.mubr.bf16.gmra.mrb[0].mxu0 %v528
    %v564 = vpop.f32.mrb[0].mxu0
    %v565 = vadd.f32 %v523, %v564
    %v566 = vpop.f32.mrb[0].mxu0
    %v567 = vpop.f32.mrb[0].mxu0
    %v568 = vpop.f32.mrb[0].mxu0
    %569 = vdwg.mxu0
    %v570 = vxor.u32 %v565, 2147483648
    %v571 = vmul.f32 %v570, 1.442695
    %v572 = vpow.pop %v571
    %v573 = vadd.f32 %v572, 1.0
    %v574 = vrcp.pop %v573
    %v575 = vmul.f32 1.0, %v574
    %v576 = vtanh.pop %v565
    %v577 = vmul.f32 %v575, %v397
    %579 = vrot.lane.b32.xlu0 %v576, 64
    %v580 = vpop.permute.xlu0 %579
    %v582 = vmul.f32 %v575, %v580
    %584 = vrot.lane.b32.xlu0 %v582, 32
    %v585 = vpop.permute.xlu0 %584
    %v587 = vadd.f32 %v577, %v585
    %v588 = vtanh.pop %v587
    %590 = vrot.lane.b32.xlu0 %v588, 64
    %v591 = vpop.permute.xlu0 %590
    %v593 = vmul.f32 %v575, %v591
    %v594 = vpack.c.bf16 %v593, %v593
    %v595 = vstv %s520
    %vm596 = vcmp.lt.s32.totalorder %v595, %v285
    %v597 = vsel %vm596, 1, 0
    %598 = vset.pattern.permute.xlu0 0
    %599 = vperm.xlu0 %598, %v597
    %v600 = vpop.permute.xlu0 %599
    %vm601 = vcmp.eq.s32.totalorder %v600, 1
    %vm602 = vmpackc.low %vm601, %vm601
    %v603 = vsel %vm602, %v594, %v396
    %v604 = vsel %vm601, %v587, %v397
    %v605 = vsel %vm602, %v594, 0
    %v606 = vunpack.c.l.bf16 %v605
    %608 = vrot.lane.b32.xlu0 %v606, 32
    %v609 = vpop.permute.xlu0 %608
    %s611 = scalar_lea.vmem %s5, 2
    %612 = vst.msk [vmem:[%s611] sm:$0x3] %vm404, %v609
    %s613 = sadd.s32 %s407, 6
    %s614 = scalar_lea.vmem [#allocation10], 6
    %v615 = vld [vmem:[%s614] sm:$0x1]
    %v616 = vunpack.c.l.bf16 %v615
    %618 = vrot.lane.b32.xlu0 %v510, 32
    %v619 = vpop.permute.xlu0 %618
    %v621 = vsel %vm297, %v619, 0
    %623 = vmatprep.subr.bf16.mxu0 0
    %624 = vmatpush1.bf16.msra.mxu0 %v288
    %625 = vmatprep.subr.bf16.mxu0 0
    %626 = vmatpush1.bf16.msra.mxu0 %v289
    %627 = vmatprep.subr.bf16.mxu0 0
    %628 = vmatpush1.bf16.msra.mxu0 0
    %629 = vmatprep.subr.bf16.mxu0 0
    %630 = vmatpush1.bf16.msra.mxu0 0
    %631 = vmatprep.subr.bf16.mxu0 0
    %632 = vmatpush1.bf16.msra.mxu0 0
    %633 = vmatprep.subr.bf16.mxu0 0
    %634 = vmatpush1.bf16.msra.mxu0 0
    %635 = vmatprep.subr.bf16.mxu0 0
    %636 = vmatpush1.bf16.msra.mxu0 0
    %637 = vmatprep.subr.bf16.mxu0 0
    %638 = vmatpush1.bf16.msra.mxu0 0
    %639 = vmatprep.subr.bf16.mxu0 0
    %640 = vmatpush1.bf16.msra.mxu0 0
    %641 = vmatprep.subr.bf16.mxu0 0
    %642 = vmatpush1.bf16.msra.mxu0 0
    %643 = vmatprep.subr.bf16.mxu0 0
    %644 = vmatpush1.bf16.msra.mxu0 0
    %645 = vmatprep.subr.bf16.mxu0 0
    %646 = vmatpush1.bf16.msra.mxu0 0
    %647 = vmatprep.subr.bf16.mxu0 0
    %648 = vmatpush1.bf16.msra.mxu0 0
    %649 = vmatprep.subr.bf16.mxu0 0
    %650 = vmatpush1.bf16.msra.mxu0 0
    %651 = vmatprep.subr.bf16.mxu0 0
    %652 = vmatpush1.bf16.msra.mxu0 0
    %653 = vmatprep.subr.bf16.mxu0 0
    %654 = vmatpush1.bf16.msra.mxu0 0
    %655 = vmatprep.mubr.bf16.mxu0 0
    %656 = vmatmul.mubr.bf16.gmra.mrb[0].mxu0 %v621
    %v657 = vpop.f32.mrb[0].mxu0
    %v658 = vadd.f32 %v616, %v657
    %v659 = vpop.f32.mrb[0].mxu0
    %v660 = vpop.f32.mrb[0].mxu0
    %v661 = vpop.f32.mrb[0].mxu0
    %662 = vdwg.mxu0
    %v663 = vxor.u32 %v658, 2147483648
    %v664 = vmul.f32 %v663, 1.442695
    %v665 = vpow.pop %v664
    %v666 = vadd.f32 %v665, 1.0
    %v667 = vrcp.pop %v666
    %v668 = vmul.f32 1.0, %v667
    %v669 = vtanh.pop %v658
    %v670 = vmul.f32 %v668, %v511
    %672 = vrot.lane.b32.xlu0 %v669, 64
    %v673 = vpop.permute.xlu0 %672
    %v675 = vmul.f32 %v668, %v673
    %677 = vrot.lane.b32.xlu0 %v675, 32
    %v678 = vpop.permute.xlu0 %677
    %v680 = vadd.f32 %v670, %v678
    %v681 = vtanh.pop %v680
    %683 = vrot.lane.b32.xlu0 %v681, 64
    %v684 = vpop.permute.xlu0 %683
    %v686 = vmul.f32 %v668, %v684
    %v687 = vpack.c.bf16 %v686, %v686
    %v688 = vstv %s613
    %vm689 = vcmp.lt.s32.totalorder %v688, %v285
    %v690 = vsel %vm689, 1, 0
    %691 = vset.pattern.permute.xlu0 0
    %692 = vperm.xlu0 %691, %v690
    %v693 = vpop.permute.xlu0 %692
    %vm694 = vcmp.eq.s32.totalorder %v693, 1
    %vm695 = vmpackc.low %vm694, %vm694
    %v696 = vsel %vm695, %v687, %v510
    %v697 = vsel %vm694, %v680, %v511
    %v698 = vsel %vm695, %v687, 0
    %v699 = vunpack.c.l.bf16 %v698
    %701 = vrot.lane.b32.xlu0 %v699, 32
    %v702 = vpop.permute.xlu0 %701
    %s704 = scalar_lea.vmem %s176, 12
    %705 = vst.msk [vmem:[%s704] sm:$0x3] %vm404, %v702
    %s706 = sadd.s32 %s294, 2
    %s707 = scalar_lea.vmem [#allocation9], 2
    %v708 = vld [vmem:[%s707] sm:$0x1]
    %v709 = vunpack.c.l.bf16 %v708
    %711 = vrot.lane.b32.xlu0 %v603, 32
    %v712 = vpop.permute.xlu0 %711
    %v714 = vsel %vm297, %v712, 0
    %716 = vmatprep.subr.bf16.mxu0 0
    %717 = vmatpush1.bf16.msra.mxu0 %v286
    %718 = vmatprep.subr.bf16.mxu0 0
    %719 = vmatpush1.bf16.msra.mxu0 %v287
    %720 = vmatprep.subr.bf16.mxu0 0
    %721 = vmatpush1.bf16.msra.mxu0 0
    %722 = vmatprep.subr.bf16.mxu0 0
    %723 = vmatpush1.bf16.msra.mxu0 0
    %724 = vmatprep.subr.bf16.mxu0 0
    %725 = vmatpush1.bf16.msra.mxu0 0
    %726 = vmatprep.subr.bf16.mxu0 0
    %727 = vmatpush1.bf16.msra.mxu0 0
    %728 = vmatprep.subr.bf16.mxu0 0
    %729 = vmatpush1.bf16.msra.mxu0 0
    %730 = vmatprep.subr.bf16.mxu0 0
    %731 = vmatpush1.bf16.msra.mxu0 0
    %732 = vmatprep.subr.bf16.mxu0 0
    %733 = vmatpush1.bf16.msra.mxu0 0
    %734 = vmatprep.subr.bf16.mxu0 0
    %735 = vmatpush1.bf16.msra.mxu0 0
    %736 = vmatprep.subr.bf16.mxu0 0
    %737 = vmatpush1.bf16.msra.mxu0 0
    %738 = vmatprep.subr.bf16.mxu0 0
    %739 = vmatpush1.bf16.msra.mxu0 0
    %740 = vmatprep.subr.bf16.mxu0 0
    %741 = vmatpush1.bf16.msra.mxu0 0
    %742 = vmatprep.subr.bf16.mxu0 0
    %743 = vmatpush1.bf16.msra.mxu0 0
    %744 = vmatprep.subr.bf16.mxu0 0
    %745 = vmatpush1.bf16.msra.mxu0 0
    %746 = vmatprep.subr.bf16.mxu0 0
    %747 = vmatpush1.bf16.msra.mxu0 0
    %748 = vmatprep.mubr.bf16.mxu0 0
    %749 = vmatmul.mubr.bf16.gmra.mrb[0].mxu0 %v714
    %v750 = vpop.f32.mrb[0].mxu0
    %v751 = vadd.f32 %v709, %v750
    %v752 = vpop.f32.mrb[0].mxu0
    %v753 = vpop.f32.mrb[0].mxu0
    %v754 = vpop.f32.mrb[0].mxu0
    %755 = vdwg.mxu0
    %v756 = vxor.u32 %v751, 2147483648
    %v757 = vmul.f32 %v756, 1.442695
    %v758 = vpow.pop %v757
    %v759 = vadd.f32 %v758, 1.0
    %v760 = vrcp.pop %v759
    %v761 = vmul.f32 1.0, %v760
    %v762 = vtanh.pop %v751
    %v763 = vmul.f32 %v761, %v604
    %765 = vrot.lane.b32.xlu0 %v762, 64
    %v766 = vpop.permute.xlu0 %765
    %v768 = vmul.f32 %v761, %v766
    %770 = vrot.lane.b32.xlu0 %v768, 32
    %v771 = vpop.permute.xlu0 %770
    %v773 = vadd.f32 %v763, %v771
    %v774 = vtanh.pop %v773
    %776 = vrot.lane.b32.xlu0 %v774, 64
    %v777 = vpop.permute.xlu0 %776
    %v779 = vmul.f32 %v761, %v777
    %v780 = vpack.c.bf16 %v779, %v779
    %v781 = vstv %s706
    %vm782 = vcmp.lt.s32.totalorder %v781, %v285
    %v783 = vsel %vm782, 1, 0
    %784 = vset.pattern.permute.xlu0 0
    %785 = vperm.xlu0 %784, %v783
    %v786 = vpop.permute.xlu0 %785
    %vm787 = vcmp.eq.s32.totalorder %v786, 1
    %vm788 = vmpackc.low %vm787, %vm787
    %v789 = vsel %vm788, %v780, %v603
    %v790 = vsel %vm787, %v773, %v604
    %v791 = vsel %vm788, %v780, 0
    %v792 = vunpack.c.l.bf16 %v791
    %794 = vrot.lane.b32.xlu0 %v792, 32
    %v795 = vpop.permute.xlu0 %794
    %s797 = scalar_lea.vmem %s5, 4
    %798 = vst.msk [vmem:[%s797] sm:$0x3] %vm404, %v795
    %s799 = sadd.s32 %s407, 5
    %s800 = scalar_lea.vmem [#allocation10], 5
    %v801 = vld [vmem:[%s800] sm:$0x1]
    %v802 = vunpack.c.l.bf16 %v801
    %804 = vrot.lane.b32.xlu0 %v696, 32
    %v805 = vpop.permute.xlu0 %804
    %v807 = vsel %vm297, %v805, 0
    %809 = vmatprep.subr.bf16.mxu0 0
    %810 = vmatpush1.bf16.msra.mxu0 %v288
    %811 = vmatprep.subr.bf16.mxu0 0
    %812 = vmatpush1.bf16.msra.mxu0 %v289
    %813 = vmatprep.subr.bf16.mxu0 0
    %814 = vmatpush1.bf16.msra.mxu0 0
    %815 = vmatprep.subr.bf16.mxu0 0
    %816 = vmatpush1.bf16.msra.mxu0 0
    %817 = vmatprep.subr.bf16.mxu0 0
    %818 = vmatpush1.bf16.msra.mxu0 0
    %819 = vmatprep.subr.bf16.mxu0 0
    %820 = vmatpush1.bf16.msra.mxu0 0
    %821 = vmatprep.subr.bf16.mxu0 0
    %822 = vmatpush1.bf16.msra.mxu0 0
    %823 = vmatprep.subr.bf16.mxu0 0
    %824 = vmatpush1.bf16.msra.mxu0 0
    %825 = vmatprep.subr.bf16.mxu0 0
    %826 = vmatpush1.bf16.msra.mxu0 0
    %827 = vmatprep.subr.bf16.mxu0 0
    %828 = vmatpush1.bf16.msra.mxu0 0
    %829 = vmatprep.subr.bf16.mxu0 0
    %830 = vmatpush1.bf16.msra.mxu0 0
    %831 = vmatprep.subr.bf16.mxu0 0
    %832 = vmatpush1.bf16.msra.mxu0 0
    %833 = vmatprep.subr.bf16.mxu0 0
    %834 = vmatpush1.bf16.msra.mxu0 0
    %835 = vmatprep.subr.bf16.mxu0 0
    %836 = vmatpush1.bf16.msra.mxu0 0
    %837 = vmatprep.subr.bf16.mxu0 0
    %838 = vmatpush1.bf16.msra.mxu0 0
    %839 = vmatprep.subr.bf16.mxu0 0
    %840 = vmatpush1.bf16.msra.mxu0 0
    %841 = vmatprep.mubr.bf16.mxu0 0
    %842 = vmatmul.mubr.bf16.gmra.mrb[0].mxu0 %v807
    %v843 = vpop.f32.mrb[0].mxu0
    %v844 = vadd.f32 %v802, %v843
    %v845 = vpop.f32.mrb[0].mxu0
    %v846 = vpop.f32.mrb[0].mxu0
    %v847 = vpop.f32.mrb[0].mxu0
    %848 = vdwg.mxu0
    %v849 = vxor.u32 %v844, 2147483648
    %v850 = vmul.f32 %v849, 1.442695
    %v851 = vpow.pop %v850
    %v852 = vadd.f32 %v851, 1.0
    %v853 = vrcp.pop %v852
    %v854 = vmul.f32 1.0, %v853
    %v855 = vtanh.pop %v844
    %v856 = vmul.f32 %v854, %v697
    %858 = vrot.lane.b32.xlu0 %v855, 64
    %v859 = vpop.permute.xlu0 %858
    %v861 = vmul.f32 %v854, %v859
    %863 = vrot.lane.b32.xlu0 %v861, 32
    %v864 = vpop.permute.xlu0 %863
    %v866 = vadd.f32 %v856, %v864
    %v867 = vtanh.pop %v866
    %869 = vrot.lane.b32.xlu0 %v867, 64
    %v870 = vpop.permute.xlu0 %869
    %v872 = vmul.f32 %v854, %v870
    %v873 = vpack.c.bf16 %v872, %v872
    %v874 = vstv %s799
    %vm875 = vcmp.lt.s32.totalorder %v874, %v285
    %v876 = vsel %vm875, 1, 0
    %877 = vset.pattern.permute.xlu0 0
    %878 = vperm.xlu0 %877, %v876
    %v879 = vpop.permute.xlu0 %878
    %vm880 = vcmp.eq.s32.totalorder %v879, 1
    %vm881 = vmpackc.low %vm880, %vm880
    %v882 = vsel %vm881, %v873, %v696
    %v883 = vsel %vm880, %v866, %v697
    %v884 = vsel %vm881, %v873, 0
    %v885 = vunpack.c.l.bf16 %v884
    %887 = vrot.lane.b32.xlu0 %v885, 32
    %v888 = vpop.permute.xlu0 %887
    %s890 = scalar_lea.vmem %s176, 10
    %891 = vst.msk [vmem:[%s890] sm:$0x3] %vm404, %v888
    %s892 = sadd.s32 %s294, 3
    %s893 = scalar_lea.vmem [#allocation9], 3
    %v894 = vld [vmem:[%s893] sm:$0x1]
    %v895 = vunpack.c.l.bf16 %v894
    %897 = vrot.lane.b32.xlu0 %v789, 32
    %v898 = vpop.permute.xlu0 %897
    %v900 = vsel %vm297, %v898, 0
    %902 = vmatprep.subr.bf16.mxu0 0
    %903 = vmatpush1.bf16.msra.mxu0 %v286
    %904 = vmatprep.subr.bf16.mxu0 0
    %905 = vmatpush1.bf16.msra.mxu0 %v287
    %906 = vmatprep.subr.bf16.mxu0 0
    %907 = vmatpush1.bf16.msra.mxu0 0
    %908 = vmatprep.subr.bf16.mxu0 0
    %909 = vmatpush1.bf16.msra.mxu0 0
    %910 = vmatprep.subr.bf16.mxu0 0
    %911 = vmatpush1.bf16.msra.mxu0 0
    %912 = vmatprep.subr.bf16.mxu0 0
    %913 = vmatpush1.bf16.msra.mxu0 0
    %914 = vmatprep.subr.bf16.mxu0 0
    %915 = vmatpush1.bf16.msra.mxu0 0
    %916 = vmatprep.subr.bf16.mxu0 0
    %917 = vmatpush1.bf16.msra.mxu0 0
    %918 = vmatprep.subr.bf16.mxu0 0
    %919 = vmatpush1.bf16.msra.mxu0 0
    %920 = vmatprep.subr.bf16.mxu0 0
    %921 = vmatpush1.bf16.msra.mxu0 0
    %922 = vmatprep.subr.bf16.mxu0 0
    %923 = vmatpush1.bf16.msra.mxu0 0
    %924 = vmatprep.subr.bf16.mxu0 0
    %925 = vmatpush1.bf16.msra.mxu0 0
    %926 = vmatprep.subr.bf16.mxu0 0
    %927 = vmatpush1.bf16.msra.mxu0 0
    %928 = vmatprep.subr.bf16.mxu0 0
    %929 = vmatpush1.bf16.msra.mxu0 0
    %930 = vmatprep.subr.bf16.mxu0 0
    %931 = vmatpush1.bf16.msra.mxu0 0
    %932 = vmatprep.subr.bf16.mxu0 0
    %933 = vmatpush1.bf16.msra.mxu0 0
    %934 = vmatprep.mubr.bf16.mxu0 0
    %935 = vmatmul.mubr.bf16.gmra.mrb[0].mxu0 %v900
    %v936 = vpop.f32.mrb[0].mxu0
    %v937 = vadd.f32 %v895, %v936
    %v938 = vpop.f32.mrb[0].mxu0
    %v939 = vpop.f32.mrb[0].mxu0
    %v940 = vpop.f32.mrb[0].mxu0
    %941 = vdwg.mxu0
    %v942 = vxor.u32 %v937, 2147483648
    %v943 = vmul.f32 %v942, 1.442695
    %v944 = vpow.pop %v943
    %v945 = vadd.f32 %v944, 1.0
    %v946 = vrcp.pop %v945
    %v947 = vmul.f32 1.0, %v946
    %v948 = vtanh.pop %v937
    %v949 = vmul.f32 %v947, %v790
    %951 = vrot.lane.b32.xlu0 %v948, 64
    %v952 = vpop.permute.xlu0 %951
    %v954 = vmul.f32 %v947, %v952
    %956 = vrot.lane.b32.xlu0 %v954, 32
    %v957 = vpop.permute.xlu0 %956
    %v959 = vadd.f32 %v949, %v957
    %v960 = vtanh.pop %v959
    %962 = vrot.lane.b32.xlu0 %v960, 64
    %v963 = vpop.permute.xlu0 %962
    %v965 = vmul.f32 %v947, %v963
    %v966 = vpack.c.bf16 %v965, %v965
    %v967 = vstv %s892
    %vm968 = vcmp.lt.s32.totalorder %v967, %v285
    %v969 = vsel %vm968, 1, 0
    %970 = vset.pattern.permute.xlu0 0
    %971 = vperm.xlu0 %970, %v969
    %v972 = vpop.permute.xlu0 %971
    %vm973 = vcmp.eq.s32.totalorder %v972, 1
    %vm974 = vmpackc.low %vm973, %vm973
    %v975 = vsel %vm974, %v966, %v789
    %v976 = vsel %vm973, %v959, %v790
    %v977 = vsel %vm974, %v966, 0
    %v978 = vunpack.c.l.bf16 %v977
    %980 = vrot.lane.b32.xlu0 %v978, 32
    %v981 = vpop.permute.xlu0 %980
    %s983 = scalar_lea.vmem %s5, 6
    %984 = vst.msk [vmem:[%s983] sm:$0x3] %vm404, %v981
    %s985 = sadd.s32 %s407, 4
    %s986 = scalar_lea.vmem [#allocation10], 4
    %v987 = vld [vmem:[%s986] sm:$0x1]
    %v988 = vunpack.c.l.bf16 %v987
    %990 = vrot.lane.b32.xlu0 %v882, 32
    %v991 = vpop.permute.xlu0 %990
    %v993 = vsel %vm297, %v991, 0
    %995 = vmatprep.subr.bf16.mxu0 0
    %996 = vmatpush1.bf16.msra.mxu0 %v288
    %997 = vmatprep.subr.bf16.mxu0 0
    %998 = vmatpush1.bf16.msra.mxu0 %v289
    %999 = vmatprep.subr.bf16.mxu0 0
    %1000 = vmatpush1.bf16.msra.mxu0 0
    %1001 = vmatprep.subr.bf16.mxu0 0
    %1002 = vmatpush1.bf16.msra.mxu0 0
    %1003 = vmatprep.subr.bf16.mxu0 0
    %1004 = vmatpush1.bf16.msra.mxu0 0
    %1005 = vmatprep.subr.bf16.mxu0 0
    %1006 = vmatpush1.bf16.msra.mxu0 0
    %1007 = vmatprep.subr.bf16.mxu0 0
    %1008 = vmatpush1.bf16.msra.mxu0 0
    %1009 = vmatprep.subr.bf16.mxu0 0
    %1010 = vmatpush1.bf16.msra.mxu0 0
    %1011 = vmatprep.subr.bf16.mxu0 0
    %1012 = vmatpush1.bf16.msra.mxu0 0
    %1013 = vmatprep.subr.bf16.mxu0 0
    %1014 = vmatpush1.bf16.msra.mxu0 0
    %1015 = vmatprep.subr.bf16.mxu0 0
    %1016 = vmatpush1.bf16.msra.mxu0 0
    %1017 = vmatprep.subr.bf16.mxu0 0
    %1018 = vmatpush1.bf16.msra.mxu0 0
    %1019 = vmatprep.subr.bf16.mxu0 0
    %1020 = vmatpush1.bf16.msra.mxu0 0
    %1021 = vmatprep.subr.bf16.mxu0 0
    %1022 = vmatpush1.bf16.msra.mxu0 0
    %1023 = vmatprep.subr.bf16.mxu0 0
    %1024 = vmatpush1.bf16.msra.mxu0 0
    %1025 = vmatprep.subr.bf16.mxu0 0
    %1026 = vmatpush1.bf16.msra.mxu0 0
    %1027 = vmatprep.mubr.bf16.mxu0 0
    %1028 = vmatmul.mubr.bf16.gmra.mrb[0].mxu0 %v993
    %v1029 = vpop.f32.mrb[0].mxu0
    %v1030 = vadd.f32 %v988, %v1029
    %v1031 = vpop.f32.mrb[0].mxu0
    %v1032 = vpop.f32.mrb[0].mxu0
    %v1033 = vpop.f32.mrb[0].mxu0
    %1034 = vdwg.mxu0
    %v1035 = vxor.u32 %v1030, 2147483648
    %v1036 = vmul.f32 %v1035, 1.442695
    %v1037 = vpow.pop %v1036
    %v1038 = vadd.f32 %v1037, 1.0
    %v1039 = vrcp.pop %v1038
    %v1040 = vmul.f32 1.0, %v1039
    %v1041 = vtanh.pop %v1030
    %v1042 = vmul.f32 %v1040, %v883
    %1044 = vrot.lane.b32.xlu0 %v1041, 64
    %v1045 = vpop.permute.xlu0 %1044
    %v1047 = vmul.f32 %v1040, %v1045
    %1049 = vrot.lane.b32.xlu0 %v1047, 32
    %v1050 = vpop.permute.xlu0 %1049
    %v1052 = vadd.f32 %v1042, %v1050
    %v1053 = vtanh.pop %v1052
    %1055 = vrot.lane.b32.xlu0 %v1053, 64
    %v1056 = vpop.permute.xlu0 %1055
    %v1058 = vmul.f32 %v1040, %v1056
    %v1059 = vpack.c.bf16 %v1058, %v1058
    %v1060 = vstv %s985
    %vm1061 = vcmp.lt.s32.totalorder %v1060, %v285
    %v1062 = vsel %vm1061, 1, 0
    %1063 = vset.pattern.permute.xlu0 0
    %1064 = vperm.xlu0 %1063, %v1062
    %v1065 = vpop.permute.xlu0 %1064
    %vm1066 = vcmp.eq.s32.totalorder %v1065, 1
    %vm1067 = vmpackc.low %vm1066, %vm1066
    %v1068 = vsel %vm1067, %v1059, %v882
    %v1069 = vsel %vm1066, %v1052, %v883
    %v1070 = vsel %vm1067, %v1059, 0
    %v1071 = vunpack.c.l.bf16 %v1070
    %1073 = vrot.lane.b32.xlu0 %v1071, 32
    %v1074 = vpop.permute.xlu0 %1073
    %s1076 = scalar_lea.vmem %s176, 8
    %1077 = vst.msk [vmem:[%s1076] sm:$0x3] %vm404, %v1074
    %s1078 = sadd.s32 %s294, 4
    %s1079 = scalar_lea.vmem [#allocation9], 4
    %v1080 = vld [vmem:[%s1079] sm:$0x1]
    %v1081 = vunpack.c.l.bf16 %v1080
    %1083 = vrot.lane.b32.xlu0 %v975, 32
    %v1084 = vpop.permute.xlu0 %1083
    %v1086 = vsel %vm297, %v1084, 0
    %1088 = vmatprep.subr.bf16.mxu0 0
    %1089 = vmatpush1.bf16.msra.mxu0 %v286
    %1090 = vmatprep.subr.bf16.mxu0 0
    %1091 = vmatpush1.bf16.msra.mxu0 %v287
    %1092 = vmatprep.subr.bf16.mxu0 0
    %1093 = vmatpush1.bf16.msra.mxu0 0
    %1094 = vmatprep.subr.bf16.mxu0 0
    %1095 = vmatpush1.bf16.msra.mxu0 0
    %1096 = vmatprep.subr.bf16.mxu0 0
    %1097 = vmatpush1.bf16.msra.mxu0 0
    %1098 = vmatprep.subr.bf16.mxu0 0
    %1099 = vmatpush1.bf16.msra.mxu0 0
    %1100 = vmatprep.subr.bf16.mxu0 0
    %1101 = vmatpush1.bf16.msra.mxu0 0
    %1102 = vmatprep.subr.bf16.mxu0 0
    %1103 = vmatpush1.bf16.msra.mxu0 0
    %1104 = vmatprep.subr.bf16.mxu0 0
    %1105 = vmatpush1.bf16.msra.mxu0 0
    %1106 = vmatprep.subr.bf16.mxu0 0
    %1107 = vmatpush1.bf16.msra.mxu0 0
    %1108 = vmatprep.subr.bf16.mxu0 0
    %1109 = vmatpush1.bf16.msra.mxu0 0
    %1110 = vmatprep.subr.bf16.mxu0 0
    %1111 = vmatpush1.bf16.msra.mxu0 0
    %1112 = vmatprep.subr.bf16.mxu0 0
    %1113 = vmatpush1.bf16.msra.mxu0 0
    %1114 = vmatprep.subr.bf16.mxu0 0
    %1115 = vmatpush1.bf16.msra.mxu0 0
    %1116 = vmatprep.subr.bf16.mxu0 0
    %1117 = vmatpush1.bf16.msra.mxu0 0
    %1118 = vmatprep.subr.bf16.mxu0 0
    %1119 = vmatpush1.bf16.msra.mxu0 0
    %1120 = vmatprep.mubr.bf16.mxu0 0
    %1121 = vmatmul.mubr.bf16.gmra.mrb[0].mxu0 %v1086
    %v1122 = vpop.f32.mrb[0].mxu0
    %v1123 = vadd.f32 %v1081, %v1122
    %v1124 = vpop.f32.mrb[0].mxu0
    %v1125 = vpop.f32.mrb[0].mxu0
    %v1126 = vpop.f32.mrb[0].mxu0
    %1127 = vdwg.mxu0
    %v1128 = vxor.u32 %v1123, 2147483648
    %v1129 = vmul.f32 %v1128, 1.442695
    %v1130 = vpow.pop %v1129
    %v1131 = vadd.f32 %v1130, 1.0
    %v1132 = vrcp.pop %v1131
    %v1133 = vmul.f32 1.0, %v1132
    %v1134 = vtanh.pop %v1123
    %v1135 = vmul.f32 %v1133, %v976
    %1137 = vrot.lane.b32.xlu0 %v1134, 64
    %v1138 = vpop.permute.xlu0 %1137
    %v1140 = vmul.f32 %v1133, %v1138
    %1142 = vrot.lane.b32.xlu0 %v1140, 32
    %v1143 = vpop.permute.xlu0 %1142
    %v1145 = vadd.f32 %v1135, %v1143
    %v1146 = vtanh.pop %v1145
    %1148 = vrot.lane.b32.xlu0 %v1146, 64
    %v1149 = vpop.permute.xlu0 %1148
    %v1151 = vmul.f32 %v1133, %v1149
    %v1152 = vpack.c.bf16 %v1151, %v1151
    %v1153 = vstv %s1078
    %vm1154 = vcmp.lt.s32.totalorder %v1153, %v285
    %v1155 = vsel %vm1154, 1, 0
    %1156 = vset.pattern.permute.xlu0 0
    %1157 = vperm.xlu0 %1156, %v1155
    %v1158 = vpop.permute.xlu0 %1157
    %vm1159 = vcmp.eq.s32.totalorder %v1158, 1
    %vm1160 = vmpackc.low %vm1159, %vm1159
    %v1161 = vsel %vm1160, %v1152, %v975
    %v1162 = vsel %vm1159, %v1145, %v976
    %v1163 = vsel %vm1160, %v1152, 0
    %v1164 = vunpack.c.l.bf16 %v1163
    %1166 = vrot.lane.b32.xlu0 %v1164, 32
    %v1167 = vpop.permute.xlu0 %1166
    %s1169 = scalar_lea.vmem %s5, 8
    %1170 = vst.msk [vmem:[%s1169] sm:$0x3] %vm404, %v1167
    %s1171 = sadd.s32 %s407, 3
    %s1172 = scalar_lea.vmem [#allocation10], 3
    %v1173 = vld [vmem:[%s1172] sm:$0x1]
    %v1174 = vunpack.c.l.bf16 %v1173
    %1176 = vrot.lane.b32.xlu0 %v1068, 32
    %v1177 = vpop.permute.xlu0 %1176
    %v1179 = vsel %vm297, %v1177, 0
    %1181 = vmatprep.subr.bf16.mxu0 0
    %1182 = vmatpush1.bf16.msra.mxu0 %v288
    %1183 = vmatprep.subr.bf16.mxu0 0
    %1184 = vmatpush1.bf16.msra.mxu0 %v289
    %1185 = vmatprep.subr.bf16.mxu0 0
    %1186 = vmatpush1.bf16.msra.mxu0 0
    %1187 = vmatprep.subr.bf16.mxu0 0
    %1188 = vmatpush1.bf16.msra.mxu0 0
    %1189 = vmatprep.subr.bf16.mxu0 0
    %1190 = vmatpush1.bf16.msra.mxu0 0
    %1191 = vmatprep.subr.bf16.mxu0 0
    %1192 = vmatpush1.bf16.msra.mxu0 0
    %1193 = vmatprep.subr.bf16.mxu0 0
    %1194 = vmatpush1.bf16.msra.mxu0 0
    %1195 = vmatprep.subr.bf16.mxu0 0
    %1196 = vmatpush1.bf16.msra.mxu0 0
    %1197 = vmatprep.subr.bf16.mxu0 0
    %1198 = vmatpush1.bf16.msra.mxu0 0
    %1199 = vmatprep.subr.bf16.mxu0 0
    %1200 = vmatpush1.bf16.msra.mxu0 0
    %1201 = vmatprep.subr.bf16.mxu0 0
    %1202 = vmatpush1.bf16.msra.mxu0 0
    %1203 = vmatprep.subr.bf16.mxu0 0
    %1204 = vmatpush1.bf16.msra.mxu0 0
    %1205 = vmatprep.subr.bf16.mxu0 0
    %1206 = vmatpush1.bf16.msra.mxu0 0
    %1207 = vmatprep.subr.bf16.mxu0 0
    %1208 = vmatpush1.bf16.msra.mxu0 0
    %1209 = vmatprep.subr.bf16.mxu0 0
    %1210 = vmatpush1.bf16.msra.mxu0 0
    %1211 = vmatprep.subr.bf16.mxu0 0
    %1212 = vmatpush1.bf16.msra.mxu0 0
    %1213 = vmatprep.mubr.bf16.mxu0 0
    %1214 = vmatmul.mubr.bf16.gmra.mrb[0].mxu0 %v1179
    %v1215 = vpop.f32.mrb[0].mxu0
    %v1216 = vadd.f32 %v1174, %v1215
    %v1217 = vpop.f32.mrb[0].mxu0
    %v1218 = vpop.f32.mrb[0].mxu0
    %v1219 = vpop.f32.mrb[0].mxu0
    %1220 = vdwg.mxu0
    %v1221 = vxor.u32 %v1216, 2147483648
    %v1222 = vmul.f32 %v1221, 1.442695
    %v1223 = vpow.pop %v1222
    %v1224 = vadd.f32 %v1223, 1.0
    %v1225 = vrcp.pop %v1224
    %v1226 = vmul.f32 1.0, %v1225
    %v1227 = vtanh.pop %v1216
    %v1228 = vmul.f32 %v1226, %v1069
    %1230 = vrot.lane.b32.xlu0 %v1227, 64
    %v1231 = vpop.permute.xlu0 %1230
    %v1233 = vmul.f32 %v1226, %v1231
    %1235 = vrot.lane.b32.xlu0 %v1233, 32
    %v1236 = vpop.permute.xlu0 %1235
    %v1238 = vadd.f32 %v1228, %v1236
    %v1239 = vtanh.pop %v1238
    %1241 = vrot.lane.b32.xlu0 %v1239, 64
    %v1242 = vpop.permute.xlu0 %1241
    %v1244 = vmul.f32 %v1226, %v1242
    %v1245 = vpack.c.bf16 %v1244, %v1244
    %v1246 = vstv %s1171
    %vm1247 = vcmp.lt.s32.totalorder %v1246, %v285
    %v1248 = vsel %vm1247, 1, 0
    %1249 = vset.pattern.permute.xlu0 0
    %1250 = vperm.xlu0 %1249, %v1248
    %v1251 = vpop.permute.xlu0 %1250
    %vm1252 = vcmp.eq.s32.totalorder %v1251, 1
    %vm1253 = vmpackc.low %vm1252, %vm1252
    %v1254 = vsel %vm1253, %v1245, %v1068
    %v1255 = vsel %vm1252, %v1238, %v1069
    %v1256 = vsel %vm1253, %v1245, 0
    %v1257 = vunpack.c.l.bf16 %v1256
    %1259 = vrot.lane.b32.xlu0 %v1257, 32
    %v1260 = vpop.permute.xlu0 %1259
    %s1262 = scalar_lea.vmem %s176, 6
    %1263 = vst.msk [vmem:[%s1262] sm:$0x3] %vm404, %v1260
    %s1264 = sadd.s32 %s294, 5
    %s1265 = scalar_lea.vmem [#allocation9], 5
    %v1266 = vld [vmem:[%s1265] sm:$0x1]
    %v1267 = vunpack.c.l.bf16 %v1266
    %1269 = vrot.lane.b32.xlu0 %v1161, 32
    %v1270 = vpop.permute.xlu0 %1269
    %v1272 = vsel %vm297, %v1270, 0
    %1274 = vmatprep.subr.bf16.mxu0 0
    %1275 = vmatpush1.bf16.msra.mxu0 %v286
    %1276 = vmatprep.subr.bf16.mxu0 0
    %1277 = vmatpush1.bf16.msra.mxu0 %v287
    %1278 = vmatprep.subr.bf16.mxu0 0
    %1279 = vmatpush1.bf16.msra.mxu0 0
    %1280 = vmatprep.subr.bf16.mxu0 0
    %1281 = vmatpush1.bf16.msra.mxu0 0
    %1282 = vmatprep.subr.bf16.mxu0 0
    %1283 = vmatpush1.bf16.msra.mxu0 0
    %1284 = vmatprep.subr.bf16.mxu0 0
    %1285 = vmatpush1.bf16.msra.mxu0 0
    %1286 = vmatprep.subr.bf16.mxu0 0
    %1287 = vmatpush1.bf16.msra.mxu0 0
    %1288 = vmatprep.subr.bf16.mxu0 0
    %1289 = vmatpush1.bf16.msra.mxu0 0
    %1290 = vmatprep.subr.bf16.mxu0 0
    %1291 = vmatpush1.bf16.msra.mxu0 0
    %1292 = vmatprep.subr.bf16.mxu0 0
    %1293 = vmatpush1.bf16.msra.mxu0 0
    %1294 = vmatprep.subr.bf16.mxu0 0
    %1295 = vmatpush1.bf16.msra.mxu0 0
    %1296 = vmatprep.subr.bf16.mxu0 0
    %1297 = vmatpush1.bf16.msra.mxu0 0
    %1298 = vmatprep.subr.bf16.mxu0 0
    %1299 = vmatpush1.bf16.msra.mxu0 0
    %1300 = vmatprep.subr.bf16.mxu0 0
    %1301 = vmatpush1.bf16.msra.mxu0 0
    %1302 = vmatprep.subr.bf16.mxu0 0
    %1303 = vmatpush1.bf16.msra.mxu0 0
    %1304 = vmatprep.subr.bf16.mxu0 0
    %1305 = vmatpush1.bf16.msra.mxu0 0
    %1306 = vmatprep.mubr.bf16.mxu0 0
    %1307 = vmatmul.mubr.bf16.gmra.mrb[0].mxu0 %v1272
    %v1308 = vpop.f32.mrb[0].mxu0
    %v1309 = vadd.f32 %v1267, %v1308
    %v1310 = vpop.f32.mrb[0].mxu0
    %v1311 = vpop.f32.mrb[0].mxu0
    %v1312 = vpop.f32.mrb[0].mxu0
    %1313 = vdwg.mxu0
    %v1314 = vxor.u32 %v1309, 2147483648
    %v1315 = vmul.f32 %v1314, 1.442695
    %v1316 = vpow.pop %v1315
    %v1317 = vadd.f32 %v1316, 1.0
    %v1318 = vrcp.pop %v1317
    %v1319 = vmul.f32 1.0, %v1318
    %v1320 = vtanh.pop %v1309
    %v1321 = vmul.f32 %v1319, %v1162
    %1323 = vrot.lane.b32.xlu0 %v1320, 64
    %v1324 = vpop.permute.xlu0 %1323
    %v1326 = vmul.f32 %v1319, %v1324
    %1328 = vrot.lane.b32.xlu0 %v1326, 32
    %v1329 = vpop.permute.xlu0 %1328
    %v1331 = vadd.f32 %v1321, %v1329
    %v1332 = vtanh.pop %v1331
    %1334 = vrot.lane.b32.xlu0 %v1332, 64
    %v1335 = vpop.permute.xlu0 %1334
    %v1337 = vmul.f32 %v1319, %v1335
    %v1338 = vpack.c.bf16 %v1337, %v1337
    %v1339 = vstv %s1264
    %vm1340 = vcmp.lt.s32.totalorder %v1339, %v285
    %v1341 = vsel %vm1340, 1, 0
    %1342 = vset.pattern.permute.xlu0 0
    %1343 = vperm.xlu0 %1342, %v1341
    %v1344 = vpop.permute.xlu0 %1343
    %vm1345 = vcmp.eq.s32.totalorder %v1344, 1
    %vm1346 = vmpackc.low %vm1345, %vm1345
    %v1347 = vsel %vm1346, %v1338, %v1161
    %v1348 = vsel %vm1345, %v1331, %v1162
    %v1349 = vsel %vm1346, %v1338, 0
    %v1350 = vunpack.c.l.bf16 %v1349
    %1352 = vrot.lane.b32.xlu0 %v1350, 32
    %v1353 = vpop.permute.xlu0 %1352
    %s1355 = scalar_lea.vmem %s5, 10
    %1356 = vst.msk [vmem:[%s1355] sm:$0x3] %vm404, %v1353
    %s1357 = sadd.s32 %s407, 2
    %s1358 = scalar_lea.vmem [#allocation10], 2
    %v1359 = vld [vmem:[%s1358] sm:$0x1]
    %v1360 = vunpack.c.l.bf16 %v1359
    %1362 = vrot.lane.b32.xlu0 %v1254, 32
    %v1363 = vpop.permute.xlu0 %1362
    %v1365 = vsel %vm297, %v1363, 0
    %1367 = vmatprep.subr.bf16.mxu0 0
    %1368 = vmatpush1.bf16.msra.mxu0 %v288
    %1369 = vmatprep.subr.bf16.mxu0 0
    %1370 = vmatpush1.bf16.msra.mxu0 %v289
    %1371 = vmatprep.subr.bf16.mxu0 0
    %1372 = vmatpush1.bf16.msra.mxu0 0
    %1373 = vmatprep.subr.bf16.mxu0 0
    %1374 = vmatpush1.bf16.msra.mxu0 0
    %1375 = vmatprep.subr.bf16.mxu0 0
    %1376 = vmatpush1.bf16.msra.mxu0 0
    %1377 = vmatprep.subr.bf16.mxu0 0
    %1378 = vmatpush1.bf16.msra.mxu0 0
    %1379 = vmatprep.subr.bf16.mxu0 0
    %1380 = vmatpush1.bf16.msra.mxu0 0
    %1381 = vmatprep.subr.bf16.mxu0 0
    %1382 = vmatpush1.bf16.msra.mxu0 0
    %1383 = vmatprep.subr.bf16.mxu0 0
    %1384 = vmatpush1.bf16.msra.mxu0 0
    %1385 = vmatprep.subr.bf16.mxu0 0
    %1386 = vmatpush1.bf16.msra.mxu0 0
    %1387 = vmatprep.subr.bf16.mxu0 0
    %1388 = vmatpush1.bf16.msra.mxu0 0
    %1389 = vmatprep.subr.bf16.mxu0 0
    %1390 = vmatpush1.bf16.msra.mxu0 0
    %1391 = vmatprep.subr.bf16.mxu0 0
    %1392 = vmatpush1.bf16.msra.mxu0 0
    %1393 = vmatprep.subr.bf16.mxu0 0
    %1394 = vmatpush1.bf16.msra.mxu0 0
    %1395 = vmatprep.subr.bf16.mxu0 0
    %1396 = vmatpush1.bf16.msra.mxu0 0
    %1397 = vmatprep.subr.bf16.mxu0 0
    %1398 = vmatpush1.bf16.msra.mxu0 0
    %1399 = vmatprep.mubr.bf16.mxu0 0
    %1400 = vmatmul.mubr.bf16.gmra.mrb[0].mxu0 %v1365
    %v1401 = vpop.f32.mrb[0].mxu0
    %v1402 = vadd.f32 %v1360, %v1401
    %v1403 = vpop.f32.mrb[0].mxu0
    %v1404 = vpop.f32.mrb[0].mxu0
    %v1405 = vpop.f32.mrb[0].mxu0
    %1406 = vdwg.mxu0
    %v1407 = vxor.u32 %v1402, 2147483648
    %v1408 = vmul.f32 %v1407, 1.442695
    %v1409 = vpow.pop %v1408
    %v1410 = vadd.f32 %v1409, 1.0
    %v1411 = vrcp.pop %v1410
    %v1412 = vmul.f32 1.0, %v1411
    %v1413 = vtanh.pop %v1402
    %v1414 = vmul.f32 %v1412, %v1255
    %1416 = vrot.lane.b32.xlu0 %v1413, 64
    %v1417 = vpop.permute.xlu0 %1416
    %v1419 = vmul.f32 %v1412, %v1417
    %1421 = vrot.lane.b32.xlu0 %v1419, 32
    %v1422 = vpop.permute.xlu0 %1421
    %v1424 = vadd.f32 %v1414, %v1422
    %v1425 = vtanh.pop %v1424
    %1427 = vrot.lane.b32.xlu0 %v1425, 64
    %v1428 = vpop.permute.xlu0 %1427
    %v1430 = vmul.f32 %v1412, %v1428
    %v1431 = vpack.c.bf16 %v1430, %v1430
    %v1432 = vstv %s1357
    %vm1433 = vcmp.lt.s32.totalorder %v1432, %v285
    %v1434 = vsel %vm1433, 1, 0
    %1435 = vset.pattern.permute.xlu0 0
    %1436 = vperm.xlu0 %1435, %v1434
    %v1437 = vpop.permute.xlu0 %1436
    %vm1438 = vcmp.eq.s32.totalorder %v1437, 1
    %vm1439 = vmpackc.low %vm1438, %vm1438
    %v1440 = vsel %vm1439, %v1431, %v1254
    %v1441 = vsel %vm1438, %v1424, %v1255
    %v1442 = vsel %vm1439, %v1431, 0
    %v1443 = vunpack.c.l.bf16 %v1442
    %1445 = vrot.lane.b32.xlu0 %v1443, 32
    %v1446 = vpop.permute.xlu0 %1445
    %s1448 = scalar_lea.vmem %s176, 4
    %1449 = vst.msk [vmem:[%s1448] sm:$0x3] %vm404, %v1446
    %s1450 = sadd.s32 %s294, 6
    %s1451 = scalar_lea.vmem [#allocation9], 6
    %v1452 = vld [vmem:[%s1451] sm:$0x1]
    %v1453 = vunpack.c.l.bf16 %v1452
    %1455 = vrot.lane.b32.xlu0 %v1347, 32
    %v1456 = vpop.permute.xlu0 %1455
    %v1458 = vsel %vm297, %v1456, 0
    %1460 = vmatprep.subr.bf16.mxu0 0
    %1461 = vmatpush1.bf16.msra.mxu0 %v286
    %1462 = vmatprep.subr.bf16.mxu0 0
    %1463 = vmatpush1.bf16.msra.mxu0 %v287
    %1464 = vmatprep.subr.bf16.mxu0 0
    %1465 = vmatpush1.bf16.msra.mxu0 0
    %1466 = vmatprep.subr.bf16.mxu0 0
    %1467 = vmatpush1.bf16.msra.mxu0 0
    %1468 = vmatprep.subr.bf16.mxu0 0
    %1469 = vmatpush1.bf16.msra.mxu0 0
    %1470 = vmatprep.subr.bf16.mxu0 0
    %1471 = vmatpush1.bf16.msra.mxu0 0
    %1472 = vmatprep.subr.bf16.mxu0 0
    %1473 = vmatpush1.bf16.msra.mxu0 0
    %1474 = vmatprep.subr.bf16.mxu0 0
    %1475 = vmatpush1.bf16.msra.mxu0 0
    %1476 = vmatprep.subr.bf16.mxu0 0
    %1477 = vmatpush1.bf16.msra.mxu0 0
    %1478 = vmatprep.subr.bf16.mxu0 0
    %1479 = vmatpush1.bf16.msra.mxu0 0
    %1480 = vmatprep.subr.bf16.mxu0 0
    %1481 = vmatpush1.bf16.msra.mxu0 0
    %1482 = vmatprep.subr.bf16.mxu0 0
    %1483 = vmatpush1.bf16.msra.mxu0 0
    %1484 = vmatprep.subr.bf16.mxu0 0
    %1485 = vmatpush1.bf16.msra.mxu0 0
    %1486 = vmatprep.subr.bf16.mxu0 0
    %1487 = vmatpush1.bf16.msra.mxu0 0
    %1488 = vmatprep.subr.bf16.mxu0 0
    %1489 = vmatpush1.bf16.msra.mxu0 0
    %1490 = vmatprep.subr.bf16.mxu0 0
    %1491 = vmatpush1.bf16.msra.mxu0 0
    %1492 = vmatprep.mubr.bf16.mxu0 0
    %1493 = vmatmul.mubr.bf16.gmra.mrb[0].mxu0 %v1458
    %v1494 = vpop.f32.mrb[0].mxu0
    %v1495 = vadd.f32 %v1453, %v1494
    %v1496 = vpop.f32.mrb[0].mxu0
    %v1497 = vpop.f32.mrb[0].mxu0
    %v1498 = vpop.f32.mrb[0].mxu0
    %1499 = vdwg.mxu0
    %v1500 = vxor.u32 %v1495, 2147483648
    %v1501 = vmul.f32 %v1500, 1.442695
    %v1502 = vpow.pop %v1501
    %v1503 = vadd.f32 %v1502, 1.0
    %v1504 = vrcp.pop %v1503
    %v1505 = vmul.f32 1.0, %v1504
    %v1506 = vtanh.pop %v1495
    %v1507 = vmul.f32 %v1505, %v1348
    %1509 = vrot.lane.b32.xlu0 %v1506, 64
    %v1510 = vpop.permute.xlu0 %1509
    %v1512 = vmul.f32 %v1505, %v1510
    %1514 = vrot.lane.b32.xlu0 %v1512, 32
    %v1515 = vpop.permute.xlu0 %1514
    %v1517 = vadd.f32 %v1507, %v1515
    %v1518 = vtanh.pop %v1517
    %1520 = vrot.lane.b32.xlu0 %v1518, 64
    %v1521 = vpop.permute.xlu0 %1520
    %v1523 = vmul.f32 %v1505, %v1521
    %v1524 = vpack.c.bf16 %v1523, %v1523
    %v1525 = vstv %s1450
    %vm1526 = vcmp.lt.s32.totalorder %v1525, %v285
    %v1527 = vsel %vm1526, 1, 0
    %1528 = vset.pattern.permute.xlu0 0
    %1529 = vperm.xlu0 %1528, %v1527
    %v1530 = vpop.permute.xlu0 %1529
    %vm1531 = vcmp.eq.s32.totalorder %v1530, 1
    %vm1532 = vmpackc.low %vm1531, %vm1531
    %v1533 = vsel %vm1532, %v1524, %v1347
    %v1534 = vsel %vm1531, %v1517, %v1348
    %v1535 = vsel %vm1532, %v1524, 0
    %v1536 = vunpack.c.l.bf16 %v1535
    %1538 = vrot.lane.b32.xlu0 %v1536, 32
    %v1539 = vpop.permute.xlu0 %1538
    %s1541 = scalar_lea.vmem %s5, 12
    %1542 = vst.msk [vmem:[%s1541] sm:$0x3] %vm404, %v1539
    %s1543 = sadd.s32 %s407, 1
    %s1544 = scalar_lea.vmem [#allocation10], 1
    %v1545 = vld [vmem:[%s1544] sm:$0x1]
    %v1546 = vunpack.c.l.bf16 %v1545
    %1548 = vrot.lane.b32.xlu0 %v1440, 32
    %v1549 = vpop.permute.xlu0 %1548
    %v1551 = vsel %vm297, %v1549, 0
    %1553 = vmatprep.subr.bf16.mxu0 0
    %1554 = vmatpush1.bf16.msra.mxu0 %v288
    %1555 = vmatprep.subr.bf16.mxu0 0
    %1556 = vmatpush1.bf16.msra.mxu0 %v289
    %1557 = vmatprep.subr.bf16.mxu0 0
    %1558 = vmatpush1.bf16.msra.mxu0 0
    %1559 = vmatprep.subr.bf16.mxu0 0
    %1560 = vmatpush1.bf16.msra.mxu0 0
    %1561 = vmatprep.subr.bf16.mxu0 0
    %1562 = vmatpush1.bf16.msra.mxu0 0
    %1563 = vmatprep.subr.bf16.mxu0 0
    %1564 = vmatpush1.bf16.msra.mxu0 0
    %1565 = vmatprep.subr.bf16.mxu0 0
    %1566 = vmatpush1.bf16.msra.mxu0 0
    %1567 = vmatprep.subr.bf16.mxu0 0
    %1568 = vmatpush1.bf16.msra.mxu0 0
    %1569 = vmatprep.subr.bf16.mxu0 0
    %1570 = vmatpush1.bf16.msra.mxu0 0
    %1571 = vmatprep.subr.bf16.mxu0 0
    %1572 = vmatpush1.bf16.msra.mxu0 0
    %1573 = vmatprep.subr.bf16.mxu0 0
    %1574 = vmatpush1.bf16.msra.mxu0 0
    %1575 = vmatprep.subr.bf16.mxu0 0
    %1576 = vmatpush1.bf16.msra.mxu0 0
    %1577 = vmatprep.subr.bf16.mxu0 0
    %1578 = vmatpush1.bf16.msra.mxu0 0
    %1579 = vmatprep.subr.bf16.mxu0 0
    %1580 = vmatpush1.bf16.msra.mxu0 0
    %1581 = vmatprep.subr.bf16.mxu0 0
    %1582 = vmatpush1.bf16.msra.mxu0 0
    %1583 = vmatprep.subr.bf16.mxu0 0
    %1584 = vmatpush1.bf16.msra.mxu0 0
    %1585 = vmatprep.mubr.bf16.mxu0 0
    %1586 = vmatmul.mubr.bf16.gmra.mrb[0].mxu0 %v1551
    %v1587 = vpop.f32.mrb[0].mxu0
    %v1588 = vadd.f32 %v1546, %v1587
    %v1589 = vpop.f32.mrb[0].mxu0
    %v1590 = vpop.f32.mrb[0].mxu0
    %v1591 = vpop.f32.mrb[0].mxu0
    %1592 = vdwg.mxu0
    %v1593 = vxor.u32 %v1588, 2147483648
    %v1594 = vmul.f32 %v1593, 1.442695
    %v1595 = vpow.pop %v1594
    %v1596 = vadd.f32 %v1595, 1.0
    %v1597 = vrcp.pop %v1596
    %v1598 = vmul.f32 1.0, %v1597
    %v1599 = vtanh.pop %v1588
    %v1600 = vmul.f32 %v1598, %v1441
    %1602 = vrot.lane.b32.xlu0 %v1599, 64
    %v1603 = vpop.permute.xlu0 %1602
    %v1605 = vmul.f32 %v1598, %v1603
    %1607 = vrot.lane.b32.xlu0 %v1605, 32
    %v1608 = vpop.permute.xlu0 %1607
    %v1610 = vadd.f32 %v1600, %v1608
    %v1611 = vtanh.pop %v1610
    %1613 = vrot.lane.b32.xlu0 %v1611, 64
    %v1614 = vpop.permute.xlu0 %1613
    %v1616 = vmul.f32 %v1598, %v1614
    %v1617 = vpack.c.bf16 %v1616, %v1616
    %v1618 = vstv %s1543
    %vm1619 = vcmp.lt.s32.totalorder %v1618, %v285
    %v1620 = vsel %vm1619, 1, 0
    %1621 = vset.pattern.permute.xlu0 0
    %1622 = vperm.xlu0 %1621, %v1620
    %v1623 = vpop.permute.xlu0 %1622
    %vm1624 = vcmp.eq.s32.totalorder %v1623, 1
    %vm1625 = vmpackc.low %vm1624, %vm1624
    %v1626 = vsel %vm1625, %v1617, %v1440
    %v1627 = vsel %vm1624, %v1610, %v1441
    %v1628 = vsel %vm1625, %v1617, 0
    %v1629 = vunpack.c.l.bf16 %v1628
    %1631 = vrot.lane.b32.xlu0 %v1629, 32
    %v1632 = vpop.permute.xlu0 %1631
    %s1634 = scalar_lea.vmem %s176, 2
    %1635 = vst.msk [vmem:[%s1634] sm:$0x3] %vm404, %v1632
    %s1636 = sadd.s32 %s294, 7
    %s1637 = scalar_lea.vmem [#allocation9], 7
    %v1638 = vld [vmem:[%s1637] sm:$0x1]
    %v1639 = vunpack.c.l.bf16 %v1638
    %1641 = vrot.lane.b32.xlu0 %v1533, 32
    %v1642 = vpop.permute.xlu0 %1641
    %v1644 = vsel %vm297, %v1642, 0
    %1646 = vmatprep.subr.bf16.mxu0 0
    %1647 = vmatpush1.bf16.msra.mxu0 %v286
    %1648 = vmatprep.subr.bf16.mxu0 0
    %1649 = vmatpush1.bf16.msra.mxu0 %v287
    %1650 = vmatprep.subr.bf16.mxu0 0
    %1651 = vmatpush1.bf16.msra.mxu0 0
    %1652 = vmatprep.subr.bf16.mxu0 0
    %1653 = vmatpush1.bf16.msra.mxu0 0
    %1654 = vmatprep.subr.bf16.mxu0 0
    %1655 = vmatpush1.bf16.msra.mxu0 0
    %1656 = vmatprep.subr.bf16.mxu0 0
    %1657 = vmatpush1.bf16.msra.mxu0 0
    %1658 = vmatprep.subr.bf16.mxu0 0
    %1659 = vmatpush1.bf16.msra.mxu0 0
    %1660 = vmatprep.subr.bf16.mxu0 0
    %1661 = vmatpush1.bf16.msra.mxu0 0
    %1662 = vmatprep.subr.bf16.mxu0 0
    %1663 = vmatpush1.bf16.msra.mxu0 0
    %1664 = vmatprep.subr.bf16.mxu0 0
    %1665 = vmatpush1.bf16.msra.mxu0 0
    %1666 = vmatprep.subr.bf16.mxu0 0
    %1667 = vmatpush1.bf16.msra.mxu0 0
    %1668 = vmatprep.subr.bf16.mxu0 0
    %1669 = vmatpush1.bf16.msra.mxu0 0
    %1670 = vmatprep.subr.bf16.mxu0 0
    %1671 = vmatpush1.bf16.msra.mxu0 0
    %1672 = vmatprep.subr.bf16.mxu0 0
    %1673 = vmatpush1.bf16.msra.mxu0 0
    %1674 = vmatprep.subr.bf16.mxu0 0
    %1675 = vmatpush1.bf16.msra.mxu0 0
    %1676 = vmatprep.subr.bf16.mxu0 0
    %1677 = vmatpush1.bf16.msra.mxu0 0
    %1678 = vmatprep.mubr.bf16.mxu0 0
    %1679 = vmatmul.mubr.bf16.gmra.mrb[0].mxu0 %v1644
    %v1680 = vpop.f32.mrb[0].mxu0
    %v1681 = vadd.f32 %v1639, %v1680
    %v1682 = vpop.f32.mrb[0].mxu0
    %v1683 = vpop.f32.mrb[0].mxu0
    %v1684 = vpop.f32.mrb[0].mxu0
    %1685 = vdwg.mxu0
    %v1686 = vxor.u32 %v1681, 2147483648
    %v1687 = vmul.f32 %v1686, 1.442695
    %v1688 = vpow.pop %v1687
    %v1689 = vadd.f32 %v1688, 1.0
    %v1690 = vrcp.pop %v1689
    %v1691 = vmul.f32 1.0, %v1690
    %v1692 = vtanh.pop %v1681
    %v1693 = vmul.f32 %v1691, %v1534
    %1695 = vrot.lane.b32.xlu0 %v1692, 64
    %v1696 = vpop.permute.xlu0 %1695
    %v1698 = vmul.f32 %v1691, %v1696
    %1700 = vrot.lane.b32.xlu0 %v1698, 32
    %v1701 = vpop.permute.xlu0 %1700
    %v1703 = vadd.f32 %v1693, %v1701
    %v1704 = vtanh.pop %v1703
    %1706 = vrot.lane.b32.xlu0 %v1704, 64
    %v1707 = vpop.permute.xlu0 %1706
    %v1709 = vmul.f32 %v1691, %v1707
    %v1710 = vpack.c.bf16 %v1709, %v1709
    %v1711 = vstv %s1636
    %vm1712 = vcmp.lt.s32.totalorder %v1711, %v285
    %v1713 = vsel %vm1712, 1, 0
    %1714 = vset.pattern.permute.xlu0 0
    %1715 = vperm.xlu0 %1714, %v1713
    %v1716 = vpop.permute.xlu0 %1715
    %vm1717 = vcmp.eq.s32.totalorder %v1716, 1
    %vm1718 = vmpackc.low %vm1717, %vm1717
    %v1719 = vsel %vm1718, %v1710, %v1533
    %v1720 = vsel %vm1717, %v1703, %v1534
    %v1721 = vsel %vm1718, %v1710, 0
    %v1722 = vunpack.c.l.bf16 %v1721
    %1724 = vrot.lane.b32.xlu0 %v1722, 32
    %v1725 = vpop.permute.xlu0 %1724
    %s1727 = scalar_lea.vmem %s5, 14
    %1728 = vst.msk [vmem:[%s1727] sm:$0x3] %vm404, %v1725
    %v1729 = vld [vmem:[#allocation10] sm:$0x1]
    %v1730 = vunpack.c.l.bf16 %v1729
    %1732 = vrot.lane.b32.xlu0 %v1626, 32
    %v1733 = vpop.permute.xlu0 %1732
    %v1735 = vsel %vm297, %v1733, 0
    %1737 = vmatprep.subr.bf16.mxu0 0
    %1738 = vmatpush1.bf16.msra.mxu0 %v288
    %1739 = vmatprep.subr.bf16.mxu0 0
    %1740 = vmatpush1.bf16.msra.mxu0 %v289
    %1741 = vmatprep.subr.bf16.mxu0 0
    %1742 = vmatpush1.bf16.msra.mxu0 0
    %1743 = vmatprep.subr.bf16.mxu0 0
    %1744 = vmatpush1.bf16.msra.mxu0 0
    %1745 = vmatprep.subr.bf16.mxu0 0
    %1746 = vmatpush1.bf16.msra.mxu0 0
    %1747 = vmatprep.subr.bf16.mxu0 0
    %1748 = vmatpush1.bf16.msra.mxu0 0
    %1749 = vmatprep.subr.bf16.mxu0 0
    %1750 = vmatpush1.bf16.msra.mxu0 0
    %1751 = vmatprep.subr.bf16.mxu0 0
    %1752 = vmatpush1.bf16.msra.mxu0 0
    %1753 = vmatprep.subr.bf16.mxu0 0
    %1754 = vmatpush1.bf16.msra.mxu0 0
    %1755 = vmatprep.subr.bf16.mxu0 0
    %1756 = vmatpush1.bf16.msra.mxu0 0
    %1757 = vmatprep.subr.bf16.mxu0 0
    %1758 = vmatpush1.bf16.msra.mxu0 0
    %1759 = vmatprep.subr.bf16.mxu0 0
    %1760 = vmatpush1.bf16.msra.mxu0 0
    %1761 = vmatprep.subr.bf16.mxu0 0
    %1762 = vmatpush1.bf16.msra.mxu0 0
    %1763 = vmatprep.subr.bf16.mxu0 0
    %1764 = vmatpush1.bf16.msra.mxu0 0
    %1765 = vmatprep.subr.bf16.mxu0 0
    %1766 = vmatpush1.bf16.msra.mxu0 0
    %1767 = vmatprep.subr.bf16.mxu0 0
    %1768 = vmatpush1.bf16.msra.mxu0 0
    %1769 = vmatprep.mubr.bf16.mxu0 0
    %1770 = vmatmul.mubr.bf16.gmra.mrb[0].mxu0 %v1735
    %v1771 = vpop.f32.mrb[0].mxu0
    %v1772 = vadd.f32 %v1730, %v1771
    %v1773 = vpop.f32.mrb[0].mxu0
    %v1774 = vpop.f32.mrb[0].mxu0
    %v1775 = vpop.f32.mrb[0].mxu0
    %1776 = vdwg.mxu0
    %v1777 = vxor.u32 %v1772, 2147483648
    %v1778 = vmul.f32 %v1777, 1.442695
    %v1779 = vpow.pop %v1778
    %v1780 = vadd.f32 %v1779, 1.0
    %v1781 = vrcp.pop %v1780
    %v1782 = vmul.f32 1.0, %v1781
    %v1783 = vtanh.pop %v1772
    %v1784 = vmul.f32 %v1782, %v1627
    %1786 = vrot.lane.b32.xlu0 %v1783, 64
    %v1787 = vpop.permute.xlu0 %1786
    %v1789 = vmul.f32 %v1782, %v1787
    %1791 = vrot.lane.b32.xlu0 %v1789, 32
    %v1792 = vpop.permute.xlu0 %1791
    %v1794 = vadd.f32 %v1784, %v1792
    %v1795 = vtanh.pop %v1794
    %1797 = vrot.lane.b32.xlu0 %v1795, 64
    %v1798 = vpop.permute.xlu0 %1797
    %v1800 = vmul.f32 %v1782, %v1798
    %v1801 = vpack.c.bf16 %v1800, %v1800
    %v1802 = vstv %s407
    %vm1803 = vcmp.lt.s32.totalorder %v1802, %v285
    %v1804 = vsel %vm1803, 1, 0
    %1805 = vset.pattern.permute.xlu0 0
    %1806 = vperm.xlu0 %1805, %v1804
    %v1807 = vpop.permute.xlu0 %1806
    %vm1808 = vcmp.eq.s32.totalorder %v1807, 1
    %vm1809 = vmpackc.low %vm1808, %vm1808
    %v1810 = vsel %vm1809, %v1801, %v1626
    %v1811 = vsel %vm1808, %v1794, %v1627
    %v1812 = vsel %vm1809, %v1801, 0
    %v1813 = vunpack.c.l.bf16 %v1812
    %1815 = vrot.lane.b32.xlu0 %v1813, 32
    %v1816 = vpop.permute.xlu0 %1815
    %1818 = vst.msk [vmem:[%s176] sm:$0x3] %vm404, %v1816
    %v1821 = vunpack.c.l.s4 1966171168
    %v1822 = vunpack.c.0.s8 %v1821
    %v1823 = vlaneseq
    %v1824 = vshrl.u32 %v1823, 7
    %v1825 = vsub.s32 %v1822, %v1824
    %v1826 = vrot.slane %v1719, %v1825
    %v1828 = vunpack.c.l.s4 1966171168
    %v1829 = vunpack.c.0.s8 %v1828
    %v1830 = vlaneseq
    %v1831 = vshrl.u32 %v1830, 7
    %v1832 = vsub.s32 %v1829, %v1831
    %v1833 = vrot.slane %v1826, %v1832
    %1834 = vrot.lane.b32.xlu0 %v1833, 32
    %v1835 = vpop.permute.xlu0 %1834
    %vm1837 = vcmask 253952
    %1838 = vst.msk [vmem:[#allocation2] sm:$0x1] %vm1837, %v1835
    %1840 = vrot.lane.b32.xlu0 %v1720, 96
    %v1841 = vpop.permute.xlu0 %1840
    %1843 = vst.msk [vmem:[#allocation3] sm:$0x3] %vm404, %v1841
    %v1846 = vunpack.c.l.s4 1966171168
    %v1847 = vunpack.c.0.s8 %v1846
    %v1848 = vlaneseq
    %v1849 = vshrl.u32 %v1848, 7
    %v1850 = vsub.s32 %v1847, %v1849
    %v1851 = vrot.slane %v1810, %v1850
    %v1853 = vunpack.c.l.s4 1966171168
    %v1854 = vunpack.c.0.s8 %v1853
    %v1855 = vlaneseq
    %v1856 = vshrl.u32 %v1855, 7
    %v1857 = vsub.s32 %v1854, %v1856
    %v1858 = vrot.slane %v1851, %v1857
    %1859 = vrot.lane.b32.xlu0 %v1858, 32
    %v1860 = vpop.permute.xlu0 %1859
    %1862 = vst.msk [vmem:[#allocation4] sm:$0x1] %vm1837, %v1860
    %1864 = vrot.lane.b32.xlu0 %v1811, 96
    %v1865 = vpop.permute.xlu0 %1864
    %1867 = vst.msk [vmem:[#allocation5] sm:$0x3] %vm404, %v1865
    // Predicated region
    $region168: #{encoder_forward.3} parent=1 // pred_check
      %p1868 = pneg %p180
    $region169: #{encoder_forward.3} parent=1 // pred_check_branch
      %1870 = sbr.rel (%p1868) target = $region171
    $region170: #{encoder_forward.3} parent=1 // pred_region
      %v1871 = vunpack.c.l.bf16 %v1719
      %1873 = vrot.lane.b32.xlu0 %v1871, 32
      %v1874 = vpop.permute.xlu0 %1873
      %1876 = vst.msk [vmem:[%s7] sm:$0x3] %vm404, %v1874
      %v1877 = vunpack.c.l.bf16 %v1810
      %1879 = vrot.lane.b32.xlu0 %v1877, 32
      %v1880 = vpop.permute.xlu0 %1879
      %s1882 = scalar_lea.vmem %s7, 2
      %1883 = vst.msk [vmem:[%s1882] sm:$0x3] %vm404, %v1880
      %1884 = vst.msk [vmem:[%s8] sm:$0x3] %vm404, %v1841
      %s1885 = scalar_lea.vmem %s8, 2
      %1886 = vst.msk [vmem:[%s1885] sm:$0x3] %vm404, %v1865
    $region171: #{encoder_forward.3} parent=1 // pred_fallthru
      _
    %s1887 = ssub.s32 0, 0
    %s1888 = smul.u32 8, %s1887
    %p1889 = scmp.lt.s32.totalorder %s1888, 7
    %s1890 = scalar_select %p1889, %s1888, 7
    %s1891 = smul.addr %s1890, 2
    %s1892 = scalar_lea.vmem %s6, %s1891
    // Predicated region
    $region172: #{encoder_forward.3} parent=1 // pred_check
      _
    $region173: #{encoder_forward.3} parent=1 // pred_check_branch
      %1894 = sbr.rel (0) target = $region175
    $region174: #{encoder_forward.3} parent=1 // pred_region
      _
    $region175: #{encoder_forward.3} parent=1 // pred_fallthru
      _
    // Predicated region
    $region176: #{encoder_forward.3} parent=1 // pred_check
      _
    $region177: #{encoder_forward.3} parent=1 // pred_check_branch
      %1896 = sbr.rel (0) target = $region179
    $region178: #{encoder_forward.3} parent=1 // pred_region
      %s1897 = ssub.s32 0, 0
      %s1898 = smul.u32 8, %s1897
    $region179: #{encoder_forward.3} parent=1 // pred_fallthru
      _
    // Predicated region
    $region180: #{encoder_forward.3} parent=1 // pred_check
      _
    $region181: #{encoder_forward.3} parent=1 // pred_check_branch
      %1900 = sbr.rel (0) target = $region183
    $region182: #{encoder_forward.3} parent=1 // pred_region
      _
    $region183: #{encoder_forward.3} parent=1 // pred_fallthru
      _
    // Predicated region
    $region184: #{encoder_forward.3} parent=1 // pred_check
      _
    $region185: #{encoder_forward.3} parent=1 // pred_check_branch
      %1902 = sbr.rel (0) target = $region187
    $region186: #{encoder_forward.3} parent=1 // pred_region
      _
    $region187: #{encoder_forward.3} parent=1 // pred_fallthru
      _
    // Predicated region
    $region188: #{encoder_forward.3} parent=1 // pred_check
      _
    $region189: #{encoder_forward.3} parent=1 // pred_check_branch
      %1904 = sbr.rel (0) target = $region191
    $region190: #{encoder_forward.3} parent=1 // pred_region
      _
    $region191: #{encoder_forward.3} parent=1 // pred_fallthru
      _
    // Predicated region
    $region192: #{encoder_forward.3} parent=1 // pred_check
      _
    $region193: #{encoder_forward.3} parent=1 // pred_check_branch
      %1906 = sbr.rel (0) target = $region195
    $region194: #{encoder_forward.3} parent=1 // pred_region
      %s1907 = ssub.s32 0, 0
      %s1908 = smul.u32 8, %s1907
      %p1909 = scmp.lt.s32.totalorder %s1908, 7
      %s1910 = scalar_select %p1909, %s1908, 7
      %s1911 = smul.addr %s1910, 2
      %s1912 = scalar_lea.vmem %s6, %s1911
    $region195: #{encoder_forward.3} parent=1 // pred_fallthru
      _
    // Predicated region
    $region196: #{encoder_forward.3} parent=1 // pred_check
      _
    $region197: #{encoder_forward.3} parent=1 // pred_check_branch
      %1914 = sbr.rel (0) target = $region199
    $region198: #{encoder_forward.3} parent=1 // pred_region
      _
    $region199: #{encoder_forward.3} parent=1 // pred_fallthru
      _
    // Predicated region
    $region200: #{encoder_forward.3} parent=1 // pred_check
      _
    $region201: #{encoder_forward.3} parent=1 // pred_check_branch
      %1916 = sbr.rel (0) target = $region203
    $region202: #{encoder_forward.3} parent=1 // pred_region
      _
    $region203: #{encoder_forward.3} parent=1 // pred_fallthru
      _
  %1917 = vsyncmov [#allocation8]
  %s1918 = vpop.sfrf %1917
  %p1919 = scmp.eq.s32.totalorder %s1918, 0
  %p1920 = pneg %p1919
  %1922 = shalt.err (%p1920)
  %s1923 = scalar_lea.sflag [#allocation8], 1
  %1924 = vsyncmov %s1923
  %s1925 = vpop.sfrf %1924
  %p1926 = scmp.eq.s32.totalorder %s1925, 0
  %p1927 = pneg %p1926
  %1929 = shalt.err (%p1927)

</llo_original>
